<compile_context>
chip_gen: v6e
topology: v6e:2x2x1
jax: 0.10.0
libtpu: 0.0.40
codegen_flags: <defaults>
</compile_context>

<pallas_src>
import math

import jax
import jax.numpy as jnp
from jax import lax
from jax.experimental import pallas as pl
from jax.experimental.pallas import tpu as pltpu

# ---------------- static (small, synthetic) configuration -------------------
N       = 2       # batch
LQ      = 16      # query length
LR      = 24      # ref_query length
D_MODEL = 32      # d_model
D_FFN   = 64      # d_ffn
N_HEADS = 8       # nn.MultiheadAttention heads
EPS     = 1e-5    # nn.LayerNorm default eps


# ---------------- in-kernel helpers (traced inside the Pallas body) ----------
def _layer_norm(x, gamma, beta):
    mu = jnp.mean(x, axis=-1, keepdims=True)
    var = jnp.mean((x - mu) ** 2, axis=-1, keepdims=True)
    return (x - mu) * lax.rsqrt(var + EPS) * gamma + beta


def _mha(q_in, k_in, v_in, wq_t, wk_t, wv_t, bq, bk, bv, wo_t, bo):
    """nn.MultiheadAttention forward (eval mode), pre-transposed weights."""
    D = q_in.shape[-1]
    dh = D // N_HEADS
    scale = 1.0 / math.sqrt(dh)

    q = jnp.dot(q_in, wq_t, preferred_element_type=jnp.float32) + bq
    k = jnp.dot(k_in, wk_t, preferred_element_type=jnp.float32) + bk
    v = jnp.dot(v_in, wv_t, preferred_element_type=jnp.float32) + bv

    heads = []
    for h in range(N_HEADS):
        sl = slice(h * dh, (h + 1) * dh)
        qh = q[:, sl] * scale                               # (Lq, dh)
        kh = k[:, sl]                                       # (Lk, dh)
        vh = v[:, sl]                                       # (Lk, dh)
        s = jnp.einsum('qd,kd->qk', qh, kh,
                       preferred_element_type=jnp.float32)  # (Lq, Lk)
        m = jnp.max(s, axis=-1, keepdims=True)
        e = jnp.exp(s - m)
        p = e / jnp.sum(e, axis=-1, keepdims=True)          # attn-dropout = identity
        heads.append(jnp.dot(p, vh, preferred_element_type=jnp.float32))
    o = jnp.concatenate(heads, axis=-1)                     # (Lq, D)
    return jnp.dot(o, wo_t, preferred_element_type=jnp.float32) + bo


# ---------------- fused encoder-layer kernel ---------------------------------
def _fused_layer_kernel(query_ref, qpos_ref, refq_ref, rpos_ref,
                        sa_wq_ref, sa_wk_ref, sa_wv_ref,
                        sa_bq_ref, sa_bk_ref, sa_bv_ref,
                        sa_wo_ref, sa_bo_ref, n2g_ref, n2b_ref,
                        ca_wq_ref, ca_wk_ref, ca_wv_ref,
                        ca_bq_ref, ca_bk_ref, ca_bv_ref,
                        ca_wo_ref, ca_bo_ref, n1g_ref, n1b_ref,
                        w1_ref, b1_ref, w2_ref, b2_ref, n3g_ref, n3b_ref,
                        out_ref):
    query = query_ref[0]      # (LQ, D)
    qpos = qpos_ref[0]        # (LQ, D)
    refq = refq_ref[0]        # (LR, D)
    rpos = rpos_ref[0]        # (LR, D)

    # ---- self-attention + residual + norm2 (dropout2 = identity) ----
    x = query + qpos          # q = k
    t2 = _mha(x, x, query,
              sa_wq_ref[...], sa_wk_ref[...], sa_wv_ref[...],
              sa_bq_ref[...], sa_bk_ref[...], sa_bv_ref[...],
              sa_wo_ref[...], sa_bo_ref[...])
    tgt = _layer_norm(query + t2, n2g_ref[...], n2b_ref[...])

    # ---- cross-attention + residual + norm1 (dropout1 = identity) ----
    t2 = _mha(tgt + qpos, refq + rpos, refq,
              ca_wq_ref[...], ca_wk_ref[...], ca_wv_ref[...],
              ca_bq_ref[...], ca_bk_ref[...], ca_bv_ref[...],
              ca_wo_ref[...], ca_bo_ref[...])
    tgt = _layer_norm(tgt + t2, n1g_ref[...], n1b_ref[...])

    # ---- FFN + residual + norm3 (dropout3/4 = identity) ----
    h = jnp.dot(tgt, w1_ref[...], preferred_element_type=jnp.float32) + b1_ref[...]
    h = jnp.maximum(h, 0.0)   # relu
    y = jnp.dot(h, w2_ref[...], preferred_element_type=jnp.float32) + b2_ref[...]
    out_ref[0] = _layer_norm(tgt + y, n3g_ref[...], n3b_ref[...])


# ---------------- pallas_call wrapper ----------------------------------------
def _bspec(L):
    return pl.BlockSpec((1, L, D_MODEL), lambda n: (n, 0, 0))


def _wspec(a):
    return pl.BlockSpec(a.shape, lambda n, _nd=a.ndim: (0,) * _nd)


def encoder_layer_forward(query, ref_query, query_pos, ref_query_pos, p):
    tensor_args = (query, query_pos, ref_query, ref_query_pos)
    weight_args = (
        p["sa_wq_t"], p["sa_wk_t"], p["sa_wv_t"],
        p["sa_bq"], p["sa_bk"], p["sa_bv"],
        p["sa_wo_t"], p["sa_bo"], p["norm2_g"], p["norm2_b"],
        p["ca_wq_t"], p["ca_wk_t"], p["ca_wv_t"],
        p["ca_bq"], p["ca_bk"], p["ca_bv"],
        p["ca_wo_t"], p["ca_bo"], p["norm1_g"], p["norm1_b"],
        p["ffn_w1_t"], p["ffn_b1"], p["ffn_w2_t"], p["ffn_b2"],
        p["norm3_g"], p["norm3_b"],
    )
    in_specs = [_bspec(LQ), _bspec(LQ), _bspec(LR), _bspec(LR)] + \
               [_wspec(a) for a in weight_args]

    d = D_MODEL
    def attn_flops(lq, lk):
        return 2 * d * d * (2 * lq + 2 * lk) + 4 * lq * lk * d
    flops = N * (attn_flops(LQ, LQ) + attn_flops(LQ, LR) + 4 * LQ * d * D_FFN)
    transcendentals = N * N_HEADS * (LQ * LQ + LQ * LR)
    bytes_accessed = sum(int(a.size) * 4 for a in tensor_args + weight_args) \
        + N * LQ * d * 4
    cost = pl.CostEstimate(flops=flops, transcendentals=transcendentals,
                           bytes_accessed=bytes_accessed)

    return pl.pallas_call(
        _fused_layer_kernel,
        out_shape=jax.ShapeDtypeStruct((N, LQ, D_MODEL), jnp.float32),
        grid=(N,),
        in_specs=in_specs,
        out_specs=_bspec(LQ),
        compiler_params=pltpu.CompilerParams(dimension_semantics=("parallel",)),
        cost_estimate=cost,
    )(*tensor_args, *weight_args)


# ---------------- deterministic parameter construction -----------------------
def make_torch_style_params(key):
    """Parameters laid out exactly like the PyTorch module ((out, in) weights)."""
    def nrm(k, shape, scale=0.1):
        return scale * jax.random.normal(k, shape, jnp.float32)

    ks = jax.random.split(key, 12)
    D, F = D_MODEL, D_FFN
    return {
        "sa_in_w": nrm(ks[0], (3 * D, D)), "sa_in_b": nrm(ks[1], (3 * D,), 0.02),
        "sa_out_w": nrm(ks[2], (D, D)),    "sa_out_b": nrm(ks[3], (D,), 0.02),
        "norm2_w": jnp.ones((D,), jnp.float32), "norm2_b": jnp.zeros((D,), jnp.float32),
        "ca_in_w": nrm(ks[4], (3 * D, D)), "ca_in_b": nrm(ks[5], (3 * D,), 0.02),
        "ca_out_w": nrm(ks[6], (D, D)),    "ca_out_b": nrm(ks[7], (D,), 0.02),
        "norm1_w": jnp.ones((D,), jnp.float32), "norm1_b": jnp.zeros((D,), jnp.float32),
        "lin1_w": nrm(ks[8], (F, D)),  "lin1_b": nrm(ks[9], (F,), 0.02),
        "lin2_w": nrm(ks[10], (D, F)), "lin2_b": nrm(ks[11], (D,), 0.02),
        "norm3_w": jnp.ones((D,), jnp.float32), "norm3_b": jnp.zeros((D,), jnp.float32),
    }


def prepare_params(tp):
    """Pre-transpose weights + split QKV biases host-side (kernel-ready layout)."""
    D = D_MODEL
    r = lambda v: v.reshape(1, -1)
    out = {}
    for pre, inw, inb, ow, ob in (("sa", "sa_in_w", "sa_in_b", "sa_out_w", "sa_out_b"),
                                  ("ca", "ca_in_w", "ca_in_b", "ca_out_w", "ca_out_b")):
        w, b = tp[inw], tp[inb]
        out[f"{pre}_wq_t"] = w[:D].T
        out[f"{pre}_wk_t"] = w[D:2 * D].T
        out[f"{pre}_wv_t"] = w[2 * D:].T
        out[f"{pre}_bq"] = r(b[:D])
        out[f"{pre}_bk"] = r(b[D:2 * D])
        out[f"{pre}_bv"] = r(b[2 * D:])
        out[f"{pre}_wo_t"] = tp[ow].T
        out[f"{pre}_bo"] = r(tp[ob])
    out["norm1_g"] = r(tp["norm1_w"]); out["norm1_b"] = r(tp["norm1_b"])
    out["norm2_g"] = r(tp["norm2_w"]); out["norm2_b"] = r(tp["norm2_b"])
    out["norm3_g"] = r(tp["norm3_w"]); out["norm3_b"] = r(tp["norm3_b"])
    out["ffn_w1_t"] = tp["lin1_w"].T;  out["ffn_b1"] = r(tp["lin1_b"])
    out["ffn_w2_t"] = tp["lin2_w"].T;  out["ffn_b2"] = r(tp["lin2_b"])
    return out


# ---------------- pure-JAX reference (sanity check of the kernel) ------------
def _ref_mha(q_in, k_in, v_in, w_in, b_in, w_out, b_out):
    D = q_in.shape[-1]
    dh = D // N_HEADS
    q = q_in @ w_in[:D].T + b_in[:D]
    k = k_in @ w_in[D:2 * D].T + b_in[D:2 * D]
    v = v_in @ w_in[2 * D:].T + b_in[2 * D:]
    qh = q.reshape(-1, N_HEADS, dh).transpose(1, 0, 2)
    kh = k.reshape(-1, N_HEADS, dh).transpose(1, 0, 2)
    vh = v.reshape(-1, N_HEADS, dh).transpose(1, 0, 2)
    s = jnp.einsum('hqd,hkd->hqk', qh, kh) / math.sqrt(dh)
    p = jax.nn.softmax(s, axis=-1)
    o = jnp.einsum('hqk,hkd->hqd', p, vh).transpose(1, 0, 2).reshape(-1, D)
    return o @ w_out.T + b_out


def reference_forward(query, ref_query, query_pos, ref_query_pos, tp):
    def ln(x, g, b):
        mu = x.mean(-1, keepdims=True)
        var = ((x - mu) ** 2).mean(-1, keepdims=True)
        return (x - mu) / jnp.sqrt(var + EPS) * g + b

    outs = []
    for b in range(N):
        qry, rq = query[b], ref_query[b]
        qp, rp = query_pos[b], ref_query_pos[b]
        x = qry + qp
        t2 = _ref_mha(x, x, qry, tp["sa_in_w"], tp["sa_in_b"],
                      tp["sa_out_w"], tp["sa_out_b"])
        tgt = ln(qry + t2, tp["norm2_w"], tp["norm2_b"])
        t2 = _ref_mha(tgt + qp, rq + rp, rq, tp["ca_in_w"], tp["ca_in_b"],
                      tp["ca_out_w"], tp["ca_out_b"])
        tgt = ln(tgt + t2, tp["norm1_w"], tp["norm1_b"])
        h = jnp.maximum(tgt @ tp["lin1_w"].T + tp["lin1_b"], 0.0)
        y = h @ tp["lin2_w"].T + tp["lin2_b"]
        outs.append(ln(tgt + y, tp["norm3_w"], tp["norm3_b"]))
    return jnp.stack(outs)


if __name__ == "__main__":
    root = jax.random.PRNGKey(0)
    k_p, k_q, k_r, k_qp, k_rp = jax.random.split(root, 5)

    torch_params = make_torch_style_params(k_p)
    params = prepare_params(torch_params)

    query = 0.5 * jax.random.normal(k_q, (N, LQ, D_MODEL), jnp.float32)
    ref_query = 0.5 * jax.random.normal(k_r, (N, LR, D_MODEL), jnp.float32)
    query_pos = 0.5 * jax.random.normal(k_qp, (N, LQ, D_MODEL), jnp.float32)
    ref_query_pos = 0.5 * jax.random.normal(k_rp, (N, LR, D_MODEL), jnp.float32)

    out = encoder_layer_forward(query, ref_query, query_pos, ref_query_pos, params)
    out = jax.block_until_ready(out)

    ref = jax.block_until_ready(
        reference_forward(query, ref_query, query_pos, ref_query_pos, torch_params))

    assert out.shape == (N, LQ, D_MODEL)
    assert bool(jnp.all(jnp.isfinite(out)))
    max_err = float(jnp.max(jnp.abs(out - ref)))
    assert max_err < 5e-2, f"kernel/reference mismatch: {max_err}"
    print("KERNEL_OK")
</pallas_src>

<mosaic_0001>
module attributes {stable_mosaic.version = 11 : i64} {
  func.func @_fused_layer_kernel(%arg0: i32, %arg1: memref<1x16x32xf32, #tpu.memory_space<vmem>>, %arg2: memref<1x16x32xf32, #tpu.memory_space<vmem>>, %arg3: memref<1x24x32xf32, #tpu.memory_space<vmem>>, %arg4: memref<1x24x32xf32, #tpu.memory_space<vmem>>, %arg5: memref<32x32xf32, #tpu.memory_space<vmem>>, %arg6: memref<32x32xf32, #tpu.memory_space<vmem>>, %arg7: memref<32x32xf32, #tpu.memory_space<vmem>>, %arg8: memref<1x32xf32, #tpu.memory_space<vmem>>, %arg9: memref<1x32xf32, #tpu.memory_space<vmem>>, %arg10: memref<1x32xf32, #tpu.memory_space<vmem>>, %arg11: memref<32x32xf32, #tpu.memory_space<vmem>>, %arg12: memref<1x32xf32, #tpu.memory_space<vmem>>, %arg13: memref<1x32xf32, #tpu.memory_space<vmem>>, %arg14: memref<1x32xf32, #tpu.memory_space<vmem>>, %arg15: memref<32x32xf32, #tpu.memory_space<vmem>>, %arg16: memref<32x32xf32, #tpu.memory_space<vmem>>, %arg17: memref<32x32xf32, #tpu.memory_space<vmem>>, %arg18: memref<1x32xf32, #tpu.memory_space<vmem>>, %arg19: memref<1x32xf32, #tpu.memory_space<vmem>>, %arg20: memref<1x32xf32, #tpu.memory_space<vmem>>, %arg21: memref<32x32xf32, #tpu.memory_space<vmem>>, %arg22: memref<1x32xf32, #tpu.memory_space<vmem>>, %arg23: memref<1x32xf32, #tpu.memory_space<vmem>>, %arg24: memref<1x32xf32, #tpu.memory_space<vmem>>, %arg25: memref<32x64xf32, #tpu.memory_space<vmem>>, %arg26: memref<1x64xf32, #tpu.memory_space<vmem>>, %arg27: memref<64x32xf32, #tpu.memory_space<vmem>>, %arg28: memref<1x32xf32, #tpu.memory_space<vmem>>, %arg29: memref<1x32xf32, #tpu.memory_space<vmem>>, %arg30: memref<1x32xf32, #tpu.memory_space<vmem>>, %arg31: memref<1x16x32xf32, #tpu.memory_space<vmem>>) attributes {dimension_semantics = [#tpu.dimension_semantics<parallel>], iteration_bounds = array<i64: 2>, scalar_prefetch = 0 : i64, scratch_operands = 0 : i64, tpu.core_type = #tpu.core_type<tc>, window_params = [{transform_indices = @transform_0, window_bounds = array<i64: 1, 16, 32>}, {transform_indices = @transform_1, window_bounds = array<i64: 1, 16, 32>}, {transform_indices = @transform_2, window_bounds = array<i64: 1, 24, 32>}, {transform_indices = @transform_3, window_bounds = array<i64: 1, 24, 32>}, {pipeline_mode = #tpu.pipeline_mode<synchronous>, transform_indices = @transform_4, window_bounds = array<i64: 32, 32>}, {pipeline_mode = #tpu.pipeline_mode<synchronous>, transform_indices = @transform_5, window_bounds = array<i64: 32, 32>}, {pipeline_mode = #tpu.pipeline_mode<synchronous>, transform_indices = @transform_6, window_bounds = array<i64: 32, 32>}, {pipeline_mode = #tpu.pipeline_mode<synchronous>, transform_indices = @transform_7, window_bounds = array<i64: 1, 32>}, {pipeline_mode = #tpu.pipeline_mode<synchronous>, transform_indices = @transform_8, window_bounds = array<i64: 1, 32>}, {pipeline_mode = #tpu.pipeline_mode<synchronous>, transform_indices = @transform_9, window_bounds = array<i64: 1, 32>}, {pipeline_mode = #tpu.pipeline_mode<synchronous>, transform_indices = @transform_10, window_bounds = array<i64: 32, 32>}, {pipeline_mode = #tpu.pipeline_mode<synchronous>, transform_indices = @transform_11, window_bounds = array<i64: 1, 32>}, {pipeline_mode = #tpu.pipeline_mode<synchronous>, transform_indices = @transform_12, window_bounds = array<i64: 1, 32>}, {pipeline_mode = #tpu.pipeline_mode<synchronous>, transform_indices = @transform_13, window_bounds = array<i64: 1, 32>}, {pipeline_mode = #tpu.pipeline_mode<synchronous>, transform_indices = @transform_14, window_bounds = array<i64: 32, 32>}, {pipeline_mode = #tpu.pipeline_mode<synchronous>, transform_indices = @transform_15, window_bounds = array<i64: 32, 32>}, {pipeline_mode = #tpu.pipeline_mode<synchronous>, transform_indices = @transform_16, window_bounds = array<i64: 32, 32>}, {pipeline_mode = #tpu.pipeline_mode<synchronous>, transform_indices = @transform_17, window_bounds = array<i64: 1, 32>}, {pipeline_mode = #tpu.pipeline_mode<synchronous>, transform_indices = @transform_18, window_bounds = array<i64: 1, 32>}, {pipeline_mode = #tpu.pipeline_mode<synchronous>, transform_indices = @transform_19, window_bounds = array<i64: 1, 32>}, {pipeline_mode = #tpu.pipeline_mode<synchronous>, transform_indices = @transform_20, window_bounds = array<i64: 32, 32>}, {pipeline_mode = #tpu.pipeline_mode<synchronous>, transform_indices = @transform_21, window_bounds = array<i64: 1, 32>}, {pipeline_mode = #tpu.pipeline_mode<synchronous>, transform_indices = @transform_22, window_bounds = array<i64: 1, 32>}, {pipeline_mode = #tpu.pipeline_mode<synchronous>, transform_indices = @transform_23, window_bounds = array<i64: 1, 32>}, {pipeline_mode = #tpu.pipeline_mode<synchronous>, transform_indices = @transform_24, window_bounds = array<i64: 32, 64>}, {pipeline_mode = #tpu.pipeline_mode<synchronous>, transform_indices = @transform_25, window_bounds = array<i64: 1, 64>}, {pipeline_mode = #tpu.pipeline_mode<synchronous>, transform_indices = @transform_26, window_bounds = array<i64: 64, 32>}, {pipeline_mode = #tpu.pipeline_mode<synchronous>, transform_indices = @transform_27, window_bounds = array<i64: 1, 32>}, {pipeline_mode = #tpu.pipeline_mode<synchronous>, transform_indices = @transform_28, window_bounds = array<i64: 1, 32>}, {pipeline_mode = #tpu.pipeline_mode<synchronous>, transform_indices = @transform_29, window_bounds = array<i64: 1, 32>}, {transform_indices = @transform_30, window_bounds = array<i64: 1, 16, 32>}]} {
    %c0 = arith.constant 0 : index
    %c0_0 = arith.constant 0 : index
    %c0_1 = arith.constant 0 : index
    %0 = vector.load %arg1[%c0, %c0_0, %c0_1] : memref<1x16x32xf32, #tpu.memory_space<vmem>>, vector<1x16x32xf32>
    %1 = vector.shape_cast %0 : vector<1x16x32xf32> to vector<16x32xf32>
    %c0_2 = arith.constant 0 : index
    %c0_3 = arith.constant 0 : index
    %c0_4 = arith.constant 0 : index
    %2 = vector.load %arg2[%c0_2, %c0_3, %c0_4] : memref<1x16x32xf32, #tpu.memory_space<vmem>>, vector<1x16x32xf32>
    %3 = vector.shape_cast %2 : vector<1x16x32xf32> to vector<16x32xf32>
    %c0_5 = arith.constant 0 : index
    %c0_6 = arith.constant 0 : index
    %c0_7 = arith.constant 0 : index
    %4 = vector.load %arg3[%c0_5, %c0_6, %c0_7] : memref<1x24x32xf32, #tpu.memory_space<vmem>>, vector<1x24x32xf32>
    %5 = vector.shape_cast %4 : vector<1x24x32xf32> to vector<24x32xf32>
    %c0_8 = arith.constant 0 : index
    %c0_9 = arith.constant 0 : index
    %c0_10 = arith.constant 0 : index
    %6 = vector.load %arg4[%c0_8, %c0_9, %c0_10] : memref<1x24x32xf32, #tpu.memory_space<vmem>>, vector<1x24x32xf32>
    %7 = vector.shape_cast %6 : vector<1x24x32xf32> to vector<24x32xf32>
    %8 = arith.addf %1, %3 : vector<16x32xf32>
    %c0_11 = arith.constant 0 : index
    %c0_12 = arith.constant 0 : index
    %9 = vector.load %arg5[%c0_11, %c0_12] : memref<32x32xf32, #tpu.memory_space<vmem>>, vector<32x32xf32>
    %c0_13 = arith.constant 0 : index
    %c0_14 = arith.constant 0 : index
    %10 = vector.load %arg6[%c0_13, %c0_14] : memref<32x32xf32, #tpu.memory_space<vmem>>, vector<32x32xf32>
    %c0_15 = arith.constant 0 : index
    %c0_16 = arith.constant 0 : index
    %11 = vector.load %arg7[%c0_15, %c0_16] : memref<32x32xf32, #tpu.memory_space<vmem>>, vector<32x32xf32>
    %c0_17 = arith.constant 0 : index
    %c0_18 = arith.constant 0 : index
    %12 = vector.load %arg8[%c0_17, %c0_18] : memref<1x32xf32, #tpu.memory_space<vmem>>, vector<1x32xf32>
    %c0_19 = arith.constant 0 : index
    %c0_20 = arith.constant 0 : index
    %13 = vector.load %arg9[%c0_19, %c0_20] : memref<1x32xf32, #tpu.memory_space<vmem>>, vector<1x32xf32>
    %c0_21 = arith.constant 0 : index
    %c0_22 = arith.constant 0 : index
    %14 = vector.load %arg10[%c0_21, %c0_22] : memref<1x32xf32, #tpu.memory_space<vmem>>, vector<1x32xf32>
    %c0_23 = arith.constant 0 : index
    %c0_24 = arith.constant 0 : index
    %15 = vector.load %arg11[%c0_23, %c0_24] : memref<32x32xf32, #tpu.memory_space<vmem>>, vector<32x32xf32>
    %c0_25 = arith.constant 0 : index
    %c0_26 = arith.constant 0 : index
    %16 = vector.load %arg12[%c0_25, %c0_26] : memref<1x32xf32, #tpu.memory_space<vmem>>, vector<1x32xf32>
    %cst = arith.constant dense<0.000000e+00> : vector<16x32xf32>
    %17 = tpu.matmul %8, %9, %cst {dimension_numbers = #tpu.dot_dimension_numbers<[1], [0], [0], [1], [0, 0, 1, 1], [], []>} : vector<16x32xf32>, vector<32x32xf32>, vector<16x32xf32> -> vector<16x32xf32>
    %18 = vector.broadcast %12 : vector<1x32xf32> to vector<16x32xf32>
    %19 = arith.addf %17, %18 : vector<16x32xf32>
    %cst_27 = arith.constant dense<0.000000e+00> : vector<16x32xf32>
    %20 = tpu.matmul %8, %10, %cst_27 {dimension_numbers = #tpu.dot_dimension_numbers<[1], [0], [0], [1], [0, 0, 1, 1], [], []>} : vector<16x32xf32>, vector<32x32xf32>, vector<16x32xf32> -> vector<16x32xf32>
    %21 = vector.broadcast %13 : vector<1x32xf32> to vector<16x32xf32>
    %22 = arith.addf %20, %21 : vector<16x32xf32>
    %cst_28 = arith.constant dense<0.000000e+00> : vector<16x32xf32>
    %23 = tpu.matmul %1, %11, %cst_28 {dimension_numbers = #tpu.dot_dimension_numbers<[1], [0], [0], [1], [0, 0, 1, 1], [], []>} : vector<16x32xf32>, vector<32x32xf32>, vector<16x32xf32> -> vector<16x32xf32>
    %24 = vector.broadcast %14 : vector<1x32xf32> to vector<16x32xf32>
    %25 = arith.addf %23, %24 : vector<16x32xf32>
    %26 = vector.extract_strided_slice %19 {offsets = [0, 0], sizes = [16, 4], strides = [1, 1]} : vector<16x32xf32> to vector<16x4xf32>
    %cst_29 = arith.constant 5.000000e-01 : f32
    %27 = vector.broadcast %cst_29 : f32 to vector<16x4xf32>
    %28 = arith.mulf %26, %27 : vector<16x4xf32>
    %29 = vector.extract_strided_slice %22 {offsets = [0, 0], sizes = [16, 4], strides = [1, 1]} : vector<16x32xf32> to vector<16x4xf32>
    %30 = vector.extract_strided_slice %25 {offsets = [0, 0], sizes = [16, 4], strides = [1, 1]} : vector<16x32xf32> to vector<16x4xf32>
    "tpu.trace_start"() <{level = 10 : i32, message = "qd,kd->qk"}> : () -> ()
    %cst_30 = arith.constant dense<0.000000e+00> : vector<16x16xf32>
    %31 = tpu.matmul %28, %29, %cst_30 {dimension_numbers = #tpu.dot_dimension_numbers<[1], [1], [0], [0], [0, 0, 1, 0], [], []>} : vector<16x4xf32>, vector<16x4xf32>, vector<16x16xf32> -> vector<16x16xf32>
    "tpu.trace_stop"() : () -> ()
    %cst_31 = arith.constant dense<0xFF800000> : vector<16xf32>
    %32 = vector.multi_reduction <maximumf>, %31, %cst_31 [1] : vector<16x16xf32> to vector<16xf32>
    %33 = vector.shape_cast %32 : vector<16xf32> to vector<16x1xf32>
    %34 = vector.broadcast %33 : vector<16x1xf32> to vector<16x16xf32>
    %35 = arith.subf %31, %34 : vector<16x16xf32>
    %36 = math.exp %35 : vector<16x16xf32>
    %cst_32 = arith.constant dense<0.000000e+00> : vector<16xf32>
    %37 = vector.multi_reduction <add>, %36, %cst_32 [1] : vector<16x16xf32> to vector<16xf32>
    %38 = vector.shape_cast %37 : vector<16xf32> to vector<16x1xf32>
    %39 = vector.broadcast %38 : vector<16x1xf32> to vector<16x16xf32>
    %40 = arith.divf %36, %39 : vector<16x16xf32>
    %cst_33 = arith.constant dense<0.000000e+00> : vector<16x4xf32>
    %41 = tpu.matmul %40, %30, %cst_33 {dimension_numbers = #tpu.dot_dimension_numbers<[1], [0], [0], [1], [0, 0, 1, 1], [], []>} : vector<16x16xf32>, vector<16x4xf32>, vector<16x4xf32> -> vector<16x4xf32>
    %42 = vector.extract_strided_slice %19 {offsets = [0, 4], sizes = [16, 4], strides = [1, 1]} : vector<16x32xf32> to vector<16x4xf32>
    %cst_34 = arith.constant 5.000000e-01 : f32
    %43 = vector.broadcast %cst_34 : f32 to vector<16x4xf32>
    %44 = arith.mulf %42, %43 : vector<16x4xf32>
    %45 = vector.extract_strided_slice %22 {offsets = [0, 4], sizes = [16, 4], strides = [1, 1]} : vector<16x32xf32> to vector<16x4xf32>
    %46 = vector.extract_strided_slice %25 {offsets = [0, 4], sizes = [16, 4], strides = [1, 1]} : vector<16x32xf32> to vector<16x4xf32>
    "tpu.trace_start"() <{level = 10 : i32, message = "qd,kd->qk"}> : () -> ()
    %cst_35 = arith.constant dense<0.000000e+00> : vector<16x16xf32>
    %47 = tpu.matmul %44, %45, %cst_35 {dimension_numbers = #tpu.dot_dimension_numbers<[1], [1], [0], [0], [0, 0, 1, 0], [], []>} : vector<16x4xf32>, vector<16x4xf32>, vector<16x16xf32> -> vector<16x16xf32>
    "tpu.trace_stop"() : () -> ()
    %cst_36 = arith.constant dense<0xFF800000> : vector<16xf32>
    %48 = vector.multi_reduction <maximumf>, %47, %cst_36 [1] : vector<16x16xf32> to vector<16xf32>
    %49 = vector.shape_cast %48 : vector<16xf32> to vector<16x1xf32>
    %50 = vector.broadcast %49 : vector<16x1xf32> to vector<16x16xf32>
    %51 = arith.subf %47, %50 : vector<16x16xf32>
    %52 = math.exp %51 : vector<16x16xf32>
    %cst_37 = arith.constant dense<0.000000e+00> : vector<16xf32>
    %53 = vector.multi_reduction <add>, %52, %cst_37 [1] : vector<16x16xf32> to vector<16xf32>
    %54 = vector.shape_cast %53 : vector<16xf32> to vector<16x1xf32>
    %55 = vector.broadcast %54 : vector<16x1xf32> to vector<16x16xf32>
    %56 = arith.divf %52, %55 : vector<16x16xf32>
    %cst_38 = arith.constant dense<0.000000e+00> : vector<16x4xf32>
    %57 = tpu.matmul %56, %46, %cst_38 {dimension_numbers = #tpu.dot_dimension_numbers<[1], [0], [0], [1], [0, 0, 1, 1], [], []>} : vector<16x16xf32>, vector<16x4xf32>, vector<16x4xf32> -> vector<16x4xf32>
    %58 = vector.extract_strided_slice %19 {offsets = [0, 8], sizes = [16, 4], strides = [1, 1]} : vector<16x32xf32> to vector<16x4xf32>
    %cst_39 = arith.constant 5.000000e-01 : f32
    %59 = vector.broadcast %cst_39 : f32 to vector<16x4xf32>
    %60 = arith.mulf %58, %59 : vector<16x4xf32>
    %61 = vector.extract_strided_slice %22 {offsets = [0, 8], sizes = [16, 4], strides = [1, 1]} : vector<16x32xf32> to vector<16x4xf32>
    %62 = vector.extract_strided_slice %25 {offsets = [0, 8], sizes = [16, 4], strides = [1, 1]} : vector<16x32xf32> to vector<16x4xf32>
    "tpu.trace_start"() <{level = 10 : i32, message = "qd,kd->qk"}> : () -> ()
    %cst_40 = arith.constant dense<0.000000e+00> : vector<16x16xf32>
    %63 = tpu.matmul %60, %61, %cst_40 {dimension_numbers = #tpu.dot_dimension_numbers<[1], [1], [0], [0], [0, 0, 1, 0], [], []>} : vector<16x4xf32>, vector<16x4xf32>, vector<16x16xf32> -> vector<16x16xf32>
    "tpu.trace_stop"() : () -> ()
    %cst_41 = arith.constant dense<0xFF800000> : vector<16xf32>
    %64 = vector.multi_reduction <maximumf>, %63, %cst_41 [1] : vector<16x16xf32> to vector<16xf32>
    %65 = vector.shape_cast %64 : vector<16xf32> to vector<16x1xf32>
    %66 = vector.broadcast %65 : vector<16x1xf32> to vector<16x16xf32>
    %67 = arith.subf %63, %66 : vector<16x16xf32>
    %68 = math.exp %67 : vector<16x16xf32>
    %cst_42 = arith.constant dense<0.000000e+00> : vector<16xf32>
    %69 = vector.multi_reduction <add>, %68, %cst_42 [1] : vector<16x16xf32> to vector<16xf32>
    %70 = vector.shape_cast %69 : vector<16xf32> to vector<16x1xf32>
    %71 = vector.broadcast %70 : vector<16x1xf32> to vector<16x16xf32>
    %72 = arith.divf %68, %71 : vector<16x16xf32>
    %cst_43 = arith.constant dense<0.000000e+00> : vector<16x4xf32>
    %73 = tpu.matmul %72, %62, %cst_43 {dimension_numbers = #tpu.dot_dimension_numbers<[1], [0], [0], [1], [0, 0, 1, 1], [], []>} : vector<16x16xf32>, vector<16x4xf32>, vector<16x4xf32> -> vector<16x4xf32>
    %74 = vector.extract_strided_slice %19 {offsets = [0, 12], sizes = [16, 4], strides = [1, 1]} : vector<16x32xf32> to vector<16x4xf32>
    %cst_44 = arith.constant 5.000000e-01 : f32
    %75 = vector.broadcast %cst_44 : f32 to vector<16x4xf32>
    %76 = arith.mulf %74, %75 : vector<16x4xf32>
    %77 = vector.extract_strided_slice %22 {offsets = [0, 12], sizes = [16, 4], strides = [1, 1]} : vector<16x32xf32> to vector<16x4xf32>
    %78 = vector.extract_strided_slice %25 {offsets = [0, 12], sizes = [16, 4], strides = [1, 1]} : vector<16x32xf32> to vector<16x4xf32>
    "tpu.trace_start"() <{level = 10 : i32, message = "qd,kd->qk"}> : () -> ()
    %cst_45 = arith.constant dense<0.000000e+00> : vector<16x16xf32>
    %79 = tpu.matmul %76, %77, %cst_45 {dimension_numbers = #tpu.dot_dimension_numbers<[1], [1], [0], [0], [0, 0, 1, 0], [], []>} : vector<16x4xf32>, vector<16x4xf32>, vector<16x16xf32> -> vector<16x16xf32>
    "tpu.trace_stop"() : () -> ()
    %cst_46 = arith.constant dense<0xFF800000> : vector<16xf32>
    %80 = vector.multi_reduction <maximumf>, %79, %cst_46 [1] : vector<16x16xf32> to vector<16xf32>
    %81 = vector.shape_cast %80 : vector<16xf32> to vector<16x1xf32>
    %82 = vector.broadcast %81 : vector<16x1xf32> to vector<16x16xf32>
    %83 = arith.subf %79, %82 : vector<16x16xf32>
    %84 = math.exp %83 : vector<16x16xf32>
    %cst_47 = arith.constant dense<0.000000e+00> : vector<16xf32>
    %85 = vector.multi_reduction <add>, %84, %cst_47 [1] : vector<16x16xf32> to vector<16xf32>
    %86 = vector.shape_cast %85 : vector<16xf32> to vector<16x1xf32>
    %87 = vector.broadcast %86 : vector<16x1xf32> to vector<16x16xf32>
    %88 = arith.divf %84, %87 : vector<16x16xf32>
    %cst_48 = arith.constant dense<0.000000e+00> : vector<16x4xf32>
    %89 = tpu.matmul %88, %78, %cst_48 {dimension_numbers = #tpu.dot_dimension_numbers<[1], [0], [0], [1], [0, 0, 1, 1], [], []>} : vector<16x16xf32>, vector<16x4xf32>, vector<16x4xf32> -> vector<16x4xf32>
    %90 = vector.extract_strided_slice %19 {offsets = [0, 16], sizes = [16, 4], strides = [1, 1]} : vector<16x32xf32> to vector<16x4xf32>
    %cst_49 = arith.constant 5.000000e-01 : f32
    %91 = vector.broadcast %cst_49 : f32 to vector<16x4xf32>
    %92 = arith.mulf %90, %91 : vector<16x4xf32>
    %93 = vector.extract_strided_slice %22 {offsets = [0, 16], sizes = [16, 4], strides = [1, 1]} : vector<16x32xf32> to vector<16x4xf32>
    %94 = vector.extract_strided_slice %25 {offsets = [0, 16], sizes = [16, 4], strides = [1, 1]} : vector<16x32xf32> to vector<16x4xf32>
    "tpu.trace_start"() <{level = 10 : i32, message = "qd,kd->qk"}> : () -> ()
    %cst_50 = arith.constant dense<0.000000e+00> : vector<16x16xf32>
    %95 = tpu.matmul %92, %93, %cst_50 {dimension_numbers = #tpu.dot_dimension_numbers<[1], [1], [0], [0], [0, 0, 1, 0], [], []>} : vector<16x4xf32>, vector<16x4xf32>, vector<16x16xf32> -> vector<16x16xf32>
    "tpu.trace_stop"() : () -> ()
    %cst_51 = arith.constant dense<0xFF800000> : vector<16xf32>
    %96 = vector.multi_reduction <maximumf>, %95, %cst_51 [1] : vector<16x16xf32> to vector<16xf32>
    %97 = vector.shape_cast %96 : vector<16xf32> to vector<16x1xf32>
    %98 = vector.broadcast %97 : vector<16x1xf32> to vector<16x16xf32>
    %99 = arith.subf %95, %98 : vector<16x16xf32>
    %100 = math.exp %99 : vector<16x16xf32>
    %cst_52 = arith.constant dense<0.000000e+00> : vector<16xf32>
    %101 = vector.multi_reduction <add>, %100, %cst_52 [1] : vector<16x16xf32> to vector<16xf32>
    %102 = vector.shape_cast %101 : vector<16xf32> to vector<16x1xf32>
    %103 = vector.broadcast %102 : vector<16x1xf32> to vector<16x16xf32>
    %104 = arith.divf %100, %103 : vector<16x16xf32>
    %cst_53 = arith.constant dense<0.000000e+00> : vector<16x4xf32>
    %105 = tpu.matmul %104, %94, %cst_53 {dimension_numbers = #tpu.dot_dimension_numbers<[1], [0], [0], [1], [0, 0, 1, 1], [], []>} : vector<16x16xf32>, vector<16x4xf32>, vector<16x4xf32> -> vector<16x4xf32>
    %106 = vector.extract_strided_slice %19 {offsets = [0, 20], sizes = [16, 4], strides = [1, 1]} : vector<16x32xf32> to vector<16x4xf32>
    %cst_54 = arith.constant 5.000000e-01 : f32
    %107 = vector.broadcast %cst_54 : f32 to vector<16x4xf32>
    %108 = arith.mulf %106, %107 : vector<16x4xf32>
    %109 = vector.extract_strided_slice %22 {offsets = [0, 20], sizes = [16, 4], strides = [1, 1]} : vector<16x32xf32> to vector<16x4xf32>
    %110 = vector.extract_strided_slice %25 {offsets = [0, 20], sizes = [16, 4], strides = [1, 1]} : vector<16x32xf32> to vector<16x4xf32>
    "tpu.trace_start"() <{level = 10 : i32, message = "qd,kd->qk"}> : () -> ()
    %cst_55 = arith.constant dense<0.000000e+00> : vector<16x16xf32>
    %111 = tpu.matmul %108, %109, %cst_55 {dimension_numbers = #tpu.dot_dimension_numbers<[1], [1], [0], [0], [0, 0, 1, 0], [], []>} : vector<16x4xf32>, vector<16x4xf32>, vector<16x16xf32> -> vector<16x16xf32>
    "tpu.trace_stop"() : () -> ()
    %cst_56 = arith.constant dense<0xFF800000> : vector<16xf32>
    %112 = vector.multi_reduction <maximumf>, %111, %cst_56 [1] : vector<16x16xf32> to vector<16xf32>
    %113 = vector.shape_cast %112 : vector<16xf32> to vector<16x1xf32>
    %114 = vector.broadcast %113 : vector<16x1xf32> to vector<16x16xf32>
    %115 = arith.subf %111, %114 : vector<16x16xf32>
    %116 = math.exp %115 : vector<16x16xf32>
    %cst_57 = arith.constant dense<0.000000e+00> : vector<16xf32>
    %117 = vector.multi_reduction <add>, %116, %cst_57 [1] : vector<16x16xf32> to vector<16xf32>
    %118 = vector.shape_cast %117 : vector<16xf32> to vector<16x1xf32>
    %119 = vector.broadcast %118 : vector<16x1xf32> to vector<16x16xf32>
    %120 = arith.divf %116, %119 : vector<16x16xf32>
    %cst_58 = arith.constant dense<0.000000e+00> : vector<16x4xf32>
    %121 = tpu.matmul %120, %110, %cst_58 {dimension_numbers = #tpu.dot_dimension_numbers<[1], [0], [0], [1], [0, 0, 1, 1], [], []>} : vector<16x16xf32>, vector<16x4xf32>, vector<16x4xf32> -> vector<16x4xf32>
    %122 = vector.extract_strided_slice %19 {offsets = [0, 24], sizes = [16, 4], strides = [1, 1]} : vector<16x32xf32> to vector<16x4xf32>
    %cst_59 = arith.constant 5.000000e-01 : f32
    %123 = vector.broadcast %cst_59 : f32 to vector<16x4xf32>
    %124 = arith.mulf %122, %123 : vector<16x4xf32>
    %125 = vector.extract_strided_slice %22 {offsets = [0, 24], sizes = [16, 4], strides = [1, 1]} : vector<16x32xf32> to vector<16x4xf32>
    %126 = vector.extract_strided_slice %25 {offsets = [0, 24], sizes = [16, 4], strides = [1, 1]} : vector<16x32xf32> to vector<16x4xf32>
    "tpu.trace_start"() <{level = 10 : i32, message = "qd,kd->qk"}> : () -> ()
    %cst_60 = arith.constant dense<0.000000e+00> : vector<16x16xf32>
    %127 = tpu.matmul %124, %125, %cst_60 {dimension_numbers = #tpu.dot_dimension_numbers<[1], [1], [0], [0], [0, 0, 1, 0], [], []>} : vector<16x4xf32>, vector<16x4xf32>, vector<16x16xf32> -> vector<16x16xf32>
    "tpu.trace_stop"() : () -> ()
    %cst_61 = arith.constant dense<0xFF800000> : vector<16xf32>
    %128 = vector.multi_reduction <maximumf>, %127, %cst_61 [1] : vector<16x16xf32> to vector<16xf32>
    %129 = vector.shape_cast %128 : vector<16xf32> to vector<16x1xf32>
    %130 = vector.broadcast %129 : vector<16x1xf32> to vector<16x16xf32>
    %131 = arith.subf %127, %130 : vector<16x16xf32>
    %132 = math.exp %131 : vector<16x16xf32>
    %cst_62 = arith.constant dense<0.000000e+00> : vector<16xf32>
    %133 = vector.multi_reduction <add>, %132, %cst_62 [1] : vector<16x16xf32> to vector<16xf32>
    %134 = vector.shape_cast %133 : vector<16xf32> to vector<16x1xf32>
    %135 = vector.broadcast %134 : vector<16x1xf32> to vector<16x16xf32>
    %136 = arith.divf %132, %135 : vector<16x16xf32>
    %cst_63 = arith.constant dense<0.000000e+00> : vector<16x4xf32>
    %137 = tpu.matmul %136, %126, %cst_63 {dimension_numbers = #tpu.dot_dimension_numbers<[1], [0], [0], [1], [0, 0, 1, 1], [], []>} : vector<16x16xf32>, vector<16x4xf32>, vector<16x4xf32> -> vector<16x4xf32>
    %138 = vector.extract_strided_slice %19 {offsets = [0, 28], sizes = [16, 4], strides = [1, 1]} : vector<16x32xf32> to vector<16x4xf32>
    %cst_64 = arith.constant 5.000000e-01 : f32
    %139 = vector.broadcast %cst_64 : f32 to vector<16x4xf32>
    %140 = arith.mulf %138, %139 : vector<16x4xf32>
    %141 = vector.extract_strided_slice %22 {offsets = [0, 28], sizes = [16, 4], strides = [1, 1]} : vector<16x32xf32> to vector<16x4xf32>
    %142 = vector.extract_strided_slice %25 {offsets = [0, 28], sizes = [16, 4], strides = [1, 1]} : vector<16x32xf32> to vector<16x4xf32>
    "tpu.trace_start"() <{level = 10 : i32, message = "qd,kd->qk"}> : () -> ()
    %cst_65 = arith.constant dense<0.000000e+00> : vector<16x16xf32>
    %143 = tpu.matmul %140, %141, %cst_65 {dimension_numbers = #tpu.dot_dimension_numbers<[1], [1], [0], [0], [0, 0, 1, 0], [], []>} : vector<16x4xf32>, vector<16x4xf32>, vector<16x16xf32> -> vector<16x16xf32>
    "tpu.trace_stop"() : () -> ()
    %cst_66 = arith.constant dense<0xFF800000> : vector<16xf32>
    %144 = vector.multi_reduction <maximumf>, %143, %cst_66 [1] : vector<16x16xf32> to vector<16xf32>
    %145 = vector.shape_cast %144 : vector<16xf32> to vector<16x1xf32>
    %146 = vector.broadcast %145 : vector<16x1xf32> to vector<16x16xf32>
    %147 = arith.subf %143, %146 : vector<16x16xf32>
    %148 = math.exp %147 : vector<16x16xf32>
    %cst_67 = arith.constant dense<0.000000e+00> : vector<16xf32>
    %149 = vector.multi_reduction <add>, %148, %cst_67 [1] : vector<16x16xf32> to vector<16xf32>
    %150 = vector.shape_cast %149 : vector<16xf32> to vector<16x1xf32>
    %151 = vector.broadcast %150 : vector<16x1xf32> to vector<16x16xf32>
    %152 = arith.divf %148, %151 : vector<16x16xf32>
    %cst_68 = arith.constant dense<0.000000e+00> : vector<16x4xf32>
    %153 = tpu.matmul %152, %142, %cst_68 {dimension_numbers = #tpu.dot_dimension_numbers<[1], [0], [0], [1], [0, 0, 1, 1], [], []>} : vector<16x16xf32>, vector<16x4xf32>, vector<16x4xf32> -> vector<16x4xf32>
    %154 = tpu.concatenate %41, %57, %73, %89, %105, %121, %137, %153 in 1 : vector<16x4xf32>, vector<16x4xf32>, vector<16x4xf32>, vector<16x4xf32>, vector<16x4xf32>, vector<16x4xf32>, vector<16x4xf32>, vector<16x4xf32> -> vector<16x32xf32>
    %cst_69 = arith.constant dense<0.000000e+00> : vector<16x32xf32>
    %155 = tpu.matmul %154, %15, %cst_69 {dimension_numbers = #tpu.dot_dimension_numbers<[1], [0], [0], [1], [0, 0, 1, 1], [], []>} : vector<16x32xf32>, vector<32x32xf32>, vector<16x32xf32> -> vector<16x32xf32>
    %156 = vector.broadcast %16 : vector<1x32xf32> to vector<16x32xf32>
    %157 = arith.addf %155, %156 : vector<16x32xf32>
    %158 = arith.addf %1, %157 : vector<16x32xf32>
    %c0_70 = arith.constant 0 : index
    %c0_71 = arith.constant 0 : index
    %159 = vector.load %arg13[%c0_70, %c0_71] : memref<1x32xf32, #tpu.memory_space<vmem>>, vector<1x32xf32>
    %c0_72 = arith.constant 0 : index
    %c0_73 = arith.constant 0 : index
    %160 = vector.load %arg14[%c0_72, %c0_73] : memref<1x32xf32, #tpu.memory_space<vmem>>, vector<1x32xf32>
    %cst_74 = arith.constant dense<0.000000e+00> : vector<16xf32>
    %161 = vector.multi_reduction <add>, %158, %cst_74 [1] : vector<16x32xf32> to vector<16xf32>
    %162 = vector.shape_cast %161 : vector<16xf32> to vector<16x1xf32>
    %cst_75 = arith.constant 3.200000e+01 : f32
    %163 = vector.broadcast %cst_75 : f32 to vector<16x1xf32>
    %164 = arith.divf %162, %163 : vector<16x1xf32>
    %165 = vector.broadcast %164 : vector<16x1xf32> to vector<16x32xf32>
    %166 = arith.subf %158, %165 : vector<16x32xf32>
    %167 = arith.mulf %166, %166 : vector<16x32xf32>
    %cst_76 = arith.constant dense<0.000000e+00> : vector<16xf32>
    %168 = vector.multi_reduction <add>, %167, %cst_76 [1] : vector<16x32xf32> to vector<16xf32>
    %169 = vector.shape_cast %168 : vector<16xf32> to vector<16x1xf32>
    %cst_77 = arith.constant 3.200000e+01 : f32
    %170 = vector.broadcast %cst_77 : f32 to vector<16x1xf32>
    %171 = arith.divf %169, %170 : vector<16x1xf32>
    %172 = vector.broadcast %164 : vector<16x1xf32> to vector<16x32xf32>
    %173 = arith.subf %158, %172 : vector<16x32xf32>
    %cst_78 = arith.constant 9.99999974E-6 : f32
    %174 = vector.broadcast %cst_78 : f32 to vector<16x1xf32>
    %175 = arith.addf %171, %174 : vector<16x1xf32>
    %176 = math.rsqrt %175 : vector<16x1xf32>
    %177 = vector.broadcast %176 : vector<16x1xf32> to vector<16x32xf32>
    %178 = arith.mulf %173, %177 : vector<16x32xf32>
    %179 = vector.broadcast %159 : vector<1x32xf32> to vector<16x32xf32>
    %180 = arith.mulf %178, %179 : vector<16x32xf32>
    %181 = vector.broadcast %160 : vector<1x32xf32> to vector<16x32xf32>
    %182 = arith.addf %180, %181 : vector<16x32xf32>
    %183 = arith.addf %182, %3 : vector<16x32xf32>
    %184 = arith.addf %5, %7 : vector<24x32xf32>
    %c0_79 = arith.constant 0 : index
    %c0_80 = arith.constant 0 : index
    %185 = vector.load %arg15[%c0_79, %c0_80] : memref<32x32xf32, #tpu.memory_space<vmem>>, vector<32x32xf32>
    %c0_81 = arith.constant 0 : index
    %c0_82 = arith.constant 0 : index
    %186 = vector.load %arg16[%c0_81, %c0_82] : memref<32x32xf32, #tpu.memory_space<vmem>>, vector<32x32xf32>
    %c0_83 = arith.constant 0 : index
    %c0_84 = arith.constant 0 : index
    %187 = vector.load %arg17[%c0_83, %c0_84] : memref<32x32xf32, #tpu.memory_space<vmem>>, vector<32x32xf32>
    %c0_85 = arith.constant 0 : index
    %c0_86 = arith.constant 0 : index
    %188 = vector.load %arg18[%c0_85, %c0_86] : memref<1x32xf32, #tpu.memory_space<vmem>>, vector<1x32xf32>
    %c0_87 = arith.constant 0 : index
    %c0_88 = arith.constant 0 : index
    %189 = vector.load %arg19[%c0_87, %c0_88] : memref<1x32xf32, #tpu.memory_space<vmem>>, vector<1x32xf32>
    %c0_89 = arith.constant 0 : index
    %c0_90 = arith.constant 0 : index
    %190 = vector.load %arg20[%c0_89, %c0_90] : memref<1x32xf32, #tpu.memory_space<vmem>>, vector<1x32xf32>
    %c0_91 = arith.constant 0 : index
    %c0_92 = arith.constant 0 : index
    %191 = vector.load %arg21[%c0_91, %c0_92] : memref<32x32xf32, #tpu.memory_space<vmem>>, vector<32x32xf32>
    %c0_93 = arith.constant 0 : index
    %c0_94 = arith.constant 0 : index
    %192 = vector.load %arg22[%c0_93, %c0_94] : memref<1x32xf32, #tpu.memory_space<vmem>>, vector<1x32xf32>
    %cst_95 = arith.constant dense<0.000000e+00> : vector<16x32xf32>
    %193 = tpu.matmul %183, %185, %cst_95 {dimension_numbers = #tpu.dot_dimension_numbers<[1], [0], [0], [1], [0, 0, 1, 1], [], []>} : vector<16x32xf32>, vector<32x32xf32>, vector<16x32xf32> -> vector<16x32xf32>
    %194 = vector.broadcast %188 : vector<1x32xf32> to vector<16x32xf32>
    %195 = arith.addf %193, %194 : vector<16x32xf32>
    %cst_96 = arith.constant dense<0.000000e+00> : vector<24x32xf32>
    %196 = tpu.matmul %184, %186, %cst_96 {dimension_numbers = #tpu.dot_dimension_numbers<[1], [0], [0], [1], [0, 0, 1, 1], [], []>} : vector<24x32xf32>, vector<32x32xf32>, vector<24x32xf32> -> vector<24x32xf32>
    %197 = vector.broadcast %189 : vector<1x32xf32> to vector<24x32xf32>
    %198 = arith.addf %196, %197 : vector<24x32xf32>
    %cst_97 = arith.constant dense<0.000000e+00> : vector<24x32xf32>
    %199 = tpu.matmul %5, %187, %cst_97 {dimension_numbers = #tpu.dot_dimension_numbers<[1], [0], [0], [1], [0, 0, 1, 1], [], []>} : vector<24x32xf32>, vector<32x32xf32>, vector<24x32xf32> -> vector<24x32xf32>
    %200 = vector.broadcast %190 : vector<1x32xf32> to vector<24x32xf32>
    %201 = arith.addf %199, %200 : vector<24x32xf32>
    %202 = vector.extract_strided_slice %195 {offsets = [0, 0], sizes = [16, 4], strides = [1, 1]} : vector<16x32xf32> to vector<16x4xf32>
    %cst_98 = arith.constant 5.000000e-01 : f32
    %203 = vector.broadcast %cst_98 : f32 to vector<16x4xf32>
    %204 = arith.mulf %202, %203 : vector<16x4xf32>
    %205 = vector.extract_strided_slice %198 {offsets = [0, 0], sizes = [24, 4], strides = [1, 1]} : vector<24x32xf32> to vector<24x4xf32>
    %206 = vector.extract_strided_slice %201 {offsets = [0, 0], sizes = [24, 4], strides = [1, 1]} : vector<24x32xf32> to vector<24x4xf32>
    "tpu.trace_start"() <{level = 10 : i32, message = "qd,kd->qk"}> : () -> ()
    %cst_99 = arith.constant dense<0.000000e+00> : vector<16x24xf32>
    %207 = tpu.matmul %204, %205, %cst_99 {dimension_numbers = #tpu.dot_dimension_numbers<[1], [1], [0], [0], [0, 0, 1, 0], [], []>} : vector<16x4xf32>, vector<24x4xf32>, vector<16x24xf32> -> vector<16x24xf32>
    "tpu.trace_stop"() : () -> ()
    %cst_100 = arith.constant dense<0xFF800000> : vector<16xf32>
    %208 = vector.multi_reduction <maximumf>, %207, %cst_100 [1] : vector<16x24xf32> to vector<16xf32>
    %209 = vector.shape_cast %208 : vector<16xf32> to vector<16x1xf32>
    %210 = vector.broadcast %209 : vector<16x1xf32> to vector<16x24xf32>
    %211 = arith.subf %207, %210 : vector<16x24xf32>
    %212 = math.exp %211 : vector<16x24xf32>
    %cst_101 = arith.constant dense<0.000000e+00> : vector<16xf32>
    %213 = vector.multi_reduction <add>, %212, %cst_101 [1] : vector<16x24xf32> to vector<16xf32>
    %214 = vector.shape_cast %213 : vector<16xf32> to vector<16x1xf32>
    %215 = vector.broadcast %214 : vector<16x1xf32> to vector<16x24xf32>
    %216 = arith.divf %212, %215 : vector<16x24xf32>
    %cst_102 = arith.constant dense<0.000000e+00> : vector<16x4xf32>
    %217 = tpu.matmul %216, %206, %cst_102 {dimension_numbers = #tpu.dot_dimension_numbers<[1], [0], [0], [1], [0, 0, 1, 1], [], []>} : vector<16x24xf32>, vector<24x4xf32>, vector<16x4xf32> -> vector<16x4xf32>
    %218 = vector.extract_strided_slice %195 {offsets = [0, 4], sizes = [16, 4], strides = [1, 1]} : vector<16x32xf32> to vector<16x4xf32>
    %cst_103 = arith.constant 5.000000e-01 : f32
    %219 = vector.broadcast %cst_103 : f32 to vector<16x4xf32>
    %220 = arith.mulf %218, %219 : vector<16x4xf32>
    %221 = vector.extract_strided_slice %198 {offsets = [0, 4], sizes = [24, 4], strides = [1, 1]} : vector<24x32xf32> to vector<24x4xf32>
    %222 = vector.extract_strided_slice %201 {offsets = [0, 4], sizes = [24, 4], strides = [1, 1]} : vector<24x32xf32> to vector<24x4xf32>
    "tpu.trace_start"() <{level = 10 : i32, message = "qd,kd->qk"}> : () -> ()
    %cst_104 = arith.constant dense<0.000000e+00> : vector<16x24xf32>
    %223 = tpu.matmul %220, %221, %cst_104 {dimension_numbers = #tpu.dot_dimension_numbers<[1], [1], [0], [0], [0, 0, 1, 0], [], []>} : vector<16x4xf32>, vector<24x4xf32>, vector<16x24xf32> -> vector<16x24xf32>
    "tpu.trace_stop"() : () -> ()
    %cst_105 = arith.constant dense<0xFF800000> : vector<16xf32>
    %224 = vector.multi_reduction <maximumf>, %223, %cst_105 [1] : vector<16x24xf32> to vector<16xf32>
    %225 = vector.shape_cast %224 : vector<16xf32> to vector<16x1xf32>
    %226 = vector.broadcast %225 : vector<16x1xf32> to vector<16x24xf32>
    %227 = arith.subf %223, %226 : vector<16x24xf32>
    %228 = math.exp %227 : vector<16x24xf32>
    %cst_106 = arith.constant dense<0.000000e+00> : vector<16xf32>
    %229 = vector.multi_reduction <add>, %228, %cst_106 [1] : vector<16x24xf32> to vector<16xf32>
    %230 = vector.shape_cast %229 : vector<16xf32> to vector<16x1xf32>
    %231 = vector.broadcast %230 : vector<16x1xf32> to vector<16x24xf32>
    %232 = arith.divf %228, %231 : vector<16x24xf32>
    %cst_107 = arith.constant dense<0.000000e+00> : vector<16x4xf32>
    %233 = tpu.matmul %232, %222, %cst_107 {dimension_numbers = #tpu.dot_dimension_numbers<[1], [0], [0], [1], [0, 0, 1, 1], [], []>} : vector<16x24xf32>, vector<24x4xf32>, vector<16x4xf32> -> vector<16x4xf32>
    %234 = vector.extract_strided_slice %195 {offsets = [0, 8], sizes = [16, 4], strides = [1, 1]} : vector<16x32xf32> to vector<16x4xf32>
    %cst_108 = arith.constant 5.000000e-01 : f32
    %235 = vector.broadcast %cst_108 : f32 to vector<16x4xf32>
    %236 = arith.mulf %234, %235 : vector<16x4xf32>
    %237 = vector.extract_strided_slice %198 {offsets = [0, 8], sizes = [24, 4], strides = [1, 1]} : vector<24x32xf32> to vector<24x4xf32>
    %238 = vector.extract_strided_slice %201 {offsets = [0, 8], sizes = [24, 4], strides = [1, 1]} : vector<24x32xf32> to vector<24x4xf32>
    "tpu.trace_start"() <{level = 10 : i32, message = "qd,kd->qk"}> : () -> ()
    %cst_109 = arith.constant dense<0.000000e+00> : vector<16x24xf32>
    %239 = tpu.matmul %236, %237, %cst_109 {dimension_numbers = #tpu.dot_dimension_numbers<[1], [1], [0], [0], [0, 0, 1, 0], [], []>} : vector<16x4xf32>, vector<24x4xf32>, vector<16x24xf32> -> vector<16x24xf32>
    "tpu.trace_stop"() : () -> ()
    %cst_110 = arith.constant dense<0xFF800000> : vector<16xf32>
    %240 = vector.multi_reduction <maximumf>, %239, %cst_110 [1] : vector<16x24xf32> to vector<16xf32>
    %241 = vector.shape_cast %240 : vector<16xf32> to vector<16x1xf32>
    %242 = vector.broadcast %241 : vector<16x1xf32> to vector<16x24xf32>
    %243 = arith.subf %239, %242 : vector<16x24xf32>
    %244 = math.exp %243 : vector<16x24xf32>
    %cst_111 = arith.constant dense<0.000000e+00> : vector<16xf32>
    %245 = vector.multi_reduction <add>, %244, %cst_111 [1] : vector<16x24xf32> to vector<16xf32>
    %246 = vector.shape_cast %245 : vector<16xf32> to vector<16x1xf32>
    %247 = vector.broadcast %246 : vector<16x1xf32> to vector<16x24xf32>
    %248 = arith.divf %244, %247 : vector<16x24xf32>
    %cst_112 = arith.constant dense<0.000000e+00> : vector<16x4xf32>
    %249 = tpu.matmul %248, %238, %cst_112 {dimension_numbers = #tpu.dot_dimension_numbers<[1], [0], [0], [1], [0, 0, 1, 1], [], []>} : vector<16x24xf32>, vector<24x4xf32>, vector<16x4xf32> -> vector<16x4xf32>
    %250 = vector.extract_strided_slice %195 {offsets = [0, 12], sizes = [16, 4], strides = [1, 1]} : vector<16x32xf32> to vector<16x4xf32>
    %cst_113 = arith.constant 5.000000e-01 : f32
    %251 = vector.broadcast %cst_113 : f32 to vector<16x4xf32>
    %252 = arith.mulf %250, %251 : vector<16x4xf32>
    %253 = vector.extract_strided_slice %198 {offsets = [0, 12], sizes = [24, 4], strides = [1, 1]} : vector<24x32xf32> to vector<24x4xf32>
    %254 = vector.extract_strided_slice %201 {offsets = [0, 12], sizes = [24, 4], strides = [1, 1]} : vector<24x32xf32> to vector<24x4xf32>
    "tpu.trace_start"() <{level = 10 : i32, message = "qd,kd->qk"}> : () -> ()
    %cst_114 = arith.constant dense<0.000000e+00> : vector<16x24xf32>
    %255 = tpu.matmul %252, %253, %cst_114 {dimension_numbers = #tpu.dot_dimension_numbers<[1], [1], [0], [0], [0, 0, 1, 0], [], []>} : vector<16x4xf32>, vector<24x4xf32>, vector<16x24xf32> -> vector<16x24xf32>
    "tpu.trace_stop"() : () -> ()
    %cst_115 = arith.constant dense<0xFF800000> : vector<16xf32>
    %256 = vector.multi_reduction <maximumf>, %255, %cst_115 [1] : vector<16x24xf32> to vector<16xf32>
    %257 = vector.shape_cast %256 : vector<16xf32> to vector<16x1xf32>
    %258 = vector.broadcast %257 : vector<16x1xf32> to vector<16x24xf32>
    %259 = arith.subf %255, %258 : vector<16x24xf32>
    %260 = math.exp %259 : vector<16x24xf32>
    %cst_116 = arith.constant dense<0.000000e+00> : vector<16xf32>
    %261 = vector.multi_reduction <add>, %260, %cst_116 [1] : vector<16x24xf32> to vector<16xf32>
    %262 = vector.shape_cast %261 : vector<16xf32> to vector<16x1xf32>
    %263 = vector.broadcast %262 : vector<16x1xf32> to vector<16x24xf32>
    %264 = arith.divf %260, %263 : vector<16x24xf32>
    %cst_117 = arith.constant dense<0.000000e+00> : vector<16x4xf32>
    %265 = tpu.matmul %264, %254, %cst_117 {dimension_numbers = #tpu.dot_dimension_numbers<[1], [0], [0], [1], [0, 0, 1, 1], [], []>} : vector<16x24xf32>, vector<24x4xf32>, vector<16x4xf32> -> vector<16x4xf32>
    %266 = vector.extract_strided_slice %195 {offsets = [0, 16], sizes = [16, 4], strides = [1, 1]} : vector<16x32xf32> to vector<16x4xf32>
    %cst_118 = arith.constant 5.000000e-01 : f32
    %267 = vector.broadcast %cst_118 : f32 to vector<16x4xf32>
    %268 = arith.mulf %266, %267 : vector<16x4xf32>
    %269 = vector.extract_strided_slice %198 {offsets = [0, 16], sizes = [24, 4], strides = [1, 1]} : vector<24x32xf32> to vector<24x4xf32>
    %270 = vector.extract_strided_slice %201 {offsets = [0, 16], sizes = [24, 4], strides = [1, 1]} : vector<24x32xf32> to vector<24x4xf32>
    "tpu.trace_start"() <{level = 10 : i32, message = "qd,kd->qk"}> : () -> ()
    %cst_119 = arith.constant dense<0.000000e+00> : vector<16x24xf32>
    %271 = tpu.matmul %268, %269, %cst_119 {dimension_numbers = #tpu.dot_dimension_numbers<[1], [1], [0], [0], [0, 0, 1, 0], [], []>} : vector<16x4xf32>, vector<24x4xf32>, vector<16x24xf32> -> vector<16x24xf32>
    "tpu.trace_stop"() : () -> ()
    %cst_120 = arith.constant dense<0xFF800000> : vector<16xf32>
    %272 = vector.multi_reduction <maximumf>, %271, %cst_120 [1] : vector<16x24xf32> to vector<16xf32>
    %273 = vector.shape_cast %272 : vector<16xf32> to vector<16x1xf32>
    %274 = vector.broadcast %273 : vector<16x1xf32> to vector<16x24xf32>
    %275 = arith.subf %271, %274 : vector<16x24xf32>
    %276 = math.exp %275 : vector<16x24xf32>
    %cst_121 = arith.constant dense<0.000000e+00> : vector<16xf32>
    %277 = vector.multi_reduction <add>, %276, %cst_121 [1] : vector<16x24xf32> to vector<16xf32>
    %278 = vector.shape_cast %277 : vector<16xf32> to vector<16x1xf32>
    %279 = vector.broadcast %278 : vector<16x1xf32> to vector<16x24xf32>
    %280 = arith.divf %276, %279 : vector<16x24xf32>
    %cst_122 = arith.constant dense<0.000000e+00> : vector<16x4xf32>
    %281 = tpu.matmul %280, %270, %cst_122 {dimension_numbers = #tpu.dot_dimension_numbers<[1], [0], [0], [1], [0, 0, 1, 1], [], []>} : vector<16x24xf32>, vector<24x4xf32>, vector<16x4xf32> -> vector<16x4xf32>
    %282 = vector.extract_strided_slice %195 {offsets = [0, 20], sizes = [16, 4], strides = [1, 1]} : vector<16x32xf32> to vector<16x4xf32>
    %cst_123 = arith.constant 5.000000e-01 : f32
    %283 = vector.broadcast %cst_123 : f32 to vector<16x4xf32>
    %284 = arith.mulf %282, %283 : vector<16x4xf32>
    %285 = vector.extract_strided_slice %198 {offsets = [0, 20], sizes = [24, 4], strides = [1, 1]} : vector<24x32xf32> to vector<24x4xf32>
    %286 = vector.extract_strided_slice %201 {offsets = [0, 20], sizes = [24, 4], strides = [1, 1]} : vector<24x32xf32> to vector<24x4xf32>
    "tpu.trace_start"() <{level = 10 : i32, message = "qd,kd->qk"}> : () -> ()
    %cst_124 = arith.constant dense<0.000000e+00> : vector<16x24xf32>
    %287 = tpu.matmul %284, %285, %cst_124 {dimension_numbers = #tpu.dot_dimension_numbers<[1], [1], [0], [0], [0, 0, 1, 0], [], []>} : vector<16x4xf32>, vector<24x4xf32>, vector<16x24xf32> -> vector<16x24xf32>
    "tpu.trace_stop"() : () -> ()
    %cst_125 = arith.constant dense<0xFF800000> : vector<16xf32>
    %288 = vector.multi_reduction <maximumf>, %287, %cst_125 [1] : vector<16x24xf32> to vector<16xf32>
    %289 = vector.shape_cast %288 : vector<16xf32> to vector<16x1xf32>
    %290 = vector.broadcast %289 : vector<16x1xf32> to vector<16x24xf32>
    %291 = arith.subf %287, %290 : vector<16x24xf32>
    %292 = math.exp %291 : vector<16x24xf32>
    %cst_126 = arith.constant dense<0.000000e+00> : vector<16xf32>
    %293 = vector.multi_reduction <add>, %292, %cst_126 [1] : vector<16x24xf32> to vector<16xf32>
    %294 = vector.shape_cast %293 : vector<16xf32> to vector<16x1xf32>
    %295 = vector.broadcast %294 : vector<16x1xf32> to vector<16x24xf32>
    %296 = arith.divf %292, %295 : vector<16x24xf32>
    %cst_127 = arith.constant dense<0.000000e+00> : vector<16x4xf32>
    %297 = tpu.matmul %296, %286, %cst_127 {dimension_numbers = #tpu.dot_dimension_numbers<[1], [0], [0], [1], [0, 0, 1, 1], [], []>} : vector<16x24xf32>, vector<24x4xf32>, vector<16x4xf32> -> vector<16x4xf32>
    %298 = vector.extract_strided_slice %195 {offsets = [0, 24], sizes = [16, 4], strides = [1, 1]} : vector<16x32xf32> to vector<16x4xf32>
    %cst_128 = arith.constant 5.000000e-01 : f32
    %299 = vector.broadcast %cst_128 : f32 to vector<16x4xf32>
    %300 = arith.mulf %298, %299 : vector<16x4xf32>
    %301 = vector.extract_strided_slice %198 {offsets = [0, 24], sizes = [24, 4], strides = [1, 1]} : vector<24x32xf32> to vector<24x4xf32>
    %302 = vector.extract_strided_slice %201 {offsets = [0, 24], sizes = [24, 4], strides = [1, 1]} : vector<24x32xf32> to vector<24x4xf32>
    "tpu.trace_start"() <{level = 10 : i32, message = "qd,kd->qk"}> : () -> ()
    %cst_129 = arith.constant dense<0.000000e+00> : vector<16x24xf32>
    %303 = tpu.matmul %300, %301, %cst_129 {dimension_numbers = #tpu.dot_dimension_numbers<[1], [1], [0], [0], [0, 0, 1, 0], [], []>} : vector<16x4xf32>, vector<24x4xf32>, vector<16x24xf32> -> vector<16x24xf32>
    "tpu.trace_stop"() : () -> ()
    %cst_130 = arith.constant dense<0xFF800000> : vector<16xf32>
    %304 = vector.multi_reduction <maximumf>, %303, %cst_130 [1] : vector<16x24xf32> to vector<16xf32>
    %305 = vector.shape_cast %304 : vector<16xf32> to vector<16x1xf32>
    %306 = vector.broadcast %305 : vector<16x1xf32> to vector<16x24xf32>
    %307 = arith.subf %303, %306 : vector<16x24xf32>
    %308 = math.exp %307 : vector<16x24xf32>
    %cst_131 = arith.constant dense<0.000000e+00> : vector<16xf32>
    %309 = vector.multi_reduction <add>, %308, %cst_131 [1] : vector<16x24xf32> to vector<16xf32>
    %310 = vector.shape_cast %309 : vector<16xf32> to vector<16x1xf32>
    %311 = vector.broadcast %310 : vector<16x1xf32> to vector<16x24xf32>
    %312 = arith.divf %308, %311 : vector<16x24xf32>
    %cst_132 = arith.constant dense<0.000000e+00> : vector<16x4xf32>
    %313 = tpu.matmul %312, %302, %cst_132 {dimension_numbers = #tpu.dot_dimension_numbers<[1], [0], [0], [1], [0, 0, 1, 1], [], []>} : vector<16x24xf32>, vector<24x4xf32>, vector<16x4xf32> -> vector<16x4xf32>
    %314 = vector.extract_strided_slice %195 {offsets = [0, 28], sizes = [16, 4], strides = [1, 1]} : vector<16x32xf32> to vector<16x4xf32>
    %cst_133 = arith.constant 5.000000e-01 : f32
    %315 = vector.broadcast %cst_133 : f32 to vector<16x4xf32>
    %316 = arith.mulf %314, %315 : vector<16x4xf32>
    %317 = vector.extract_strided_slice %198 {offsets = [0, 28], sizes = [24, 4], strides = [1, 1]} : vector<24x32xf32> to vector<24x4xf32>
    %318 = vector.extract_strided_slice %201 {offsets = [0, 28], sizes = [24, 4], strides = [1, 1]} : vector<24x32xf32> to vector<24x4xf32>
    "tpu.trace_start"() <{level = 10 : i32, message = "qd,kd->qk"}> : () -> ()
    %cst_134 = arith.constant dense<0.000000e+00> : vector<16x24xf32>
    %319 = tpu.matmul %316, %317, %cst_134 {dimension_numbers = #tpu.dot_dimension_numbers<[1], [1], [0], [0], [0, 0, 1, 0], [], []>} : vector<16x4xf32>, vector<24x4xf32>, vector<16x24xf32> -> vector<16x24xf32>
    "tpu.trace_stop"() : () -> ()
    %cst_135 = arith.constant dense<0xFF800000> : vector<16xf32>
    %320 = vector.multi_reduction <maximumf>, %319, %cst_135 [1] : vector<16x24xf32> to vector<16xf32>
    %321 = vector.shape_cast %320 : vector<16xf32> to vector<16x1xf32>
    %322 = vector.broadcast %321 : vector<16x1xf32> to vector<16x24xf32>
    %323 = arith.subf %319, %322 : vector<16x24xf32>
    %324 = math.exp %323 : vector<16x24xf32>
    %cst_136 = arith.constant dense<0.000000e+00> : vector<16xf32>
    %325 = vector.multi_reduction <add>, %324, %cst_136 [1] : vector<16x24xf32> to vector<16xf32>
    %326 = vector.shape_cast %325 : vector<16xf32> to vector<16x1xf32>
    %327 = vector.broadcast %326 : vector<16x1xf32> to vector<16x24xf32>
    %328 = arith.divf %324, %327 : vector<16x24xf32>
    %cst_137 = arith.constant dense<0.000000e+00> : vector<16x4xf32>
    %329 = tpu.matmul %328, %318, %cst_137 {dimension_numbers = #tpu.dot_dimension_numbers<[1], [0], [0], [1], [0, 0, 1, 1], [], []>} : vector<16x24xf32>, vector<24x4xf32>, vector<16x4xf32> -> vector<16x4xf32>
    %330 = tpu.concatenate %217, %233, %249, %265, %281, %297, %313, %329 in 1 : vector<16x4xf32>, vector<16x4xf32>, vector<16x4xf32>, vector<16x4xf32>, vector<16x4xf32>, vector<16x4xf32>, vector<16x4xf32>, vector<16x4xf32> -> vector<16x32xf32>
    %cst_138 = arith.constant dense<0.000000e+00> : vector<16x32xf32>
    %331 = tpu.matmul %330, %191, %cst_138 {dimension_numbers = #tpu.dot_dimension_numbers<[1], [0], [0], [1], [0, 0, 1, 1], [], []>} : vector<16x32xf32>, vector<32x32xf32>, vector<16x32xf32> -> vector<16x32xf32>
    %332 = vector.broadcast %192 : vector<1x32xf32> to vector<16x32xf32>
    %333 = arith.addf %331, %332 : vector<16x32xf32>
    %334 = arith.addf %182, %333 : vector<16x32xf32>
    %c0_139 = arith.constant 0 : index
    %c0_140 = arith.constant 0 : index
    %335 = vector.load %arg23[%c0_139, %c0_140] : memref<1x32xf32, #tpu.memory_space<vmem>>, vector<1x32xf32>
    %c0_141 = arith.constant 0 : index
    %c0_142 = arith.constant 0 : index
    %336 = vector.load %arg24[%c0_141, %c0_142] : memref<1x32xf32, #tpu.memory_space<vmem>>, vector<1x32xf32>
    %cst_143 = arith.constant dense<0.000000e+00> : vector<16xf32>
    %337 = vector.multi_reduction <add>, %334, %cst_143 [1] : vector<16x32xf32> to vector<16xf32>
    %338 = vector.shape_cast %337 : vector<16xf32> to vector<16x1xf32>
    %cst_144 = arith.constant 3.200000e+01 : f32
    %339 = vector.broadcast %cst_144 : f32 to vector<16x1xf32>
    %340 = arith.divf %338, %339 : vector<16x1xf32>
    %341 = vector.broadcast %340 : vector<16x1xf32> to vector<16x32xf32>
    %342 = arith.subf %334, %341 : vector<16x32xf32>
    %343 = arith.mulf %342, %342 : vector<16x32xf32>
    %cst_145 = arith.constant dense<0.000000e+00> : vector<16xf32>
    %344 = vector.multi_reduction <add>, %343, %cst_145 [1] : vector<16x32xf32> to vector<16xf32>
    %345 = vector.shape_cast %344 : vector<16xf32> to vector<16x1xf32>
    %cst_146 = arith.constant 3.200000e+01 : f32
    %346 = vector.broadcast %cst_146 : f32 to vector<16x1xf32>
    %347 = arith.divf %345, %346 : vector<16x1xf32>
    %348 = vector.broadcast %340 : vector<16x1xf32> to vector<16x32xf32>
    %349 = arith.subf %334, %348 : vector<16x32xf32>
    %cst_147 = arith.constant 9.99999974E-6 : f32
    %350 = vector.broadcast %cst_147 : f32 to vector<16x1xf32>
    %351 = arith.addf %347, %350 : vector<16x1xf32>
    %352 = math.rsqrt %351 : vector<16x1xf32>
    %353 = vector.broadcast %352 : vector<16x1xf32> to vector<16x32xf32>
    %354 = arith.mulf %349, %353 : vector<16x32xf32>
    %355 = vector.broadcast %335 : vector<1x32xf32> to vector<16x32xf32>
    %356 = arith.mulf %354, %355 : vector<16x32xf32>
    %357 = vector.broadcast %336 : vector<1x32xf32> to vector<16x32xf32>
    %358 = arith.addf %356, %357 : vector<16x32xf32>
    %c0_148 = arith.constant 0 : index
    %c0_149 = arith.constant 0 : index
    %359 = vector.load %arg25[%c0_148, %c0_149] : memref<32x64xf32, #tpu.memory_space<vmem>>, vector<32x64xf32>
    %cst_150 = arith.constant dense<0.000000e+00> : vector<16x64xf32>
    %360 = tpu.matmul %358, %359, %cst_150 {dimension_numbers = #tpu.dot_dimension_numbers<[1], [0], [0], [1], [0, 0, 1, 1], [], []>} : vector<16x32xf32>, vector<32x64xf32>, vector<16x64xf32> -> vector<16x64xf32>
    %c0_151 = arith.constant 0 : index
    %c0_152 = arith.constant 0 : index
    %361 = vector.load %arg26[%c0_151, %c0_152] : memref<1x64xf32, #tpu.memory_space<vmem>>, vector<1x64xf32>
    %362 = vector.broadcast %361 : vector<1x64xf32> to vector<16x64xf32>
    %363 = arith.addf %360, %362 : vector<16x64xf32>
    %cst_153 = arith.constant 0.000000e+00 : f32
    %364 = vector.broadcast %cst_153 : f32 to vector<16x64xf32>
    %365 = arith.maximumf %363, %364 : vector<16x64xf32>
    %c0_154 = arith.constant 0 : index
    %c0_155 = arith.constant 0 : index
    %366 = vector.load %arg27[%c0_154, %c0_155] : memref<64x32xf32, #tpu.memory_space<vmem>>, vector<64x32xf32>
    %cst_156 = arith.constant dense<0.000000e+00> : vector<16x32xf32>
    %367 = tpu.matmul %365, %366, %cst_156 {dimension_numbers = #tpu.dot_dimension_numbers<[1], [0], [0], [1], [0, 0, 1, 1], [], []>} : vector<16x64xf32>, vector<64x32xf32>, vector<16x32xf32> -> vector<16x32xf32>
    %c0_157 = arith.constant 0 : index
    %c0_158 = arith.constant 0 : index
    %368 = vector.load %arg28[%c0_157, %c0_158] : memref<1x32xf32, #tpu.memory_space<vmem>>, vector<1x32xf32>
    %369 = vector.broadcast %368 : vector<1x32xf32> to vector<16x32xf32>
    %370 = arith.addf %367, %369 : vector<16x32xf32>
    %371 = arith.addf %358, %370 : vector<16x32xf32>
    %c0_159 = arith.constant 0 : index
    %c0_160 = arith.constant 0 : index
    %372 = vector.load %arg29[%c0_159, %c0_160] : memref<1x32xf32, #tpu.memory_space<vmem>>, vector<1x32xf32>
    %c0_161 = arith.constant 0 : index
    %c0_162 = arith.constant 0 : index
    %373 = vector.load %arg30[%c0_161, %c0_162] : memref<1x32xf32, #tpu.memory_space<vmem>>, vector<1x32xf32>
    %cst_163 = arith.constant dense<0.000000e+00> : vector<16xf32>
    %374 = vector.multi_reduction <add>, %371, %cst_163 [1] : vector<16x32xf32> to vector<16xf32>
    %375 = vector.shape_cast %374 : vector<16xf32> to vector<16x1xf32>
    %cst_164 = arith.constant 3.200000e+01 : f32
    %376 = vector.broadcast %cst_164 : f32 to vector<16x1xf32>
    %377 = arith.divf %375, %376 : vector<16x1xf32>
    %378 = vector.broadcast %377 : vector<16x1xf32> to vector<16x32xf32>
    %379 = arith.subf %371, %378 : vector<16x32xf32>
    %380 = arith.mulf %379, %379 : vector<16x32xf32>
    %cst_165 = arith.constant dense<0.000000e+00> : vector<16xf32>
    %381 = vector.multi_reduction <add>, %380, %cst_165 [1] : vector<16x32xf32> to vector<16xf32>
    %382 = vector.shape_cast %381 : vector<16xf32> to vector<16x1xf32>
    %cst_166 = arith.constant 3.200000e+01 : f32
    %383 = vector.broadcast %cst_166 : f32 to vector<16x1xf32>
    %384 = arith.divf %382, %383 : vector<16x1xf32>
    %385 = vector.broadcast %377 : vector<16x1xf32> to vector<16x32xf32>
    %386 = arith.subf %371, %385 : vector<16x32xf32>
    %cst_167 = arith.constant 9.99999974E-6 : f32
    %387 = vector.broadcast %cst_167 : f32 to vector<16x1xf32>
    %388 = arith.addf %384, %387 : vector<16x1xf32>
    %389 = math.rsqrt %388 : vector<16x1xf32>
    %390 = vector.broadcast %389 : vector<16x1xf32> to vector<16x32xf32>
    %391 = arith.mulf %386, %390 : vector<16x32xf32>
    %392 = vector.broadcast %372 : vector<1x32xf32> to vector<16x32xf32>
    %393 = arith.mulf %391, %392 : vector<16x32xf32>
    %394 = vector.broadcast %373 : vector<1x32xf32> to vector<16x32xf32>
    %395 = arith.addf %393, %394 : vector<16x32xf32>
    %c0_168 = arith.constant 0 : index
    %c0_169 = arith.constant 0 : index
    %c0_170 = arith.constant 0 : index
    %396 = vector.load %arg31[%c0_168, %c0_169, %c0_170] : memref<1x16x32xf32, #tpu.memory_space<vmem>>, vector<1x16x32xf32>
    %397 = vector.shape_cast %396 : vector<1x16x32xf32> to vector<16x32xf32>
    %398 = vector.shape_cast %395 : vector<16x32xf32> to vector<1x16x32xf32>
    tpu.vector_store %arg31[%c0_168, %c0_169, %c0_170], %398 {strides = array<i32>} : memref<1x16x32xf32, #tpu.memory_space<vmem>>, vector<1x16x32xf32>,
    return
  }
  func.func @transform_0(%arg0: i32) -> (i32, i32, i32) {
    %c0_i32 = arith.constant 0 : i32
    %c0_i32_0 = arith.constant 0 : i32
    %c0_i32_1 = arith.constant 0 : i32
    return %arg0, %c0_i32, %c0_i32_0 : i32, i32, i32
  }
  func.func @transform_1(%arg0: i32) -> (i32, i32, i32) {
    %c0_i32 = arith.constant 0 : i32
    %c0_i32_0 = arith.constant 0 : i32
    %c0_i32_1 = arith.constant 0 : i32
    return %arg0, %c0_i32, %c0_i32_0 : i32, i32, i32
  }
  func.func @transform_2(%arg0: i32) -> (i32, i32, i32) {
    %c0_i32 = arith.constant 0 : i32
    %c0_i32_0 = arith.constant 0 : i32
    %c0_i32_1 = arith.constant 0 : i32
    return %arg0, %c0_i32, %c0_i32_0 : i32, i32, i32
  }
  func.func @transform_3(%arg0: i32) -> (i32, i32, i32) {
    %c0_i32 = arith.constant 0 : i32
    %c0_i32_0 = arith.constant 0 : i32
    %c0_i32_1 = arith.constant 0 : i32
    return %arg0, %c0_i32, %c0_i32_0 : i32, i32, i32
  }
  func.func @transform_4(%arg0: i32) -> (i32, i32) {
    %c0_i32 = arith.constant 0 : i32
    %c0_i32_0 = arith.constant 0 : i32
    %c0_i32_1 = arith.constant 0 : i32
    return %c0_i32, %c0_i32_0 : i32, i32
  }
  func.func @transform_5(%arg0: i32) -> (i32, i32) {
    %c0_i32 = arith.constant 0 : i32
    %c0_i32_0 = arith.constant 0 : i32
    %c0_i32_1 = arith.constant 0 : i32
    return %c0_i32, %c0_i32_0 : i32, i32
  }
  func.func @transform_6(%arg0: i32) -> (i32, i32) {
    %c0_i32 = arith.constant 0 : i32
    %c0_i32_0 = arith.constant 0 : i32
    %c0_i32_1 = arith.constant 0 : i32
    return %c0_i32, %c0_i32_0 : i32, i32
  }
  func.func @transform_7(%arg0: i32) -> (i32, i32) {
    %c0_i32 = arith.constant 0 : i32
    %c0_i32_0 = arith.constant 0 : i32
    %c0_i32_1 = arith.constant 0 : i32
    return %c0_i32, %c0_i32_0 : i32, i32
  }
  func.func @transform_8(%arg0: i32) -> (i32, i32) {
    %c0_i32 = arith.constant 0 : i32
    %c0_i32_0 = arith.constant 0 : i32
    %c0_i32_1 = arith.constant 0 : i32
    return %c0_i32, %c0_i32_0 : i32, i32
  }
  func.func @transform_9(%arg0: i32) -> (i32, i32) {
    %c0_i32 = arith.constant 0 : i32
    %c0_i32_0 = arith.constant 0 : i32
    %c0_i32_1 = arith.constant 0 : i32
    return %c0_i32, %c0_i32_0 : i32, i32
  }
  func.func @transform_10(%arg0: i32) -> (i32, i32) {
    %c0_i32 = arith.constant 0 : i32
    %c0_i32_0 = arith.constant 0 : i32
    %c0_i32_1 = arith.constant 0 : i32
    return %c0_i32, %c0_i32_0 : i32, i32
  }
  func.func @transform_11(%arg0: i32) -> (i32, i32) {
    %c0_i32 = arith.constant 0 : i32
    %c0_i32_0 = arith.constant 0 : i32
    %c0_i32_1 = arith.constant 0 : i32
    return %c0_i32, %c0_i32_0 : i32, i32
  }
  func.func @transform_12(%arg0: i32) -> (i32, i32) {
    %c0_i32 = arith.constant 0 : i32
    %c0_i32_0 = arith.constant 0 : i32
    %c0_i32_1 = arith.constant 0 : i32
    return %c0_i32, %c0_i32_0 : i32, i32
  }
  func.func @transform_13(%arg0: i32) -> (i32, i32) {
    %c0_i32 = arith.constant 0 : i32
    %c0_i32_0 = arith.constant 0 : i32
    %c0_i32_1 = arith.constant 0 : i32
    return %c0_i32, %c0_i32_0 : i32, i32
  }
  func.func @transform_14(%arg0: i32) -> (i32, i32) {
    %c0_i32 = arith.constant 0 : i32
    %c0_i32_0 = arith.constant 0 : i32
    %c0_i32_1 = arith.constant 0 : i32
    return %c0_i32, %c0_i32_0 : i32, i32
  }
  func.func @transform_15(%arg0: i32) -> (i32, i32) {
    %c0_i32 = arith.constant 0 : i32
    %c0_i32_0 = arith.constant 0 : i32
    %c0_i32_1 = arith.constant 0 : i32
    return %c0_i32, %c0_i32_0 : i32, i32
  }
  func.func @transform_16(%arg0: i32) -> (i32, i32) {
    %c0_i32 = arith.constant 0 : i32
    %c0_i32_0 = arith.constant 0 : i32
    %c0_i32_1 = arith.constant 0 : i32
    return %c0_i32, %c0_i32_0 : i32, i32
  }
  func.func @transform_17(%arg0: i32) -> (i32, i32) {
    %c0_i32 = arith.constant 0 : i32
    %c0_i32_0 = arith.constant 0 : i32
    %c0_i32_1 = arith.constant 0 : i32
    return %c0_i32, %c0_i32_0 : i32, i32
  }
  func.func @transform_18(%arg0: i32) -> (i32, i32) {
    %c0_i32 = arith.constant 0 : i32
    %c0_i32_0 = arith.constant 0 : i32
    %c0_i32_1 = arith.constant 0 : i32
    return %c0_i32, %c0_i32_0 : i32, i32
  }
  func.func @transform_19(%arg0: i32) -> (i32, i32) {
    %c0_i32 = arith.constant 0 : i32
    %c0_i32_0 = arith.constant 0 : i32
    %c0_i32_1 = arith.constant 0 : i32
    return %c0_i32, %c0_i32_0 : i32, i32
  }
  func.func @transform_20(%arg0: i32) -> (i32, i32) {
    %c0_i32 = arith.constant 0 : i32
    %c0_i32_0 = arith.constant 0 : i32
    %c0_i32_1 = arith.constant 0 : i32
    return %c0_i32, %c0_i32_0 : i32, i32
  }
  func.func @transform_21(%arg0: i32) -> (i32, i32) {
    %c0_i32 = arith.constant 0 : i32
    %c0_i32_0 = arith.constant 0 : i32
    %c0_i32_1 = arith.constant 0 : i32
    return %c0_i32, %c0_i32_0 : i32, i32
  }
  func.func @transform_22(%arg0: i32) -> (i32, i32) {
    %c0_i32 = arith.constant 0 : i32
    %c0_i32_0 = arith.constant 0 : i32
    %c0_i32_1 = arith.constant 0 : i32
    return %c0_i32, %c0_i32_0 : i32, i32
  }
  func.func @transform_23(%arg0: i32) -> (i32, i32) {
    %c0_i32 = arith.constant 0 : i32
    %c0_i32_0 = arith.constant 0 : i32
    %c0_i32_1 = arith.constant 0 : i32
    return %c0_i32, %c0_i32_0 : i32, i32
  }
  func.func @transform_24(%arg0: i32) -> (i32, i32) {
    %c0_i32 = arith.constant 0 : i32
    %c0_i32_0 = arith.constant 0 : i32
    %c0_i32_1 = arith.constant 0 : i32
    return %c0_i32, %c0_i32_0 : i32, i32
  }
  func.func @transform_25(%arg0: i32) -> (i32, i32) {
    %c0_i32 = arith.constant 0 : i32
    %c0_i32_0 = arith.constant 0 : i32
    %c0_i32_1 = arith.constant 0 : i32
    return %c0_i32, %c0_i32_0 : i32, i32
  }
  func.func @transform_26(%arg0: i32) -> (i32, i32) {
    %c0_i32 = arith.constant 0 : i32
    %c0_i32_0 = arith.constant 0 : i32
    %c0_i32_1 = arith.constant 0 : i32
    return %c0_i32, %c0_i32_0 : i32, i32
  }
  func.func @transform_27(%arg0: i32) -> (i32, i32) {
    %c0_i32 = arith.constant 0 : i32
    %c0_i32_0 = arith.constant 0 : i32
    %c0_i32_1 = arith.constant 0 : i32
    return %c0_i32, %c0_i32_0 : i32, i32
  }
  func.func @transform_28(%arg0: i32) -> (i32, i32) {
    %c0_i32 = arith.constant 0 : i32
    %c0_i32_0 = arith.constant 0 : i32
    %c0_i32_1 = arith.constant 0 : i32
    return %c0_i32, %c0_i32_0 : i32, i32
  }
  func.func @transform_29(%arg0: i32) -> (i32, i32) {
    %c0_i32 = arith.constant 0 : i32
    %c0_i32_0 = arith.constant 0 : i32
    %c0_i32_1 = arith.constant 0 : i32
    return %c0_i32, %c0_i32_0 : i32, i32
  }
  func.func @transform_30(%arg0: i32) -> (i32, i32, i32) {
    %c0_i32 = arith.constant 0 : i32
    %c0_i32_0 = arith.constant 0 : i32
    %c0_i32_1 = arith.constant 0 : i32
    return %arg0, %c0_i32, %c0_i32_0 : i32, i32, i32
  }
}

</mosaic_0001>

<llo_original>
// kernel: tpu_custom_call.1
$region0: #{tpu_custom_call.1}
  #allocation0 [shape = 'u32[]', space=smem, size = 0x4, offset = 0x4, fixed_abs, tag = 'smem constant byte address 0x4 - core index']
  #allocation1 [shape = 'u32[144,128]{1,0:T(1,128)}', space=vmem, size = 0x12000, scoped, tag = 'internal scratch']
  %s0 = inlined_call_operand.smem [shape: u32[31], index: -1, kind: input, shape index: {}]
  %s1 = sld [smem:[%s0]]
  %s2 = scalar_lea.smem %s0, 1
  %s3 = sld [smem:[%s2]]
  %s4 = scalar_lea.smem %s0, 2
  %s5 = sld [smem:[%s4]]
  %s6 = scalar_lea.smem %s0, 3
  %s7 = sld [smem:[%s6]]
  %s8 = scalar_lea.smem %s0, 4
  %s9 = sld [smem:[%s8]]
  %s10 = scalar_lea.smem %s0, 5
  %s11 = sld [smem:[%s10]]
  %s12 = scalar_lea.smem %s0, 6
  %s13 = sld [smem:[%s12]]
  %s14 = scalar_lea.smem %s0, 7
  %s15 = sld [smem:[%s14]]
  %s16 = scalar_lea.smem %s0, 8
  %s17 = sld [smem:[%s16]]
  %s18 = scalar_lea.smem %s0, 9
  %s19 = sld [smem:[%s18]]
  %s20 = scalar_lea.smem %s0, 10
  %s21 = sld [smem:[%s20]]
  %s22 = scalar_lea.smem %s0, 11
  %s23 = sld [smem:[%s22]]
  %s24 = scalar_lea.smem %s0, 12
  %s25 = sld [smem:[%s24]]
  %s26 = scalar_lea.smem %s0, 13
  %s27 = sld [smem:[%s26]]
  %s28 = scalar_lea.smem %s0, 14
  %s29 = sld [smem:[%s28]]
  %s30 = scalar_lea.smem %s0, 15
  %s31 = sld [smem:[%s30]]
  %s32 = scalar_lea.smem %s0, 16
  %s33 = sld [smem:[%s32]]
  %s34 = scalar_lea.smem %s0, 17
  %s35 = sld [smem:[%s34]]
  %s36 = scalar_lea.smem %s0, 18
  %s37 = sld [smem:[%s36]]
  %s38 = scalar_lea.smem %s0, 19
  %s39 = sld [smem:[%s38]]
  %s40 = scalar_lea.smem %s0, 20
  %s41 = sld [smem:[%s40]]
  %s42 = scalar_lea.smem %s0, 21
  %s43 = sld [smem:[%s42]]
  %s44 = scalar_lea.smem %s0, 22
  %s45 = sld [smem:[%s44]]
  %s46 = scalar_lea.smem %s0, 23
  %s47 = sld [smem:[%s46]]
  %s48 = scalar_lea.smem %s0, 24
  %s49 = sld [smem:[%s48]]
  %s50 = scalar_lea.smem %s0, 25
  %s51 = sld [smem:[%s50]]
  %s52 = scalar_lea.smem %s0, 26
  %s53 = sld [smem:[%s52]]
  %s54 = scalar_lea.smem %s0, 27
  %s55 = sld [smem:[%s54]]
  %s56 = scalar_lea.smem %s0, 28
  %s57 = sld [smem:[%s56]]
  %s58 = scalar_lea.smem %s0, 29
  %s59 = sld [smem:[%s58]]
  %s60 = scalar_lea.smem %s0, 30
  %s61 = sld [smem:[%s60]]
  %s62 = sld [smem:[#allocation0]]
  $region197: #{tpu_custom_call.1} parent=0
    _
  %s64 = ssub.s32 1, %s62
  %s65 = scalar_select 0, %s64, %s62
  $region1: #{tpu_custom_call.1} parent=0
    #allocation2 [shape = 'u8[16384]{0}', space=vmem, size = 0x4000, scoped, tag = 'input window, operand 0']
    #allocation3 [shape = 's32[2]{0}', space=sflag, size = 0x8, scoped, tag = 'scoped memory for tpu_custom_call.1']
    #allocation4 [shape = 's32[2]{0}', space=sflag, size = 0x8, scoped, tag = 'scoped memory for tpu_custom_call.1']
    #allocation5 [shape = 'u8[16384]{0}', space=vmem, size = 0x4000, scoped, tag = 'input window, operand 1']
    #allocation6 [shape = 's32[2]{0}', space=sflag, size = 0x8, scoped, tag = 'scoped memory for tpu_custom_call.1']
    #allocation7 [shape = 'u8[16384]{0}', space=vmem, size = 0x4000, scoped, tag = 'input window, operand 4, single buffered']
    #allocation8 [shape = 'u8[16384]{0}', space=vmem, size = 0x4000, scoped, tag = 'input window, operand 5, single buffered']
    #allocation9 [shape = 's32[1]{0}', space=sflag, size = 0x4, scoped, tag = 'scoped memory for tpu_custom_call.1']
    #allocation10 [shape = 'u8[16384]{0}', space=vmem, size = 0x4000, scoped, tag = 'input window, operand 6, single buffered']
    #allocation11 [shape = 'u8[16384]{0}', space=vmem, size = 0x4000, scoped, tag = 'input window, operand 10, single buffered']
    #allocation12 [shape = 's32[1]{0}', space=sflag, size = 0x4, scoped, tag = 'scoped memory for tpu_custom_call.1']
    #allocation13 [shape = 'u8[16384]{0}', space=vmem, size = 0x4000, scoped, tag = 'input window, operand 14, single buffered']
    #allocation14 [shape = 'u8[16384]{0}', space=vmem, size = 0x4000, scoped, tag = 'input window, operand 15, single buffered']
    #allocation15 [shape = 's32[1]{0}', space=sflag, size = 0x4, scoped, tag = 'scoped memory for tpu_custom_call.1']
    #allocation16 [shape = 'u8[16384]{0}', space=vmem, size = 0x4000, scoped, tag = 'input window, operand 16, single buffered']
    #allocation17 [shape = 'u8[16384]{0}', space=vmem, size = 0x4000, scoped, tag = 'input window, operand 20, single buffered']
    #allocation18 [shape = 's32[1]{0}', space=sflag, size = 0x4, scoped, tag = 'scoped memory for tpu_custom_call.1']
    #allocation19 [shape = 'u8[16384]{0}', space=vmem, size = 0x4000, scoped, tag = 'input window, operand 24, single buffered']
    #allocation20 [shape = 'u8[16384]{0}', space=vmem, size = 0x4000, scoped, tag = 'output window, operand 0']
    %66 = vsyncpa [#allocation3], 0
    %s67 = scalar_lea.sflag [#allocation3], 1
    %68 = vsyncpa %s67, 0
    %69 = vsyncpa [#allocation6], 0
    %s70 = scalar_lea.sflag [#allocation6], 1
    %71 = vsyncpa %s70, 0
    %72 = vsyncpa [#allocation9], 0
    %73 = vsyncpa [#allocation12], 0
    %74 = vsyncpa [#allocation15], 0
    %75 = vsyncpa [#allocation18], 0
    %76 = vsyncpa [#allocation4], 0
    %s77 = scalar_lea.sflag [#allocation4], 1
    %78 = vsyncpa %s77, 0
    loop: start=0, step=1, limit=4
    $region2: #{tpu_custom_call.1} parent=1 // loop_pre_header
      _
    $region3: #{tpu_custom_call.1} parent=1 // loop_header
      %s80 = sphi 0, %s84
      %p81 = scmp.ge.s32.totalorder %s80, 4
      %s90 = sphi 0, %s92
      %s93 = sphi 0, %s90
      %s94 = sphi 0, %s93
      %s110 = sphi 0, %s94
      %s116 = sphi 0, %s118
      %s119 = sphi 0, %s116
      %s120 = sphi 0, %s119
      %s136 = sphi 0, %s120
      %s142 = sphi 0, %s144
      %s145 = sphi 0, %s142
      %s146 = sphi 0, %s145
      %s162 = sphi 0, %s146
      %s168 = sphi 0, %s170
      %s171 = sphi 0, %s168
      %s172 = sphi 0, %s171
      %s188 = sphi 0, %s172
      %s192 = sphi 0, %s192
      %s194 = sphi 0, %s192
      %s195 = sphi 0, %s194
      %s209 = sphi 0, %s195
      %s213 = sphi 0, %s213
      %s215 = sphi 0, %s213
      %s216 = sphi 0, %s215
      %s230 = sphi 0, %s216
      %s234 = sphi 0, %s234
      %s236 = sphi 0, %s234
      %s237 = sphi 0, %s236
      %s251 = sphi 0, %s237
      %s255 = sphi 0, %s255
      %s257 = sphi 0, %s255
      %s258 = sphi 0, %s257
      %s272 = sphi 0, %s258
      %s276 = sphi 0, %s276
      %s278 = sphi 0, %s276
      %s279 = sphi 0, %s278
      %s293 = sphi 0, %s279
      %s297 = sphi 0, %s297
      %s299 = sphi 0, %s297
      %s300 = sphi 0, %s299
      %s314 = sphi 0, %s300
      %s318 = sphi 0, %s318
      %s320 = sphi 0, %s318
      %s321 = sphi 0, %s320
      %s335 = sphi 0, %s321
      %s339 = sphi 0, %s339
      %s341 = sphi 0, %s339
      %s342 = sphi 0, %s341
      %s356 = sphi 0, %s342
      %s360 = sphi 0, %s360
      %s362 = sphi 0, %s360
      %s363 = sphi 0, %s362
      %s377 = sphi 0, %s363
      %s381 = sphi 0, %s381
      %s383 = sphi 0, %s381
      %s384 = sphi 0, %s383
      %s398 = sphi 0, %s384
      %s402 = sphi 0, %s402
      %s404 = sphi 0, %s402
      %s405 = sphi 0, %s404
      %s419 = sphi 0, %s405
      %s423 = sphi 0, %s423
      %s425 = sphi 0, %s423
      %s426 = sphi 0, %s425
      %s440 = sphi 0, %s426
      %s444 = sphi 0, %s444
      %s446 = sphi 0, %s444
      %s447 = sphi 0, %s446
      %s461 = sphi 0, %s447
      %s465 = sphi 0, %s465
      %s467 = sphi 0, %s465
      %s468 = sphi 0, %s467
      %s482 = sphi 0, %s468
      %s486 = sphi 0, %s486
      %s488 = sphi 0, %s486
      %s489 = sphi 0, %s488
      %s503 = sphi 0, %s489
      %s507 = sphi 0, %s507
      %s509 = sphi 0, %s507
      %s510 = sphi 0, %s509
      %s524 = sphi 0, %s510
      %s528 = sphi 0, %s528
      %s530 = sphi 0, %s528
      %s531 = sphi 0, %s530
      %s545 = sphi 0, %s531
      %s549 = sphi 0, %s549
      %s551 = sphi 0, %s549
      %s552 = sphi 0, %s551
      %s566 = sphi 0, %s552
      %s570 = sphi 0, %s570
      %s572 = sphi 0, %s570
      %s573 = sphi 0, %s572
      %s587 = sphi 0, %s573
      %s591 = sphi 0, %s591
      %s593 = sphi 0, %s591
      %s594 = sphi 0, %s593
      %s608 = sphi 0, %s594
      %s612 = sphi 0, %s612
      %s614 = sphi 0, %s612
      %s615 = sphi 0, %s614
      %s629 = sphi 0, %s615
      %s633 = sphi 0, %s633
      %s635 = sphi 0, %s633
      %s636 = sphi 0, %s635
      %s650 = sphi 0, %s636
      %s654 = sphi 0, %s654
      %s656 = sphi 0, %s654
      %s657 = sphi 0, %s656
      %s671 = sphi 0, %s657
      %s675 = sphi 0, %s675
      %s677 = sphi 0, %s675
      %s678 = sphi 0, %s677
      %s692 = sphi 0, %s678
      %s696 = sphi 0, %s696
      %s698 = sphi 0, %s696
      %s699 = sphi 0, %s698
      %s713 = sphi 0, %s699
      %s717 = sphi 0, %s717
      %s719 = sphi 0, %s717
      %s720 = sphi 0, %s719
      %s734 = sphi 0, %s720
      %s740 = sphi 0, %s742
      %s743 = sphi 0, %s740
      %s744 = sphi 0, %s743
      %s760 = sphi 0, %s744
    $region4: #{tpu_custom_call.1} parent=1 // loop_header_branch
      %83 = sbr.rel (%p81) target = $region8
    $region5: #{tpu_custom_call.1} parent=1 // loop_body
      %s85 = ssub.s32 %s80, 1
      %s86 = ssub.s32 %s80, 2
      %s87 = sadd.s32 %s80, 1
      %s88 = ssub.s32 %s80, %s87
      %p89 = scmp.eq.s32.totalorder %s88, 0
      %s91 = sadd.s32 %s90, 1
      %s92 = scalar_select %p89, %s90, %s91
      %p95 = pneg %p89
      %p96 = scmp.eq.s32.totalorder %s80, 1
      %p97 = por %p95, %p96
      %p98 = scmp.ne.s32.totalorder %s90, %s93
      %p99 = scmp.eq.s32.totalorder %s80, 0
      %p100 = por %p98, %p99
      %p101 = scmp.ne.s32.totalorder %s90, %s93
      %p102 = scmp.eq.s32.totalorder %s85, 1
      %p103 = por %p101, %p102
      %p104 = scmp.ne.s32.totalorder %s93, %s94
      %p105 = scmp.eq.s32.totalorder %s85, 0
      %p106 = por %p104, %p105
      %p107 = scmp.ne.s32.totalorder %s93, %s94
      %p108 = scmp.eq.s32.totalorder %s86, 1
      %p109 = por %p107, %p108
      %p111 = scmp.ne.s32.totalorder %s94, %s110
      %p112 = scmp.eq.s32.totalorder %s86, 0
      %p113 = por %p111, %p112
      %s114 = ssub.s32 %s80, %s87
      %p115 = scmp.eq.s32.totalorder %s114, 0
      %s117 = sadd.s32 %s116, 1
      %s118 = scalar_select %p115, %s116, %s117
      %p121 = pneg %p115
      %p122 = scmp.eq.s32.totalorder %s80, 1
      %p123 = por %p121, %p122
      %p124 = scmp.ne.s32.totalorder %s116, %s119
      %p125 = scmp.eq.s32.totalorder %s80, 0
      %p126 = por %p124, %p125
      %p127 = scmp.ne.s32.totalorder %s116, %s119
      %p128 = scmp.eq.s32.totalorder %s85, 1
      %p129 = por %p127, %p128
      %p130 = scmp.ne.s32.totalorder %s119, %s120
      %p131 = scmp.eq.s32.totalorder %s85, 0
      %p132 = por %p130, %p131
      %p133 = scmp.ne.s32.totalorder %s119, %s120
      %p134 = scmp.eq.s32.totalorder %s86, 1
      %p135 = por %p133, %p134
      %p137 = scmp.ne.s32.totalorder %s120, %s136
      %p138 = scmp.eq.s32.totalorder %s86, 0
      %p139 = por %p137, %p138
      %s140 = ssub.s32 %s80, %s87
      %p141 = scmp.eq.s32.totalorder %s140, 0
      %s143 = sadd.s32 %s142, 1
      %s144 = scalar_select %p141, %s142, %s143
      %p147 = pneg %p141
      %p148 = scmp.eq.s32.totalorder %s80, 1
      %p149 = por %p147, %p148
      %p150 = scmp.ne.s32.totalorder %s142, %s145
      %p151 = scmp.eq.s32.totalorder %s80, 0
      %p152 = por %p150, %p151
      %p153 = scmp.ne.s32.totalorder %s142, %s145
      %p154 = scmp.eq.s32.totalorder %s85, 1
      %p155 = por %p153, %p154
      %p156 = scmp.ne.s32.totalorder %s145, %s146
      %p157 = scmp.eq.s32.totalorder %s85, 0
      %p158 = por %p156, %p157
      %p159 = scmp.ne.s32.totalorder %s145, %s146
      %p160 = scmp.eq.s32.totalorder %s86, 1
      %p161 = por %p159, %p160
      %p163 = scmp.ne.s32.totalorder %s146, %s162
      %p164 = scmp.eq.s32.totalorder %s86, 0
      %p165 = por %p163, %p164
      %s166 = ssub.s32 %s80, %s87
      %p167 = scmp.eq.s32.totalorder %s166, 0
      %s169 = sadd.s32 %s168, 1
      %s170 = scalar_select %p167, %s168, %s169
      %p173 = pneg %p167
      %p174 = scmp.eq.s32.totalorder %s80, 1
      %p175 = por %p173, %p174
      %p176 = scmp.ne.s32.totalorder %s168, %s171
      %p177 = scmp.eq.s32.totalorder %s80, 0
      %p178 = por %p176, %p177
      %p179 = scmp.ne.s32.totalorder %s168, %s171
      %p180 = scmp.eq.s32.totalorder %s85, 1
      %p181 = por %p179, %p180
      %p182 = scmp.ne.s32.totalorder %s171, %s172
      %p183 = scmp.eq.s32.totalorder %s85, 0
      %p184 = por %p182, %p183
      %p185 = scmp.ne.s32.totalorder %s171, %s172
      %p186 = scmp.eq.s32.totalorder %s86, 1
      %p187 = por %p185, %p186
      %p189 = scmp.ne.s32.totalorder %s172, %s188
      %p190 = scmp.eq.s32.totalorder %s86, 0
      %p191 = por %p189, %p190
      %s193 = sadd.s32 %s192, 1
      %p196 = scmp.eq.s32.totalorder %s80, 1
      %p197 = scmp.ne.s32.totalorder %s192, %s194
      %p198 = scmp.eq.s32.totalorder %s80, 0
      %p199 = por %p197, %p198
      %p200 = scmp.ne.s32.totalorder %s192, %s194
      %p201 = scmp.eq.s32.totalorder %s85, 1
      %p202 = por %p200, %p201
      %p203 = scmp.ne.s32.totalorder %s194, %s195
      %p204 = scmp.eq.s32.totalorder %s85, 0
      %p205 = por %p203, %p204
      %p206 = scmp.ne.s32.totalorder %s194, %s195
      %p207 = scmp.eq.s32.totalorder %s86, 1
      %p208 = por %p206, %p207
      %p210 = scmp.ne.s32.totalorder %s195, %s209
      %p211 = scmp.eq.s32.totalorder %s86, 0
      %p212 = por %p210, %p211
      %s214 = sadd.s32 %s213, 1
      %p217 = scmp.eq.s32.totalorder %s80, 1
      %p218 = scmp.ne.s32.totalorder %s213, %s215
      %p219 = scmp.eq.s32.totalorder %s80, 0
      %p220 = por %p218, %p219
      %p221 = scmp.ne.s32.totalorder %s213, %s215
      %p222 = scmp.eq.s32.totalorder %s85, 1
      %p223 = por %p221, %p222
      %p224 = scmp.ne.s32.totalorder %s215, %s216
      %p225 = scmp.eq.s32.totalorder %s85, 0
      %p226 = por %p224, %p225
      %p227 = scmp.ne.s32.totalorder %s215, %s216
      %p228 = scmp.eq.s32.totalorder %s86, 1
      %p229 = por %p227, %p228
      %p231 = scmp.ne.s32.totalorder %s216, %s230
      %p232 = scmp.eq.s32.totalorder %s86, 0
      %p233 = por %p231, %p232
      %s235 = sadd.s32 %s234, 1
      %p238 = scmp.eq.s32.totalorder %s80, 1
      %p239 = scmp.ne.s32.totalorder %s234, %s236
      %p240 = scmp.eq.s32.totalorder %s80, 0
      %p241 = por %p239, %p240
      %p242 = scmp.ne.s32.totalorder %s234, %s236
      %p243 = scmp.eq.s32.totalorder %s85, 1
      %p244 = por %p242, %p243
      %p245 = scmp.ne.s32.totalorder %s236, %s237
      %p246 = scmp.eq.s32.totalorder %s85, 0
      %p247 = por %p245, %p246
      %p248 = scmp.ne.s32.totalorder %s236, %s237
      %p249 = scmp.eq.s32.totalorder %s86, 1
      %p250 = por %p248, %p249
      %p252 = scmp.ne.s32.totalorder %s237, %s251
      %p253 = scmp.eq.s32.totalorder %s86, 0
      %p254 = por %p252, %p253
      %s256 = sadd.s32 %s255, 1
      %p259 = scmp.eq.s32.totalorder %s80, 1
      %p260 = scmp.ne.s32.totalorder %s255, %s257
      %p261 = scmp.eq.s32.totalorder %s80, 0
      %p262 = por %p260, %p261
      %p263 = scmp.ne.s32.totalorder %s255, %s257
      %p264 = scmp.eq.s32.totalorder %s85, 1
      %p265 = por %p263, %p264
      %p266 = scmp.ne.s32.totalorder %s257, %s258
      %p267 = scmp.eq.s32.totalorder %s85, 0
      %p268 = por %p266, %p267
      %p269 = scmp.ne.s32.totalorder %s257, %s258
      %p270 = scmp.eq.s32.totalorder %s86, 1
      %p271 = por %p269, %p270
      %p273 = scmp.ne.s32.totalorder %s258, %s272
      %p274 = scmp.eq.s32.totalorder %s86, 0
      %p275 = por %p273, %p274
      %s277 = sadd.s32 %s276, 1
      %p280 = scmp.eq.s32.totalorder %s80, 1
      %p281 = scmp.ne.s32.totalorder %s276, %s278
      %p282 = scmp.eq.s32.totalorder %s80, 0
      %p283 = por %p281, %p282
      %p284 = scmp.ne.s32.totalorder %s276, %s278
      %p285 = scmp.eq.s32.totalorder %s85, 1
      %p286 = por %p284, %p285
      %p287 = scmp.ne.s32.totalorder %s278, %s279
      %p288 = scmp.eq.s32.totalorder %s85, 0
      %p289 = por %p287, %p288
      %p290 = scmp.ne.s32.totalorder %s278, %s279
      %p291 = scmp.eq.s32.totalorder %s86, 1
      %p292 = por %p290, %p291
      %p294 = scmp.ne.s32.totalorder %s279, %s293
      %p295 = scmp.eq.s32.totalorder %s86, 0
      %p296 = por %p294, %p295
      %s298 = sadd.s32 %s297, 1
      %p301 = scmp.eq.s32.totalorder %s80, 1
      %p302 = scmp.ne.s32.totalorder %s297, %s299
      %p303 = scmp.eq.s32.totalorder %s80, 0
      %p304 = por %p302, %p303
      %p305 = scmp.ne.s32.totalorder %s297, %s299
      %p306 = scmp.eq.s32.totalorder %s85, 1
      %p307 = por %p305, %p306
      %p308 = scmp.ne.s32.totalorder %s299, %s300
      %p309 = scmp.eq.s32.totalorder %s85, 0
      %p310 = por %p308, %p309
      %p311 = scmp.ne.s32.totalorder %s299, %s300
      %p312 = scmp.eq.s32.totalorder %s86, 1
      %p313 = por %p311, %p312
      %p315 = scmp.ne.s32.totalorder %s300, %s314
      %p316 = scmp.eq.s32.totalorder %s86, 0
      %p317 = por %p315, %p316
      %s319 = sadd.s32 %s318, 1
      %p322 = scmp.eq.s32.totalorder %s80, 1
      %p323 = scmp.ne.s32.totalorder %s318, %s320
      %p324 = scmp.eq.s32.totalorder %s80, 0
      %p325 = por %p323, %p324
      %p326 = scmp.ne.s32.totalorder %s318, %s320
      %p327 = scmp.eq.s32.totalorder %s85, 1
      %p328 = por %p326, %p327
      %p329 = scmp.ne.s32.totalorder %s320, %s321
      %p330 = scmp.eq.s32.totalorder %s85, 0
      %p331 = por %p329, %p330
      %p332 = scmp.ne.s32.totalorder %s320, %s321
      %p333 = scmp.eq.s32.totalorder %s86, 1
      %p334 = por %p332, %p333
      %p336 = scmp.ne.s32.totalorder %s321, %s335
      %p337 = scmp.eq.s32.totalorder %s86, 0
      %p338 = por %p336, %p337
      %s340 = sadd.s32 %s339, 1
      %p343 = scmp.eq.s32.totalorder %s80, 1
      %p344 = scmp.ne.s32.totalorder %s339, %s341
      %p345 = scmp.eq.s32.totalorder %s80, 0
      %p346 = por %p344, %p345
      %p347 = scmp.ne.s32.totalorder %s339, %s341
      %p348 = scmp.eq.s32.totalorder %s85, 1
      %p349 = por %p347, %p348
      %p350 = scmp.ne.s32.totalorder %s341, %s342
      %p351 = scmp.eq.s32.totalorder %s85, 0
      %p352 = por %p350, %p351
      %p353 = scmp.ne.s32.totalorder %s341, %s342
      %p354 = scmp.eq.s32.totalorder %s86, 1
      %p355 = por %p353, %p354
      %p357 = scmp.ne.s32.totalorder %s342, %s356
      %p358 = scmp.eq.s32.totalorder %s86, 0
      %p359 = por %p357, %p358
      %s361 = sadd.s32 %s360, 1
      %p364 = scmp.eq.s32.totalorder %s80, 1
      %p365 = scmp.ne.s32.totalorder %s360, %s362
      %p366 = scmp.eq.s32.totalorder %s80, 0
      %p367 = por %p365, %p366
      %p368 = scmp.ne.s32.totalorder %s360, %s362
      %p369 = scmp.eq.s32.totalorder %s85, 1
      %p370 = por %p368, %p369
      %p371 = scmp.ne.s32.totalorder %s362, %s363
      %p372 = scmp.eq.s32.totalorder %s85, 0
      %p373 = por %p371, %p372
      %p374 = scmp.ne.s32.totalorder %s362, %s363
      %p375 = scmp.eq.s32.totalorder %s86, 1
      %p376 = por %p374, %p375
      %p378 = scmp.ne.s32.totalorder %s363, %s377
      %p379 = scmp.eq.s32.totalorder %s86, 0
      %p380 = por %p378, %p379
      %s382 = sadd.s32 %s381, 1
      %p385 = scmp.eq.s32.totalorder %s80, 1
      %p386 = scmp.ne.s32.totalorder %s381, %s383
      %p387 = scmp.eq.s32.totalorder %s80, 0
      %p388 = por %p386, %p387
      %p389 = scmp.ne.s32.totalorder %s381, %s383
      %p390 = scmp.eq.s32.totalorder %s85, 1
      %p391 = por %p389, %p390
      %p392 = scmp.ne.s32.totalorder %s383, %s384
      %p393 = scmp.eq.s32.totalorder %s85, 0
      %p394 = por %p392, %p393
      %p395 = scmp.ne.s32.totalorder %s383, %s384
      %p396 = scmp.eq.s32.totalorder %s86, 1
      %p397 = por %p395, %p396
      %p399 = scmp.ne.s32.totalorder %s384, %s398
      %p400 = scmp.eq.s32.totalorder %s86, 0
      %p401 = por %p399, %p400
      %s403 = sadd.s32 %s402, 1
      %p406 = scmp.eq.s32.totalorder %s80, 1
      %p407 = scmp.ne.s32.totalorder %s402, %s404
      %p408 = scmp.eq.s32.totalorder %s80, 0
      %p409 = por %p407, %p408
      %p410 = scmp.ne.s32.totalorder %s402, %s404
      %p411 = scmp.eq.s32.totalorder %s85, 1
      %p412 = por %p410, %p411
      %p413 = scmp.ne.s32.totalorder %s404, %s405
      %p414 = scmp.eq.s32.totalorder %s85, 0
      %p415 = por %p413, %p414
      %p416 = scmp.ne.s32.totalorder %s404, %s405
      %p417 = scmp.eq.s32.totalorder %s86, 1
      %p418 = por %p416, %p417
      %p420 = scmp.ne.s32.totalorder %s405, %s419
      %p421 = scmp.eq.s32.totalorder %s86, 0
      %p422 = por %p420, %p421
      %s424 = sadd.s32 %s423, 1
      %p427 = scmp.eq.s32.totalorder %s80, 1
      %p428 = scmp.ne.s32.totalorder %s423, %s425
      %p429 = scmp.eq.s32.totalorder %s80, 0
      %p430 = por %p428, %p429
      %p431 = scmp.ne.s32.totalorder %s423, %s425
      %p432 = scmp.eq.s32.totalorder %s85, 1
      %p433 = por %p431, %p432
      %p434 = scmp.ne.s32.totalorder %s425, %s426
      %p435 = scmp.eq.s32.totalorder %s85, 0
      %p436 = por %p434, %p435
      %p437 = scmp.ne.s32.totalorder %s425, %s426
      %p438 = scmp.eq.s32.totalorder %s86, 1
      %p439 = por %p437, %p438
      %p441 = scmp.ne.s32.totalorder %s426, %s440
      %p442 = scmp.eq.s32.totalorder %s86, 0
      %p443 = por %p441, %p442
      %s445 = sadd.s32 %s444, 1
      %p448 = scmp.eq.s32.totalorder %s80, 1
      %p449 = scmp.ne.s32.totalorder %s444, %s446
      %p450 = scmp.eq.s32.totalorder %s80, 0
      %p451 = por %p449, %p450
      %p452 = scmp.ne.s32.totalorder %s444, %s446
      %p453 = scmp.eq.s32.totalorder %s85, 1
      %p454 = por %p452, %p453
      %p455 = scmp.ne.s32.totalorder %s446, %s447
      %p456 = scmp.eq.s32.totalorder %s85, 0
      %p457 = por %p455, %p456
      %p458 = scmp.ne.s32.totalorder %s446, %s447
      %p459 = scmp.eq.s32.totalorder %s86, 1
      %p460 = por %p458, %p459
      %p462 = scmp.ne.s32.totalorder %s447, %s461
      %p463 = scmp.eq.s32.totalorder %s86, 0
      %p464 = por %p462, %p463
      %s466 = sadd.s32 %s465, 1
      %p469 = scmp.eq.s32.totalorder %s80, 1
      %p470 = scmp.ne.s32.totalorder %s465, %s467
      %p471 = scmp.eq.s32.totalorder %s80, 0
      %p472 = por %p470, %p471
      %p473 = scmp.ne.s32.totalorder %s465, %s467
      %p474 = scmp.eq.s32.totalorder %s85, 1
      %p475 = por %p473, %p474
      %p476 = scmp.ne.s32.totalorder %s467, %s468
      %p477 = scmp.eq.s32.totalorder %s85, 0
      %p478 = por %p476, %p477
      %p479 = scmp.ne.s32.totalorder %s467, %s468
      %p480 = scmp.eq.s32.totalorder %s86, 1
      %p481 = por %p479, %p480
      %p483 = scmp.ne.s32.totalorder %s468, %s482
      %p484 = scmp.eq.s32.totalorder %s86, 0
      %p485 = por %p483, %p484
      %s487 = sadd.s32 %s486, 1
      %p490 = scmp.eq.s32.totalorder %s80, 1
      %p491 = scmp.ne.s32.totalorder %s486, %s488
      %p492 = scmp.eq.s32.totalorder %s80, 0
      %p493 = por %p491, %p492
      %p494 = scmp.ne.s32.totalorder %s486, %s488
      %p495 = scmp.eq.s32.totalorder %s85, 1
      %p496 = por %p494, %p495
      %p497 = scmp.ne.s32.totalorder %s488, %s489
      %p498 = scmp.eq.s32.totalorder %s85, 0
      %p499 = por %p497, %p498
      %p500 = scmp.ne.s32.totalorder %s488, %s489
      %p501 = scmp.eq.s32.totalorder %s86, 1
      %p502 = por %p500, %p501
      %p504 = scmp.ne.s32.totalorder %s489, %s503
      %p505 = scmp.eq.s32.totalorder %s86, 0
      %p506 = por %p504, %p505
      %s508 = sadd.s32 %s507, 1
      %p511 = scmp.eq.s32.totalorder %s80, 1
      %p512 = scmp.ne.s32.totalorder %s507, %s509
      %p513 = scmp.eq.s32.totalorder %s80, 0
      %p514 = por %p512, %p513
      %p515 = scmp.ne.s32.totalorder %s507, %s509
      %p516 = scmp.eq.s32.totalorder %s85, 1
      %p517 = por %p515, %p516
      %p518 = scmp.ne.s32.totalorder %s509, %s510
      %p519 = scmp.eq.s32.totalorder %s85, 0
      %p520 = por %p518, %p519
      %p521 = scmp.ne.s32.totalorder %s509, %s510
      %p522 = scmp.eq.s32.totalorder %s86, 1
      %p523 = por %p521, %p522
      %p525 = scmp.ne.s32.totalorder %s510, %s524
      %p526 = scmp.eq.s32.totalorder %s86, 0
      %p527 = por %p525, %p526
      %s529 = sadd.s32 %s528, 1
      %p532 = scmp.eq.s32.totalorder %s80, 1
      %p533 = scmp.ne.s32.totalorder %s528, %s530
      %p534 = scmp.eq.s32.totalorder %s80, 0
      %p535 = por %p533, %p534
      %p536 = scmp.ne.s32.totalorder %s528, %s530
      %p537 = scmp.eq.s32.totalorder %s85, 1
      %p538 = por %p536, %p537
      %p539 = scmp.ne.s32.totalorder %s530, %s531
      %p540 = scmp.eq.s32.totalorder %s85, 0
      %p541 = por %p539, %p540
      %p542 = scmp.ne.s32.totalorder %s530, %s531
      %p543 = scmp.eq.s32.totalorder %s86, 1
      %p544 = por %p542, %p543
      %p546 = scmp.ne.s32.totalorder %s531, %s545
      %p547 = scmp.eq.s32.totalorder %s86, 0
      %p548 = por %p546, %p547
      %s550 = sadd.s32 %s549, 1
      %p553 = scmp.eq.s32.totalorder %s80, 1
      %p554 = scmp.ne.s32.totalorder %s549, %s551
      %p555 = scmp.eq.s32.totalorder %s80, 0
      %p556 = por %p554, %p555
      %p557 = scmp.ne.s32.totalorder %s549, %s551
      %p558 = scmp.eq.s32.totalorder %s85, 1
      %p559 = por %p557, %p558
      %p560 = scmp.ne.s32.totalorder %s551, %s552
      %p561 = scmp.eq.s32.totalorder %s85, 0
      %p562 = por %p560, %p561
      %p563 = scmp.ne.s32.totalorder %s551, %s552
      %p564 = scmp.eq.s32.totalorder %s86, 1
      %p565 = por %p563, %p564
      %p567 = scmp.ne.s32.totalorder %s552, %s566
      %p568 = scmp.eq.s32.totalorder %s86, 0
      %p569 = por %p567, %p568
      %s571 = sadd.s32 %s570, 1
      %p574 = scmp.eq.s32.totalorder %s80, 1
      %p575 = scmp.ne.s32.totalorder %s570, %s572
      %p576 = scmp.eq.s32.totalorder %s80, 0
      %p577 = por %p575, %p576
      %p578 = scmp.ne.s32.totalorder %s570, %s572
      %p579 = scmp.eq.s32.totalorder %s85, 1
      %p580 = por %p578, %p579
      %p581 = scmp.ne.s32.totalorder %s572, %s573
      %p582 = scmp.eq.s32.totalorder %s85, 0
      %p583 = por %p581, %p582
      %p584 = scmp.ne.s32.totalorder %s572, %s573
      %p585 = scmp.eq.s32.totalorder %s86, 1
      %p586 = por %p584, %p585
      %p588 = scmp.ne.s32.totalorder %s573, %s587
      %p589 = scmp.eq.s32.totalorder %s86, 0
      %p590 = por %p588, %p589
      %s592 = sadd.s32 %s591, 1
      %p595 = scmp.eq.s32.totalorder %s80, 1
      %p596 = scmp.ne.s32.totalorder %s591, %s593
      %p597 = scmp.eq.s32.totalorder %s80, 0
      %p598 = por %p596, %p597
      %p599 = scmp.ne.s32.totalorder %s591, %s593
      %p600 = scmp.eq.s32.totalorder %s85, 1
      %p601 = por %p599, %p600
      %p602 = scmp.ne.s32.totalorder %s593, %s594
      %p603 = scmp.eq.s32.totalorder %s85, 0
      %p604 = por %p602, %p603
      %p605 = scmp.ne.s32.totalorder %s593, %s594
      %p606 = scmp.eq.s32.totalorder %s86, 1
      %p607 = por %p605, %p606
      %p609 = scmp.ne.s32.totalorder %s594, %s608
      %p610 = scmp.eq.s32.totalorder %s86, 0
      %p611 = por %p609, %p610
      %s613 = sadd.s32 %s612, 1
      %p616 = scmp.eq.s32.totalorder %s80, 1
      %p617 = scmp.ne.s32.totalorder %s612, %s614
      %p618 = scmp.eq.s32.totalorder %s80, 0
      %p619 = por %p617, %p618
      %p620 = scmp.ne.s32.totalorder %s612, %s614
      %p621 = scmp.eq.s32.totalorder %s85, 1
      %p622 = por %p620, %p621
      %p623 = scmp.ne.s32.totalorder %s614, %s615
      %p624 = scmp.eq.s32.totalorder %s85, 0
      %p625 = por %p623, %p624
      %p626 = scmp.ne.s32.totalorder %s614, %s615
      %p627 = scmp.eq.s32.totalorder %s86, 1
      %p628 = por %p626, %p627
      %p630 = scmp.ne.s32.totalorder %s615, %s629
      %p631 = scmp.eq.s32.totalorder %s86, 0
      %p632 = por %p630, %p631
      %s634 = sadd.s32 %s633, 1
      %p637 = scmp.eq.s32.totalorder %s80, 1
      %p638 = scmp.ne.s32.totalorder %s633, %s635
      %p639 = scmp.eq.s32.totalorder %s80, 0
      %p640 = por %p638, %p639
      %p641 = scmp.ne.s32.totalorder %s633, %s635
      %p642 = scmp.eq.s32.totalorder %s85, 1
      %p643 = por %p641, %p642
      %p644 = scmp.ne.s32.totalorder %s635, %s636
      %p645 = scmp.eq.s32.totalorder %s85, 0
      %p646 = por %p644, %p645
      %p647 = scmp.ne.s32.totalorder %s635, %s636
      %p648 = scmp.eq.s32.totalorder %s86, 1
      %p649 = por %p647, %p648
      %p651 = scmp.ne.s32.totalorder %s636, %s650
      %p652 = scmp.eq.s32.totalorder %s86, 0
      %p653 = por %p651, %p652
      %s655 = sadd.s32 %s654, 1
      %p658 = scmp.eq.s32.totalorder %s80, 1
      %p659 = scmp.ne.s32.totalorder %s654, %s656
      %p660 = scmp.eq.s32.totalorder %s80, 0
      %p661 = por %p659, %p660
      %p662 = scmp.ne.s32.totalorder %s654, %s656
      %p663 = scmp.eq.s32.totalorder %s85, 1
      %p664 = por %p662, %p663
      %p665 = scmp.ne.s32.totalorder %s656, %s657
      %p666 = scmp.eq.s32.totalorder %s85, 0
      %p667 = por %p665, %p666
      %p668 = scmp.ne.s32.totalorder %s656, %s657
      %p669 = scmp.eq.s32.totalorder %s86, 1
      %p670 = por %p668, %p669
      %p672 = scmp.ne.s32.totalorder %s657, %s671
      %p673 = scmp.eq.s32.totalorder %s86, 0
      %p674 = por %p672, %p673
      %s676 = sadd.s32 %s675, 1
      %p679 = scmp.eq.s32.totalorder %s80, 1
      %p680 = scmp.ne.s32.totalorder %s675, %s677
      %p681 = scmp.eq.s32.totalorder %s80, 0
      %p682 = por %p680, %p681
      %p683 = scmp.ne.s32.totalorder %s675, %s677
      %p684 = scmp.eq.s32.totalorder %s85, 1
      %p685 = por %p683, %p684
      %p686 = scmp.ne.s32.totalorder %s677, %s678
      %p687 = scmp.eq.s32.totalorder %s85, 0
      %p688 = por %p686, %p687
      %p689 = scmp.ne.s32.totalorder %s677, %s678
      %p690 = scmp.eq.s32.totalorder %s86, 1
      %p691 = por %p689, %p690
      %p693 = scmp.ne.s32.totalorder %s678, %s692
      %p694 = scmp.eq.s32.totalorder %s86, 0
      %p695 = por %p693, %p694
      %s697 = sadd.s32 %s696, 1
      %p700 = scmp.eq.s32.totalorder %s80, 1
      %p701 = scmp.ne.s32.totalorder %s696, %s698
      %p702 = scmp.eq.s32.totalorder %s80, 0
      %p703 = por %p701, %p702
      %p704 = scmp.ne.s32.totalorder %s696, %s698
      %p705 = scmp.eq.s32.totalorder %s85, 1
      %p706 = por %p704, %p705
      %p707 = scmp.ne.s32.totalorder %s698, %s699
      %p708 = scmp.eq.s32.totalorder %s85, 0
      %p709 = por %p707, %p708
      %p710 = scmp.ne.s32.totalorder %s698, %s699
      %p711 = scmp.eq.s32.totalorder %s86, 1
      %p712 = por %p710, %p711
      %p714 = scmp.ne.s32.totalorder %s699, %s713
      %p715 = scmp.eq.s32.totalorder %s86, 0
      %p716 = por %p714, %p715
      %s718 = sadd.s32 %s717, 1
      %p721 = scmp.eq.s32.totalorder %s80, 1
      %p722 = scmp.ne.s32.totalorder %s717, %s719
      %p723 = scmp.eq.s32.totalorder %s80, 0
      %p724 = por %p722, %p723
      %p725 = scmp.ne.s32.totalorder %s717, %s719
      %p726 = scmp.eq.s32.totalorder %s85, 1
      %p727 = por %p725, %p726
      %p728 = scmp.ne.s32.totalorder %s719, %s720
      %p729 = scmp.eq.s32.totalorder %s85, 0
      %p730 = por %p728, %p729
      %p731 = scmp.ne.s32.totalorder %s719, %s720
      %p732 = scmp.eq.s32.totalorder %s86, 1
      %p733 = por %p731, %p732
      %p735 = scmp.ne.s32.totalorder %s720, %s734
      %p736 = scmp.eq.s32.totalorder %s86, 0
      %p737 = por %p735, %p736
      %s738 = ssub.s32 %s80, %s87
      %p739 = scmp.eq.s32.totalorder %s738, 0
      %s741 = sadd.s32 %s740, 1
      %s742 = scalar_select %p739, %s740, %s741
      %p745 = pneg %p739
      %p746 = scmp.eq.s32.totalorder %s80, 1
      %p747 = por %p745, %p746
      %p748 = scmp.ne.s32.totalorder %s740, %s743
      %p749 = scmp.eq.s32.totalorder %s80, 0
      %p750 = por %p748, %p749
      %p751 = scmp.ne.s32.totalorder %s740, %s743
      %p752 = scmp.eq.s32.totalorder %s85, 1
      %p753 = por %p751, %p752
      %p754 = scmp.ne.s32.totalorder %s743, %s744
      %p755 = scmp.eq.s32.totalorder %s85, 0
      %p756 = por %p754, %p755
      %p757 = scmp.ne.s32.totalorder %s743, %s744
      %p758 = scmp.eq.s32.totalorder %s86, 1
      %p759 = por %p757, %p758
      %p761 = scmp.ne.s32.totalorder %s744, %s760
      %p762 = scmp.eq.s32.totalorder %s86, 0
      %p763 = por %p761, %p762
      %p764 = scmp.le.s32.totalorder 1, %s80
      %p765 = scmp.lt.s32.totalorder %s80, 3
      %p766 = pnand %p764, %p765
      %p767 = pneg %p766
      // Predicated region
      $region9: #{tpu_custom_call.1} parent=5 // pred_check
        _
      $region10: #{tpu_custom_call.1} parent=5 // pred_check_branch
        %769 = sbr.rel (%p766) target = $region12
      $region11: #{tpu_custom_call.1} parent=5 // pred_region
        %s770 = ssub.s32 %s80, 1
        // Predicated region
        $region13: #{tpu_custom_call.1} parent=11 // pred_check
          %p771 = pneg %p205
        $region14: #{tpu_custom_call.1} parent=11 // pred_check_branch
          %773 = sbr.rel (%p771) target = $region16
        $region15: #{tpu_custom_call.1} parent=11 // pred_region
          %s775 = ssub.s32 512, 512
          %776 = vsyncadd [#allocation6], %s775
          %s777 = sshll.u32 [#allocation7], 4
          %s778 = int_to_ptr.vmem [resolvable:$true] %s777
          %783 = dma.hbm_to_vmem [thread:$0]  %s9, 512, %s778, [#allocation6], 128, 128, 8
        $region16: #{tpu_custom_call.1} parent=11 // pred_fallthru
          _
        // Predicated region
        $region17: #{tpu_custom_call.1} parent=11 // pred_check
          %p784 = pneg %p226
        $region18: #{tpu_custom_call.1} parent=11 // pred_check_branch
          %786 = sbr.rel (%p784) target = $region20
        $region19: #{tpu_custom_call.1} parent=11 // pred_region
          %s788 = ssub.s32 512, 512
          %789 = vsyncadd [#allocation9], %s788
          %s790 = sshll.u32 [#allocation8], 4
          %s791 = int_to_ptr.vmem [resolvable:$true] %s790
          %796 = dma.hbm_to_vmem [thread:$0]  %s11, 512, %s791, [#allocation9], 128, 128, 8
        $region20: #{tpu_custom_call.1} parent=11 // pred_fallthru
          _
        // Predicated region
        $region21: #{tpu_custom_call.1} parent=11 // pred_check
          %p797 = pneg %p247
        $region22: #{tpu_custom_call.1} parent=11 // pred_check_branch
          %799 = sbr.rel (%p797) target = $region24
        $region23: #{tpu_custom_call.1} parent=11 // pred_region
          %s801 = ssub.s32 512, 512
          %802 = vsyncadd [#allocation9], %s801
          %s803 = sshll.u32 [#allocation10], 4
          %s804 = int_to_ptr.vmem [resolvable:$true] %s803
          %809 = dma.hbm_to_vmem [thread:$0]  %s13, 512, %s804, [#allocation9], 128, 128, 8
        $region24: #{tpu_custom_call.1} parent=11 // pred_fallthru
          _
        // Predicated region
        $region25: #{tpu_custom_call.1} parent=11 // pred_check
          %p810 = pneg %p268
        $region26: #{tpu_custom_call.1} parent=11 // pred_check_branch
          %812 = sbr.rel (%p810) target = $region28
        $region27: #{tpu_custom_call.1} parent=11 // pred_region
          _
        $region28: #{tpu_custom_call.1} parent=11 // pred_fallthru
          _
        // Predicated region
        $region29: #{tpu_custom_call.1} parent=11 // pred_check
          %p813 = pneg %p289
        $region30: #{tpu_custom_call.1} parent=11 // pred_check_branch
          %815 = sbr.rel (%p813) target = $region32
        $region31: #{tpu_custom_call.1} parent=11 // pred_region
          _
        $region32: #{tpu_custom_call.1} parent=11 // pred_fallthru
          _
        // Predicated region
        $region33: #{tpu_custom_call.1} parent=11 // pred_check
          %p816 = pneg %p310
        $region34: #{tpu_custom_call.1} parent=11 // pred_check_branch
          %818 = sbr.rel (%p816) target = $region36
        $region35: #{tpu_custom_call.1} parent=11 // pred_region
          _
        $region36: #{tpu_custom_call.1} parent=11 // pred_fallthru
          _
        // Predicated region
        $region37: #{tpu_custom_call.1} parent=11 // pred_check
          %p819 = pneg %p331
        $region38: #{tpu_custom_call.1} parent=11 // pred_check_branch
          %821 = sbr.rel (%p819) target = $region40
        $region39: #{tpu_custom_call.1} parent=11 // pred_region
          %s823 = ssub.s32 512, 512
          %824 = vsyncadd [#allocation12], %s823
          %s825 = sshll.u32 [#allocation11], 4
          %s826 = int_to_ptr.vmem [resolvable:$true] %s825
          %831 = dma.hbm_to_vmem [thread:$0]  %s21, 512, %s826, [#allocation12], 128, 128, 8
        $region40: #{tpu_custom_call.1} parent=11 // pred_fallthru
          _
        // Predicated region
        $region41: #{tpu_custom_call.1} parent=11 // pred_check
          %p832 = pneg %p352
        $region42: #{tpu_custom_call.1} parent=11 // pred_check_branch
          %834 = sbr.rel (%p832) target = $region44
        $region43: #{tpu_custom_call.1} parent=11 // pred_region
          _
        $region44: #{tpu_custom_call.1} parent=11 // pred_fallthru
          _
        // Predicated region
        $region45: #{tpu_custom_call.1} parent=11 // pred_check
          %p835 = pneg %p373
        $region46: #{tpu_custom_call.1} parent=11 // pred_check_branch
          %837 = sbr.rel (%p835) target = $region48
        $region47: #{tpu_custom_call.1} parent=11 // pred_region
          _
        $region48: #{tpu_custom_call.1} parent=11 // pred_fallthru
          _
        // Predicated region
        $region49: #{tpu_custom_call.1} parent=11 // pred_check
          %p838 = pneg %p394
        $region50: #{tpu_custom_call.1} parent=11 // pred_check_branch
          %840 = sbr.rel (%p838) target = $region52
        $region51: #{tpu_custom_call.1} parent=11 // pred_region
          _
        $region52: #{tpu_custom_call.1} parent=11 // pred_fallthru
          _
        // Predicated region
        $region53: #{tpu_custom_call.1} parent=11 // pred_check
          %p841 = pneg %p415
        $region54: #{tpu_custom_call.1} parent=11 // pred_check_branch
          %843 = sbr.rel (%p841) target = $region56
        $region55: #{tpu_custom_call.1} parent=11 // pred_region
          %s845 = ssub.s32 512, 512
          %846 = vsyncadd [#allocation12], %s845
          %s847 = sshll.u32 [#allocation13], 4
          %s848 = int_to_ptr.vmem [resolvable:$true] %s847
          %853 = dma.hbm_to_vmem [thread:$0]  %s29, 512, %s848, [#allocation12], 128, 128, 8
        $region56: #{tpu_custom_call.1} parent=11 // pred_fallthru
          _
        // Predicated region
        $region57: #{tpu_custom_call.1} parent=11 // pred_check
          %p854 = pneg %p436
        $region58: #{tpu_custom_call.1} parent=11 // pred_check_branch
          %856 = sbr.rel (%p854) target = $region60
        $region59: #{tpu_custom_call.1} parent=11 // pred_region
          %s858 = ssub.s32 512, 512
          %859 = vsyncadd [#allocation15], %s858
          %s860 = sshll.u32 [#allocation14], 4
          %s861 = int_to_ptr.vmem [resolvable:$true] %s860
          %866 = dma.hbm_to_vmem [thread:$0]  %s31, 512, %s861, [#allocation15], 128, 128, 8
        $region60: #{tpu_custom_call.1} parent=11 // pred_fallthru
          _
        // Predicated region
        $region61: #{tpu_custom_call.1} parent=11 // pred_check
          %p867 = pneg %p457
        $region62: #{tpu_custom_call.1} parent=11 // pred_check_branch
          %869 = sbr.rel (%p867) target = $region64
        $region63: #{tpu_custom_call.1} parent=11 // pred_region
          %s871 = ssub.s32 512, 512
          %872 = vsyncadd [#allocation15], %s871
          %s873 = sshll.u32 [#allocation16], 4
          %s874 = int_to_ptr.vmem [resolvable:$true] %s873
          %879 = dma.hbm_to_vmem [thread:$0]  %s33, 512, %s874, [#allocation15], 128, 128, 8
        $region64: #{tpu_custom_call.1} parent=11 // pred_fallthru
          _
        // Predicated region
        $region65: #{tpu_custom_call.1} parent=11 // pred_check
          %p880 = pneg %p478
        $region66: #{tpu_custom_call.1} parent=11 // pred_check_branch
          %882 = sbr.rel (%p880) target = $region68
        $region67: #{tpu_custom_call.1} parent=11 // pred_region
          _
        $region68: #{tpu_custom_call.1} parent=11 // pred_fallthru
          _
        // Predicated region
        $region69: #{tpu_custom_call.1} parent=11 // pred_check
          %p883 = pneg %p499
        $region70: #{tpu_custom_call.1} parent=11 // pred_check_branch
          %885 = sbr.rel (%p883) target = $region72
        $region71: #{tpu_custom_call.1} parent=11 // pred_region
          _
        $region72: #{tpu_custom_call.1} parent=11 // pred_fallthru
          _
        // Predicated region
        $region73: #{tpu_custom_call.1} parent=11 // pred_check
          %p886 = pneg %p520
        $region74: #{tpu_custom_call.1} parent=11 // pred_check_branch
          %888 = sbr.rel (%p886) target = $region76
        $region75: #{tpu_custom_call.1} parent=11 // pred_region
          _
        $region76: #{tpu_custom_call.1} parent=11 // pred_fallthru
          _
        // Predicated region
        $region77: #{tpu_custom_call.1} parent=11 // pred_check
          %p889 = pneg %p541
        $region78: #{tpu_custom_call.1} parent=11 // pred_check_branch
          %891 = sbr.rel (%p889) target = $region80
        $region79: #{tpu_custom_call.1} parent=11 // pred_region
          %s893 = ssub.s32 512, 512
          %894 = vsyncadd [#allocation18], %s893
          %s895 = sshll.u32 [#allocation17], 4
          %s896 = int_to_ptr.vmem [resolvable:$true] %s895
          %901 = dma.hbm_to_vmem [thread:$0]  %s41, 512, %s896, [#allocation18], 128, 128, 8
        $region80: #{tpu_custom_call.1} parent=11 // pred_fallthru
          _
        // Predicated region
        $region81: #{tpu_custom_call.1} parent=11 // pred_check
          %p902 = pneg %p562
        $region82: #{tpu_custom_call.1} parent=11 // pred_check_branch
          %904 = sbr.rel (%p902) target = $region84
        $region83: #{tpu_custom_call.1} parent=11 // pred_region
          _
        $region84: #{tpu_custom_call.1} parent=11 // pred_fallthru
          _
        // Predicated region
        $region85: #{tpu_custom_call.1} parent=11 // pred_check
          %p905 = pneg %p583
        $region86: #{tpu_custom_call.1} parent=11 // pred_check_branch
          %907 = sbr.rel (%p905) target = $region88
        $region87: #{tpu_custom_call.1} parent=11 // pred_region
          _
        $region88: #{tpu_custom_call.1} parent=11 // pred_fallthru
          _
        // Predicated region
        $region89: #{tpu_custom_call.1} parent=11 // pred_check
          %p908 = pneg %p604
        $region90: #{tpu_custom_call.1} parent=11 // pred_check_branch
          %910 = sbr.rel (%p908) target = $region92
        $region91: #{tpu_custom_call.1} parent=11 // pred_region
          _
        $region92: #{tpu_custom_call.1} parent=11 // pred_fallthru
          _
        // Predicated region
        $region93: #{tpu_custom_call.1} parent=11 // pred_check
          %p911 = pneg %p625
        $region94: #{tpu_custom_call.1} parent=11 // pred_check_branch
          %913 = sbr.rel (%p911) target = $region96
        $region95: #{tpu_custom_call.1} parent=11 // pred_region
          %s915 = ssub.s32 512, 512
          %916 = vsyncadd [#allocation18], %s915
          %s917 = sshll.u32 [#allocation19], 4
          %s918 = int_to_ptr.vmem [resolvable:$true] %s917
          %923 = dma.hbm_to_vmem [thread:$0]  %s49, 512, %s918, [#allocation18], 128, 128, 8
        $region96: #{tpu_custom_call.1} parent=11 // pred_fallthru
          _
        // Predicated region
        $region97: #{tpu_custom_call.1} parent=11 // pred_check
          %p924 = pneg %p646
        $region98: #{tpu_custom_call.1} parent=11 // pred_check_branch
          %926 = sbr.rel (%p924) target = $region100
        $region99: #{tpu_custom_call.1} parent=11 // pred_region
          _
        $region100: #{tpu_custom_call.1} parent=11 // pred_fallthru
          _
        // Predicated region
        $region101: #{tpu_custom_call.1} parent=11 // pred_check
          %p927 = pneg %p667
        $region102: #{tpu_custom_call.1} parent=11 // pred_check_branch
          %929 = sbr.rel (%p927) target = $region104
        $region103: #{tpu_custom_call.1} parent=11 // pred_region
          _
        $region104: #{tpu_custom_call.1} parent=11 // pred_fallthru
          _
        // Predicated region
        $region105: #{tpu_custom_call.1} parent=11 // pred_check
          %p930 = pneg %p688
        $region106: #{tpu_custom_call.1} parent=11 // pred_check_branch
          %932 = sbr.rel (%p930) target = $region108
        $region107: #{tpu_custom_call.1} parent=11 // pred_region
          _
        $region108: #{tpu_custom_call.1} parent=11 // pred_fallthru
          _
        // Predicated region
        $region109: #{tpu_custom_call.1} parent=11 // pred_check
          %p933 = pneg %p709
        $region110: #{tpu_custom_call.1} parent=11 // pred_check_branch
          %935 = sbr.rel (%p933) target = $region112
        $region111: #{tpu_custom_call.1} parent=11 // pred_region
          _
        $region112: #{tpu_custom_call.1} parent=11 // pred_fallthru
          _
        // Predicated region
        $region113: #{tpu_custom_call.1} parent=11 // pred_check
          %p936 = pneg %p730
        $region114: #{tpu_custom_call.1} parent=11 // pred_check_branch
          %938 = sbr.rel (%p936) target = $region116
        $region115: #{tpu_custom_call.1} parent=11 // pred_region
          _
        $region116: #{tpu_custom_call.1} parent=11 // pred_fallthru
          _
      $region12: #{tpu_custom_call.1} parent=5 // pred_fallthru
        _
      %p939 = scmp.lt.s32.totalorder %s80, 2
      // Predicated region
      $region117: #{tpu_custom_call.1} parent=5 // pred_check
        %p940 = pneg %p939
      $region118: #{tpu_custom_call.1} parent=5 // pred_check_branch
        %942 = sbr.rel (%p940) target = $region120
      $region119: #{tpu_custom_call.1} parent=5 // pred_region
        // Predicated region
        $region121: #{tpu_custom_call.1} parent=119 // pred_check
          %p943 = pneg %p100
        $region122: #{tpu_custom_call.1} parent=119 // pred_check_branch
          %945 = sbr.rel (%p943) target = $region124
        $region123: #{tpu_custom_call.1} parent=119 // pred_region
          %s946 = sand.u32 %s90, 1
          %s947 = scalar_lea.sflag [#allocation3], %s946
          %s948 = sand.u32 %s90, 1
          %s949 = smul.addr %s948, 16
          %s950 = scalar_lea.vmem [#allocation2], %s949
          %s952 = ssub.s32 256, 256
          %953 = vsyncadd %s947, %s952
          %s954 = smul.addr %s80, 2
          %s955 = smul.addr %s954, 128
          %s956 = scalar_lea.hbm %s1, %s955
          %s957 = sshll.u32 %s950, 4
          %s958 = int_to_ptr.vmem [resolvable:$true] %s957
          %963 = dma.hbm_to_vmem [thread:$0]  %s956, 256, %s958, %s947, 128, 128, 8
        $region124: #{tpu_custom_call.1} parent=119 // pred_fallthru
          _
        // Predicated region
        $region125: #{tpu_custom_call.1} parent=119 // pred_check
          %p964 = pneg %p126
        $region126: #{tpu_custom_call.1} parent=119 // pred_check_branch
          %966 = sbr.rel (%p964) target = $region128
        $region127: #{tpu_custom_call.1} parent=119 // pred_region
          %s967 = sand.u32 %s80, 1
          %s968 = scalar_lea.sflag [#allocation6], %s967
          %s969 = sand.u32 %s116, 1
          %s970 = smul.addr %s969, 16
          %s971 = scalar_lea.vmem [#allocation5], %s970
          %s973 = ssub.s32 256, 256
          %974 = vsyncadd %s968, %s973
          %s975 = smul.addr %s80, 2
          %s976 = smul.addr %s975, 128
          %s977 = scalar_lea.hbm %s3, %s976
          %s978 = sshll.u32 %s971, 4
          %s979 = int_to_ptr.vmem [resolvable:$true] %s978
          %984 = dma.hbm_to_vmem [thread:$0]  %s977, 256, %s979, %s968, 128, 128, 8
        $region128: #{tpu_custom_call.1} parent=119 // pred_fallthru
          _
        // Predicated region
        $region129: #{tpu_custom_call.1} parent=119 // pred_check
          %p985 = pneg %p152
        $region130: #{tpu_custom_call.1} parent=119 // pred_check_branch
          %987 = sbr.rel (%p985) target = $region132
        $region131: #{tpu_custom_call.1} parent=119 // pred_region
          %p988 = scmp.lt.s32.totalorder %s80, 1
          %s989 = scalar_select %p988, %s80, 1
          %s990 = smul.addr %s989, 3
          %s991 = smul.addr %s990, 8
          %s992 = scalar_lea.vmem %s5, %s991
        $region132: #{tpu_custom_call.1} parent=119 // pred_fallthru
          _
        // Predicated region
        $region133: #{tpu_custom_call.1} parent=119 // pred_check
          %p993 = pneg %p178
        $region134: #{tpu_custom_call.1} parent=119 // pred_check_branch
          %995 = sbr.rel (%p993) target = $region136
        $region135: #{tpu_custom_call.1} parent=119 // pred_region
          %p996 = scmp.lt.s32.totalorder %s80, 1
          %s997 = scalar_select %p996, %s80, 1
          %s998 = smul.addr %s997, 3
          %s999 = smul.addr %s998, 8
          %s1000 = scalar_lea.vmem %s7, %s999
        $region136: #{tpu_custom_call.1} parent=119 // pred_fallthru
          _
      $region120: #{tpu_custom_call.1} parent=5 // pred_fallthru
        _
      %p1001 = scmp.le.s32.totalorder 1, %s80
      %p1002 = scmp.lt.s32.totalorder %s80, 3
      %p1003 = pnand %p1001, %p1002
      %p1004 = pneg %p1003
      // Predicated region
      $region137: #{tpu_custom_call.1} parent=5 // pred_check
        _
      $region138: #{tpu_custom_call.1} parent=5 // pred_check_branch
        %1006 = sbr.rel (%p1003) target = $region140
      $region139: #{tpu_custom_call.1} parent=5 // pred_region
        %s1007 = ssub.s32 %s80, 1
        %s1008 = sand.u32 %s93, 1
        %s1009 = scalar_lea.sflag [#allocation3], %s1008
        %s1010 = sand.u32 %s93, 1
        %s1011 = smul.addr %s1010, 16
        %s1012 = scalar_lea.vmem [#allocation2], %s1011
        // Predicated region
        $region141: #{tpu_custom_call.1} parent=139 // pred_check
          %p1013 = pneg %p106
        $region142: #{tpu_custom_call.1} parent=139 // pred_check_branch
          %1015 = sbr.rel (%p1013) target = $region144
        $region143: #{tpu_custom_call.1} parent=139 // pred_region
          %1016 = dma.done %s1009, 256
        $region144: #{tpu_custom_call.1} parent=139 // pred_fallthru
          _
        %s1017 = sand.u32 %s85, 1
        %s1018 = scalar_lea.sflag [#allocation6], %s1017
        %s1019 = sand.u32 %s119, 1
        %s1020 = smul.addr %s1019, 16
        %s1021 = scalar_lea.vmem [#allocation5], %s1020
        // Predicated region
        $region145: #{tpu_custom_call.1} parent=139 // pred_check
          %p1022 = pneg %p132
        $region146: #{tpu_custom_call.1} parent=139 // pred_check_branch
          %1024 = sbr.rel (%p1022) target = $region148
        $region147: #{tpu_custom_call.1} parent=139 // pred_region
          %1025 = dma.done %s1018, 256
        $region148: #{tpu_custom_call.1} parent=139 // pred_fallthru
          _
        // Predicated region
        $region149: #{tpu_custom_call.1} parent=139 // pred_check
          %p1026 = pneg %p205
        $region150: #{tpu_custom_call.1} parent=139 // pred_check_branch
          %1028 = sbr.rel (%p1026) target = $region152
        $region151: #{tpu_custom_call.1} parent=139 // pred_region
          %1029 = dma.done [#allocation6], 512
        $region152: #{tpu_custom_call.1} parent=139 // pred_fallthru
          _
        // Predicated region
        $region153: #{tpu_custom_call.1} parent=139 // pred_check
          %p1030 = pneg %p226
        $region154: #{tpu_custom_call.1} parent=139 // pred_check_branch
          %1032 = sbr.rel (%p1030) target = $region156
        $region155: #{tpu_custom_call.1} parent=139 // pred_region
          %1033 = dma.done [#allocation9], 512
        $region156: #{tpu_custom_call.1} parent=139 // pred_fallthru
          _
        // Predicated region
        $region157: #{tpu_custom_call.1} parent=139 // pred_check
          %p1034 = pneg %p247
        $region158: #{tpu_custom_call.1} parent=139 // pred_check_branch
          %1036 = sbr.rel (%p1034) target = $region160
        $region159: #{tpu_custom_call.1} parent=139 // pred_region
          %1037 = dma.done [#allocation9], 512
        $region160: #{tpu_custom_call.1} parent=139 // pred_fallthru
          _
        // Predicated region
        $region161: #{tpu_custom_call.1} parent=139 // pred_check
          %p1038 = pneg %p331
        $region162: #{tpu_custom_call.1} parent=139 // pred_check_branch
          %1040 = sbr.rel (%p1038) target = $region164
        $region163: #{tpu_custom_call.1} parent=139 // pred_region
          %1041 = dma.done [#allocation12], 512
        $region164: #{tpu_custom_call.1} parent=139 // pred_fallthru
          _
        // Predicated region
        $region165: #{tpu_custom_call.1} parent=139 // pred_check
          %p1042 = pneg %p415
        $region166: #{tpu_custom_call.1} parent=139 // pred_check_branch
          %1044 = sbr.rel (%p1042) target = $region168
        $region167: #{tpu_custom_call.1} parent=139 // pred_region
          %1045 = dma.done [#allocation12], 512
        $region168: #{tpu_custom_call.1} parent=139 // pred_fallthru
          _
        // Predicated region
        $region169: #{tpu_custom_call.1} parent=139 // pred_check
          %p1046 = pneg %p436
        $region170: #{tpu_custom_call.1} parent=139 // pred_check_branch
          %1048 = sbr.rel (%p1046) target = $region172
        $region171: #{tpu_custom_call.1} parent=139 // pred_region
          %1049 = dma.done [#allocation15], 512
        $region172: #{tpu_custom_call.1} parent=139 // pred_fallthru
          _
        // Predicated region
        $region173: #{tpu_custom_call.1} parent=139 // pred_check
          %p1050 = pneg %p457
        $region174: #{tpu_custom_call.1} parent=139 // pred_check_branch
          %1052 = sbr.rel (%p1050) target = $region176
        $region175: #{tpu_custom_call.1} parent=139 // pred_region
          %1053 = dma.done [#allocation15], 512
        $region176: #{tpu_custom_call.1} parent=139 // pred_fallthru
          _
        // Predicated region
        $region177: #{tpu_custom_call.1} parent=139 // pred_check
          %p1054 = pneg %p541
        $region178: #{tpu_custom_call.1} parent=139 // pred_check_branch
          %1056 = sbr.rel (%p1054) target = $region180
        $region179: #{tpu_custom_call.1} parent=139 // pred_region
          %1057 = dma.done [#allocation18], 512
        $region180: #{tpu_custom_call.1} parent=139 // pred_fallthru
          _
        // Predicated region
        $region181: #{tpu_custom_call.1} parent=139 // pred_check
          %p1058 = pneg %p625
        $region182: #{tpu_custom_call.1} parent=139 // pred_check_branch
          %1060 = sbr.rel (%p1058) target = $region184
        $region183: #{tpu_custom_call.1} parent=139 // pred_region
          %1061 = dma.done [#allocation18], 512
        $region184: #{tpu_custom_call.1} parent=139 // pred_fallthru
          _
        %s1062 = sand.u32 %s93, 1
        %s1063 = scalar_lea.sflag [#allocation3], %s1062
        %s1064 = sand.u32 %s93, 1
        %s1065 = smul.addr %s1064, 16
        %s1066 = scalar_lea.vmem [#allocation2], %s1065
        %p1067 = pneg %p106
        %p1068 = pneg %p103
        %s1069 = sand.u32 %s85, 1
        %s1070 = scalar_lea.sflag [#allocation6], %s1069
        %s1071 = sand.u32 %s119, 1
        %s1072 = smul.addr %s1071, 16
        %s1073 = scalar_lea.vmem [#allocation5], %s1072
        %p1074 = pneg %p132
        %p1075 = pneg %p129
        %p1076 = scmp.lt.s32.totalorder %s85, 1
        %s1077 = scalar_select %p1076, %s85, 1
        %s1078 = smul.addr %s1077, 3
        %s1079 = smul.addr %s1078, 8
        %s1080 = scalar_lea.vmem %s5, %s1079
        %p1081 = pneg %p158
        %p1082 = pneg %p155
        %p1083 = scmp.lt.s32.totalorder %s85, 1
        %s1084 = scalar_select %p1083, %s85, 1
        %s1085 = smul.addr %s1084, 3
        %s1086 = smul.addr %s1085, 8
        %s1087 = scalar_lea.vmem %s7, %s1086
        %p1088 = pneg %p184
        %p1089 = pneg %p181
        %p1090 = pneg %p205
        %p1091 = pneg %p202
        %p1092 = pneg %p226
        %p1093 = pneg %p223
        %p1094 = pneg %p247
        %p1095 = pneg %p244
        %p1096 = pneg %p268
        %p1097 = pneg %p265
        %p1098 = pneg %p289
        %p1099 = pneg %p286
        %p1100 = pneg %p310
        %p1101 = pneg %p307
        %p1102 = pneg %p331
        %p1103 = pneg %p328
        %p1104 = pneg %p352
        %p1105 = pneg %p349
        %p1106 = pneg %p373
        %p1107 = pneg %p370
        %p1108 = pneg %p394
        %p1109 = pneg %p391
        %p1110 = pneg %p415
        %p1111 = pneg %p412
        %p1112 = pneg %p436
        %p1113 = pneg %p433
        %p1114 = pneg %p457
        %p1115 = pneg %p454
        %p1116 = pneg %p478
        %p1117 = pneg %p475
        %p1118 = pneg %p499
        %p1119 = pneg %p496
        %p1120 = pneg %p520
        %p1121 = pneg %p517
        %p1122 = pneg %p541
        %p1123 = pneg %p538
        %p1124 = pneg %p562
        %p1125 = pneg %p559
        %p1126 = pneg %p583
        %p1127 = pneg %p580
        %p1128 = pneg %p604
        %p1129 = pneg %p601
        %p1130 = pneg %p625
        %p1131 = pneg %p622
        %p1132 = pneg %p646
        %p1133 = pneg %p643
        %p1134 = pneg %p667
        %p1135 = pneg %p664
        %p1136 = pneg %p688
        %p1137 = pneg %p685
        %p1138 = pneg %p709
        %p1139 = pneg %p706
        %p1140 = pneg %p730
        %p1141 = pneg %p727
        %p1142 = pneg %p756
        %p1143 = pneg %p753
        %s1144 = sand.u32 %s743, 1
        %s1145 = scalar_lea.sflag [#allocation4], %s1144
        %s1146 = sand.u32 %s743, 1
        %s1147 = smul.addr %s1146, 16
        %s1148 = scalar_lea.vmem [#allocation20], %s1147
        %p1149 = scmp.lt.s32.totalorder %s85, 1
        %s1150 = scalar_select %p1149, %s85, 1
        %s1151 = smul.addr %s1150, 3
        %s1152 = smul.addr %s1151, 8
        %s1153 = scalar_lea.vmem %s5, %s1152
        %p1154 = scmp.lt.s32.totalorder %s85, 1
        %s1155 = scalar_select %p1154, %s85, 1
        %s1156 = smul.addr %s1155, 3
        %s1157 = smul.addr %s1156, 8
        %s1158 = scalar_lea.vmem %s7, %s1157
        %v1159 = vld [vmem:[%s1012] sm:$0xff]
        %v1160 = vld [vmem:[%s1012 + $0x8] sm:$0xff]
        %v1161 = vld [vmem:[%s1021] sm:$0xff]
        %v1162 = vld [vmem:[%s1021 + $0x8] sm:$0xff]
        %v1163 = vld [vmem:[%s1153] sm:$0xff]
        %v1164 = vld [vmem:[%s1153 + $0x8] sm:$0xff]
        %v1165 = vld [vmem:[%s1153 + $0x10] sm:$0xff]
        %v1166 = vld [vmem:[%s1158] sm:$0xff]
        %v1167 = vld [vmem:[%s1158 + $0x8] sm:$0xff]
        %v1168 = vld [vmem:[%s1158 + $0x10] sm:$0xff]
        %v1169 = vadd.f32 %v1159, %v1161
        %v1170 = vadd.f32 %v1160, %v1162
        %v1171 = vld [vmem:[#allocation7] sm:$0xff]
        %v1172 = vld [vmem:[#allocation7 + $0x8] sm:$0xff]
        %v1173 = vld [vmem:[#allocation7 + $0x10] sm:$0xff]
        %v1174 = vld [vmem:[#allocation7 + $0x18] sm:$0xff]
        %v1175 = vld [vmem:[#allocation8] sm:$0xff]
        %v1176 = vld [vmem:[#allocation8 + $0x8] sm:$0xff]
        %v1177 = vld [vmem:[#allocation8 + $0x10] sm:$0xff]
        %v1178 = vld [vmem:[#allocation8 + $0x18] sm:$0xff]
        %v1179 = vld [vmem:[#allocation10] sm:$0xff]
        %v1180 = vld [vmem:[#allocation10 + $0x8] sm:$0xff]
        %v1181 = vld [vmem:[#allocation10 + $0x10] sm:$0xff]
        %v1182 = vld [vmem:[#allocation10 + $0x18] sm:$0xff]
        %v1183 = vld [vmem:[%s15] sm:$0x1]
        %v1184 = vld [vmem:[%s17] sm:$0x1]
        %v1185 = vld [vmem:[%s19] sm:$0x1]
        %v1186 = vld [vmem:[#allocation11] sm:$0xff]
        %v1187 = vld [vmem:[#allocation11 + $0x8] sm:$0xff]
        %v1188 = vld [vmem:[#allocation11 + $0x10] sm:$0xff]
        %v1189 = vld [vmem:[#allocation11 + $0x18] sm:$0xff]
        %v1190 = vld [vmem:[%s23] sm:$0x1]
        %v1192 = vlaneseq
        %v1193 = vshrl.u32 %v1192, 7
        %v1194 = vsub.s32 0, %v1193
        %v1195 = vrot.slane %v1183, %v1194
        %vm1197 = vcmask 261120
        %v1199 = vsel %vm1197, %v1169, 0
        %v1202 = vsel %vm1197, %v1170, 0
        %1204 = vmatprep.subr.mxu0 0.0
        %1205 = vmatpush1.msra.mxu0 0.0
        %1206 = vmatprep.subr.mxu0 0.0
        %1207 = vmatpush1.msra.mxu0 0.0
        %1208 = vmatprep.subr.mxu0 0.0
        %1209 = vmatpush1.msra.mxu0 0.0
        %1210 = vmatprep.subr.mxu0 0.0
        %1211 = vmatpush1.msra.mxu0 0.0
        %1212 = vmatprep.subr.mxu0 0.0
        %1213 = vmatpush1.msra.mxu0 0.0
        %1214 = vmatprep.subr.mxu0 0.0
        %1215 = vmatpush1.msra.mxu0 0.0
        %1216 = vmatprep.subr.mxu0 0.0
        %1217 = vmatpush1.msra.mxu0 0.0
        %1218 = vmatprep.subr.mxu0 0.0
        %1219 = vmatpush1.msra.mxu0 0.0
        %1220 = vmatprep.subr.mxu0 0.0
        %1221 = vmatpush1.msra.mxu0 0.0
        %1222 = vmatprep.subr.mxu0 0.0
        %1223 = vmatpush1.msra.mxu0 0.0
        %1224 = vmatprep.subr.mxu0 0.0
        %1225 = vmatpush1.msra.mxu0 0.0
        %1226 = vmatprep.subr.mxu0 0.0
        %1227 = vmatpush1.msra.mxu0 0.0
        %1228 = vmatprep.subr.mxu0 0.0
        %1229 = vmatpush1.msra.mxu0 %v1174
        %1230 = vmatprep.subr.mxu0 0.0
        %1231 = vmatpush1.msra.mxu0 %v1173
        %1232 = vmatprep.subr.mxu0 0.0
        %1233 = vmatpush1.msra.mxu0 %v1172
        %1234 = vmatprep.subr.mxu0 0.0
        %1235 = vmatpush1.msra.mxu0 %v1171
        %1236 = vmatprep.subr.mxu0 0.0
        %1237 = vmatpush2.msra.mxu0 0.0
        %1238 = vmatprep.subr.mxu0 0.0
        %1239 = vmatpush2.msra.mxu0 0.0
        %1240 = vmatprep.subr.mxu0 0.0
        %1241 = vmatpush2.msra.mxu0 0.0
        %1242 = vmatprep.subr.mxu0 0.0
        %1243 = vmatpush2.msra.mxu0 0.0
        %1244 = vmatprep.subr.mxu0 0.0
        %1245 = vmatpush2.msra.mxu0 0.0
        %1246 = vmatprep.subr.mxu0 0.0
        %1247 = vmatpush2.msra.mxu0 0.0
        %1248 = vmatprep.subr.mxu0 0.0
        %1249 = vmatpush2.msra.mxu0 0.0
        %1250 = vmatprep.subr.mxu0 0.0
        %1251 = vmatpush2.msra.mxu0 0.0
        %1252 = vmatprep.subr.mxu0 0.0
        %1253 = vmatpush2.msra.mxu0 0.0
        %1254 = vmatprep.subr.mxu0 0.0
        %1255 = vmatpush2.msra.mxu0 0.0
        %1256 = vmatprep.subr.mxu0 0.0
        %1257 = vmatpush2.msra.mxu0 0.0
        %1258 = vmatprep.subr.mxu0 0.0
        %1259 = vmatpush2.msra.mxu0 0.0
        %1260 = vmatprep.subr.mxu0 0.0
        %1261 = vmatpush2.msra.mxu0 0.0
        %1262 = vmatprep.subr.mxu0 0.0
        %1263 = vmatpush2.msra.mxu0 0.0
        %1264 = vmatprep.subr.mxu0 0.0
        %1265 = vmatpush2.msra.mxu0 0.0
        %1266 = vmatprep.subr.mxu0 0.0
        %1267 = vmatpush2.msra.mxu0 0.0
        %1268 = vmatprep.mubr.f32.mxu0 0.0
        %1269 = vmatmul.mubr.f32.gmra.mxu0 %v1199
        %v1270 = vpop.f32.mrf.mxu0
        %v1271 = vadd.f32 %v1195, %v1270
        %v1272 = vpop.f32.mrf.mxu0
        %1273 = vmatprep.mubr.f32.mxu0 0.0
        %1274 = vmatmul.mubr.f32.gmra.mxu0 %v1202
        %v1275 = vpop.f32.mrf.mxu0
        %v1276 = vadd.f32 %v1195, %v1275
        %v1277 = vpop.f32.mrf.mxu0
        %1278 = vdwg.mxu0
        %v1280 = vlaneseq
        %v1281 = vshrl.u32 %v1280, 7
        %v1282 = vsub.s32 0, %v1281
        %v1283 = vrot.slane %v1184, %v1282
        %1285 = vmatprep.subr.mxu0 0.0
        %1286 = vmatpush1.msra.mxu0 0.0
        %1287 = vmatprep.subr.mxu0 0.0
        %1288 = vmatpush1.msra.mxu0 0.0
        %1289 = vmatprep.subr.mxu0 0.0
        %1290 = vmatpush1.msra.mxu0 0.0
        %1291 = vmatprep.subr.mxu0 0.0
        %1292 = vmatpush1.msra.mxu0 0.0
        %1293 = vmatprep.subr.mxu0 0.0
        %1294 = vmatpush1.msra.mxu0 0.0
        %1295 = vmatprep.subr.mxu0 0.0
        %1296 = vmatpush1.msra.mxu0 0.0
        %1297 = vmatprep.subr.mxu0 0.0
        %1298 = vmatpush1.msra.mxu0 0.0
        %1299 = vmatprep.subr.mxu0 0.0
        %1300 = vmatpush1.msra.mxu0 0.0
        %1301 = vmatprep.subr.mxu0 0.0
        %1302 = vmatpush1.msra.mxu0 0.0
        %1303 = vmatprep.subr.mxu0 0.0
        %1304 = vmatpush1.msra.mxu0 0.0
        %1305 = vmatprep.subr.mxu0 0.0
        %1306 = vmatpush1.msra.mxu0 0.0
        %1307 = vmatprep.subr.mxu0 0.0
        %1308 = vmatpush1.msra.mxu0 0.0
        %1309 = vmatprep.subr.mxu0 0.0
        %1310 = vmatpush1.msra.mxu0 %v1178
        %1311 = vmatprep.subr.mxu0 0.0
        %1312 = vmatpush1.msra.mxu0 %v1177
        %1313 = vmatprep.subr.mxu0 0.0
        %1314 = vmatpush1.msra.mxu0 %v1176
        %1315 = vmatprep.subr.mxu0 0.0
        %1316 = vmatpush1.msra.mxu0 %v1175
        %1317 = vmatprep.subr.mxu0 0.0
        %1318 = vmatpush2.msra.mxu0 0.0
        %1319 = vmatprep.subr.mxu0 0.0
        %1320 = vmatpush2.msra.mxu0 0.0
        %1321 = vmatprep.subr.mxu0 0.0
        %1322 = vmatpush2.msra.mxu0 0.0
        %1323 = vmatprep.subr.mxu0 0.0
        %1324 = vmatpush2.msra.mxu0 0.0
        %1325 = vmatprep.subr.mxu0 0.0
        %1326 = vmatpush2.msra.mxu0 0.0
        %1327 = vmatprep.subr.mxu0 0.0
        %1328 = vmatpush2.msra.mxu0 0.0
        %1329 = vmatprep.subr.mxu0 0.0
        %1330 = vmatpush2.msra.mxu0 0.0
        %1331 = vmatprep.subr.mxu0 0.0
        %1332 = vmatpush2.msra.mxu0 0.0
        %1333 = vmatprep.subr.mxu0 0.0
        %1334 = vmatpush2.msra.mxu0 0.0
        %1335 = vmatprep.subr.mxu0 0.0
        %1336 = vmatpush2.msra.mxu0 0.0
        %1337 = vmatprep.subr.mxu0 0.0
        %1338 = vmatpush2.msra.mxu0 0.0
        %1339 = vmatprep.subr.mxu0 0.0
        %1340 = vmatpush2.msra.mxu0 0.0
        %1341 = vmatprep.subr.mxu0 0.0
        %1342 = vmatpush2.msra.mxu0 0.0
        %1343 = vmatprep.subr.mxu0 0.0
        %1344 = vmatpush2.msra.mxu0 0.0
        %1345 = vmatprep.subr.mxu0 0.0
        %1346 = vmatpush2.msra.mxu0 0.0
        %1347 = vmatprep.subr.mxu0 0.0
        %1348 = vmatpush2.msra.mxu0 0.0
        %1349 = vmatprep.mubr.f32.mxu0 0.0
        %1350 = vmatmul.mubr.f32.gmra.mxu0 %v1199
        %v1351 = vpop.f32.mrf.mxu0
        %v1352 = vadd.f32 %v1283, %v1351
        %v1353 = vpop.f32.mrf.mxu0
        %1354 = vmatprep.mubr.f32.mxu0 0.0
        %1355 = vmatmul.mubr.f32.gmra.mxu0 %v1202
        %v1356 = vpop.f32.mrf.mxu0
        %v1357 = vadd.f32 %v1283, %v1356
        %v1358 = vpop.f32.mrf.mxu0
        %1359 = vdwg.mxu0
        %v1361 = vlaneseq
        %v1362 = vshrl.u32 %v1361, 7
        %v1363 = vsub.s32 0, %v1362
        %v1364 = vrot.slane %v1185, %v1363
        %v1367 = vsel %vm1197, %v1159, 0
        %v1370 = vsel %vm1197, %v1160, 0
        %1372 = vmatprep.subr.mxu0 0.0
        %1373 = vmatpush1.msra.mxu0 0.0
        %1374 = vmatprep.subr.mxu0 0.0
        %1375 = vmatpush1.msra.mxu0 0.0
        %1376 = vmatprep.subr.mxu0 0.0
        %1377 = vmatpush1.msra.mxu0 0.0
        %1378 = vmatprep.subr.mxu0 0.0
        %1379 = vmatpush1.msra.mxu0 0.0
        %1380 = vmatprep.subr.mxu0 0.0
        %1381 = vmatpush1.msra.mxu0 0.0
        %1382 = vmatprep.subr.mxu0 0.0
        %1383 = vmatpush1.msra.mxu0 0.0
        %1384 = vmatprep.subr.mxu0 0.0
        %1385 = vmatpush1.msra.mxu0 0.0
        %1386 = vmatprep.subr.mxu0 0.0
        %1387 = vmatpush1.msra.mxu0 0.0
        %1388 = vmatprep.subr.mxu0 0.0
        %1389 = vmatpush1.msra.mxu0 0.0
        %1390 = vmatprep.subr.mxu0 0.0
        %1391 = vmatpush1.msra.mxu0 0.0
        %1392 = vmatprep.subr.mxu0 0.0
        %1393 = vmatpush1.msra.mxu0 0.0
        %1394 = vmatprep.subr.mxu0 0.0
        %1395 = vmatpush1.msra.mxu0 0.0
        %1396 = vmatprep.subr.mxu0 0.0
        %1397 = vmatpush1.msra.mxu0 %v1182
        %1398 = vmatprep.subr.mxu0 0.0
        %1399 = vmatpush1.msra.mxu0 %v1181
        %1400 = vmatprep.subr.mxu0 0.0
        %1401 = vmatpush1.msra.mxu0 %v1180
        %1402 = vmatprep.subr.mxu0 0.0
        %1403 = vmatpush1.msra.mxu0 %v1179
        %1404 = vmatprep.subr.mxu0 0.0
        %1405 = vmatpush2.msra.mxu0 0.0
        %1406 = vmatprep.subr.mxu0 0.0
        %1407 = vmatpush2.msra.mxu0 0.0
        %1408 = vmatprep.subr.mxu0 0.0
        %1409 = vmatpush2.msra.mxu0 0.0
        %1410 = vmatprep.subr.mxu0 0.0
        %1411 = vmatpush2.msra.mxu0 0.0
        %1412 = vmatprep.subr.mxu0 0.0
        %1413 = vmatpush2.msra.mxu0 0.0
        %1414 = vmatprep.subr.mxu0 0.0
        %1415 = vmatpush2.msra.mxu0 0.0
        %1416 = vmatprep.subr.mxu0 0.0
        %1417 = vmatpush2.msra.mxu0 0.0
        %1418 = vmatprep.subr.mxu0 0.0
        %1419 = vmatpush2.msra.mxu0 0.0
        %1420 = vmatprep.subr.mxu0 0.0
        %1421 = vmatpush2.msra.mxu0 0.0
        %1422 = vmatprep.subr.mxu0 0.0
        %1423 = vmatpush2.msra.mxu0 0.0
        %1424 = vmatprep.subr.mxu0 0.0
        %1425 = vmatpush2.msra.mxu0 0.0
        %1426 = vmatprep.subr.mxu0 0.0
        %1427 = vmatpush2.msra.mxu0 0.0
        %1428 = vmatprep.subr.mxu0 0.0
        %1429 = vmatpush2.msra.mxu0 0.0
        %1430 = vmatprep.subr.mxu0 0.0
        %1431 = vmatpush2.msra.mxu0 0.0
        %1432 = vmatprep.subr.mxu0 0.0
        %1433 = vmatpush2.msra.mxu0 0.0
        %1434 = vmatprep.subr.mxu0 0.0
        %1435 = vmatpush2.msra.mxu0 0.0
        %1436 = vmatprep.mubr.f32.mxu0 0.0
        %1437 = vmatmul.mubr.f32.gmra.mxu0 %v1367
        %v1438 = vpop.f32.mrf.mxu0
        %v1439 = vadd.f32 %v1364, %v1438
        %v1440 = vpop.f32.mrf.mxu0
        %1441 = vmatprep.mubr.f32.mxu0 0.0
        %1442 = vmatmul.mubr.f32.gmra.mxu0 %v1370
        %v1443 = vpop.f32.mrf.mxu0
        %v1444 = vadd.f32 %v1364, %v1443
        %v1445 = vpop.f32.mrf.mxu0
        %1446 = vdwg.mxu0
        %v1447 = vmul.f32 %v1271, 0.5
        %v1448 = vmul.f32 %v1276, 0.5
        %vm1449 = vcmask 31744
        %v1451 = vsel %vm1449, %v1447, 0
        %v1454 = vsel %vm1449, %v1448, 0
        %v1457 = vsel %vm1449, %v1352, 0
        %v1460 = vsel %vm1449, %v1357, 0
        %1462 = vmatprep.subr.mxu0 0.0
        %1463 = vmatpush1.xpose.msra.mxu0 0.0
        %1464 = vmatprep.subr.mxu0 0.0
        %1465 = vmatpush1.xpose.msra.mxu0 0.0
        %1466 = vmatprep.subr.mxu0 0.0
        %1467 = vmatpush1.xpose.msra.mxu0 0.0
        %1468 = vmatprep.subr.mxu0 0.0
        %1469 = vmatpush1.xpose.msra.mxu0 0.0
        %1470 = vmatprep.subr.mxu0 0.0
        %1471 = vmatpush1.xpose.msra.mxu0 0.0
        %1472 = vmatprep.subr.mxu0 0.0
        %1473 = vmatpush1.xpose.msra.mxu0 0.0
        %1474 = vmatprep.subr.mxu0 0.0
        %1475 = vmatpush1.xpose.msra.mxu0 0.0
        %1476 = vmatprep.subr.mxu0 0.0
        %1477 = vmatpush1.xpose.msra.mxu0 0.0
        %1478 = vmatprep.subr.mxu0 0.0
        %1479 = vmatpush1.xpose.msra.mxu0 0.0
        %1480 = vmatprep.subr.mxu0 0.0
        %1481 = vmatpush1.xpose.msra.mxu0 0.0
        %1482 = vmatprep.subr.mxu0 0.0
        %1483 = vmatpush1.xpose.msra.mxu0 0.0
        %1484 = vmatprep.subr.mxu0 0.0
        %1485 = vmatpush1.xpose.msra.mxu0 0.0
        %1486 = vmatprep.subr.mxu0 0.0
        %1487 = vmatpush1.xpose.msra.mxu0 0.0
        %1488 = vmatprep.subr.mxu0 0.0
        %1489 = vmatpush1.xpose.msra.mxu0 0.0
        %1490 = vmatprep.subr.mxu0 0.0
        %1491 = vmatpush1.xpose.msra.mxu0 %v1460
        %1492 = vmatprep.subr.mxu0 0.0
        %1493 = vmatpush1.xpose.msra.mxu0 %v1457
        %1494 = vmatprep.subr.mxu0 0.0
        %1495 = vmatpush2.xpose.msra.mxu0 0.0
        %1496 = vmatprep.subr.mxu0 0.0
        %1497 = vmatpush2.xpose.msra.mxu0 0.0
        %1498 = vmatprep.subr.mxu0 0.0
        %1499 = vmatpush2.xpose.msra.mxu0 0.0
        %1500 = vmatprep.subr.mxu0 0.0
        %1501 = vmatpush2.xpose.msra.mxu0 0.0
        %1502 = vmatprep.subr.mxu0 0.0
        %1503 = vmatpush2.xpose.msra.mxu0 0.0
        %1504 = vmatprep.subr.mxu0 0.0
        %1505 = vmatpush2.xpose.msra.mxu0 0.0
        %1506 = vmatprep.subr.mxu0 0.0
        %1507 = vmatpush2.xpose.msra.mxu0 0.0
        %1508 = vmatprep.subr.mxu0 0.0
        %1509 = vmatpush2.xpose.msra.mxu0 0.0
        %1510 = vmatprep.subr.mxu0 0.0
        %1511 = vmatpush2.xpose.msra.mxu0 0.0
        %1512 = vmatprep.subr.mxu0 0.0
        %1513 = vmatpush2.xpose.msra.mxu0 0.0
        %1514 = vmatprep.subr.mxu0 0.0
        %1515 = vmatpush2.xpose.msra.mxu0 0.0
        %1516 = vmatprep.subr.mxu0 0.0
        %1517 = vmatpush2.xpose.msra.mxu0 0.0
        %1518 = vmatprep.subr.mxu0 0.0
        %1519 = vmatpush2.xpose.msra.mxu0 0.0
        %1520 = vmatprep.subr.mxu0 0.0
        %1521 = vmatpush2.xpose.msra.mxu0 0.0
        %1522 = vmatprep.subr.mxu0 0.0
        %1523 = vmatpush2.xpose.msra.mxu0 0.0
        %1524 = vmatprep.subr.mxu0 0.0
        %1525 = vmatpush2.xpose.msra.mxu0 0.0
        %1526 = vmatprep.mubr.f32.mxu0 0.0
        %1527 = vmatmul.mubr.f32.gmra.mxu0 %v1451
        %v1528 = vpop.f32.mrf.mxu0
        %v1529 = vadd.f32 0.0, %v1528
        %v1530 = vpop.f32.mrf.mxu0
        %1531 = vmatprep.mubr.f32.mxu0 0.0
        %1532 = vmatmul.mubr.f32.gmra.mxu0 %v1454
        %v1533 = vpop.f32.mrf.mxu0
        %v1534 = vadd.f32 0.0, %v1533
        %v1535 = vpop.f32.mrf.mxu0
        %1536 = vdwg.mxu0
        %vm1537 = vcmask 130048
        %v1538 = vsel %vm1537, %v1529, -inf
        %1539 = vmax.xlane.f32.xlu0 %v1538
        %v1540 = vpop.xlane.xlu0 %1539
        %v1541 = vsel %vm1537, %v1534, -inf
        %1542 = vmax.xlane.f32.xlu0 %v1541
        %v1543 = vpop.xlane.xlu0 %1542
        %v1544 = vsub.f32 %v1529, %v1540
        %v1545 = vsub.f32 %v1534, %v1543
        %v1546 = vmul.f32 %v1544, 1.442695
        %v1547 = vpow.pop %v1546
        %v1548 = vmul.f32 %v1545, 1.442695
        %v1549 = vpow.pop %v1548
        %v1550 = vsel %vm1537, %v1547, 0.0
        %1551 = vadd.xlane.f32.xlu0 %v1550
        %v1552 = vpop.xlane.xlu0 %1551
        %v1553 = vsel %vm1537, %v1549, 0.0
        %1554 = vadd.xlane.f32.xlu0 %v1553
        %v1555 = vpop.xlane.xlu0 %1554
        %v1556 = vrcp.pop %v1552
        %v1557 = vmul.f32 %v1547, %v1556
        %v1558 = vrcp.pop %v1555
        %v1559 = vmul.f32 %v1549, %v1558
        %v1561 = vsel %vm1537, %v1557, 0
        %v1564 = vsel %vm1537, %v1559, 0
        %1566 = vmatprep.subr.mxu0 0.0
        %1567 = vmatpush1.msra.mxu0 0.0
        %1568 = vmatprep.subr.mxu0 0.0
        %1569 = vmatpush1.msra.mxu0 0.0
        %1570 = vmatprep.subr.mxu0 0.0
        %1571 = vmatpush1.msra.mxu0 0.0
        %1572 = vmatprep.subr.mxu0 0.0
        %1573 = vmatpush1.msra.mxu0 0.0
        %1574 = vmatprep.subr.mxu0 0.0
        %1575 = vmatpush1.msra.mxu0 0.0
        %1576 = vmatprep.subr.mxu0 0.0
        %1577 = vmatpush1.msra.mxu0 0.0
        %1578 = vmatprep.subr.mxu0 0.0
        %1579 = vmatpush1.msra.mxu0 0.0
        %1580 = vmatprep.subr.mxu0 0.0
        %1581 = vmatpush1.msra.mxu0 0.0
        %1582 = vmatprep.subr.mxu0 0.0
        %1583 = vmatpush1.msra.mxu0 0.0
        %1584 = vmatprep.subr.mxu0 0.0
        %1585 = vmatpush1.msra.mxu0 0.0
        %1586 = vmatprep.subr.mxu0 0.0
        %1587 = vmatpush1.msra.mxu0 0.0
        %1588 = vmatprep.subr.mxu0 0.0
        %1589 = vmatpush1.msra.mxu0 0.0
        %1590 = vmatprep.subr.mxu0 0.0
        %1591 = vmatpush1.msra.mxu0 0.0
        %1592 = vmatprep.subr.mxu0 0.0
        %1593 = vmatpush1.msra.mxu0 0.0
        %1594 = vmatprep.subr.mxu0 0.0
        %1595 = vmatpush1.msra.mxu0 %v1444
        %1596 = vmatprep.subr.mxu0 0.0
        %1597 = vmatpush1.msra.mxu0 %v1439
        %1598 = vmatprep.subr.mxu0 0.0
        %1599 = vmatpush2.msra.mxu0 0.0
        %1600 = vmatprep.subr.mxu0 0.0
        %1601 = vmatpush2.msra.mxu0 0.0
        %1602 = vmatprep.subr.mxu0 0.0
        %1603 = vmatpush2.msra.mxu0 0.0
        %1604 = vmatprep.subr.mxu0 0.0
        %1605 = vmatpush2.msra.mxu0 0.0
        %1606 = vmatprep.subr.mxu0 0.0
        %1607 = vmatpush2.msra.mxu0 0.0
        %1608 = vmatprep.subr.mxu0 0.0
        %1609 = vmatpush2.msra.mxu0 0.0
        %1610 = vmatprep.subr.mxu0 0.0
        %1611 = vmatpush2.msra.mxu0 0.0
        %1612 = vmatprep.subr.mxu0 0.0
        %1613 = vmatpush2.msra.mxu0 0.0
        %1614 = vmatprep.subr.mxu0 0.0
        %1615 = vmatpush2.msra.mxu0 0.0
        %1616 = vmatprep.subr.mxu0 0.0
        %1617 = vmatpush2.msra.mxu0 0.0
        %1618 = vmatprep.subr.mxu0 0.0
        %1619 = vmatpush2.msra.mxu0 0.0
        %1620 = vmatprep.subr.mxu0 0.0
        %1621 = vmatpush2.msra.mxu0 0.0
        %1622 = vmatprep.subr.mxu0 0.0
        %1623 = vmatpush2.msra.mxu0 0.0
        %1624 = vmatprep.subr.mxu0 0.0
        %1625 = vmatpush2.msra.mxu0 0.0
        %1626 = vmatprep.subr.mxu0 0.0
        %1627 = vmatpush2.msra.mxu0 0.0
        %1628 = vmatprep.subr.mxu0 0.0
        %1629 = vmatpush2.msra.mxu0 0.0
        %1630 = vmatprep.mubr.f32.mxu0 0.0
        %1631 = vmatmul.mubr.f32.gmra.mxu0 %v1561
        %v1632 = vpop.f32.mrf.mxu0
        %v1633 = vadd.f32 0.0, %v1632
        %v1634 = vpop.f32.mrf.mxu0
        %1635 = vmatprep.mubr.f32.mxu0 0.0
        %1636 = vmatmul.mubr.f32.gmra.mxu0 %v1564
        %v1637 = vpop.f32.mrf.mxu0
        %v1638 = vadd.f32 0.0, %v1637
        %v1639 = vpop.f32.mrf.mxu0
        %1640 = vdwg.mxu0
        %1641 = vrot.lane.b32.xlu0 %v1447, 124
        %v1642 = vpop.permute.xlu0 %1641
        %1643 = vrot.lane.b32.xlu0 %v1448, 124
        %v1644 = vpop.permute.xlu0 %1643
        %1645 = vrot.lane.b32.xlu0 %v1352, 124
        %v1646 = vpop.permute.xlu0 %1645
        %1647 = vrot.lane.b32.xlu0 %v1357, 124
        %v1648 = vpop.permute.xlu0 %1647
        %v1649 = vsel %vm1449, %v1642, 0
        %v1651 = vsel %vm1449, %v1644, 0
        %v1653 = vsel %vm1449, %v1646, 0
        %v1655 = vsel %vm1449, %v1648, 0
        %1657 = vmatprep.subr.mxu0 0.0
        %1658 = vmatpush1.xpose.msra.mxu0 0.0
        %1659 = vmatprep.subr.mxu0 0.0
        %1660 = vmatpush1.xpose.msra.mxu0 0.0
        %1661 = vmatprep.subr.mxu0 0.0
        %1662 = vmatpush1.xpose.msra.mxu0 0.0
        %1663 = vmatprep.subr.mxu0 0.0
        %1664 = vmatpush1.xpose.msra.mxu0 0.0
        %1665 = vmatprep.subr.mxu0 0.0
        %1666 = vmatpush1.xpose.msra.mxu0 0.0
        %1667 = vmatprep.subr.mxu0 0.0
        %1668 = vmatpush1.xpose.msra.mxu0 0.0
        %1669 = vmatprep.subr.mxu0 0.0
        %1670 = vmatpush1.xpose.msra.mxu0 0.0
        %1671 = vmatprep.subr.mxu0 0.0
        %1672 = vmatpush1.xpose.msra.mxu0 0.0
        %1673 = vmatprep.subr.mxu0 0.0
        %1674 = vmatpush1.xpose.msra.mxu0 0.0
        %1675 = vmatprep.subr.mxu0 0.0
        %1676 = vmatpush1.xpose.msra.mxu0 0.0
        %1677 = vmatprep.subr.mxu0 0.0
        %1678 = vmatpush1.xpose.msra.mxu0 0.0
        %1679 = vmatprep.subr.mxu0 0.0
        %1680 = vmatpush1.xpose.msra.mxu0 0.0
        %1681 = vmatprep.subr.mxu0 0.0
        %1682 = vmatpush1.xpose.msra.mxu0 0.0
        %1683 = vmatprep.subr.mxu0 0.0
        %1684 = vmatpush1.xpose.msra.mxu0 0.0
        %1685 = vmatprep.subr.mxu0 0.0
        %1686 = vmatpush1.xpose.msra.mxu0 %v1655
        %1687 = vmatprep.subr.mxu0 0.0
        %1688 = vmatpush1.xpose.msra.mxu0 %v1653
        %1689 = vmatprep.subr.mxu0 0.0
        %1690 = vmatpush2.xpose.msra.mxu0 0.0
        %1691 = vmatprep.subr.mxu0 0.0
        %1692 = vmatpush2.xpose.msra.mxu0 0.0
        %1693 = vmatprep.subr.mxu0 0.0
        %1694 = vmatpush2.xpose.msra.mxu0 0.0
        %1695 = vmatprep.subr.mxu0 0.0
        %1696 = vmatpush2.xpose.msra.mxu0 0.0
        %1697 = vmatprep.subr.mxu0 0.0
        %1698 = vmatpush2.xpose.msra.mxu0 0.0
        %1699 = vmatprep.subr.mxu0 0.0
        %1700 = vmatpush2.xpose.msra.mxu0 0.0
        %1701 = vmatprep.subr.mxu0 0.0
        %1702 = vmatpush2.xpose.msra.mxu0 0.0
        %1703 = vmatprep.subr.mxu0 0.0
        %1704 = vmatpush2.xpose.msra.mxu0 0.0
        %1705 = vmatprep.subr.mxu0 0.0
        %1706 = vmatpush2.xpose.msra.mxu0 0.0
        %1707 = vmatprep.subr.mxu0 0.0
        %1708 = vmatpush2.xpose.msra.mxu0 0.0
        %1709 = vmatprep.subr.mxu0 0.0
        %1710 = vmatpush2.xpose.msra.mxu0 0.0
        %1711 = vmatprep.subr.mxu0 0.0
        %1712 = vmatpush2.xpose.msra.mxu0 0.0
        %1713 = vmatprep.subr.mxu0 0.0
        %1714 = vmatpush2.xpose.msra.mxu0 0.0
        %1715 = vmatprep.subr.mxu0 0.0
        %1716 = vmatpush2.xpose.msra.mxu0 0.0
        %1717 = vmatprep.subr.mxu0 0.0
        %1718 = vmatpush2.xpose.msra.mxu0 0.0
        %1719 = vmatprep.subr.mxu0 0.0
        %1720 = vmatpush2.xpose.msra.mxu0 0.0
        %1721 = vmatprep.mubr.f32.mxu0 0.0
        %1722 = vmatmul.mubr.f32.gmra.mxu0 %v1649
        %v1723 = vpop.f32.mrf.mxu0
        %v1724 = vadd.f32 0.0, %v1723
        %v1725 = vpop.f32.mrf.mxu0
        %1726 = vmatprep.mubr.f32.mxu0 0.0
        %1727 = vmatmul.mubr.f32.gmra.mxu0 %v1651
        %v1728 = vpop.f32.mrf.mxu0
        %v1729 = vadd.f32 0.0, %v1728
        %v1730 = vpop.f32.mrf.mxu0
        %1731 = vdwg.mxu0
        %v1732 = vsel %vm1537, %v1724, -inf
        %1733 = vmax.xlane.f32.xlu0 %v1732
        %v1734 = vpop.xlane.xlu0 %1733
        %v1735 = vsel %vm1537, %v1729, -inf
        %1736 = vmax.xlane.f32.xlu0 %v1735
        %v1737 = vpop.xlane.xlu0 %1736
        %v1738 = vsub.f32 %v1724, %v1734
        %v1739 = vsub.f32 %v1729, %v1737
        %v1740 = vmul.f32 %v1738, 1.442695
        %v1741 = vpow.pop %v1740
        %v1742 = vmul.f32 %v1739, 1.442695
        %v1743 = vpow.pop %v1742
        %v1744 = vsel %vm1537, %v1741, 0.0
        %1745 = vadd.xlane.f32.xlu0 %v1744
        %v1746 = vpop.xlane.xlu0 %1745
        %v1747 = vsel %vm1537, %v1743, 0.0
        %1748 = vadd.xlane.f32.xlu0 %v1747
        %v1749 = vpop.xlane.xlu0 %1748
        %v1750 = vrcp.pop %v1746
        %v1751 = vmul.f32 %v1741, %v1750
        %v1752 = vrcp.pop %v1749
        %v1753 = vmul.f32 %v1743, %v1752
        %1756 = vrot.lane.b32.xlu0 %v1439, 124
        %v1757 = vpop.permute.xlu0 %1756
        %1758 = vrot.lane.b32.xlu0 %v1444, 124
        %v1759 = vpop.permute.xlu0 %1758
        %v1763 = vsel %vm1537, %v1751, 0
        %v1766 = vsel %vm1537, %v1753, 0
        %1768 = vmatprep.subr.mxu0 0.0
        %1769 = vmatpush1.msra.mxu0 0.0
        %1770 = vmatprep.subr.mxu0 0.0
        %1771 = vmatpush1.msra.mxu0 0.0
        %1772 = vmatprep.subr.mxu0 0.0
        %1773 = vmatpush1.msra.mxu0 0.0
        %1774 = vmatprep.subr.mxu0 0.0
        %1775 = vmatpush1.msra.mxu0 0.0
        %1776 = vmatprep.subr.mxu0 0.0
        %1777 = vmatpush1.msra.mxu0 0.0
        %1778 = vmatprep.subr.mxu0 0.0
        %1779 = vmatpush1.msra.mxu0 0.0
        %1780 = vmatprep.subr.mxu0 0.0
        %1781 = vmatpush1.msra.mxu0 0.0
        %1782 = vmatprep.subr.mxu0 0.0
        %1783 = vmatpush1.msra.mxu0 0.0
        %1784 = vmatprep.subr.mxu0 0.0
        %1785 = vmatpush1.msra.mxu0 0.0
        %1786 = vmatprep.subr.mxu0 0.0
        %1787 = vmatpush1.msra.mxu0 0.0
        %1788 = vmatprep.subr.mxu0 0.0
        %1789 = vmatpush1.msra.mxu0 0.0
        %1790 = vmatprep.subr.mxu0 0.0
        %1791 = vmatpush1.msra.mxu0 0.0
        %1792 = vmatprep.subr.mxu0 0.0
        %1793 = vmatpush1.msra.mxu0 0.0
        %1794 = vmatprep.subr.mxu0 0.0
        %1795 = vmatpush1.msra.mxu0 0.0
        %1796 = vmatprep.subr.mxu0 0.0
        %1797 = vmatpush1.msra.mxu0 %v1759
        %1798 = vmatprep.subr.mxu0 0.0
        %1799 = vmatpush1.msra.mxu0 %v1757
        %1800 = vmatprep.subr.mxu0 0.0
        %1801 = vmatpush2.msra.mxu0 0.0
        %1802 = vmatprep.subr.mxu0 0.0
        %1803 = vmatpush2.msra.mxu0 0.0
        %1804 = vmatprep.subr.mxu0 0.0
        %1805 = vmatpush2.msra.mxu0 0.0
        %1806 = vmatprep.subr.mxu0 0.0
        %1807 = vmatpush2.msra.mxu0 0.0
        %1808 = vmatprep.subr.mxu0 0.0
        %1809 = vmatpush2.msra.mxu0 0.0
        %1810 = vmatprep.subr.mxu0 0.0
        %1811 = vmatpush2.msra.mxu0 0.0
        %1812 = vmatprep.subr.mxu0 0.0
        %1813 = vmatpush2.msra.mxu0 0.0
        %1814 = vmatprep.subr.mxu0 0.0
        %1815 = vmatpush2.msra.mxu0 0.0
        %1816 = vmatprep.subr.mxu0 0.0
        %1817 = vmatpush2.msra.mxu0 0.0
        %1818 = vmatprep.subr.mxu0 0.0
        %1819 = vmatpush2.msra.mxu0 0.0
        %1820 = vmatprep.subr.mxu0 0.0
        %1821 = vmatpush2.msra.mxu0 0.0
        %1822 = vmatprep.subr.mxu0 0.0
        %1823 = vmatpush2.msra.mxu0 0.0
        %1824 = vmatprep.subr.mxu0 0.0
        %1825 = vmatpush2.msra.mxu0 0.0
        %1826 = vmatprep.subr.mxu0 0.0
        %1827 = vmatpush2.msra.mxu0 0.0
        %1828 = vmatprep.subr.mxu0 0.0
        %1829 = vmatpush2.msra.mxu0 0.0
        %1830 = vmatprep.subr.mxu0 0.0
        %1831 = vmatpush2.msra.mxu0 0.0
        %1832 = vmatprep.mubr.f32.mxu0 0.0
        %1833 = vmatmul.mubr.f32.gmra.mxu0 %v1763
        %v1834 = vpop.f32.mrf.mxu0
        %v1835 = vadd.f32 0.0, %v1834
        %v1836 = vpop.f32.mrf.mxu0
        %1837 = vmatprep.mubr.f32.mxu0 0.0
        %1838 = vmatmul.mubr.f32.gmra.mxu0 %v1766
        %v1839 = vpop.f32.mrf.mxu0
        %v1840 = vadd.f32 0.0, %v1839
        %v1841 = vpop.f32.mrf.mxu0
        %1842 = vdwg.mxu0
        %1843 = vrot.lane.b32.xlu0 %v1447, 120
        %v1844 = vpop.permute.xlu0 %1843
        %1845 = vrot.lane.b32.xlu0 %v1448, 120
        %v1846 = vpop.permute.xlu0 %1845
        %1847 = vrot.lane.b32.xlu0 %v1352, 120
        %v1848 = vpop.permute.xlu0 %1847
        %1849 = vrot.lane.b32.xlu0 %v1357, 120
        %v1850 = vpop.permute.xlu0 %1849
        %v1851 = vsel %vm1449, %v1844, 0
        %v1853 = vsel %vm1449, %v1846, 0
        %v1855 = vsel %vm1449, %v1848, 0
        %v1857 = vsel %vm1449, %v1850, 0
        %1859 = vmatprep.subr.mxu0 0.0
        %1860 = vmatpush1.xpose.msra.mxu0 0.0
        %1861 = vmatprep.subr.mxu0 0.0
        %1862 = vmatpush1.xpose.msra.mxu0 0.0
        %1863 = vmatprep.subr.mxu0 0.0
        %1864 = vmatpush1.xpose.msra.mxu0 0.0
        %1865 = vmatprep.subr.mxu0 0.0
        %1866 = vmatpush1.xpose.msra.mxu0 0.0
        %1867 = vmatprep.subr.mxu0 0.0
        %1868 = vmatpush1.xpose.msra.mxu0 0.0
        %1869 = vmatprep.subr.mxu0 0.0
        %1870 = vmatpush1.xpose.msra.mxu0 0.0
        %1871 = vmatprep.subr.mxu0 0.0
        %1872 = vmatpush1.xpose.msra.mxu0 0.0
        %1873 = vmatprep.subr.mxu0 0.0
        %1874 = vmatpush1.xpose.msra.mxu0 0.0
        %1875 = vmatprep.subr.mxu0 0.0
        %1876 = vmatpush1.xpose.msra.mxu0 0.0
        %1877 = vmatprep.subr.mxu0 0.0
        %1878 = vmatpush1.xpose.msra.mxu0 0.0
        %1879 = vmatprep.subr.mxu0 0.0
        %1880 = vmatpush1.xpose.msra.mxu0 0.0
        %1881 = vmatprep.subr.mxu0 0.0
        %1882 = vmatpush1.xpose.msra.mxu0 0.0
        %1883 = vmatprep.subr.mxu0 0.0
        %1884 = vmatpush1.xpose.msra.mxu0 0.0
        %1885 = vmatprep.subr.mxu0 0.0
        %1886 = vmatpush1.xpose.msra.mxu0 0.0
        %1887 = vmatprep.subr.mxu0 0.0
        %1888 = vmatpush1.xpose.msra.mxu0 %v1857
        %1889 = vmatprep.subr.mxu0 0.0
        %1890 = vmatpush1.xpose.msra.mxu0 %v1855
        %1891 = vmatprep.subr.mxu0 0.0
        %1892 = vmatpush2.xpose.msra.mxu0 0.0
        %1893 = vmatprep.subr.mxu0 0.0
        %1894 = vmatpush2.xpose.msra.mxu0 0.0
        %1895 = vmatprep.subr.mxu0 0.0
        %1896 = vmatpush2.xpose.msra.mxu0 0.0
        %1897 = vmatprep.subr.mxu0 0.0
        %1898 = vmatpush2.xpose.msra.mxu0 0.0
        %1899 = vmatprep.subr.mxu0 0.0
        %1900 = vmatpush2.xpose.msra.mxu0 0.0
        %1901 = vmatprep.subr.mxu0 0.0
        %1902 = vmatpush2.xpose.msra.mxu0 0.0
        %1903 = vmatprep.subr.mxu0 0.0
        %1904 = vmatpush2.xpose.msra.mxu0 0.0
        %1905 = vmatprep.subr.mxu0 0.0
        %1906 = vmatpush2.xpose.msra.mxu0 0.0
        %1907 = vmatprep.subr.mxu0 0.0
        %1908 = vmatpush2.xpose.msra.mxu0 0.0
        %1909 = vmatprep.subr.mxu0 0.0
        %1910 = vmatpush2.xpose.msra.mxu0 0.0
        %1911 = vmatprep.subr.mxu0 0.0
        %1912 = vmatpush2.xpose.msra.mxu0 0.0
        %1913 = vmatprep.subr.mxu0 0.0
        %1914 = vmatpush2.xpose.msra.mxu0 0.0
        %1915 = vmatprep.subr.mxu0 0.0
        %1916 = vmatpush2.xpose.msra.mxu0 0.0
        %1917 = vmatprep.subr.mxu0 0.0
        %1918 = vmatpush2.xpose.msra.mxu0 0.0
        %1919 = vmatprep.subr.mxu0 0.0
        %1920 = vmatpush2.xpose.msra.mxu0 0.0
        %1921 = vmatprep.subr.mxu0 0.0
        %1922 = vmatpush2.xpose.msra.mxu0 0.0
        %1923 = vmatprep.mubr.f32.mxu0 0.0
        %1924 = vmatmul.mubr.f32.gmra.mxu0 %v1851
        %v1925 = vpop.f32.mrf.mxu0
        %v1926 = vadd.f32 0.0, %v1925
        %v1927 = vpop.f32.mrf.mxu0
        %1928 = vmatprep.mubr.f32.mxu0 0.0
        %1929 = vmatmul.mubr.f32.gmra.mxu0 %v1853
        %v1930 = vpop.f32.mrf.mxu0
        %v1931 = vadd.f32 0.0, %v1930
        %v1932 = vpop.f32.mrf.mxu0
        %1933 = vdwg.mxu0
        %v1934 = vsel %vm1537, %v1926, -inf
        %1935 = vmax.xlane.f32.xlu0 %v1934
        %v1936 = vpop.xlane.xlu0 %1935
        %v1937 = vsel %vm1537, %v1931, -inf
        %1938 = vmax.xlane.f32.xlu0 %v1937
        %v1939 = vpop.xlane.xlu0 %1938
        %v1940 = vsub.f32 %v1926, %v1936
        %v1941 = vsub.f32 %v1931, %v1939
        %v1942 = vmul.f32 %v1940, 1.442695
        %v1943 = vpow.pop %v1942
        %v1944 = vmul.f32 %v1941, 1.442695
        %v1945 = vpow.pop %v1944
        %v1946 = vsel %vm1537, %v1943, 0.0
        %1947 = vadd.xlane.f32.xlu0 %v1946
        %v1948 = vpop.xlane.xlu0 %1947
        %v1949 = vsel %vm1537, %v1945, 0.0
        %1950 = vadd.xlane.f32.xlu0 %v1949
        %v1951 = vpop.xlane.xlu0 %1950
        %v1952 = vrcp.pop %v1948
        %v1953 = vmul.f32 %v1943, %v1952
        %v1954 = vrcp.pop %v1951
        %v1955 = vmul.f32 %v1945, %v1954
        %1956 = vrot.lane.b32.xlu0 %v1439, 120
        %v1957 = vpop.permute.xlu0 %1956
        %1958 = vrot.lane.b32.xlu0 %v1444, 120
        %v1959 = vpop.permute.xlu0 %1958
        %v1963 = vsel %vm1537, %v1953, 0
        %v1966 = vsel %vm1537, %v1955, 0
        %1968 = vmatprep.subr.mxu0 0.0
        %1969 = vmatpush1.msra.mxu0 0.0
        %1970 = vmatprep.subr.mxu0 0.0
        %1971 = vmatpush1.msra.mxu0 0.0
        %1972 = vmatprep.subr.mxu0 0.0
        %1973 = vmatpush1.msra.mxu0 0.0
        %1974 = vmatprep.subr.mxu0 0.0
        %1975 = vmatpush1.msra.mxu0 0.0
        %1976 = vmatprep.subr.mxu0 0.0
        %1977 = vmatpush1.msra.mxu0 0.0
        %1978 = vmatprep.subr.mxu0 0.0
        %1979 = vmatpush1.msra.mxu0 0.0
        %1980 = vmatprep.subr.mxu0 0.0
        %1981 = vmatpush1.msra.mxu0 0.0
        %1982 = vmatprep.subr.mxu0 0.0
        %1983 = vmatpush1.msra.mxu0 0.0
        %1984 = vmatprep.subr.mxu0 0.0
        %1985 = vmatpush1.msra.mxu0 0.0
        %1986 = vmatprep.subr.mxu0 0.0
        %1987 = vmatpush1.msra.mxu0 0.0
        %1988 = vmatprep.subr.mxu0 0.0
        %1989 = vmatpush1.msra.mxu0 0.0
        %1990 = vmatprep.subr.mxu0 0.0
        %1991 = vmatpush1.msra.mxu0 0.0
        %1992 = vmatprep.subr.mxu0 0.0
        %1993 = vmatpush1.msra.mxu0 0.0
        %1994 = vmatprep.subr.mxu0 0.0
        %1995 = vmatpush1.msra.mxu0 0.0
        %1996 = vmatprep.subr.mxu0 0.0
        %1997 = vmatpush1.msra.mxu0 %v1959
        %1998 = vmatprep.subr.mxu0 0.0
        %1999 = vmatpush1.msra.mxu0 %v1957
        %2000 = vmatprep.subr.mxu0 0.0
        %2001 = vmatpush2.msra.mxu0 0.0
        %2002 = vmatprep.subr.mxu0 0.0
        %2003 = vmatpush2.msra.mxu0 0.0
        %2004 = vmatprep.subr.mxu0 0.0
        %2005 = vmatpush2.msra.mxu0 0.0
        %2006 = vmatprep.subr.mxu0 0.0
        %2007 = vmatpush2.msra.mxu0 0.0
        %2008 = vmatprep.subr.mxu0 0.0
        %2009 = vmatpush2.msra.mxu0 0.0
        %2010 = vmatprep.subr.mxu0 0.0
        %2011 = vmatpush2.msra.mxu0 0.0
        %2012 = vmatprep.subr.mxu0 0.0
        %2013 = vmatpush2.msra.mxu0 0.0
        %2014 = vmatprep.subr.mxu0 0.0
        %2015 = vmatpush2.msra.mxu0 0.0
        %2016 = vmatprep.subr.mxu0 0.0
        %2017 = vmatpush2.msra.mxu0 0.0
        %2018 = vmatprep.subr.mxu0 0.0
        %2019 = vmatpush2.msra.mxu0 0.0
        %2020 = vmatprep.subr.mxu0 0.0
        %2021 = vmatpush2.msra.mxu0 0.0
        %2022 = vmatprep.subr.mxu0 0.0
        %2023 = vmatpush2.msra.mxu0 0.0
        %2024 = vmatprep.subr.mxu0 0.0
        %2025 = vmatpush2.msra.mxu0 0.0
        %2026 = vmatprep.subr.mxu0 0.0
        %2027 = vmatpush2.msra.mxu0 0.0
        %2028 = vmatprep.subr.mxu0 0.0
        %2029 = vmatpush2.msra.mxu0 0.0
        %2030 = vmatprep.subr.mxu0 0.0
        %2031 = vmatpush2.msra.mxu0 0.0
        %2032 = vmatprep.mubr.f32.mxu0 0.0
        %2033 = vmatmul.mubr.f32.gmra.mxu0 %v1963
        %v2034 = vpop.f32.mrf.mxu0
        %v2035 = vadd.f32 0.0, %v2034
        %v2036 = vpop.f32.mrf.mxu0
        %2037 = vmatprep.mubr.f32.mxu0 0.0
        %2038 = vmatmul.mubr.f32.gmra.mxu0 %v1966
        %v2039 = vpop.f32.mrf.mxu0
        %v2040 = vadd.f32 0.0, %v2039
        %v2041 = vpop.f32.mrf.mxu0
        %2042 = vdwg.mxu0
        %2043 = vrot.lane.b32.xlu0 %v1447, 116
        %v2044 = vpop.permute.xlu0 %2043
        %2045 = vrot.lane.b32.xlu0 %v1448, 116
        %v2046 = vpop.permute.xlu0 %2045
        %2047 = vrot.lane.b32.xlu0 %v1352, 116
        %v2048 = vpop.permute.xlu0 %2047
        %2049 = vrot.lane.b32.xlu0 %v1357, 116
        %v2050 = vpop.permute.xlu0 %2049
        %v2051 = vsel %vm1449, %v2044, 0
        %v2053 = vsel %vm1449, %v2046, 0
        %v2055 = vsel %vm1449, %v2048, 0
        %v2057 = vsel %vm1449, %v2050, 0
        %2059 = vmatprep.subr.mxu0 0.0
        %2060 = vmatpush1.xpose.msra.mxu0 0.0
        %2061 = vmatprep.subr.mxu0 0.0
        %2062 = vmatpush1.xpose.msra.mxu0 0.0
        %2063 = vmatprep.subr.mxu0 0.0
        %2064 = vmatpush1.xpose.msra.mxu0 0.0
        %2065 = vmatprep.subr.mxu0 0.0
        %2066 = vmatpush1.xpose.msra.mxu0 0.0
        %2067 = vmatprep.subr.mxu0 0.0
        %2068 = vmatpush1.xpose.msra.mxu0 0.0
        %2069 = vmatprep.subr.mxu0 0.0
        %2070 = vmatpush1.xpose.msra.mxu0 0.0
        %2071 = vmatprep.subr.mxu0 0.0
        %2072 = vmatpush1.xpose.msra.mxu0 0.0
        %2073 = vmatprep.subr.mxu0 0.0
        %2074 = vmatpush1.xpose.msra.mxu0 0.0
        %2075 = vmatprep.subr.mxu0 0.0
        %2076 = vmatpush1.xpose.msra.mxu0 0.0
        %2077 = vmatprep.subr.mxu0 0.0
        %2078 = vmatpush1.xpose.msra.mxu0 0.0
        %2079 = vmatprep.subr.mxu0 0.0
        %2080 = vmatpush1.xpose.msra.mxu0 0.0
        %2081 = vmatprep.subr.mxu0 0.0
        %2082 = vmatpush1.xpose.msra.mxu0 0.0
        %2083 = vmatprep.subr.mxu0 0.0
        %2084 = vmatpush1.xpose.msra.mxu0 0.0
        %2085 = vmatprep.subr.mxu0 0.0
        %2086 = vmatpush1.xpose.msra.mxu0 0.0
        %2087 = vmatprep.subr.mxu0 0.0
        %2088 = vmatpush1.xpose.msra.mxu0 %v2057
        %2089 = vmatprep.subr.mxu0 0.0
        %2090 = vmatpush1.xpose.msra.mxu0 %v2055
        %2091 = vmatprep.subr.mxu0 0.0
        %2092 = vmatpush2.xpose.msra.mxu0 0.0
        %2093 = vmatprep.subr.mxu0 0.0
        %2094 = vmatpush2.xpose.msra.mxu0 0.0
        %2095 = vmatprep.subr.mxu0 0.0
        %2096 = vmatpush2.xpose.msra.mxu0 0.0
        %2097 = vmatprep.subr.mxu0 0.0
        %2098 = vmatpush2.xpose.msra.mxu0 0.0
        %2099 = vmatprep.subr.mxu0 0.0
        %2100 = vmatpush2.xpose.msra.mxu0 0.0
        %2101 = vmatprep.subr.mxu0 0.0
        %2102 = vmatpush2.xpose.msra.mxu0 0.0
        %2103 = vmatprep.subr.mxu0 0.0
        %2104 = vmatpush2.xpose.msra.mxu0 0.0
        %2105 = vmatprep.subr.mxu0 0.0
        %2106 = vmatpush2.xpose.msra.mxu0 0.0
        %2107 = vmatprep.subr.mxu0 0.0
        %2108 = vmatpush2.xpose.msra.mxu0 0.0
        %2109 = vmatprep.subr.mxu0 0.0
        %2110 = vmatpush2.xpose.msra.mxu0 0.0
        %2111 = vmatprep.subr.mxu0 0.0
        %2112 = vmatpush2.xpose.msra.mxu0 0.0
        %2113 = vmatprep.subr.mxu0 0.0
        %2114 = vmatpush2.xpose.msra.mxu0 0.0
        %2115 = vmatprep.subr.mxu0 0.0
        %2116 = vmatpush2.xpose.msra.mxu0 0.0
        %2117 = vmatprep.subr.mxu0 0.0
        %2118 = vmatpush2.xpose.msra.mxu0 0.0
        %2119 = vmatprep.subr.mxu0 0.0
        %2120 = vmatpush2.xpose.msra.mxu0 0.0
        %2121 = vmatprep.subr.mxu0 0.0
        %2122 = vmatpush2.xpose.msra.mxu0 0.0
        %2123 = vmatprep.mubr.f32.mxu0 0.0
        %2124 = vmatmul.mubr.f32.gmra.mxu0 %v2051
        %v2125 = vpop.f32.mrf.mxu0
        %v2126 = vadd.f32 0.0, %v2125
        %v2127 = vpop.f32.mrf.mxu0
        %2128 = vmatprep.mubr.f32.mxu0 0.0
        %2129 = vmatmul.mubr.f32.gmra.mxu0 %v2053
        %v2130 = vpop.f32.mrf.mxu0
        %v2131 = vadd.f32 0.0, %v2130
        %v2132 = vpop.f32.mrf.mxu0
        %2133 = vdwg.mxu0
        %v2134 = vsel %vm1537, %v2126, -inf
        %2135 = vmax.xlane.f32.xlu0 %v2134
        %v2136 = vpop.xlane.xlu0 %2135
        %v2137 = vsel %vm1537, %v2131, -inf
        %2138 = vmax.xlane.f32.xlu0 %v2137
        %v2139 = vpop.xlane.xlu0 %2138
        %v2140 = vsub.f32 %v2126, %v2136
        %v2141 = vsub.f32 %v2131, %v2139
        %v2142 = vmul.f32 %v2140, 1.442695
        %v2143 = vpow.pop %v2142
        %v2144 = vmul.f32 %v2141, 1.442695
        %v2145 = vpow.pop %v2144
        %v2146 = vsel %vm1537, %v2143, 0.0
        %2147 = vadd.xlane.f32.xlu0 %v2146
        %v2148 = vpop.xlane.xlu0 %2147
        %v2149 = vsel %vm1537, %v2145, 0.0
        %2150 = vadd.xlane.f32.xlu0 %v2149
        %v2151 = vpop.xlane.xlu0 %2150
        %v2152 = vrcp.pop %v2148
        %v2153 = vmul.f32 %v2143, %v2152
        %v2154 = vrcp.pop %v2151
        %v2155 = vmul.f32 %v2145, %v2154
        %2156 = vrot.lane.b32.xlu0 %v1439, 116
        %v2157 = vpop.permute.xlu0 %2156
        %2158 = vrot.lane.b32.xlu0 %v1444, 116
        %v2159 = vpop.permute.xlu0 %2158
        %v2163 = vsel %vm1537, %v2153, 0
        %v2166 = vsel %vm1537, %v2155, 0
        %2168 = vmatprep.subr.mxu0 0.0
        %2169 = vmatpush1.msra.mxu0 0.0
        %2170 = vmatprep.subr.mxu0 0.0
        %2171 = vmatpush1.msra.mxu0 0.0
        %2172 = vmatprep.subr.mxu0 0.0
        %2173 = vmatpush1.msra.mxu0 0.0
        %2174 = vmatprep.subr.mxu0 0.0
        %2175 = vmatpush1.msra.mxu0 0.0
        %2176 = vmatprep.subr.mxu0 0.0
        %2177 = vmatpush1.msra.mxu0 0.0
        %2178 = vmatprep.subr.mxu0 0.0
        %2179 = vmatpush1.msra.mxu0 0.0
        %2180 = vmatprep.subr.mxu0 0.0
        %2181 = vmatpush1.msra.mxu0 0.0
        %2182 = vmatprep.subr.mxu0 0.0
        %2183 = vmatpush1.msra.mxu0 0.0
        %2184 = vmatprep.subr.mxu0 0.0
        %2185 = vmatpush1.msra.mxu0 0.0
        %2186 = vmatprep.subr.mxu0 0.0
        %2187 = vmatpush1.msra.mxu0 0.0
        %2188 = vmatprep.subr.mxu0 0.0
        %2189 = vmatpush1.msra.mxu0 0.0
        %2190 = vmatprep.subr.mxu0 0.0
        %2191 = vmatpush1.msra.mxu0 0.0
        %2192 = vmatprep.subr.mxu0 0.0
        %2193 = vmatpush1.msra.mxu0 0.0
        %2194 = vmatprep.subr.mxu0 0.0
        %2195 = vmatpush1.msra.mxu0 0.0
        %2196 = vmatprep.subr.mxu0 0.0
        %2197 = vmatpush1.msra.mxu0 %v2159
        %2198 = vmatprep.subr.mxu0 0.0
        %2199 = vmatpush1.msra.mxu0 %v2157
        %2200 = vmatprep.subr.mxu0 0.0
        %2201 = vmatpush2.msra.mxu0 0.0
        %2202 = vmatprep.subr.mxu0 0.0
        %2203 = vmatpush2.msra.mxu0 0.0
        %2204 = vmatprep.subr.mxu0 0.0
        %2205 = vmatpush2.msra.mxu0 0.0
        %2206 = vmatprep.subr.mxu0 0.0
        %2207 = vmatpush2.msra.mxu0 0.0
        %2208 = vmatprep.subr.mxu0 0.0
        %2209 = vmatpush2.msra.mxu0 0.0
        %2210 = vmatprep.subr.mxu0 0.0
        %2211 = vmatpush2.msra.mxu0 0.0
        %2212 = vmatprep.subr.mxu0 0.0
        %2213 = vmatpush2.msra.mxu0 0.0
        %2214 = vmatprep.subr.mxu0 0.0
        %2215 = vmatpush2.msra.mxu0 0.0
        %2216 = vmatprep.subr.mxu0 0.0
        %2217 = vmatpush2.msra.mxu0 0.0
        %2218 = vmatprep.subr.mxu0 0.0
        %2219 = vmatpush2.msra.mxu0 0.0
        %2220 = vmatprep.subr.mxu0 0.0
        %2221 = vmatpush2.msra.mxu0 0.0
        %2222 = vmatprep.subr.mxu0 0.0
        %2223 = vmatpush2.msra.mxu0 0.0
        %2224 = vmatprep.subr.mxu0 0.0
        %2225 = vmatpush2.msra.mxu0 0.0
        %2226 = vmatprep.subr.mxu0 0.0
        %2227 = vmatpush2.msra.mxu0 0.0
        %2228 = vmatprep.subr.mxu0 0.0
        %2229 = vmatpush2.msra.mxu0 0.0
        %2230 = vmatprep.subr.mxu0 0.0
        %2231 = vmatpush2.msra.mxu0 0.0
        %2232 = vmatprep.mubr.f32.mxu0 0.0
        %2233 = vmatmul.mubr.f32.gmra.mxu0 %v2163
        %v2234 = vpop.f32.mrf.mxu0
        %v2235 = vadd.f32 0.0, %v2234
        %v2236 = vpop.f32.mrf.mxu0
        %2237 = vmatprep.mubr.f32.mxu0 0.0
        %2238 = vmatmul.mubr.f32.gmra.mxu0 %v2166
        %v2239 = vpop.f32.mrf.mxu0
        %v2240 = vadd.f32 0.0, %v2239
        %v2241 = vpop.f32.mrf.mxu0
        %2242 = vdwg.mxu0
        %2243 = vrot.lane.b32.xlu0 %v1447, 112
        %v2244 = vpop.permute.xlu0 %2243
        %2245 = vrot.lane.b32.xlu0 %v1448, 112
        %v2246 = vpop.permute.xlu0 %2245
        %2247 = vrot.lane.b32.xlu0 %v1352, 112
        %v2248 = vpop.permute.xlu0 %2247
        %2249 = vrot.lane.b32.xlu0 %v1357, 112
        %v2250 = vpop.permute.xlu0 %2249
        %v2251 = vsel %vm1449, %v2244, 0
        %v2253 = vsel %vm1449, %v2246, 0
        %v2255 = vsel %vm1449, %v2248, 0
        %v2257 = vsel %vm1449, %v2250, 0
        %2259 = vmatprep.subr.mxu0 0.0
        %2260 = vmatpush1.xpose.msra.mxu0 0.0
        %2261 = vmatprep.subr.mxu0 0.0
        %2262 = vmatpush1.xpose.msra.mxu0 0.0
        %2263 = vmatprep.subr.mxu0 0.0
        %2264 = vmatpush1.xpose.msra.mxu0 0.0
        %2265 = vmatprep.subr.mxu0 0.0
        %2266 = vmatpush1.xpose.msra.mxu0 0.0
        %2267 = vmatprep.subr.mxu0 0.0
        %2268 = vmatpush1.xpose.msra.mxu0 0.0
        %2269 = vmatprep.subr.mxu0 0.0
        %2270 = vmatpush1.xpose.msra.mxu0 0.0
        %2271 = vmatprep.subr.mxu0 0.0
        %2272 = vmatpush1.xpose.msra.mxu0 0.0
        %2273 = vmatprep.subr.mxu0 0.0
        %2274 = vmatpush1.xpose.msra.mxu0 0.0
        %2275 = vmatprep.subr.mxu0 0.0
        %2276 = vmatpush1.xpose.msra.mxu0 0.0
        %2277 = vmatprep.subr.mxu0 0.0
        %2278 = vmatpush1.xpose.msra.mxu0 0.0
        %2279 = vmatprep.subr.mxu0 0.0
        %2280 = vmatpush1.xpose.msra.mxu0 0.0
        %2281 = vmatprep.subr.mxu0 0.0
        %2282 = vmatpush1.xpose.msra.mxu0 0.0
        %2283 = vmatprep.subr.mxu0 0.0
        %2284 = vmatpush1.xpose.msra.mxu0 0.0
        %2285 = vmatprep.subr.mxu0 0.0
        %2286 = vmatpush1.xpose.msra.mxu0 0.0
        %2287 = vmatprep.subr.mxu0 0.0
        %2288 = vmatpush1.xpose.msra.mxu0 %v2257
        %2289 = vmatprep.subr.mxu0 0.0
        %2290 = vmatpush1.xpose.msra.mxu0 %v2255
        %2291 = vmatprep.subr.mxu0 0.0
        %2292 = vmatpush2.xpose.msra.mxu0 0.0
        %2293 = vmatprep.subr.mxu0 0.0
        %2294 = vmatpush2.xpose.msra.mxu0 0.0
        %2295 = vmatprep.subr.mxu0 0.0
        %2296 = vmatpush2.xpose.msra.mxu0 0.0
        %2297 = vmatprep.subr.mxu0 0.0
        %2298 = vmatpush2.xpose.msra.mxu0 0.0
        %2299 = vmatprep.subr.mxu0 0.0
        %2300 = vmatpush2.xpose.msra.mxu0 0.0
        %2301 = vmatprep.subr.mxu0 0.0
        %2302 = vmatpush2.xpose.msra.mxu0 0.0
        %2303 = vmatprep.subr.mxu0 0.0
        %2304 = vmatpush2.xpose.msra.mxu0 0.0
        %2305 = vmatprep.subr.mxu0 0.0
        %2306 = vmatpush2.xpose.msra.mxu0 0.0
        %2307 = vmatprep.subr.mxu0 0.0
        %2308 = vmatpush2.xpose.msra.mxu0 0.0
        %2309 = vmatprep.subr.mxu0 0.0
        %2310 = vmatpush2.xpose.msra.mxu0 0.0
        %2311 = vmatprep.subr.mxu0 0.0
        %2312 = vmatpush2.xpose.msra.mxu0 0.0
        %2313 = vmatprep.subr.mxu0 0.0
        %2314 = vmatpush2.xpose.msra.mxu0 0.0
        %2315 = vmatprep.subr.mxu0 0.0
        %2316 = vmatpush2.xpose.msra.mxu0 0.0
        %2317 = vmatprep.subr.mxu0 0.0
        %2318 = vmatpush2.xpose.msra.mxu0 0.0
        %2319 = vmatprep.subr.mxu0 0.0
        %2320 = vmatpush2.xpose.msra.mxu0 0.0
        %2321 = vmatprep.subr.mxu0 0.0
        %2322 = vmatpush2.xpose.msra.mxu0 0.0
        %2323 = vmatprep.mubr.f32.mxu0 0.0
        %2324 = vmatmul.mubr.f32.gmra.mxu0 %v2251
        %v2325 = vpop.f32.mrf.mxu0
        %v2326 = vadd.f32 0.0, %v2325
        %v2327 = vpop.f32.mrf.mxu0
        %2328 = vmatprep.mubr.f32.mxu0 0.0
        %2329 = vmatmul.mubr.f32.gmra.mxu0 %v2253
        %v2330 = vpop.f32.mrf.mxu0
        %v2331 = vadd.f32 0.0, %v2330
        %v2332 = vpop.f32.mrf.mxu0
        %2333 = vdwg.mxu0
        %v2334 = vsel %vm1537, %v2326, -inf
        %2335 = vmax.xlane.f32.xlu0 %v2334
        %v2336 = vpop.xlane.xlu0 %2335
        %v2337 = vsel %vm1537, %v2331, -inf
        %2338 = vmax.xlane.f32.xlu0 %v2337
        %v2339 = vpop.xlane.xlu0 %2338
        %v2340 = vsub.f32 %v2326, %v2336
        %v2341 = vsub.f32 %v2331, %v2339
        %v2342 = vmul.f32 %v2340, 1.442695
        %v2343 = vpow.pop %v2342
        %v2344 = vmul.f32 %v2341, 1.442695
        %v2345 = vpow.pop %v2344
        %v2346 = vsel %vm1537, %v2343, 0.0
        %2347 = vadd.xlane.f32.xlu0 %v2346
        %v2348 = vpop.xlane.xlu0 %2347
        %v2349 = vsel %vm1537, %v2345, 0.0
        %2350 = vadd.xlane.f32.xlu0 %v2349
        %v2351 = vpop.xlane.xlu0 %2350
        %v2352 = vrcp.pop %v2348
        %v2353 = vmul.f32 %v2343, %v2352
        %v2354 = vrcp.pop %v2351
        %v2355 = vmul.f32 %v2345, %v2354
        %2356 = vrot.lane.b32.xlu0 %v1439, 112
        %v2357 = vpop.permute.xlu0 %2356
        %2358 = vrot.lane.b32.xlu0 %v1444, 112
        %v2359 = vpop.permute.xlu0 %2358
        %v2363 = vsel %vm1537, %v2353, 0
        %v2366 = vsel %vm1537, %v2355, 0
        %2368 = vmatprep.subr.mxu0 0.0
        %2369 = vmatpush1.msra.mxu0 0.0
        %2370 = vmatprep.subr.mxu0 0.0
        %2371 = vmatpush1.msra.mxu0 0.0
        %2372 = vmatprep.subr.mxu0 0.0
        %2373 = vmatpush1.msra.mxu0 0.0
        %2374 = vmatprep.subr.mxu0 0.0
        %2375 = vmatpush1.msra.mxu0 0.0
        %2376 = vmatprep.subr.mxu0 0.0
        %2377 = vmatpush1.msra.mxu0 0.0
        %2378 = vmatprep.subr.mxu0 0.0
        %2379 = vmatpush1.msra.mxu0 0.0
        %2380 = vmatprep.subr.mxu0 0.0
        %2381 = vmatpush1.msra.mxu0 0.0
        %2382 = vmatprep.subr.mxu0 0.0
        %2383 = vmatpush1.msra.mxu0 0.0
        %2384 = vmatprep.subr.mxu0 0.0
        %2385 = vmatpush1.msra.mxu0 0.0
        %2386 = vmatprep.subr.mxu0 0.0
        %2387 = vmatpush1.msra.mxu0 0.0
        %2388 = vmatprep.subr.mxu0 0.0
        %2389 = vmatpush1.msra.mxu0 0.0
        %2390 = vmatprep.subr.mxu0 0.0
        %2391 = vmatpush1.msra.mxu0 0.0
        %2392 = vmatprep.subr.mxu0 0.0
        %2393 = vmatpush1.msra.mxu0 0.0
        %2394 = vmatprep.subr.mxu0 0.0
        %2395 = vmatpush1.msra.mxu0 0.0
        %2396 = vmatprep.subr.mxu0 0.0
        %2397 = vmatpush1.msra.mxu0 %v2359
        %2398 = vmatprep.subr.mxu0 0.0
        %2399 = vmatpush1.msra.mxu0 %v2357
        %2400 = vmatprep.subr.mxu0 0.0
        %2401 = vmatpush2.msra.mxu0 0.0
        %2402 = vmatprep.subr.mxu0 0.0
        %2403 = vmatpush2.msra.mxu0 0.0
        %2404 = vmatprep.subr.mxu0 0.0
        %2405 = vmatpush2.msra.mxu0 0.0
        %2406 = vmatprep.subr.mxu0 0.0
        %2407 = vmatpush2.msra.mxu0 0.0
        %2408 = vmatprep.subr.mxu0 0.0
        %2409 = vmatpush2.msra.mxu0 0.0
        %2410 = vmatprep.subr.mxu0 0.0
        %2411 = vmatpush2.msra.mxu0 0.0
        %2412 = vmatprep.subr.mxu0 0.0
        %2413 = vmatpush2.msra.mxu0 0.0
        %2414 = vmatprep.subr.mxu0 0.0
        %2415 = vmatpush2.msra.mxu0 0.0
        %2416 = vmatprep.subr.mxu0 0.0
        %2417 = vmatpush2.msra.mxu0 0.0
        %2418 = vmatprep.subr.mxu0 0.0
        %2419 = vmatpush2.msra.mxu0 0.0
        %2420 = vmatprep.subr.mxu0 0.0
        %2421 = vmatpush2.msra.mxu0 0.0
        %2422 = vmatprep.subr.mxu0 0.0
        %2423 = vmatpush2.msra.mxu0 0.0
        %2424 = vmatprep.subr.mxu0 0.0
        %2425 = vmatpush2.msra.mxu0 0.0
        %2426 = vmatprep.subr.mxu0 0.0
        %2427 = vmatpush2.msra.mxu0 0.0
        %2428 = vmatprep.subr.mxu0 0.0
        %2429 = vmatpush2.msra.mxu0 0.0
        %2430 = vmatprep.subr.mxu0 0.0
        %2431 = vmatpush2.msra.mxu0 0.0
        %2432 = vmatprep.mubr.f32.mxu0 0.0
        %2433 = vmatmul.mubr.f32.gmra.mxu0 %v2363
        %v2434 = vpop.f32.mrf.mxu0
        %v2435 = vadd.f32 0.0, %v2434
        %v2436 = vpop.f32.mrf.mxu0
        %2437 = vmatprep.mubr.f32.mxu0 0.0
        %2438 = vmatmul.mubr.f32.gmra.mxu0 %v2366
        %v2439 = vpop.f32.mrf.mxu0
        %v2440 = vadd.f32 0.0, %v2439
        %v2441 = vpop.f32.mrf.mxu0
        %2442 = vdwg.mxu0
        %2443 = vrot.lane.b32.xlu0 %v1447, 108
        %v2444 = vpop.permute.xlu0 %2443
        %2445 = vrot.lane.b32.xlu0 %v1448, 108
        %v2446 = vpop.permute.xlu0 %2445
        %2447 = vrot.lane.b32.xlu0 %v1352, 108
        %v2448 = vpop.permute.xlu0 %2447
        %2449 = vrot.lane.b32.xlu0 %v1357, 108
        %v2450 = vpop.permute.xlu0 %2449
        %v2451 = vsel %vm1449, %v2444, 0
        %v2453 = vsel %vm1449, %v2446, 0
        %v2455 = vsel %vm1449, %v2448, 0
        %v2457 = vsel %vm1449, %v2450, 0
        %2459 = vmatprep.subr.mxu0 0.0
        %2460 = vmatpush1.xpose.msra.mxu0 0.0
        %2461 = vmatprep.subr.mxu0 0.0
        %2462 = vmatpush1.xpose.msra.mxu0 0.0
        %2463 = vmatprep.subr.mxu0 0.0
        %2464 = vmatpush1.xpose.msra.mxu0 0.0
        %2465 = vmatprep.subr.mxu0 0.0
        %2466 = vmatpush1.xpose.msra.mxu0 0.0
        %2467 = vmatprep.subr.mxu0 0.0
        %2468 = vmatpush1.xpose.msra.mxu0 0.0
        %2469 = vmatprep.subr.mxu0 0.0
        %2470 = vmatpush1.xpose.msra.mxu0 0.0
        %2471 = vmatprep.subr.mxu0 0.0
        %2472 = vmatpush1.xpose.msra.mxu0 0.0
        %2473 = vmatprep.subr.mxu0 0.0
        %2474 = vmatpush1.xpose.msra.mxu0 0.0
        %2475 = vmatprep.subr.mxu0 0.0
        %2476 = vmatpush1.xpose.msra.mxu0 0.0
        %2477 = vmatprep.subr.mxu0 0.0
        %2478 = vmatpush1.xpose.msra.mxu0 0.0
        %2479 = vmatprep.subr.mxu0 0.0
        %2480 = vmatpush1.xpose.msra.mxu0 0.0
        %2481 = vmatprep.subr.mxu0 0.0
        %2482 = vmatpush1.xpose.msra.mxu0 0.0
        %2483 = vmatprep.subr.mxu0 0.0
        %2484 = vmatpush1.xpose.msra.mxu0 0.0
        %2485 = vmatprep.subr.mxu0 0.0
        %2486 = vmatpush1.xpose.msra.mxu0 0.0
        %2487 = vmatprep.subr.mxu0 0.0
        %2488 = vmatpush1.xpose.msra.mxu0 %v2457
        %2489 = vmatprep.subr.mxu0 0.0
        %2490 = vmatpush1.xpose.msra.mxu0 %v2455
        %2491 = vmatprep.subr.mxu0 0.0
        %2492 = vmatpush2.xpose.msra.mxu0 0.0
        %2493 = vmatprep.subr.mxu0 0.0
        %2494 = vmatpush2.xpose.msra.mxu0 0.0
        %2495 = vmatprep.subr.mxu0 0.0
        %2496 = vmatpush2.xpose.msra.mxu0 0.0
        %2497 = vmatprep.subr.mxu0 0.0
        %2498 = vmatpush2.xpose.msra.mxu0 0.0
        %2499 = vmatprep.subr.mxu0 0.0
        %2500 = vmatpush2.xpose.msra.mxu0 0.0
        %2501 = vmatprep.subr.mxu0 0.0
        %2502 = vmatpush2.xpose.msra.mxu0 0.0
        %2503 = vmatprep.subr.mxu0 0.0
        %2504 = vmatpush2.xpose.msra.mxu0 0.0
        %2505 = vmatprep.subr.mxu0 0.0
        %2506 = vmatpush2.xpose.msra.mxu0 0.0
        %2507 = vmatprep.subr.mxu0 0.0
        %2508 = vmatpush2.xpose.msra.mxu0 0.0
        %2509 = vmatprep.subr.mxu0 0.0
        %2510 = vmatpush2.xpose.msra.mxu0 0.0
        %2511 = vmatprep.subr.mxu0 0.0
        %2512 = vmatpush2.xpose.msra.mxu0 0.0
        %2513 = vmatprep.subr.mxu0 0.0
        %2514 = vmatpush2.xpose.msra.mxu0 0.0
        %2515 = vmatprep.subr.mxu0 0.0
        %2516 = vmatpush2.xpose.msra.mxu0 0.0
        %2517 = vmatprep.subr.mxu0 0.0
        %2518 = vmatpush2.xpose.msra.mxu0 0.0
        %2519 = vmatprep.subr.mxu0 0.0
        %2520 = vmatpush2.xpose.msra.mxu0 0.0
        %2521 = vmatprep.subr.mxu0 0.0
        %2522 = vmatpush2.xpose.msra.mxu0 0.0
        %2523 = vmatprep.mubr.f32.mxu0 0.0
        %2524 = vmatmul.mubr.f32.gmra.mxu0 %v2451
        %v2525 = vpop.f32.mrf.mxu0
        %v2526 = vadd.f32 0.0, %v2525
        %v2527 = vpop.f32.mrf.mxu0
        %2528 = vmatprep.mubr.f32.mxu0 0.0
        %2529 = vmatmul.mubr.f32.gmra.mxu0 %v2453
        %v2530 = vpop.f32.mrf.mxu0
        %v2531 = vadd.f32 0.0, %v2530
        %v2532 = vpop.f32.mrf.mxu0
        %2533 = vdwg.mxu0
        %v2534 = vsel %vm1537, %v2526, -inf
        %2535 = vmax.xlane.f32.xlu0 %v2534
        %v2536 = vpop.xlane.xlu0 %2535
        %v2537 = vsel %vm1537, %v2531, -inf
        %2538 = vmax.xlane.f32.xlu0 %v2537
        %v2539 = vpop.xlane.xlu0 %2538
        %v2540 = vsub.f32 %v2526, %v2536
        %v2541 = vsub.f32 %v2531, %v2539
        %v2542 = vmul.f32 %v2540, 1.442695
        %v2543 = vpow.pop %v2542
        %v2544 = vmul.f32 %v2541, 1.442695
        %v2545 = vpow.pop %v2544
        %v2546 = vsel %vm1537, %v2543, 0.0
        %2547 = vadd.xlane.f32.xlu0 %v2546
        %v2548 = vpop.xlane.xlu0 %2547
        %v2549 = vsel %vm1537, %v2545, 0.0
        %2550 = vadd.xlane.f32.xlu0 %v2549
        %v2551 = vpop.xlane.xlu0 %2550
        %v2552 = vrcp.pop %v2548
        %v2553 = vmul.f32 %v2543, %v2552
        %v2554 = vrcp.pop %v2551
        %v2555 = vmul.f32 %v2545, %v2554
        %2556 = vrot.lane.b32.xlu0 %v1439, 108
        %v2557 = vpop.permute.xlu0 %2556
        %2558 = vrot.lane.b32.xlu0 %v1444, 108
        %v2559 = vpop.permute.xlu0 %2558
        %v2563 = vsel %vm1537, %v2553, 0
        %v2566 = vsel %vm1537, %v2555, 0
        %2568 = vmatprep.subr.mxu0 0.0
        %2569 = vmatpush1.msra.mxu0 0.0
        %2570 = vmatprep.subr.mxu0 0.0
        %2571 = vmatpush1.msra.mxu0 0.0
        %2572 = vmatprep.subr.mxu0 0.0
        %2573 = vmatpush1.msra.mxu0 0.0
        %2574 = vmatprep.subr.mxu0 0.0
        %2575 = vmatpush1.msra.mxu0 0.0
        %2576 = vmatprep.subr.mxu0 0.0
        %2577 = vmatpush1.msra.mxu0 0.0
        %2578 = vmatprep.subr.mxu0 0.0
        %2579 = vmatpush1.msra.mxu0 0.0
        %2580 = vmatprep.subr.mxu0 0.0
        %2581 = vmatpush1.msra.mxu0 0.0
        %2582 = vmatprep.subr.mxu0 0.0
        %2583 = vmatpush1.msra.mxu0 0.0
        %2584 = vmatprep.subr.mxu0 0.0
        %2585 = vmatpush1.msra.mxu0 0.0
        %2586 = vmatprep.subr.mxu0 0.0
        %2587 = vmatpush1.msra.mxu0 0.0
        %2588 = vmatprep.subr.mxu0 0.0
        %2589 = vmatpush1.msra.mxu0 0.0
        %2590 = vmatprep.subr.mxu0 0.0
        %2591 = vmatpush1.msra.mxu0 0.0
        %2592 = vmatprep.subr.mxu0 0.0
        %2593 = vmatpush1.msra.mxu0 0.0
        %2594 = vmatprep.subr.mxu0 0.0
        %2595 = vmatpush1.msra.mxu0 0.0
        %2596 = vmatprep.subr.mxu0 0.0
        %2597 = vmatpush1.msra.mxu0 %v2559
        %2598 = vmatprep.subr.mxu0 0.0
        %2599 = vmatpush1.msra.mxu0 %v2557
        %2600 = vmatprep.subr.mxu0 0.0
        %2601 = vmatpush2.msra.mxu0 0.0
        %2602 = vmatprep.subr.mxu0 0.0
        %2603 = vmatpush2.msra.mxu0 0.0
        %2604 = vmatprep.subr.mxu0 0.0
        %2605 = vmatpush2.msra.mxu0 0.0
        %2606 = vmatprep.subr.mxu0 0.0
        %2607 = vmatpush2.msra.mxu0 0.0
        %2608 = vmatprep.subr.mxu0 0.0
        %2609 = vmatpush2.msra.mxu0 0.0
        %2610 = vmatprep.subr.mxu0 0.0
        %2611 = vmatpush2.msra.mxu0 0.0
        %2612 = vmatprep.subr.mxu0 0.0
        %2613 = vmatpush2.msra.mxu0 0.0
        %2614 = vmatprep.subr.mxu0 0.0
        %2615 = vmatpush2.msra.mxu0 0.0
        %2616 = vmatprep.subr.mxu0 0.0
        %2617 = vmatpush2.msra.mxu0 0.0
        %2618 = vmatprep.subr.mxu0 0.0
        %2619 = vmatpush2.msra.mxu0 0.0
        %2620 = vmatprep.subr.mxu0 0.0
        %2621 = vmatpush2.msra.mxu0 0.0
        %2622 = vmatprep.subr.mxu0 0.0
        %2623 = vmatpush2.msra.mxu0 0.0
        %2624 = vmatprep.subr.mxu0 0.0
        %2625 = vmatpush2.msra.mxu0 0.0
        %2626 = vmatprep.subr.mxu0 0.0
        %2627 = vmatpush2.msra.mxu0 0.0
        %2628 = vmatprep.subr.mxu0 0.0
        %2629 = vmatpush2.msra.mxu0 0.0
        %2630 = vmatprep.subr.mxu0 0.0
        %2631 = vmatpush2.msra.mxu0 0.0
        %2632 = vmatprep.mubr.f32.mxu0 0.0
        %2633 = vmatmul.mubr.f32.gmra.mxu0 %v2563
        %v2634 = vpop.f32.mrf.mxu0
        %v2635 = vadd.f32 0.0, %v2634
        %v2636 = vpop.f32.mrf.mxu0
        %2637 = vmatprep.mubr.f32.mxu0 0.0
        %2638 = vmatmul.mubr.f32.gmra.mxu0 %v2566
        %v2639 = vpop.f32.mrf.mxu0
        %v2640 = vadd.f32 0.0, %v2639
        %v2641 = vpop.f32.mrf.mxu0
        %2642 = vdwg.mxu0
        %2643 = vrot.lane.b32.xlu0 %v1447, 104
        %v2644 = vpop.permute.xlu0 %2643
        %2645 = vrot.lane.b32.xlu0 %v1448, 104
        %v2646 = vpop.permute.xlu0 %2645
        %2647 = vrot.lane.b32.xlu0 %v1352, 104
        %v2648 = vpop.permute.xlu0 %2647
        %2649 = vrot.lane.b32.xlu0 %v1357, 104
        %v2650 = vpop.permute.xlu0 %2649
        %v2651 = vsel %vm1449, %v2644, 0
        %v2653 = vsel %vm1449, %v2646, 0
        %v2655 = vsel %vm1449, %v2648, 0
        %v2657 = vsel %vm1449, %v2650, 0
        %2659 = vmatprep.subr.mxu0 0.0
        %2660 = vmatpush1.xpose.msra.mxu0 0.0
        %2661 = vmatprep.subr.mxu0 0.0
        %2662 = vmatpush1.xpose.msra.mxu0 0.0
        %2663 = vmatprep.subr.mxu0 0.0
        %2664 = vmatpush1.xpose.msra.mxu0 0.0
        %2665 = vmatprep.subr.mxu0 0.0
        %2666 = vmatpush1.xpose.msra.mxu0 0.0
        %2667 = vmatprep.subr.mxu0 0.0
        %2668 = vmatpush1.xpose.msra.mxu0 0.0
        %2669 = vmatprep.subr.mxu0 0.0
        %2670 = vmatpush1.xpose.msra.mxu0 0.0
        %2671 = vmatprep.subr.mxu0 0.0
        %2672 = vmatpush1.xpose.msra.mxu0 0.0
        %2673 = vmatprep.subr.mxu0 0.0
        %2674 = vmatpush1.xpose.msra.mxu0 0.0
        %2675 = vmatprep.subr.mxu0 0.0
        %2676 = vmatpush1.xpose.msra.mxu0 0.0
        %2677 = vmatprep.subr.mxu0 0.0
        %2678 = vmatpush1.xpose.msra.mxu0 0.0
        %2679 = vmatprep.subr.mxu0 0.0
        %2680 = vmatpush1.xpose.msra.mxu0 0.0
        %2681 = vmatprep.subr.mxu0 0.0
        %2682 = vmatpush1.xpose.msra.mxu0 0.0
        %2683 = vmatprep.subr.mxu0 0.0
        %2684 = vmatpush1.xpose.msra.mxu0 0.0
        %2685 = vmatprep.subr.mxu0 0.0
        %2686 = vmatpush1.xpose.msra.mxu0 0.0
        %2687 = vmatprep.subr.mxu0 0.0
        %2688 = vmatpush1.xpose.msra.mxu0 %v2657
        %2689 = vmatprep.subr.mxu0 0.0
        %2690 = vmatpush1.xpose.msra.mxu0 %v2655
        %2691 = vmatprep.subr.mxu0 0.0
        %2692 = vmatpush2.xpose.msra.mxu0 0.0
        %2693 = vmatprep.subr.mxu0 0.0
        %2694 = vmatpush2.xpose.msra.mxu0 0.0
        %2695 = vmatprep.subr.mxu0 0.0
        %2696 = vmatpush2.xpose.msra.mxu0 0.0
        %2697 = vmatprep.subr.mxu0 0.0
        %2698 = vmatpush2.xpose.msra.mxu0 0.0
        %2699 = vmatprep.subr.mxu0 0.0
        %2700 = vmatpush2.xpose.msra.mxu0 0.0
        %2701 = vmatprep.subr.mxu0 0.0
        %2702 = vmatpush2.xpose.msra.mxu0 0.0
        %2703 = vmatprep.subr.mxu0 0.0
        %2704 = vmatpush2.xpose.msra.mxu0 0.0
        %2705 = vmatprep.subr.mxu0 0.0
        %2706 = vmatpush2.xpose.msra.mxu0 0.0
        %2707 = vmatprep.subr.mxu0 0.0
        %2708 = vmatpush2.xpose.msra.mxu0 0.0
        %2709 = vmatprep.subr.mxu0 0.0
        %2710 = vmatpush2.xpose.msra.mxu0 0.0
        %2711 = vmatprep.subr.mxu0 0.0
        %2712 = vmatpush2.xpose.msra.mxu0 0.0
        %2713 = vmatprep.subr.mxu0 0.0
        %2714 = vmatpush2.xpose.msra.mxu0 0.0
        %2715 = vmatprep.subr.mxu0 0.0
        %2716 = vmatpush2.xpose.msra.mxu0 0.0
        %2717 = vmatprep.subr.mxu0 0.0
        %2718 = vmatpush2.xpose.msra.mxu0 0.0
        %2719 = vmatprep.subr.mxu0 0.0
        %2720 = vmatpush2.xpose.msra.mxu0 0.0
        %2721 = vmatprep.subr.mxu0 0.0
        %2722 = vmatpush2.xpose.msra.mxu0 0.0
        %2723 = vmatprep.mubr.f32.mxu0 0.0
        %2724 = vmatmul.mubr.f32.gmra.mxu0 %v2651
        %v2725 = vpop.f32.mrf.mxu0
        %v2726 = vadd.f32 0.0, %v2725
        %v2727 = vpop.f32.mrf.mxu0
        %2728 = vmatprep.mubr.f32.mxu0 0.0
        %2729 = vmatmul.mubr.f32.gmra.mxu0 %v2653
        %v2730 = vpop.f32.mrf.mxu0
        %v2731 = vadd.f32 0.0, %v2730
        %v2732 = vpop.f32.mrf.mxu0
        %2733 = vdwg.mxu0
        %v2734 = vsel %vm1537, %v2726, -inf
        %2735 = vmax.xlane.f32.xlu0 %v2734
        %v2736 = vpop.xlane.xlu0 %2735
        %v2737 = vsel %vm1537, %v2731, -inf
        %2738 = vmax.xlane.f32.xlu0 %v2737
        %v2739 = vpop.xlane.xlu0 %2738
        %v2740 = vsub.f32 %v2726, %v2736
        %v2741 = vsub.f32 %v2731, %v2739
        %v2742 = vmul.f32 %v2740, 1.442695
        %v2743 = vpow.pop %v2742
        %v2744 = vmul.f32 %v2741, 1.442695
        %v2745 = vpow.pop %v2744
        %v2746 = vsel %vm1537, %v2743, 0.0
        %2747 = vadd.xlane.f32.xlu0 %v2746
        %v2748 = vpop.xlane.xlu0 %2747
        %v2749 = vsel %vm1537, %v2745, 0.0
        %2750 = vadd.xlane.f32.xlu0 %v2749
        %v2751 = vpop.xlane.xlu0 %2750
        %v2752 = vrcp.pop %v2748
        %v2753 = vmul.f32 %v2743, %v2752
        %v2754 = vrcp.pop %v2751
        %v2755 = vmul.f32 %v2745, %v2754
        %2756 = vrot.lane.b32.xlu0 %v1439, 104
        %v2757 = vpop.permute.xlu0 %2756
        %2758 = vrot.lane.b32.xlu0 %v1444, 104
        %v2759 = vpop.permute.xlu0 %2758
        %v2763 = vsel %vm1537, %v2753, 0
        %v2766 = vsel %vm1537, %v2755, 0
        %2768 = vmatprep.subr.mxu0 0.0
        %2769 = vmatpush1.msra.mxu0 0.0
        %2770 = vmatprep.subr.mxu0 0.0
        %2771 = vmatpush1.msra.mxu0 0.0
        %2772 = vmatprep.subr.mxu0 0.0
        %2773 = vmatpush1.msra.mxu0 0.0
        %2774 = vmatprep.subr.mxu0 0.0
        %2775 = vmatpush1.msra.mxu0 0.0
        %2776 = vmatprep.subr.mxu0 0.0
        %2777 = vmatpush1.msra.mxu0 0.0
        %2778 = vmatprep.subr.mxu0 0.0
        %2779 = vmatpush1.msra.mxu0 0.0
        %2780 = vmatprep.subr.mxu0 0.0
        %2781 = vmatpush1.msra.mxu0 0.0
        %2782 = vmatprep.subr.mxu0 0.0
        %2783 = vmatpush1.msra.mxu0 0.0
        %2784 = vmatprep.subr.mxu0 0.0
        %2785 = vmatpush1.msra.mxu0 0.0
        %2786 = vmatprep.subr.mxu0 0.0
        %2787 = vmatpush1.msra.mxu0 0.0
        %2788 = vmatprep.subr.mxu0 0.0
        %2789 = vmatpush1.msra.mxu0 0.0
        %2790 = vmatprep.subr.mxu0 0.0
        %2791 = vmatpush1.msra.mxu0 0.0
        %2792 = vmatprep.subr.mxu0 0.0
        %2793 = vmatpush1.msra.mxu0 0.0
        %2794 = vmatprep.subr.mxu0 0.0
        %2795 = vmatpush1.msra.mxu0 0.0
        %2796 = vmatprep.subr.mxu0 0.0
        %2797 = vmatpush1.msra.mxu0 %v2759
        %2798 = vmatprep.subr.mxu0 0.0
        %2799 = vmatpush1.msra.mxu0 %v2757
        %2800 = vmatprep.subr.mxu0 0.0
        %2801 = vmatpush2.msra.mxu0 0.0
        %2802 = vmatprep.subr.mxu0 0.0
        %2803 = vmatpush2.msra.mxu0 0.0
        %2804 = vmatprep.subr.mxu0 0.0
        %2805 = vmatpush2.msra.mxu0 0.0
        %2806 = vmatprep.subr.mxu0 0.0
        %2807 = vmatpush2.msra.mxu0 0.0
        %2808 = vmatprep.subr.mxu0 0.0
        %2809 = vmatpush2.msra.mxu0 0.0
        %2810 = vmatprep.subr.mxu0 0.0
        %2811 = vmatpush2.msra.mxu0 0.0
        %2812 = vmatprep.subr.mxu0 0.0
        %2813 = vmatpush2.msra.mxu0 0.0
        %2814 = vmatprep.subr.mxu0 0.0
        %2815 = vmatpush2.msra.mxu0 0.0
        %2816 = vmatprep.subr.mxu0 0.0
        %2817 = vmatpush2.msra.mxu0 0.0
        %2818 = vmatprep.subr.mxu0 0.0
        %2819 = vmatpush2.msra.mxu0 0.0
        %2820 = vmatprep.subr.mxu0 0.0
        %2821 = vmatpush2.msra.mxu0 0.0
        %2822 = vmatprep.subr.mxu0 0.0
        %2823 = vmatpush2.msra.mxu0 0.0
        %2824 = vmatprep.subr.mxu0 0.0
        %2825 = vmatpush2.msra.mxu0 0.0
        %2826 = vmatprep.subr.mxu0 0.0
        %2827 = vmatpush2.msra.mxu0 0.0
        %2828 = vmatprep.subr.mxu0 0.0
        %2829 = vmatpush2.msra.mxu0 0.0
        %2830 = vmatprep.subr.mxu0 0.0
        %2831 = vmatpush2.msra.mxu0 0.0
        %2832 = vmatprep.mubr.f32.mxu0 0.0
        %2833 = vmatmul.mubr.f32.gmra.mxu0 %v2763
        %v2834 = vpop.f32.mrf.mxu0
        %v2835 = vadd.f32 0.0, %v2834
        %v2836 = vpop.f32.mrf.mxu0
        %2837 = vmatprep.mubr.f32.mxu0 0.0
        %2838 = vmatmul.mubr.f32.gmra.mxu0 %v2766
        %v2839 = vpop.f32.mrf.mxu0
        %v2840 = vadd.f32 0.0, %v2839
        %v2841 = vpop.f32.mrf.mxu0
        %2842 = vdwg.mxu0
        %2843 = vrot.lane.b32.xlu0 %v1447, 100
        %v2844 = vpop.permute.xlu0 %2843
        %2845 = vrot.lane.b32.xlu0 %v1448, 100
        %v2846 = vpop.permute.xlu0 %2845
        %2847 = vrot.lane.b32.xlu0 %v1352, 100
        %v2848 = vpop.permute.xlu0 %2847
        %2849 = vrot.lane.b32.xlu0 %v1357, 100
        %v2850 = vpop.permute.xlu0 %2849
        %v2851 = vsel %vm1449, %v2844, 0
        %v2853 = vsel %vm1449, %v2846, 0
        %v2855 = vsel %vm1449, %v2848, 0
        %v2857 = vsel %vm1449, %v2850, 0
        %2859 = vmatprep.subr.mxu0 0.0
        %2860 = vmatpush1.xpose.msra.mxu0 0.0
        %2861 = vmatprep.subr.mxu0 0.0
        %2862 = vmatpush1.xpose.msra.mxu0 0.0
        %2863 = vmatprep.subr.mxu0 0.0
        %2864 = vmatpush1.xpose.msra.mxu0 0.0
        %2865 = vmatprep.subr.mxu0 0.0
        %2866 = vmatpush1.xpose.msra.mxu0 0.0
        %2867 = vmatprep.subr.mxu0 0.0
        %2868 = vmatpush1.xpose.msra.mxu0 0.0
        %2869 = vmatprep.subr.mxu0 0.0
        %2870 = vmatpush1.xpose.msra.mxu0 0.0
        %2871 = vmatprep.subr.mxu0 0.0
        %2872 = vmatpush1.xpose.msra.mxu0 0.0
        %2873 = vmatprep.subr.mxu0 0.0
        %2874 = vmatpush1.xpose.msra.mxu0 0.0
        %2875 = vmatprep.subr.mxu0 0.0
        %2876 = vmatpush1.xpose.msra.mxu0 0.0
        %2877 = vmatprep.subr.mxu0 0.0
        %2878 = vmatpush1.xpose.msra.mxu0 0.0
        %2879 = vmatprep.subr.mxu0 0.0
        %2880 = vmatpush1.xpose.msra.mxu0 0.0
        %2881 = vmatprep.subr.mxu0 0.0
        %2882 = vmatpush1.xpose.msra.mxu0 0.0
        %2883 = vmatprep.subr.mxu0 0.0
        %2884 = vmatpush1.xpose.msra.mxu0 0.0
        %2885 = vmatprep.subr.mxu0 0.0
        %2886 = vmatpush1.xpose.msra.mxu0 0.0
        %2887 = vmatprep.subr.mxu0 0.0
        %2888 = vmatpush1.xpose.msra.mxu0 %v2857
        %2889 = vmatprep.subr.mxu0 0.0
        %2890 = vmatpush1.xpose.msra.mxu0 %v2855
        %2891 = vmatprep.subr.mxu0 0.0
        %2892 = vmatpush2.xpose.msra.mxu0 0.0
        %2893 = vmatprep.subr.mxu0 0.0
        %2894 = vmatpush2.xpose.msra.mxu0 0.0
        %2895 = vmatprep.subr.mxu0 0.0
        %2896 = vmatpush2.xpose.msra.mxu0 0.0
        %2897 = vmatprep.subr.mxu0 0.0
        %2898 = vmatpush2.xpose.msra.mxu0 0.0
        %2899 = vmatprep.subr.mxu0 0.0
        %2900 = vmatpush2.xpose.msra.mxu0 0.0
        %2901 = vmatprep.subr.mxu0 0.0
        %2902 = vmatpush2.xpose.msra.mxu0 0.0
        %2903 = vmatprep.subr.mxu0 0.0
        %2904 = vmatpush2.xpose.msra.mxu0 0.0
        %2905 = vmatprep.subr.mxu0 0.0
        %2906 = vmatpush2.xpose.msra.mxu0 0.0
        %2907 = vmatprep.subr.mxu0 0.0
        %2908 = vmatpush2.xpose.msra.mxu0 0.0
        %2909 = vmatprep.subr.mxu0 0.0
        %2910 = vmatpush2.xpose.msra.mxu0 0.0
        %2911 = vmatprep.subr.mxu0 0.0
        %2912 = vmatpush2.xpose.msra.mxu0 0.0
        %2913 = vmatprep.subr.mxu0 0.0
        %2914 = vmatpush2.xpose.msra.mxu0 0.0
        %2915 = vmatprep.subr.mxu0 0.0
        %2916 = vmatpush2.xpose.msra.mxu0 0.0
        %2917 = vmatprep.subr.mxu0 0.0
        %2918 = vmatpush2.xpose.msra.mxu0 0.0
        %2919 = vmatprep.subr.mxu0 0.0
        %2920 = vmatpush2.xpose.msra.mxu0 0.0
        %2921 = vmatprep.subr.mxu0 0.0
        %2922 = vmatpush2.xpose.msra.mxu0 0.0
        %2923 = vmatprep.mubr.f32.mxu0 0.0
        %2924 = vmatmul.mubr.f32.gmra.mxu0 %v2851
        %v2925 = vpop.f32.mrf.mxu0
        %v2926 = vadd.f32 0.0, %v2925
        %v2927 = vpop.f32.mrf.mxu0
        %2928 = vmatprep.mubr.f32.mxu0 0.0
        %2929 = vmatmul.mubr.f32.gmra.mxu0 %v2853
        %v2930 = vpop.f32.mrf.mxu0
        %v2931 = vadd.f32 0.0, %v2930
        %v2932 = vpop.f32.mrf.mxu0
        %2933 = vdwg.mxu0
        %v2934 = vsel %vm1537, %v2926, -inf
        %2935 = vmax.xlane.f32.xlu0 %v2934
        %v2936 = vpop.xlane.xlu0 %2935
        %v2937 = vsel %vm1537, %v2931, -inf
        %2938 = vmax.xlane.f32.xlu0 %v2937
        %v2939 = vpop.xlane.xlu0 %2938
        %v2940 = vsub.f32 %v2926, %v2936
        %v2941 = vsub.f32 %v2931, %v2939
        %v2942 = vmul.f32 %v2940, 1.442695
        %v2943 = vpow.pop %v2942
        %v2944 = vmul.f32 %v2941, 1.442695
        %v2945 = vpow.pop %v2944
        %v2946 = vsel %vm1537, %v2943, 0.0
        %2947 = vadd.xlane.f32.xlu0 %v2946
        %v2948 = vpop.xlane.xlu0 %2947
        %v2949 = vsel %vm1537, %v2945, 0.0
        %2950 = vadd.xlane.f32.xlu0 %v2949
        %v2951 = vpop.xlane.xlu0 %2950
        %v2952 = vrcp.pop %v2948
        %v2953 = vmul.f32 %v2943, %v2952
        %v2954 = vrcp.pop %v2951
        %v2955 = vmul.f32 %v2945, %v2954
        %2956 = vrot.lane.b32.xlu0 %v1439, 100
        %v2957 = vpop.permute.xlu0 %2956
        %2958 = vrot.lane.b32.xlu0 %v1444, 100
        %v2959 = vpop.permute.xlu0 %2958
        %v2963 = vsel %vm1537, %v2953, 0
        %v2966 = vsel %vm1537, %v2955, 0
        %2968 = vmatprep.subr.mxu0 0.0
        %2969 = vmatpush1.msra.mxu0 0.0
        %2970 = vmatprep.subr.mxu0 0.0
        %2971 = vmatpush1.msra.mxu0 0.0
        %2972 = vmatprep.subr.mxu0 0.0
        %2973 = vmatpush1.msra.mxu0 0.0
        %2974 = vmatprep.subr.mxu0 0.0
        %2975 = vmatpush1.msra.mxu0 0.0
        %2976 = vmatprep.subr.mxu0 0.0
        %2977 = vmatpush1.msra.mxu0 0.0
        %2978 = vmatprep.subr.mxu0 0.0
        %2979 = vmatpush1.msra.mxu0 0.0
        %2980 = vmatprep.subr.mxu0 0.0
        %2981 = vmatpush1.msra.mxu0 0.0
        %2982 = vmatprep.subr.mxu0 0.0
        %2983 = vmatpush1.msra.mxu0 0.0
        %2984 = vmatprep.subr.mxu0 0.0
        %2985 = vmatpush1.msra.mxu0 0.0
        %2986 = vmatprep.subr.mxu0 0.0
        %2987 = vmatpush1.msra.mxu0 0.0
        %2988 = vmatprep.subr.mxu0 0.0
        %2989 = vmatpush1.msra.mxu0 0.0
        %2990 = vmatprep.subr.mxu0 0.0
        %2991 = vmatpush1.msra.mxu0 0.0
        %2992 = vmatprep.subr.mxu0 0.0
        %2993 = vmatpush1.msra.mxu0 0.0
        %2994 = vmatprep.subr.mxu0 0.0
        %2995 = vmatpush1.msra.mxu0 0.0
        %2996 = vmatprep.subr.mxu0 0.0
        %2997 = vmatpush1.msra.mxu0 %v2959
        %2998 = vmatprep.subr.mxu0 0.0
        %2999 = vmatpush1.msra.mxu0 %v2957
        %3000 = vmatprep.subr.mxu0 0.0
        %3001 = vmatpush2.msra.mxu0 0.0
        %3002 = vmatprep.subr.mxu0 0.0
        %3003 = vmatpush2.msra.mxu0 0.0
        %3004 = vmatprep.subr.mxu0 0.0
        %3005 = vmatpush2.msra.mxu0 0.0
        %3006 = vmatprep.subr.mxu0 0.0
        %3007 = vmatpush2.msra.mxu0 0.0
        %3008 = vmatprep.subr.mxu0 0.0
        %3009 = vmatpush2.msra.mxu0 0.0
        %3010 = vmatprep.subr.mxu0 0.0
        %3011 = vmatpush2.msra.mxu0 0.0
        %3012 = vmatprep.subr.mxu0 0.0
        %3013 = vmatpush2.msra.mxu0 0.0
        %3014 = vmatprep.subr.mxu0 0.0
        %3015 = vmatpush2.msra.mxu0 0.0
        %3016 = vmatprep.subr.mxu0 0.0
        %3017 = vmatpush2.msra.mxu0 0.0
        %3018 = vmatprep.subr.mxu0 0.0
        %3019 = vmatpush2.msra.mxu0 0.0
        %3020 = vmatprep.subr.mxu0 0.0
        %3021 = vmatpush2.msra.mxu0 0.0
        %3022 = vmatprep.subr.mxu0 0.0
        %3023 = vmatpush2.msra.mxu0 0.0
        %3024 = vmatprep.subr.mxu0 0.0
        %3025 = vmatpush2.msra.mxu0 0.0
        %3026 = vmatprep.subr.mxu0 0.0
        %3027 = vmatpush2.msra.mxu0 0.0
        %3028 = vmatprep.subr.mxu0 0.0
        %3029 = vmatpush2.msra.mxu0 0.0
        %3030 = vmatprep.subr.mxu0 0.0
        %3031 = vmatpush2.msra.mxu0 0.0
        %3032 = vmatprep.mubr.f32.mxu0 0.0
        %3033 = vmatmul.mubr.f32.gmra.mxu0 %v2963
        %v3034 = vpop.f32.mrf.mxu0
        %v3035 = vadd.f32 0.0, %v3034
        %v3036 = vpop.f32.mrf.mxu0
        %3037 = vmatprep.mubr.f32.mxu0 0.0
        %3038 = vmatmul.mubr.f32.gmra.mxu0 %v2966
        %v3039 = vpop.f32.mrf.mxu0
        %v3040 = vadd.f32 0.0, %v3039
        %v3041 = vpop.f32.mrf.mxu0
        %3042 = vdwg.mxu0
        %3045 = vrot.lane.b32.xlu0 %v1835, 4
        %v3046 = vpop.permute.xlu0 %3045
        %3047 = vrot.lane.b32.xlu0 %v1840, 4
        %v3048 = vpop.permute.xlu0 %3047
        %3053 = vrot.lane.b32.xlu0 %v2035, 8
        %v3054 = vpop.permute.xlu0 %3053
        %3055 = vrot.lane.b32.xlu0 %v2040, 8
        %v3056 = vpop.permute.xlu0 %3055
        %3061 = vrot.lane.b32.xlu0 %v2235, 12
        %v3062 = vpop.permute.xlu0 %3061
        %3063 = vrot.lane.b32.xlu0 %v2240, 12
        %v3064 = vpop.permute.xlu0 %3063
        %3069 = vrot.lane.b32.xlu0 %v2435, 16
        %v3070 = vpop.permute.xlu0 %3069
        %3071 = vrot.lane.b32.xlu0 %v2440, 16
        %v3072 = vpop.permute.xlu0 %3071
        %3077 = vrot.lane.b32.xlu0 %v2635, 20
        %v3078 = vpop.permute.xlu0 %3077
        %3079 = vrot.lane.b32.xlu0 %v2640, 20
        %v3080 = vpop.permute.xlu0 %3079
        %3085 = vrot.lane.b32.xlu0 %v2835, 24
        %v3086 = vpop.permute.xlu0 %3085
        %3087 = vrot.lane.b32.xlu0 %v2840, 24
        %v3088 = vpop.permute.xlu0 %3087
        %3093 = vrot.lane.b32.xlu0 %v3035, 28
        %v3094 = vpop.permute.xlu0 %3093
        %3095 = vrot.lane.b32.xlu0 %v3040, 28
        %v3096 = vpop.permute.xlu0 %3095
        %v3099 = vsel %vm1449, %v1633, %v3046
        %v3100 = vsel %vm1449, %v1638, %v3048
        %vm3101 = vcmask 64512
        %v3102 = vsel %vm3101, %v3099, %v3054
        %v3103 = vsel %vm3101, %v3100, %v3056
        %vm3104 = vcmask 97280
        %v3105 = vsel %vm3104, %v3102, %v3062
        %v3106 = vsel %vm3104, %v3103, %v3064
        %v3107 = vsel %vm1537, %v3105, %v3070
        %v3108 = vsel %vm1537, %v3106, %v3072
        %vm3109 = vcmask 162816
        %v3110 = vsel %vm3109, %v3107, %v3078
        %v3111 = vsel %vm3109, %v3108, %v3080
        %vm3112 = vcmask 195584
        %v3113 = vsel %vm3112, %v3110, %v3086
        %v3114 = vsel %vm3112, %v3111, %v3088
        %vm3115 = vcmask 228352
        %v3116 = vsel %vm3115, %v3113, %v3094
        %v3117 = vsel %vm3115, %v3114, %v3096
        %v3119 = vlaneseq
        %v3120 = vshrl.u32 %v3119, 7
        %v3121 = vsub.s32 0, %v3120
        %v3122 = vrot.slane %v1190, %v3121
        %v3125 = vsel %vm1197, %v3116, 0
        %v3128 = vsel %vm1197, %v3117, 0
        %3130 = vmatprep.subr.mxu0 0.0
        %3131 = vmatpush1.msra.mxu0 0.0
        %3132 = vmatprep.subr.mxu0 0.0
        %3133 = vmatpush1.msra.mxu0 0.0
        %3134 = vmatprep.subr.mxu0 0.0
        %3135 = vmatpush1.msra.mxu0 0.0
        %3136 = vmatprep.subr.mxu0 0.0
        %3137 = vmatpush1.msra.mxu0 0.0
        %3138 = vmatprep.subr.mxu0 0.0
        %3139 = vmatpush1.msra.mxu0 0.0
        %3140 = vmatprep.subr.mxu0 0.0
        %3141 = vmatpush1.msra.mxu0 0.0
        %3142 = vmatprep.subr.mxu0 0.0
        %3143 = vmatpush1.msra.mxu0 0.0
        %3144 = vmatprep.subr.mxu0 0.0
        %3145 = vmatpush1.msra.mxu0 0.0
        %3146 = vmatprep.subr.mxu0 0.0
        %3147 = vmatpush1.msra.mxu0 0.0
        %3148 = vmatprep.subr.mxu0 0.0
        %3149 = vmatpush1.msra.mxu0 0.0
        %3150 = vmatprep.subr.mxu0 0.0
        %3151 = vmatpush1.msra.mxu0 0.0
        %3152 = vmatprep.subr.mxu0 0.0
        %3153 = vmatpush1.msra.mxu0 0.0
        %3154 = vmatprep.subr.mxu0 0.0
        %3155 = vmatpush1.msra.mxu0 %v1189
        %3156 = vmatprep.subr.mxu0 0.0
        %3157 = vmatpush1.msra.mxu0 %v1188
        %3158 = vmatprep.subr.mxu0 0.0
        %3159 = vmatpush1.msra.mxu0 %v1187
        %3160 = vmatprep.subr.mxu0 0.0
        %3161 = vmatpush1.msra.mxu0 %v1186
        %3162 = vmatprep.subr.mxu0 0.0
        %3163 = vmatpush2.msra.mxu0 0.0
        %3164 = vmatprep.subr.mxu0 0.0
        %3165 = vmatpush2.msra.mxu0 0.0
        %3166 = vmatprep.subr.mxu0 0.0
        %3167 = vmatpush2.msra.mxu0 0.0
        %3168 = vmatprep.subr.mxu0 0.0
        %3169 = vmatpush2.msra.mxu0 0.0
        %3170 = vmatprep.subr.mxu0 0.0
        %3171 = vmatpush2.msra.mxu0 0.0
        %3172 = vmatprep.subr.mxu0 0.0
        %3173 = vmatpush2.msra.mxu0 0.0
        %3174 = vmatprep.subr.mxu0 0.0
        %3175 = vmatpush2.msra.mxu0 0.0
        %3176 = vmatprep.subr.mxu0 0.0
        %3177 = vmatpush2.msra.mxu0 0.0
        %3178 = vmatprep.subr.mxu0 0.0
        %3179 = vmatpush2.msra.mxu0 0.0
        %3180 = vmatprep.subr.mxu0 0.0
        %3181 = vmatpush2.msra.mxu0 0.0
        %3182 = vmatprep.subr.mxu0 0.0
        %3183 = vmatpush2.msra.mxu0 0.0
        %3184 = vmatprep.subr.mxu0 0.0
        %3185 = vmatpush2.msra.mxu0 0.0
        %3186 = vmatprep.subr.mxu0 0.0
        %3187 = vmatpush2.msra.mxu0 0.0
        %3188 = vmatprep.subr.mxu0 0.0
        %3189 = vmatpush2.msra.mxu0 0.0
        %3190 = vmatprep.subr.mxu0 0.0
        %3191 = vmatpush2.msra.mxu0 0.0
        %3192 = vmatprep.subr.mxu0 0.0
        %3193 = vmatpush2.msra.mxu0 0.0
        %3194 = vmatprep.mubr.f32.mxu0 0.0
        %3195 = vmatmul.mubr.f32.gmra.mxu0 %v3125
        %v3196 = vpop.f32.mrf.mxu0
        %v3197 = vadd.f32 %v3122, %v3196
        %v3198 = vpop.f32.mrf.mxu0
        %3199 = vmatprep.mubr.f32.mxu0 0.0
        %3200 = vmatmul.mubr.f32.gmra.mxu0 %v3128
        %v3201 = vpop.f32.mrf.mxu0
        %v3202 = vadd.f32 %v3122, %v3201
        %v3203 = vpop.f32.mrf.mxu0
        %3204 = vdwg.mxu0
        %v3205 = vadd.f32 %v1159, %v3197
        %v3206 = vadd.f32 %v1160, %v3202
        %v3207 = vld [vmem:[%s25] sm:$0x1]
        %v3208 = vld [vmem:[%s27] sm:$0x1]
        %v3209 = vsel %vm1197, %v3205, 0.0
        %3210 = vadd.xlane.f32.xlu0 %v3209
        %v3211 = vpop.xlane.xlu0 %3210
        %v3212 = vsel %vm1197, %v3206, 0.0
        %3213 = vadd.xlane.f32.xlu0 %v3212
        %v3214 = vpop.xlane.xlu0 %3213
        %v3215 = vrcp.pop 32.0
        %v3216 = vmul.f32 %v3211, %v3215
        %v3217 = vmul.f32 %v3214, %v3215
        %v3218 = vsub.f32 %v3205, %v3216
        %v3219 = vsub.f32 %v3206, %v3217
        %v3220 = vmul.f32 %v3218, %v3218
        %v3221 = vmul.f32 %v3219, %v3219
        %v3222 = vsel %vm1197, %v3220, 0.0
        %3223 = vadd.xlane.f32.xlu0 %v3222
        %v3224 = vpop.xlane.xlu0 %3223
        %v3225 = vsel %vm1197, %v3221, 0.0
        %3226 = vadd.xlane.f32.xlu0 %v3225
        %v3227 = vpop.xlane.xlu0 %3226
        %v3228 = vmul.f32 %v3224, %v3215
        %v3229 = vmul.f32 %v3227, %v3215
        %v3230 = vadd.f32 %v3228, 1e-05
        %v3231 = vadd.f32 %v3229, 1e-05
        %v3232 = vrsqrt.pop %v3230
        %v3233 = vrsqrt.pop %v3231
        %v3234 = vmul.f32 %v3218, %v3232
        %v3235 = vmul.f32 %v3219, %v3233
        %v3237 = vlaneseq
        %v3238 = vshrl.u32 %v3237, 7
        %v3239 = vsub.s32 0, %v3238
        %v3240 = vrot.slane %v3207, %v3239
        %v3242 = vmul.f32 %v3234, %v3240
        %v3243 = vmul.f32 %v3235, %v3240
        %v3245 = vlaneseq
        %v3246 = vshrl.u32 %v3245, 7
        %v3247 = vsub.s32 0, %v3246
        %v3248 = vrot.slane %v3208, %v3247
        %v3250 = vadd.f32 %v3242, %v3248
        %v3251 = vadd.f32 %v3243, %v3248
        %v3252 = vadd.f32 %v3250, %v1161
        %v3253 = vadd.f32 %v3251, %v1162
        %v3254 = vadd.f32 %v1163, %v1166
        %v3255 = vadd.f32 %v1164, %v1167
        %v3256 = vadd.f32 %v1165, %v1168
        %v3257 = vld [vmem:[#allocation13] sm:$0xff]
        %v3258 = vld [vmem:[#allocation13 + $0x8] sm:$0xff]
        %v3259 = vld [vmem:[#allocation13 + $0x10] sm:$0xff]
        %v3260 = vld [vmem:[#allocation13 + $0x18] sm:$0xff]
        %v3261 = vld [vmem:[#allocation14] sm:$0xff]
        %v3262 = vld [vmem:[#allocation14 + $0x8] sm:$0xff]
        %v3263 = vld [vmem:[#allocation14 + $0x10] sm:$0xff]
        %v3264 = vld [vmem:[#allocation14 + $0x18] sm:$0xff]
        %v3265 = vld [vmem:[#allocation16] sm:$0xff]
        %v3266 = vld [vmem:[#allocation16 + $0x8] sm:$0xff]
        %v3267 = vld [vmem:[#allocation16 + $0x10] sm:$0xff]
        %v3268 = vld [vmem:[#allocation16 + $0x18] sm:$0xff]
        %v3269 = vld [vmem:[%s35] sm:$0x1]
        %v3270 = vld [vmem:[%s37] sm:$0x1]
        %v3271 = vld [vmem:[%s39] sm:$0x1]
        %v3272 = vld [vmem:[#allocation17] sm:$0xff]
        %v3273 = vld [vmem:[#allocation17 + $0x8] sm:$0xff]
        %v3274 = vld [vmem:[#allocation17 + $0x10] sm:$0xff]
        %v3275 = vld [vmem:[#allocation17 + $0x18] sm:$0xff]
        %v3276 = vld [vmem:[%s43] sm:$0x1]
        %v3278 = vlaneseq
        %v3279 = vshrl.u32 %v3278, 7
        %v3280 = vsub.s32 0, %v3279
        %v3281 = vrot.slane %v3269, %v3280
        %v3284 = vsel %vm1197, %v3252, 0
        %v3287 = vsel %vm1197, %v3253, 0
        %3289 = vmatprep.subr.mxu0 0.0
        %3290 = vmatpush1.msra.mxu0 0.0
        %3291 = vmatprep.subr.mxu0 0.0
        %3292 = vmatpush1.msra.mxu0 0.0
        %3293 = vmatprep.subr.mxu0 0.0
        %3294 = vmatpush1.msra.mxu0 0.0
        %3295 = vmatprep.subr.mxu0 0.0
        %3296 = vmatpush1.msra.mxu0 0.0
        %3297 = vmatprep.subr.mxu0 0.0
        %3298 = vmatpush1.msra.mxu0 0.0
        %3299 = vmatprep.subr.mxu0 0.0
        %3300 = vmatpush1.msra.mxu0 0.0
        %3301 = vmatprep.subr.mxu0 0.0
        %3302 = vmatpush1.msra.mxu0 0.0
        %3303 = vmatprep.subr.mxu0 0.0
        %3304 = vmatpush1.msra.mxu0 0.0
        %3305 = vmatprep.subr.mxu0 0.0
        %3306 = vmatpush1.msra.mxu0 0.0
        %3307 = vmatprep.subr.mxu0 0.0
        %3308 = vmatpush1.msra.mxu0 0.0
        %3309 = vmatprep.subr.mxu0 0.0
        %3310 = vmatpush1.msra.mxu0 0.0
        %3311 = vmatprep.subr.mxu0 0.0
        %3312 = vmatpush1.msra.mxu0 0.0
        %3313 = vmatprep.subr.mxu0 0.0
        %3314 = vmatpush1.msra.mxu0 %v3260
        %3315 = vmatprep.subr.mxu0 0.0
        %3316 = vmatpush1.msra.mxu0 %v3259
        %3317 = vmatprep.subr.mxu0 0.0
        %3318 = vmatpush1.msra.mxu0 %v3258
        %3319 = vmatprep.subr.mxu0 0.0
        %3320 = vmatpush1.msra.mxu0 %v3257
        %3321 = vmatprep.subr.mxu0 0.0
        %3322 = vmatpush2.msra.mxu0 0.0
        %3323 = vmatprep.subr.mxu0 0.0
        %3324 = vmatpush2.msra.mxu0 0.0
        %3325 = vmatprep.subr.mxu0 0.0
        %3326 = vmatpush2.msra.mxu0 0.0
        %3327 = vmatprep.subr.mxu0 0.0
        %3328 = vmatpush2.msra.mxu0 0.0
        %3329 = vmatprep.subr.mxu0 0.0
        %3330 = vmatpush2.msra.mxu0 0.0
        %3331 = vmatprep.subr.mxu0 0.0
        %3332 = vmatpush2.msra.mxu0 0.0
        %3333 = vmatprep.subr.mxu0 0.0
        %3334 = vmatpush2.msra.mxu0 0.0
        %3335 = vmatprep.subr.mxu0 0.0
        %3336 = vmatpush2.msra.mxu0 0.0
        %3337 = vmatprep.subr.mxu0 0.0
        %3338 = vmatpush2.msra.mxu0 0.0
        %3339 = vmatprep.subr.mxu0 0.0
        %3340 = vmatpush2.msra.mxu0 0.0
        %3341 = vmatprep.subr.mxu0 0.0
        %3342 = vmatpush2.msra.mxu0 0.0
        %3343 = vmatprep.subr.mxu0 0.0
        %3344 = vmatpush2.msra.mxu0 0.0
        %3345 = vmatprep.subr.mxu0 0.0
        %3346 = vmatpush2.msra.mxu0 0.0
        %3347 = vmatprep.subr.mxu0 0.0
        %3348 = vmatpush2.msra.mxu0 0.0
        %3349 = vmatprep.subr.mxu0 0.0
        %3350 = vmatpush2.msra.mxu0 0.0
        %3351 = vmatprep.subr.mxu0 0.0
        %3352 = vmatpush2.msra.mxu0 0.0
        %3353 = vmatprep.mubr.f32.mxu0 0.0
        %3354 = vmatmul.mubr.f32.gmra.mxu0 %v3284
        %v3355 = vpop.f32.mrf.mxu0
        %v3356 = vadd.f32 %v3281, %v3355
        %v3357 = vpop.f32.mrf.mxu0
        %3358 = vmatprep.mubr.f32.mxu0 0.0
        %3359 = vmatmul.mubr.f32.gmra.mxu0 %v3287
        %v3360 = vpop.f32.mrf.mxu0
        %v3361 = vadd.f32 %v3281, %v3360
        %v3362 = vpop.f32.mrf.mxu0
        %3363 = vdwg.mxu0
        %v3365 = vlaneseq
        %v3366 = vshrl.u32 %v3365, 7
        %v3367 = vsub.s32 0, %v3366
        %v3368 = vrot.slane %v3270, %v3367
        %v3371 = vsel %vm1197, %v3254, 0
        %v3374 = vsel %vm1197, %v3255, 0
        %v3377 = vsel %vm1197, %v3256, 0
        %3379 = vmatprep.subr.mxu0 0.0
        %3380 = vmatpush1.msra.mxu0 0.0
        %3381 = vmatprep.subr.mxu0 0.0
        %3382 = vmatpush1.msra.mxu0 0.0
        %3383 = vmatprep.subr.mxu0 0.0
        %3384 = vmatpush1.msra.mxu0 0.0
        %3385 = vmatprep.subr.mxu0 0.0
        %3386 = vmatpush1.msra.mxu0 0.0
        %3387 = vmatprep.subr.mxu0 0.0
        %3388 = vmatpush1.msra.mxu0 0.0
        %3389 = vmatprep.subr.mxu0 0.0
        %3390 = vmatpush1.msra.mxu0 0.0
        %3391 = vmatprep.subr.mxu0 0.0
        %3392 = vmatpush1.msra.mxu0 0.0
        %3393 = vmatprep.subr.mxu0 0.0
        %3394 = vmatpush1.msra.mxu0 0.0
        %3395 = vmatprep.subr.mxu0 0.0
        %3396 = vmatpush1.msra.mxu0 0.0
        %3397 = vmatprep.subr.mxu0 0.0
        %3398 = vmatpush1.msra.mxu0 0.0
        %3399 = vmatprep.subr.mxu0 0.0
        %3400 = vmatpush1.msra.mxu0 0.0
        %3401 = vmatprep.subr.mxu0 0.0
        %3402 = vmatpush1.msra.mxu0 0.0
        %3403 = vmatprep.subr.mxu0 0.0
        %3404 = vmatpush1.msra.mxu0 %v3264
        %3405 = vmatprep.subr.mxu0 0.0
        %3406 = vmatpush1.msra.mxu0 %v3263
        %3407 = vmatprep.subr.mxu0 0.0
        %3408 = vmatpush1.msra.mxu0 %v3262
        %3409 = vmatprep.subr.mxu0 0.0
        %3410 = vmatpush1.msra.mxu0 %v3261
        %3411 = vmatprep.subr.mxu0 0.0
        %3412 = vmatpush2.msra.mxu0 0.0
        %3413 = vmatprep.subr.mxu0 0.0
        %3414 = vmatpush2.msra.mxu0 0.0
        %3415 = vmatprep.subr.mxu0 0.0
        %3416 = vmatpush2.msra.mxu0 0.0
        %3417 = vmatprep.subr.mxu0 0.0
        %3418 = vmatpush2.msra.mxu0 0.0
        %3419 = vmatprep.subr.mxu0 0.0
        %3420 = vmatpush2.msra.mxu0 0.0
        %3421 = vmatprep.subr.mxu0 0.0
        %3422 = vmatpush2.msra.mxu0 0.0
        %3423 = vmatprep.subr.mxu0 0.0
        %3424 = vmatpush2.msra.mxu0 0.0
        %3425 = vmatprep.subr.mxu0 0.0
        %3426 = vmatpush2.msra.mxu0 0.0
        %3427 = vmatprep.subr.mxu0 0.0
        %3428 = vmatpush2.msra.mxu0 0.0
        %3429 = vmatprep.subr.mxu0 0.0
        %3430 = vmatpush2.msra.mxu0 0.0
        %3431 = vmatprep.subr.mxu0 0.0
        %3432 = vmatpush2.msra.mxu0 0.0
        %3433 = vmatprep.subr.mxu0 0.0
        %3434 = vmatpush2.msra.mxu0 0.0
        %3435 = vmatprep.subr.mxu0 0.0
        %3436 = vmatpush2.msra.mxu0 0.0
        %3437 = vmatprep.subr.mxu0 0.0
        %3438 = vmatpush2.msra.mxu0 0.0
        %3439 = vmatprep.subr.mxu0 0.0
        %3440 = vmatpush2.msra.mxu0 0.0
        %3441 = vmatprep.subr.mxu0 0.0
        %3442 = vmatpush2.msra.mxu0 0.0
        %3443 = vmatprep.mubr.f32.mxu0 0.0
        %3444 = vmatmul.mubr.f32.gmra.mxu0 %v3371
        %v3445 = vpop.f32.mrf.mxu0
        %v3446 = vadd.f32 %v3368, %v3445
        %v3447 = vpop.f32.mrf.mxu0
        %3448 = vmatprep.mubr.f32.mxu0 0.0
        %3449 = vmatmul.mubr.f32.gmra.mxu0 %v3374
        %v3450 = vpop.f32.mrf.mxu0
        %v3451 = vadd.f32 %v3368, %v3450
        %v3452 = vpop.f32.mrf.mxu0
        %3453 = vmatprep.mubr.f32.mxu0 0.0
        %3454 = vmatmul.mubr.f32.gmra.mxu0 %v3377
        %v3455 = vpop.f32.mrf.mxu0
        %v3456 = vadd.f32 %v3368, %v3455
        %v3457 = vpop.f32.mrf.mxu0
        %3458 = vdwg.mxu0
        %v3460 = vlaneseq
        %v3461 = vshrl.u32 %v3460, 7
        %v3462 = vsub.s32 0, %v3461
        %v3463 = vrot.slane %v3271, %v3462
        %v3466 = vsel %vm1197, %v1163, 0
        %v3469 = vsel %vm1197, %v1164, 0
        %v3472 = vsel %vm1197, %v1165, 0
        %3474 = vmatprep.subr.mxu0 0.0
        %3475 = vmatpush1.msra.mxu0 0.0
        %3476 = vmatprep.subr.mxu0 0.0
        %3477 = vmatpush1.msra.mxu0 0.0
        %3478 = vmatprep.subr.mxu0 0.0
        %3479 = vmatpush1.msra.mxu0 0.0
        %3480 = vmatprep.subr.mxu0 0.0
        %3481 = vmatpush1.msra.mxu0 0.0
        %3482 = vmatprep.subr.mxu0 0.0
        %3483 = vmatpush1.msra.mxu0 0.0
        %3484 = vmatprep.subr.mxu0 0.0
        %3485 = vmatpush1.msra.mxu0 0.0
        %3486 = vmatprep.subr.mxu0 0.0
        %3487 = vmatpush1.msra.mxu0 0.0
        %3488 = vmatprep.subr.mxu0 0.0
        %3489 = vmatpush1.msra.mxu0 0.0
        %3490 = vmatprep.subr.mxu0 0.0
        %3491 = vmatpush1.msra.mxu0 0.0
        %3492 = vmatprep.subr.mxu0 0.0
        %3493 = vmatpush1.msra.mxu0 0.0
        %3494 = vmatprep.subr.mxu0 0.0
        %3495 = vmatpush1.msra.mxu0 0.0
        %3496 = vmatprep.subr.mxu0 0.0
        %3497 = vmatpush1.msra.mxu0 0.0
        %3498 = vmatprep.subr.mxu0 0.0
        %3499 = vmatpush1.msra.mxu0 %v3268
        %3500 = vmatprep.subr.mxu0 0.0
        %3501 = vmatpush1.msra.mxu0 %v3267
        %3502 = vmatprep.subr.mxu0 0.0
        %3503 = vmatpush1.msra.mxu0 %v3266
        %3504 = vmatprep.subr.mxu0 0.0
        %3505 = vmatpush1.msra.mxu0 %v3265
        %3506 = vmatprep.subr.mxu0 0.0
        %3507 = vmatpush2.msra.mxu0 0.0
        %3508 = vmatprep.subr.mxu0 0.0
        %3509 = vmatpush2.msra.mxu0 0.0
        %3510 = vmatprep.subr.mxu0 0.0
        %3511 = vmatpush2.msra.mxu0 0.0
        %3512 = vmatprep.subr.mxu0 0.0
        %3513 = vmatpush2.msra.mxu0 0.0
        %3514 = vmatprep.subr.mxu0 0.0
        %3515 = vmatpush2.msra.mxu0 0.0
        %3516 = vmatprep.subr.mxu0 0.0
        %3517 = vmatpush2.msra.mxu0 0.0
        %3518 = vmatprep.subr.mxu0 0.0
        %3519 = vmatpush2.msra.mxu0 0.0
        %3520 = vmatprep.subr.mxu0 0.0
        %3521 = vmatpush2.msra.mxu0 0.0
        %3522 = vmatprep.subr.mxu0 0.0
        %3523 = vmatpush2.msra.mxu0 0.0
        %3524 = vmatprep.subr.mxu0 0.0
        %3525 = vmatpush2.msra.mxu0 0.0
        %3526 = vmatprep.subr.mxu0 0.0
        %3527 = vmatpush2.msra.mxu0 0.0
        %3528 = vmatprep.subr.mxu0 0.0
        %3529 = vmatpush2.msra.mxu0 0.0
        %3530 = vmatprep.subr.mxu0 0.0
        %3531 = vmatpush2.msra.mxu0 0.0
        %3532 = vmatprep.subr.mxu0 0.0
        %3533 = vmatpush2.msra.mxu0 0.0
        %3534 = vmatprep.subr.mxu0 0.0
        %3535 = vmatpush2.msra.mxu0 0.0
        %3536 = vmatprep.subr.mxu0 0.0
        %3537 = vmatpush2.msra.mxu0 0.0
        %3538 = vmatprep.mubr.f32.mxu0 0.0
        %3539 = vmatmul.mubr.f32.gmra.mxu0 %v3466
        %v3540 = vpop.f32.mrf.mxu0
        %v3541 = vadd.f32 %v3463, %v3540
        %v3542 = vpop.f32.mrf.mxu0
        %3543 = vmatprep.mubr.f32.mxu0 0.0
        %3544 = vmatmul.mubr.f32.gmra.mxu0 %v3469
        %v3545 = vpop.f32.mrf.mxu0
        %v3546 = vadd.f32 %v3463, %v3545
        %v3547 = vpop.f32.mrf.mxu0
        %3548 = vmatprep.mubr.f32.mxu0 0.0
        %3549 = vmatmul.mubr.f32.gmra.mxu0 %v3472
        %v3550 = vpop.f32.mrf.mxu0
        %v3551 = vadd.f32 %v3463, %v3550
        %v3552 = vpop.f32.mrf.mxu0
        %3553 = vdwg.mxu0
        %v3554 = vmul.f32 %v3356, 0.5
        %v3555 = vmul.f32 %v3361, 0.5
        %v3557 = vsel %vm1449, %v3554, 0
        %v3560 = vsel %vm1449, %v3555, 0
        %v3563 = vsel %vm1449, %v3446, 0
        %v3566 = vsel %vm1449, %v3451, 0
        %v3569 = vsel %vm1449, %v3456, 0
        %3571 = vmatprep.subr.mxu0 0.0
        %3572 = vmatpush1.xpose.msra.mxu0 0.0
        %3573 = vmatprep.subr.mxu0 0.0
        %3574 = vmatpush1.xpose.msra.mxu0 0.0
        %3575 = vmatprep.subr.mxu0 0.0
        %3576 = vmatpush1.xpose.msra.mxu0 0.0
        %3577 = vmatprep.subr.mxu0 0.0
        %3578 = vmatpush1.xpose.msra.mxu0 0.0
        %3579 = vmatprep.subr.mxu0 0.0
        %3580 = vmatpush1.xpose.msra.mxu0 0.0
        %3581 = vmatprep.subr.mxu0 0.0
        %3582 = vmatpush1.xpose.msra.mxu0 0.0
        %3583 = vmatprep.subr.mxu0 0.0
        %3584 = vmatpush1.xpose.msra.mxu0 0.0
        %3585 = vmatprep.subr.mxu0 0.0
        %3586 = vmatpush1.xpose.msra.mxu0 0.0
        %3587 = vmatprep.subr.mxu0 0.0
        %3588 = vmatpush1.xpose.msra.mxu0 0.0
        %3589 = vmatprep.subr.mxu0 0.0
        %3590 = vmatpush1.xpose.msra.mxu0 0.0
        %3591 = vmatprep.subr.mxu0 0.0
        %3592 = vmatpush1.xpose.msra.mxu0 0.0
        %3593 = vmatprep.subr.mxu0 0.0
        %3594 = vmatpush1.xpose.msra.mxu0 0.0
        %3595 = vmatprep.subr.mxu0 0.0
        %3596 = vmatpush1.xpose.msra.mxu0 0.0
        %3597 = vmatprep.subr.mxu0 0.0
        %3598 = vmatpush1.xpose.msra.mxu0 %v3569
        %3599 = vmatprep.subr.mxu0 0.0
        %3600 = vmatpush1.xpose.msra.mxu0 %v3566
        %3601 = vmatprep.subr.mxu0 0.0
        %3602 = vmatpush1.xpose.msra.mxu0 %v3563
        %3603 = vmatprep.subr.mxu0 0.0
        %3604 = vmatpush2.xpose.msra.mxu0 0.0
        %3605 = vmatprep.subr.mxu0 0.0
        %3606 = vmatpush2.xpose.msra.mxu0 0.0
        %3607 = vmatprep.subr.mxu0 0.0
        %3608 = vmatpush2.xpose.msra.mxu0 0.0
        %3609 = vmatprep.subr.mxu0 0.0
        %3610 = vmatpush2.xpose.msra.mxu0 0.0
        %3611 = vmatprep.subr.mxu0 0.0
        %3612 = vmatpush2.xpose.msra.mxu0 0.0
        %3613 = vmatprep.subr.mxu0 0.0
        %3614 = vmatpush2.xpose.msra.mxu0 0.0
        %3615 = vmatprep.subr.mxu0 0.0
        %3616 = vmatpush2.xpose.msra.mxu0 0.0
        %3617 = vmatprep.subr.mxu0 0.0
        %3618 = vmatpush2.xpose.msra.mxu0 0.0
        %3619 = vmatprep.subr.mxu0 0.0
        %3620 = vmatpush2.xpose.msra.mxu0 0.0
        %3621 = vmatprep.subr.mxu0 0.0
        %3622 = vmatpush2.xpose.msra.mxu0 0.0
        %3623 = vmatprep.subr.mxu0 0.0
        %3624 = vmatpush2.xpose.msra.mxu0 0.0
        %3625 = vmatprep.subr.mxu0 0.0
        %3626 = vmatpush2.xpose.msra.mxu0 0.0
        %3627 = vmatprep.subr.mxu0 0.0
        %3628 = vmatpush2.xpose.msra.mxu0 0.0
        %3629 = vmatprep.subr.mxu0 0.0
        %3630 = vmatpush2.xpose.msra.mxu0 0.0
        %3631 = vmatprep.subr.mxu0 0.0
        %3632 = vmatpush2.xpose.msra.mxu0 0.0
        %3633 = vmatprep.subr.mxu0 0.0
        %3634 = vmatpush2.xpose.msra.mxu0 0.0
        %3635 = vmatprep.mubr.f32.mxu0 0.0
        %3636 = vmatmul.mubr.f32.gmra.mxu0 %v3557
        %v3637 = vpop.f32.mrf.mxu0
        %v3638 = vadd.f32 0.0, %v3637
        %v3639 = vpop.f32.mrf.mxu0
        %3640 = vmatprep.mubr.f32.mxu0 0.0
        %3641 = vmatmul.mubr.f32.gmra.mxu0 %v3560
        %v3642 = vpop.f32.mrf.mxu0
        %v3643 = vadd.f32 0.0, %v3642
        %v3644 = vpop.f32.mrf.mxu0
        %3645 = vdwg.mxu0
        %v3646 = vsel %vm3112, %v3638, -inf
        %3647 = vmax.xlane.f32.xlu0 %v3646
        %v3648 = vpop.xlane.xlu0 %3647
        %v3649 = vsel %vm3112, %v3643, -inf
        %3650 = vmax.xlane.f32.xlu0 %v3649
        %v3651 = vpop.xlane.xlu0 %3650
        %v3652 = vsub.f32 %v3638, %v3648
        %v3653 = vsub.f32 %v3643, %v3651
        %v3654 = vmul.f32 %v3652, 1.442695
        %v3655 = vpow.pop %v3654
        %v3656 = vmul.f32 %v3653, 1.442695
        %v3657 = vpow.pop %v3656
        %v3658 = vsel %vm3112, %v3655, 0.0
        %3659 = vadd.xlane.f32.xlu0 %v3658
        %v3660 = vpop.xlane.xlu0 %3659
        %v3661 = vsel %vm3112, %v3657, 0.0
        %3662 = vadd.xlane.f32.xlu0 %v3661
        %v3663 = vpop.xlane.xlu0 %3662
        %v3664 = vrcp.pop %v3660
        %v3665 = vmul.f32 %v3655, %v3664
        %v3666 = vrcp.pop %v3663
        %v3667 = vmul.f32 %v3657, %v3666
        %v3669 = vsel %vm3112, %v3665, 0
        %v3672 = vsel %vm3112, %v3667, 0
        %3674 = vmatprep.subr.mxu0 0.0
        %3675 = vmatpush1.msra.mxu0 0.0
        %3676 = vmatprep.subr.mxu0 0.0
        %3677 = vmatpush1.msra.mxu0 0.0
        %3678 = vmatprep.subr.mxu0 0.0
        %3679 = vmatpush1.msra.mxu0 0.0
        %3680 = vmatprep.subr.mxu0 0.0
        %3681 = vmatpush1.msra.mxu0 0.0
        %3682 = vmatprep.subr.mxu0 0.0
        %3683 = vmatpush1.msra.mxu0 0.0
        %3684 = vmatprep.subr.mxu0 0.0
        %3685 = vmatpush1.msra.mxu0 0.0
        %3686 = vmatprep.subr.mxu0 0.0
        %3687 = vmatpush1.msra.mxu0 0.0
        %3688 = vmatprep.subr.mxu0 0.0
        %3689 = vmatpush1.msra.mxu0 0.0
        %3690 = vmatprep.subr.mxu0 0.0
        %3691 = vmatpush1.msra.mxu0 0.0
        %3692 = vmatprep.subr.mxu0 0.0
        %3693 = vmatpush1.msra.mxu0 0.0
        %3694 = vmatprep.subr.mxu0 0.0
        %3695 = vmatpush1.msra.mxu0 0.0
        %3696 = vmatprep.subr.mxu0 0.0
        %3697 = vmatpush1.msra.mxu0 0.0
        %3698 = vmatprep.subr.mxu0 0.0
        %3699 = vmatpush1.msra.mxu0 0.0
        %3700 = vmatprep.subr.mxu0 0.0
        %3701 = vmatpush1.msra.mxu0 %v3551
        %3702 = vmatprep.subr.mxu0 0.0
        %3703 = vmatpush1.msra.mxu0 %v3546
        %3704 = vmatprep.subr.mxu0 0.0
        %3705 = vmatpush1.msra.mxu0 %v3541
        %3706 = vmatprep.subr.mxu0 0.0
        %3707 = vmatpush2.msra.mxu0 0.0
        %3708 = vmatprep.subr.mxu0 0.0
        %3709 = vmatpush2.msra.mxu0 0.0
        %3710 = vmatprep.subr.mxu0 0.0
        %3711 = vmatpush2.msra.mxu0 0.0
        %3712 = vmatprep.subr.mxu0 0.0
        %3713 = vmatpush2.msra.mxu0 0.0
        %3714 = vmatprep.subr.mxu0 0.0
        %3715 = vmatpush2.msra.mxu0 0.0
        %3716 = vmatprep.subr.mxu0 0.0
        %3717 = vmatpush2.msra.mxu0 0.0
        %3718 = vmatprep.subr.mxu0 0.0
        %3719 = vmatpush2.msra.mxu0 0.0
        %3720 = vmatprep.subr.mxu0 0.0
        %3721 = vmatpush2.msra.mxu0 0.0
        %3722 = vmatprep.subr.mxu0 0.0
        %3723 = vmatpush2.msra.mxu0 0.0
        %3724 = vmatprep.subr.mxu0 0.0
        %3725 = vmatpush2.msra.mxu0 0.0
        %3726 = vmatprep.subr.mxu0 0.0
        %3727 = vmatpush2.msra.mxu0 0.0
        %3728 = vmatprep.subr.mxu0 0.0
        %3729 = vmatpush2.msra.mxu0 0.0
        %3730 = vmatprep.subr.mxu0 0.0
        %3731 = vmatpush2.msra.mxu0 0.0
        %3732 = vmatprep.subr.mxu0 0.0
        %3733 = vmatpush2.msra.mxu0 0.0
        %3734 = vmatprep.subr.mxu0 0.0
        %3735 = vmatpush2.msra.mxu0 0.0
        %3736 = vmatprep.subr.mxu0 0.0
        %3737 = vmatpush2.msra.mxu0 0.0
        %3738 = vmatprep.mubr.f32.mxu0 0.0
        %3739 = vmatmul.mubr.f32.gmra.mxu0 %v3669
        %v3740 = vpop.f32.mrf.mxu0
        %v3741 = vadd.f32 0.0, %v3740
        %v3742 = vpop.f32.mrf.mxu0
        %3743 = vmatprep.mubr.f32.mxu0 0.0
        %3744 = vmatmul.mubr.f32.gmra.mxu0 %v3672
        %v3745 = vpop.f32.mrf.mxu0
        %v3746 = vadd.f32 0.0, %v3745
        %v3747 = vpop.f32.mrf.mxu0
        %3748 = vdwg.mxu0
        %3749 = vrot.lane.b32.xlu0 %v3554, 124
        %v3750 = vpop.permute.xlu0 %3749
        %3751 = vrot.lane.b32.xlu0 %v3555, 124
        %v3752 = vpop.permute.xlu0 %3751
        %3753 = vrot.lane.b32.xlu0 %v3446, 124
        %v3754 = vpop.permute.xlu0 %3753
        %3755 = vrot.lane.b32.xlu0 %v3451, 124
        %v3756 = vpop.permute.xlu0 %3755
        %3757 = vrot.lane.b32.xlu0 %v3456, 124
        %v3758 = vpop.permute.xlu0 %3757
        %v3759 = vsel %vm1449, %v3750, 0
        %v3761 = vsel %vm1449, %v3752, 0
        %v3763 = vsel %vm1449, %v3754, 0
        %v3765 = vsel %vm1449, %v3756, 0
        %v3767 = vsel %vm1449, %v3758, 0
        %3769 = vmatprep.subr.mxu0 0.0
        %3770 = vmatpush1.xpose.msra.mxu0 0.0
        %3771 = vmatprep.subr.mxu0 0.0
        %3772 = vmatpush1.xpose.msra.mxu0 0.0
        %3773 = vmatprep.subr.mxu0 0.0
        %3774 = vmatpush1.xpose.msra.mxu0 0.0
        %3775 = vmatprep.subr.mxu0 0.0
        %3776 = vmatpush1.xpose.msra.mxu0 0.0
        %3777 = vmatprep.subr.mxu0 0.0
        %3778 = vmatpush1.xpose.msra.mxu0 0.0
        %3779 = vmatprep.subr.mxu0 0.0
        %3780 = vmatpush1.xpose.msra.mxu0 0.0
        %3781 = vmatprep.subr.mxu0 0.0
        %3782 = vmatpush1.xpose.msra.mxu0 0.0
        %3783 = vmatprep.subr.mxu0 0.0
        %3784 = vmatpush1.xpose.msra.mxu0 0.0
        %3785 = vmatprep.subr.mxu0 0.0
        %3786 = vmatpush1.xpose.msra.mxu0 0.0
        %3787 = vmatprep.subr.mxu0 0.0
        %3788 = vmatpush1.xpose.msra.mxu0 0.0
        %3789 = vmatprep.subr.mxu0 0.0
        %3790 = vmatpush1.xpose.msra.mxu0 0.0
        %3791 = vmatprep.subr.mxu0 0.0
        %3792 = vmatpush1.xpose.msra.mxu0 0.0
        %3793 = vmatprep.subr.mxu0 0.0
        %3794 = vmatpush1.xpose.msra.mxu0 0.0
        %3795 = vmatprep.subr.mxu0 0.0
        %3796 = vmatpush1.xpose.msra.mxu0 %v3767
        %3797 = vmatprep.subr.mxu0 0.0
        %3798 = vmatpush1.xpose.msra.mxu0 %v3765
        %3799 = vmatprep.subr.mxu0 0.0
        %3800 = vmatpush1.xpose.msra.mxu0 %v3763
        %3801 = vmatprep.subr.mxu0 0.0
        %3802 = vmatpush2.xpose.msra.mxu0 0.0
        %3803 = vmatprep.subr.mxu0 0.0
        %3804 = vmatpush2.xpose.msra.mxu0 0.0
        %3805 = vmatprep.subr.mxu0 0.0
        %3806 = vmatpush2.xpose.msra.mxu0 0.0
        %3807 = vmatprep.subr.mxu0 0.0
        %3808 = vmatpush2.xpose.msra.mxu0 0.0
        %3809 = vmatprep.subr.mxu0 0.0
        %3810 = vmatpush2.xpose.msra.mxu0 0.0
        %3811 = vmatprep.subr.mxu0 0.0
        %3812 = vmatpush2.xpose.msra.mxu0 0.0
        %3813 = vmatprep.subr.mxu0 0.0
        %3814 = vmatpush2.xpose.msra.mxu0 0.0
        %3815 = vmatprep.subr.mxu0 0.0
        %3816 = vmatpush2.xpose.msra.mxu0 0.0
        %3817 = vmatprep.subr.mxu0 0.0
        %3818 = vmatpush2.xpose.msra.mxu0 0.0
        %3819 = vmatprep.subr.mxu0 0.0
        %3820 = vmatpush2.xpose.msra.mxu0 0.0
        %3821 = vmatprep.subr.mxu0 0.0
        %3822 = vmatpush2.xpose.msra.mxu0 0.0
        %3823 = vmatprep.subr.mxu0 0.0
        %3824 = vmatpush2.xpose.msra.mxu0 0.0
        %3825 = vmatprep.subr.mxu0 0.0
        %3826 = vmatpush2.xpose.msra.mxu0 0.0
        %3827 = vmatprep.subr.mxu0 0.0
        %3828 = vmatpush2.xpose.msra.mxu0 0.0
        %3829 = vmatprep.subr.mxu0 0.0
        %3830 = vmatpush2.xpose.msra.mxu0 0.0
        %3831 = vmatprep.subr.mxu0 0.0
        %3832 = vmatpush2.xpose.msra.mxu0 0.0
        %3833 = vmatprep.mubr.f32.mxu0 0.0
        %3834 = vmatmul.mubr.f32.gmra.mxu0 %v3759
        %v3835 = vpop.f32.mrf.mxu0
        %v3836 = vadd.f32 0.0, %v3835
        %v3837 = vpop.f32.mrf.mxu0
        %3838 = vmatprep.mubr.f32.mxu0 0.0
        %3839 = vmatmul.mubr.f32.gmra.mxu0 %v3761
        %v3840 = vpop.f32.mrf.mxu0
        %v3841 = vadd.f32 0.0, %v3840
        %v3842 = vpop.f32.mrf.mxu0
        %3843 = vdwg.mxu0
        %v3844 = vsel %vm3112, %v3836, -inf
        %3845 = vmax.xlane.f32.xlu0 %v3844
        %v3846 = vpop.xlane.xlu0 %3845
        %v3847 = vsel %vm3112, %v3841, -inf
        %3848 = vmax.xlane.f32.xlu0 %v3847
        %v3849 = vpop.xlane.xlu0 %3848
        %v3850 = vsub.f32 %v3836, %v3846
        %v3851 = vsub.f32 %v3841, %v3849
        %v3852 = vmul.f32 %v3850, 1.442695
        %v3853 = vpow.pop %v3852
        %v3854 = vmul.f32 %v3851, 1.442695
        %v3855 = vpow.pop %v3854
        %v3856 = vsel %vm3112, %v3853, 0.0
        %3857 = vadd.xlane.f32.xlu0 %v3856
        %v3858 = vpop.xlane.xlu0 %3857
        %v3859 = vsel %vm3112, %v3855, 0.0
        %3860 = vadd.xlane.f32.xlu0 %v3859
        %v3861 = vpop.xlane.xlu0 %3860
        %v3862 = vrcp.pop %v3858
        %v3863 = vmul.f32 %v3853, %v3862
        %v3864 = vrcp.pop %v3861
        %v3865 = vmul.f32 %v3855, %v3864
        %3869 = vrot.lane.b32.xlu0 %v3541, 124
        %v3870 = vpop.permute.xlu0 %3869
        %3871 = vrot.lane.b32.xlu0 %v3546, 124
        %v3872 = vpop.permute.xlu0 %3871
        %3873 = vrot.lane.b32.xlu0 %v3551, 124
        %v3874 = vpop.permute.xlu0 %3873
        %v3879 = vsel %vm3112, %v3863, 0
        %v3882 = vsel %vm3112, %v3865, 0
        %3884 = vmatprep.subr.mxu0 0.0
        %3885 = vmatpush1.msra.mxu0 0.0
        %3886 = vmatprep.subr.mxu0 0.0
        %3887 = vmatpush1.msra.mxu0 0.0
        %3888 = vmatprep.subr.mxu0 0.0
        %3889 = vmatpush1.msra.mxu0 0.0
        %3890 = vmatprep.subr.mxu0 0.0
        %3891 = vmatpush1.msra.mxu0 0.0
        %3892 = vmatprep.subr.mxu0 0.0
        %3893 = vmatpush1.msra.mxu0 0.0
        %3894 = vmatprep.subr.mxu0 0.0
        %3895 = vmatpush1.msra.mxu0 0.0
        %3896 = vmatprep.subr.mxu0 0.0
        %3897 = vmatpush1.msra.mxu0 0.0
        %3898 = vmatprep.subr.mxu0 0.0
        %3899 = vmatpush1.msra.mxu0 0.0
        %3900 = vmatprep.subr.mxu0 0.0
        %3901 = vmatpush1.msra.mxu0 0.0
        %3902 = vmatprep.subr.mxu0 0.0
        %3903 = vmatpush1.msra.mxu0 0.0
        %3904 = vmatprep.subr.mxu0 0.0
        %3905 = vmatpush1.msra.mxu0 0.0
        %3906 = vmatprep.subr.mxu0 0.0
        %3907 = vmatpush1.msra.mxu0 0.0
        %3908 = vmatprep.subr.mxu0 0.0
        %3909 = vmatpush1.msra.mxu0 0.0
        %3910 = vmatprep.subr.mxu0 0.0
        %3911 = vmatpush1.msra.mxu0 %v3874
        %3912 = vmatprep.subr.mxu0 0.0
        %3913 = vmatpush1.msra.mxu0 %v3872
        %3914 = vmatprep.subr.mxu0 0.0
        %3915 = vmatpush1.msra.mxu0 %v3870
        %3916 = vmatprep.subr.mxu0 0.0
        %3917 = vmatpush2.msra.mxu0 0.0
        %3918 = vmatprep.subr.mxu0 0.0
        %3919 = vmatpush2.msra.mxu0 0.0
        %3920 = vmatprep.subr.mxu0 0.0
        %3921 = vmatpush2.msra.mxu0 0.0
        %3922 = vmatprep.subr.mxu0 0.0
        %3923 = vmatpush2.msra.mxu0 0.0
        %3924 = vmatprep.subr.mxu0 0.0
        %3925 = vmatpush2.msra.mxu0 0.0
        %3926 = vmatprep.subr.mxu0 0.0
        %3927 = vmatpush2.msra.mxu0 0.0
        %3928 = vmatprep.subr.mxu0 0.0
        %3929 = vmatpush2.msra.mxu0 0.0
        %3930 = vmatprep.subr.mxu0 0.0
        %3931 = vmatpush2.msra.mxu0 0.0
        %3932 = vmatprep.subr.mxu0 0.0
        %3933 = vmatpush2.msra.mxu0 0.0
        %3934 = vmatprep.subr.mxu0 0.0
        %3935 = vmatpush2.msra.mxu0 0.0
        %3936 = vmatprep.subr.mxu0 0.0
        %3937 = vmatpush2.msra.mxu0 0.0
        %3938 = vmatprep.subr.mxu0 0.0
        %3939 = vmatpush2.msra.mxu0 0.0
        %3940 = vmatprep.subr.mxu0 0.0
        %3941 = vmatpush2.msra.mxu0 0.0
        %3942 = vmatprep.subr.mxu0 0.0
        %3943 = vmatpush2.msra.mxu0 0.0
        %3944 = vmatprep.subr.mxu0 0.0
        %3945 = vmatpush2.msra.mxu0 0.0
        %3946 = vmatprep.subr.mxu0 0.0
        %3947 = vmatpush2.msra.mxu0 0.0
        %3948 = vmatprep.mubr.f32.mxu0 0.0
        %3949 = vmatmul.mubr.f32.gmra.mxu0 %v3879
        %v3950 = vpop.f32.mrf.mxu0
        %v3951 = vadd.f32 0.0, %v3950
        %v3952 = vpop.f32.mrf.mxu0
        %3953 = vmatprep.mubr.f32.mxu0 0.0
        %3954 = vmatmul.mubr.f32.gmra.mxu0 %v3882
        %v3955 = vpop.f32.mrf.mxu0
        %v3956 = vadd.f32 0.0, %v3955
        %v3957 = vpop.f32.mrf.mxu0
        %3958 = vdwg.mxu0
        %3959 = vrot.lane.b32.xlu0 %v3554, 120
        %v3960 = vpop.permute.xlu0 %3959
        %3961 = vrot.lane.b32.xlu0 %v3555, 120
        %v3962 = vpop.permute.xlu0 %3961
        %3963 = vrot.lane.b32.xlu0 %v3446, 120
        %v3964 = vpop.permute.xlu0 %3963
        %3965 = vrot.lane.b32.xlu0 %v3451, 120
        %v3966 = vpop.permute.xlu0 %3965
        %3967 = vrot.lane.b32.xlu0 %v3456, 120
        %v3968 = vpop.permute.xlu0 %3967
        %v3969 = vsel %vm1449, %v3960, 0
        %v3971 = vsel %vm1449, %v3962, 0
        %v3973 = vsel %vm1449, %v3964, 0
        %v3975 = vsel %vm1449, %v3966, 0
        %v3977 = vsel %vm1449, %v3968, 0
        %3979 = vmatprep.subr.mxu0 0.0
        %3980 = vmatpush1.xpose.msra.mxu0 0.0
        %3981 = vmatprep.subr.mxu0 0.0
        %3982 = vmatpush1.xpose.msra.mxu0 0.0
        %3983 = vmatprep.subr.mxu0 0.0
        %3984 = vmatpush1.xpose.msra.mxu0 0.0
        %3985 = vmatprep.subr.mxu0 0.0
        %3986 = vmatpush1.xpose.msra.mxu0 0.0
        %3987 = vmatprep.subr.mxu0 0.0
        %3988 = vmatpush1.xpose.msra.mxu0 0.0
        %3989 = vmatprep.subr.mxu0 0.0
        %3990 = vmatpush1.xpose.msra.mxu0 0.0
        %3991 = vmatprep.subr.mxu0 0.0
        %3992 = vmatpush1.xpose.msra.mxu0 0.0
        %3993 = vmatprep.subr.mxu0 0.0
        %3994 = vmatpush1.xpose.msra.mxu0 0.0
        %3995 = vmatprep.subr.mxu0 0.0
        %3996 = vmatpush1.xpose.msra.mxu0 0.0
        %3997 = vmatprep.subr.mxu0 0.0
        %3998 = vmatpush1.xpose.msra.mxu0 0.0
        %3999 = vmatprep.subr.mxu0 0.0
        %4000 = vmatpush1.xpose.msra.mxu0 0.0
        %4001 = vmatprep.subr.mxu0 0.0
        %4002 = vmatpush1.xpose.msra.mxu0 0.0
        %4003 = vmatprep.subr.mxu0 0.0
        %4004 = vmatpush1.xpose.msra.mxu0 0.0
        %4005 = vmatprep.subr.mxu0 0.0
        %4006 = vmatpush1.xpose.msra.mxu0 %v3977
        %4007 = vmatprep.subr.mxu0 0.0
        %4008 = vmatpush1.xpose.msra.mxu0 %v3975
        %4009 = vmatprep.subr.mxu0 0.0
        %4010 = vmatpush1.xpose.msra.mxu0 %v3973
        %4011 = vmatprep.subr.mxu0 0.0
        %4012 = vmatpush2.xpose.msra.mxu0 0.0
        %4013 = vmatprep.subr.mxu0 0.0
        %4014 = vmatpush2.xpose.msra.mxu0 0.0
        %4015 = vmatprep.subr.mxu0 0.0
        %4016 = vmatpush2.xpose.msra.mxu0 0.0
        %4017 = vmatprep.subr.mxu0 0.0
        %4018 = vmatpush2.xpose.msra.mxu0 0.0
        %4019 = vmatprep.subr.mxu0 0.0
        %4020 = vmatpush2.xpose.msra.mxu0 0.0
        %4021 = vmatprep.subr.mxu0 0.0
        %4022 = vmatpush2.xpose.msra.mxu0 0.0
        %4023 = vmatprep.subr.mxu0 0.0
        %4024 = vmatpush2.xpose.msra.mxu0 0.0
        %4025 = vmatprep.subr.mxu0 0.0
        %4026 = vmatpush2.xpose.msra.mxu0 0.0
        %4027 = vmatprep.subr.mxu0 0.0
        %4028 = vmatpush2.xpose.msra.mxu0 0.0
        %4029 = vmatprep.subr.mxu0 0.0
        %4030 = vmatpush2.xpose.msra.mxu0 0.0
        %4031 = vmatprep.subr.mxu0 0.0
        %4032 = vmatpush2.xpose.msra.mxu0 0.0
        %4033 = vmatprep.subr.mxu0 0.0
        %4034 = vmatpush2.xpose.msra.mxu0 0.0
        %4035 = vmatprep.subr.mxu0 0.0
        %4036 = vmatpush2.xpose.msra.mxu0 0.0
        %4037 = vmatprep.subr.mxu0 0.0
        %4038 = vmatpush2.xpose.msra.mxu0 0.0
        %4039 = vmatprep.subr.mxu0 0.0
        %4040 = vmatpush2.xpose.msra.mxu0 0.0
        %4041 = vmatprep.subr.mxu0 0.0
        %4042 = vmatpush2.xpose.msra.mxu0 0.0
        %4043 = vmatprep.mubr.f32.mxu0 0.0
        %4044 = vmatmul.mubr.f32.gmra.mxu0 %v3969
        %v4045 = vpop.f32.mrf.mxu0
        %v4046 = vadd.f32 0.0, %v4045
        %v4047 = vpop.f32.mrf.mxu0
        %4048 = vmatprep.mubr.f32.mxu0 0.0
        %4049 = vmatmul.mubr.f32.gmra.mxu0 %v3971
        %v4050 = vpop.f32.mrf.mxu0
        %v4051 = vadd.f32 0.0, %v4050
        %v4052 = vpop.f32.mrf.mxu0
        %4053 = vdwg.mxu0
        %v4054 = vsel %vm3112, %v4046, -inf
        %4055 = vmax.xlane.f32.xlu0 %v4054
        %v4056 = vpop.xlane.xlu0 %4055
        %v4057 = vsel %vm3112, %v4051, -inf
        %4058 = vmax.xlane.f32.xlu0 %v4057
        %v4059 = vpop.xlane.xlu0 %4058
        %v4060 = vsub.f32 %v4046, %v4056
        %v4061 = vsub.f32 %v4051, %v4059
        %v4062 = vmul.f32 %v4060, 1.442695
        %v4063 = vpow.pop %v4062
        %v4064 = vmul.f32 %v4061, 1.442695
        %v4065 = vpow.pop %v4064
        %v4066 = vsel %vm3112, %v4063, 0.0
        %4067 = vadd.xlane.f32.xlu0 %v4066
        %v4068 = vpop.xlane.xlu0 %4067
        %v4069 = vsel %vm3112, %v4065, 0.0
        %4070 = vadd.xlane.f32.xlu0 %v4069
        %v4071 = vpop.xlane.xlu0 %4070
        %v4072 = vrcp.pop %v4068
        %v4073 = vmul.f32 %v4063, %v4072
        %v4074 = vrcp.pop %v4071
        %v4075 = vmul.f32 %v4065, %v4074
        %4076 = vrot.lane.b32.xlu0 %v3541, 120
        %v4077 = vpop.permute.xlu0 %4076
        %4078 = vrot.lane.b32.xlu0 %v3546, 120
        %v4079 = vpop.permute.xlu0 %4078
        %4080 = vrot.lane.b32.xlu0 %v3551, 120
        %v4081 = vpop.permute.xlu0 %4080
        %v4086 = vsel %vm3112, %v4073, 0
        %v4089 = vsel %vm3112, %v4075, 0
        %4091 = vmatprep.subr.mxu0 0.0
        %4092 = vmatpush1.msra.mxu0 0.0
        %4093 = vmatprep.subr.mxu0 0.0
        %4094 = vmatpush1.msra.mxu0 0.0
        %4095 = vmatprep.subr.mxu0 0.0
        %4096 = vmatpush1.msra.mxu0 0.0
        %4097 = vmatprep.subr.mxu0 0.0
        %4098 = vmatpush1.msra.mxu0 0.0
        %4099 = vmatprep.subr.mxu0 0.0
        %4100 = vmatpush1.msra.mxu0 0.0
        %4101 = vmatprep.subr.mxu0 0.0
        %4102 = vmatpush1.msra.mxu0 0.0
        %4103 = vmatprep.subr.mxu0 0.0
        %4104 = vmatpush1.msra.mxu0 0.0
        %4105 = vmatprep.subr.mxu0 0.0
        %4106 = vmatpush1.msra.mxu0 0.0
        %4107 = vmatprep.subr.mxu0 0.0
        %4108 = vmatpush1.msra.mxu0 0.0
        %4109 = vmatprep.subr.mxu0 0.0
        %4110 = vmatpush1.msra.mxu0 0.0
        %4111 = vmatprep.subr.mxu0 0.0
        %4112 = vmatpush1.msra.mxu0 0.0
        %4113 = vmatprep.subr.mxu0 0.0
        %4114 = vmatpush1.msra.mxu0 0.0
        %4115 = vmatprep.subr.mxu0 0.0
        %4116 = vmatpush1.msra.mxu0 0.0
        %4117 = vmatprep.subr.mxu0 0.0
        %4118 = vmatpush1.msra.mxu0 %v4081
        %4119 = vmatprep.subr.mxu0 0.0
        %4120 = vmatpush1.msra.mxu0 %v4079
        %4121 = vmatprep.subr.mxu0 0.0
        %4122 = vmatpush1.msra.mxu0 %v4077
        %4123 = vmatprep.subr.mxu0 0.0
        %4124 = vmatpush2.msra.mxu0 0.0
        %4125 = vmatprep.subr.mxu0 0.0
        %4126 = vmatpush2.msra.mxu0 0.0
        %4127 = vmatprep.subr.mxu0 0.0
        %4128 = vmatpush2.msra.mxu0 0.0
        %4129 = vmatprep.subr.mxu0 0.0
        %4130 = vmatpush2.msra.mxu0 0.0
        %4131 = vmatprep.subr.mxu0 0.0
        %4132 = vmatpush2.msra.mxu0 0.0
        %4133 = vmatprep.subr.mxu0 0.0
        %4134 = vmatpush2.msra.mxu0 0.0
        %4135 = vmatprep.subr.mxu0 0.0
        %4136 = vmatpush2.msra.mxu0 0.0
        %4137 = vmatprep.subr.mxu0 0.0
        %4138 = vmatpush2.msra.mxu0 0.0
        %4139 = vmatprep.subr.mxu0 0.0
        %4140 = vmatpush2.msra.mxu0 0.0
        %4141 = vmatprep.subr.mxu0 0.0
        %4142 = vmatpush2.msra.mxu0 0.0
        %4143 = vmatprep.subr.mxu0 0.0
        %4144 = vmatpush2.msra.mxu0 0.0
        %4145 = vmatprep.subr.mxu0 0.0
        %4146 = vmatpush2.msra.mxu0 0.0
        %4147 = vmatprep.subr.mxu0 0.0
        %4148 = vmatpush2.msra.mxu0 0.0
        %4149 = vmatprep.subr.mxu0 0.0
        %4150 = vmatpush2.msra.mxu0 0.0
        %4151 = vmatprep.subr.mxu0 0.0
        %4152 = vmatpush2.msra.mxu0 0.0
        %4153 = vmatprep.subr.mxu0 0.0
        %4154 = vmatpush2.msra.mxu0 0.0
        %4155 = vmatprep.mubr.f32.mxu0 0.0
        %4156 = vmatmul.mubr.f32.gmra.mxu0 %v4086
        %v4157 = vpop.f32.mrf.mxu0
        %v4158 = vadd.f32 0.0, %v4157
        %v4159 = vpop.f32.mrf.mxu0
        %4160 = vmatprep.mubr.f32.mxu0 0.0
        %4161 = vmatmul.mubr.f32.gmra.mxu0 %v4089
        %v4162 = vpop.f32.mrf.mxu0
        %v4163 = vadd.f32 0.0, %v4162
        %v4164 = vpop.f32.mrf.mxu0
        %4165 = vdwg.mxu0
        %4166 = vrot.lane.b32.xlu0 %v3554, 116
        %v4167 = vpop.permute.xlu0 %4166
        %4168 = vrot.lane.b32.xlu0 %v3555, 116
        %v4169 = vpop.permute.xlu0 %4168
        %4170 = vrot.lane.b32.xlu0 %v3446, 116
        %v4171 = vpop.permute.xlu0 %4170
        %4172 = vrot.lane.b32.xlu0 %v3451, 116
        %v4173 = vpop.permute.xlu0 %4172
        %4174 = vrot.lane.b32.xlu0 %v3456, 116
        %v4175 = vpop.permute.xlu0 %4174
        %v4176 = vsel %vm1449, %v4167, 0
        %v4178 = vsel %vm1449, %v4169, 0
        %v4180 = vsel %vm1449, %v4171, 0
        %v4182 = vsel %vm1449, %v4173, 0
        %v4184 = vsel %vm1449, %v4175, 0
        %4186 = vmatprep.subr.mxu0 0.0
        %4187 = vmatpush1.xpose.msra.mxu0 0.0
        %4188 = vmatprep.subr.mxu0 0.0
        %4189 = vmatpush1.xpose.msra.mxu0 0.0
        %4190 = vmatprep.subr.mxu0 0.0
        %4191 = vmatpush1.xpose.msra.mxu0 0.0
        %4192 = vmatprep.subr.mxu0 0.0
        %4193 = vmatpush1.xpose.msra.mxu0 0.0
        %4194 = vmatprep.subr.mxu0 0.0
        %4195 = vmatpush1.xpose.msra.mxu0 0.0
        %4196 = vmatprep.subr.mxu0 0.0
        %4197 = vmatpush1.xpose.msra.mxu0 0.0
        %4198 = vmatprep.subr.mxu0 0.0
        %4199 = vmatpush1.xpose.msra.mxu0 0.0
        %4200 = vmatprep.subr.mxu0 0.0
        %4201 = vmatpush1.xpose.msra.mxu0 0.0
        %4202 = vmatprep.subr.mxu0 0.0
        %4203 = vmatpush1.xpose.msra.mxu0 0.0
        %4204 = vmatprep.subr.mxu0 0.0
        %4205 = vmatpush1.xpose.msra.mxu0 0.0
        %4206 = vmatprep.subr.mxu0 0.0
        %4207 = vmatpush1.xpose.msra.mxu0 0.0
        %4208 = vmatprep.subr.mxu0 0.0
        %4209 = vmatpush1.xpose.msra.mxu0 0.0
        %4210 = vmatprep.subr.mxu0 0.0
        %4211 = vmatpush1.xpose.msra.mxu0 0.0
        %4212 = vmatprep.subr.mxu0 0.0
        %4213 = vmatpush1.xpose.msra.mxu0 %v4184
        %4214 = vmatprep.subr.mxu0 0.0
        %4215 = vmatpush1.xpose.msra.mxu0 %v4182
        %4216 = vmatprep.subr.mxu0 0.0
        %4217 = vmatpush1.xpose.msra.mxu0 %v4180
        %4218 = vmatprep.subr.mxu0 0.0
        %4219 = vmatpush2.xpose.msra.mxu0 0.0
        %4220 = vmatprep.subr.mxu0 0.0
        %4221 = vmatpush2.xpose.msra.mxu0 0.0
        %4222 = vmatprep.subr.mxu0 0.0
        %4223 = vmatpush2.xpose.msra.mxu0 0.0
        %4224 = vmatprep.subr.mxu0 0.0
        %4225 = vmatpush2.xpose.msra.mxu0 0.0
        %4226 = vmatprep.subr.mxu0 0.0
        %4227 = vmatpush2.xpose.msra.mxu0 0.0
        %4228 = vmatprep.subr.mxu0 0.0
        %4229 = vmatpush2.xpose.msra.mxu0 0.0
        %4230 = vmatprep.subr.mxu0 0.0
        %4231 = vmatpush2.xpose.msra.mxu0 0.0
        %4232 = vmatprep.subr.mxu0 0.0
        %4233 = vmatpush2.xpose.msra.mxu0 0.0
        %4234 = vmatprep.subr.mxu0 0.0
        %4235 = vmatpush2.xpose.msra.mxu0 0.0
        %4236 = vmatprep.subr.mxu0 0.0
        %4237 = vmatpush2.xpose.msra.mxu0 0.0
        %4238 = vmatprep.subr.mxu0 0.0
        %4239 = vmatpush2.xpose.msra.mxu0 0.0
        %4240 = vmatprep.subr.mxu0 0.0
        %4241 = vmatpush2.xpose.msra.mxu0 0.0
        %4242 = vmatprep.subr.mxu0 0.0
        %4243 = vmatpush2.xpose.msra.mxu0 0.0
        %4244 = vmatprep.subr.mxu0 0.0
        %4245 = vmatpush2.xpose.msra.mxu0 0.0
        %4246 = vmatprep.subr.mxu0 0.0
        %4247 = vmatpush2.xpose.msra.mxu0 0.0
        %4248 = vmatprep.subr.mxu0 0.0
        %4249 = vmatpush2.xpose.msra.mxu0 0.0
        %4250 = vmatprep.mubr.f32.mxu0 0.0
        %4251 = vmatmul.mubr.f32.gmra.mxu0 %v4176
        %v4252 = vpop.f32.mrf.mxu0
        %v4253 = vadd.f32 0.0, %v4252
        %v4254 = vpop.f32.mrf.mxu0
        %4255 = vmatprep.mubr.f32.mxu0 0.0
        %4256 = vmatmul.mubr.f32.gmra.mxu0 %v4178
        %v4257 = vpop.f32.mrf.mxu0
        %v4258 = vadd.f32 0.0, %v4257
        %v4259 = vpop.f32.mrf.mxu0
        %4260 = vdwg.mxu0
        %v4261 = vsel %vm3112, %v4253, -inf
        %4262 = vmax.xlane.f32.xlu0 %v4261
        %v4263 = vpop.xlane.xlu0 %4262
        %v4264 = vsel %vm3112, %v4258, -inf
        %4265 = vmax.xlane.f32.xlu0 %v4264
        %v4266 = vpop.xlane.xlu0 %4265
        %v4267 = vsub.f32 %v4253, %v4263
        %v4268 = vsub.f32 %v4258, %v4266
        %v4269 = vmul.f32 %v4267, 1.442695
        %v4270 = vpow.pop %v4269
        %v4271 = vmul.f32 %v4268, 1.442695
        %v4272 = vpow.pop %v4271
        %v4273 = vsel %vm3112, %v4270, 0.0
        %4274 = vadd.xlane.f32.xlu0 %v4273
        %v4275 = vpop.xlane.xlu0 %4274
        %v4276 = vsel %vm3112, %v4272, 0.0
        %4277 = vadd.xlane.f32.xlu0 %v4276
        %v4278 = vpop.xlane.xlu0 %4277
        %v4279 = vrcp.pop %v4275
        %v4280 = vmul.f32 %v4270, %v4279
        %v4281 = vrcp.pop %v4278
        %v4282 = vmul.f32 %v4272, %v4281
        %4283 = vrot.lane.b32.xlu0 %v3541, 116
        %v4284 = vpop.permute.xlu0 %4283
        %4285 = vrot.lane.b32.xlu0 %v3546, 116
        %v4286 = vpop.permute.xlu0 %4285
        %4287 = vrot.lane.b32.xlu0 %v3551, 116
        %v4288 = vpop.permute.xlu0 %4287
        %v4293 = vsel %vm3112, %v4280, 0
        %v4296 = vsel %vm3112, %v4282, 0
        %4298 = vmatprep.subr.mxu0 0.0
        %4299 = vmatpush1.msra.mxu0 0.0
        %4300 = vmatprep.subr.mxu0 0.0
        %4301 = vmatpush1.msra.mxu0 0.0
        %4302 = vmatprep.subr.mxu0 0.0
        %4303 = vmatpush1.msra.mxu0 0.0
        %4304 = vmatprep.subr.mxu0 0.0
        %4305 = vmatpush1.msra.mxu0 0.0
        %4306 = vmatprep.subr.mxu0 0.0
        %4307 = vmatpush1.msra.mxu0 0.0
        %4308 = vmatprep.subr.mxu0 0.0
        %4309 = vmatpush1.msra.mxu0 0.0
        %4310 = vmatprep.subr.mxu0 0.0
        %4311 = vmatpush1.msra.mxu0 0.0
        %4312 = vmatprep.subr.mxu0 0.0
        %4313 = vmatpush1.msra.mxu0 0.0
        %4314 = vmatprep.subr.mxu0 0.0
        %4315 = vmatpush1.msra.mxu0 0.0
        %4316 = vmatprep.subr.mxu0 0.0
        %4317 = vmatpush1.msra.mxu0 0.0
        %4318 = vmatprep.subr.mxu0 0.0
        %4319 = vmatpush1.msra.mxu0 0.0
        %4320 = vmatprep.subr.mxu0 0.0
        %4321 = vmatpush1.msra.mxu0 0.0
        %4322 = vmatprep.subr.mxu0 0.0
        %4323 = vmatpush1.msra.mxu0 0.0
        %4324 = vmatprep.subr.mxu0 0.0
        %4325 = vmatpush1.msra.mxu0 %v4288
        %4326 = vmatprep.subr.mxu0 0.0
        %4327 = vmatpush1.msra.mxu0 %v4286
        %4328 = vmatprep.subr.mxu0 0.0
        %4329 = vmatpush1.msra.mxu0 %v4284
        %4330 = vmatprep.subr.mxu0 0.0
        %4331 = vmatpush2.msra.mxu0 0.0
        %4332 = vmatprep.subr.mxu0 0.0
        %4333 = vmatpush2.msra.mxu0 0.0
        %4334 = vmatprep.subr.mxu0 0.0
        %4335 = vmatpush2.msra.mxu0 0.0
        %4336 = vmatprep.subr.mxu0 0.0
        %4337 = vmatpush2.msra.mxu0 0.0
        %4338 = vmatprep.subr.mxu0 0.0
        %4339 = vmatpush2.msra.mxu0 0.0
        %4340 = vmatprep.subr.mxu0 0.0
        %4341 = vmatpush2.msra.mxu0 0.0
        %4342 = vmatprep.subr.mxu0 0.0
        %4343 = vmatpush2.msra.mxu0 0.0
        %4344 = vmatprep.subr.mxu0 0.0
        %4345 = vmatpush2.msra.mxu0 0.0
        %4346 = vmatprep.subr.mxu0 0.0
        %4347 = vmatpush2.msra.mxu0 0.0
        %4348 = vmatprep.subr.mxu0 0.0
        %4349 = vmatpush2.msra.mxu0 0.0
        %4350 = vmatprep.subr.mxu0 0.0
        %4351 = vmatpush2.msra.mxu0 0.0
        %4352 = vmatprep.subr.mxu0 0.0
        %4353 = vmatpush2.msra.mxu0 0.0
        %4354 = vmatprep.subr.mxu0 0.0
        %4355 = vmatpush2.msra.mxu0 0.0
        %4356 = vmatprep.subr.mxu0 0.0
        %4357 = vmatpush2.msra.mxu0 0.0
        %4358 = vmatprep.subr.mxu0 0.0
        %4359 = vmatpush2.msra.mxu0 0.0
        %4360 = vmatprep.subr.mxu0 0.0
        %4361 = vmatpush2.msra.mxu0 0.0
        %4362 = vmatprep.mubr.f32.mxu0 0.0
        %4363 = vmatmul.mubr.f32.gmra.mxu0 %v4293
        %v4364 = vpop.f32.mrf.mxu0
        %v4365 = vadd.f32 0.0, %v4364
        %v4366 = vpop.f32.mrf.mxu0
        %4367 = vmatprep.mubr.f32.mxu0 0.0
        %4368 = vmatmul.mubr.f32.gmra.mxu0 %v4296
        %v4369 = vpop.f32.mrf.mxu0
        %v4370 = vadd.f32 0.0, %v4369
        %v4371 = vpop.f32.mrf.mxu0
        %4372 = vdwg.mxu0
        %4373 = vrot.lane.b32.xlu0 %v3554, 112
        %v4374 = vpop.permute.xlu0 %4373
        %4375 = vrot.lane.b32.xlu0 %v3555, 112
        %v4376 = vpop.permute.xlu0 %4375
        %4377 = vrot.lane.b32.xlu0 %v3446, 112
        %v4378 = vpop.permute.xlu0 %4377
        %4379 = vrot.lane.b32.xlu0 %v3451, 112
        %v4380 = vpop.permute.xlu0 %4379
        %4381 = vrot.lane.b32.xlu0 %v3456, 112
        %v4382 = vpop.permute.xlu0 %4381
        %v4383 = vsel %vm1449, %v4374, 0
        %v4385 = vsel %vm1449, %v4376, 0
        %v4387 = vsel %vm1449, %v4378, 0
        %v4389 = vsel %vm1449, %v4380, 0
        %v4391 = vsel %vm1449, %v4382, 0
        %4393 = vmatprep.subr.mxu0 0.0
        %4394 = vmatpush1.xpose.msra.mxu0 0.0
        %4395 = vmatprep.subr.mxu0 0.0
        %4396 = vmatpush1.xpose.msra.mxu0 0.0
        %4397 = vmatprep.subr.mxu0 0.0
        %4398 = vmatpush1.xpose.msra.mxu0 0.0
        %4399 = vmatprep.subr.mxu0 0.0
        %4400 = vmatpush1.xpose.msra.mxu0 0.0
        %4401 = vmatprep.subr.mxu0 0.0
        %4402 = vmatpush1.xpose.msra.mxu0 0.0
        %4403 = vmatprep.subr.mxu0 0.0
        %4404 = vmatpush1.xpose.msra.mxu0 0.0
        %4405 = vmatprep.subr.mxu0 0.0
        %4406 = vmatpush1.xpose.msra.mxu0 0.0
        %4407 = vmatprep.subr.mxu0 0.0
        %4408 = vmatpush1.xpose.msra.mxu0 0.0
        %4409 = vmatprep.subr.mxu0 0.0
        %4410 = vmatpush1.xpose.msra.mxu0 0.0
        %4411 = vmatprep.subr.mxu0 0.0
        %4412 = vmatpush1.xpose.msra.mxu0 0.0
        %4413 = vmatprep.subr.mxu0 0.0
        %4414 = vmatpush1.xpose.msra.mxu0 0.0
        %4415 = vmatprep.subr.mxu0 0.0
        %4416 = vmatpush1.xpose.msra.mxu0 0.0
        %4417 = vmatprep.subr.mxu0 0.0
        %4418 = vmatpush1.xpose.msra.mxu0 0.0
        %4419 = vmatprep.subr.mxu0 0.0
        %4420 = vmatpush1.xpose.msra.mxu0 %v4391
        %4421 = vmatprep.subr.mxu0 0.0
        %4422 = vmatpush1.xpose.msra.mxu0 %v4389
        %4423 = vmatprep.subr.mxu0 0.0
        %4424 = vmatpush1.xpose.msra.mxu0 %v4387
        %4425 = vmatprep.subr.mxu0 0.0
        %4426 = vmatpush2.xpose.msra.mxu0 0.0
        %4427 = vmatprep.subr.mxu0 0.0
        %4428 = vmatpush2.xpose.msra.mxu0 0.0
        %4429 = vmatprep.subr.mxu0 0.0
        %4430 = vmatpush2.xpose.msra.mxu0 0.0
        %4431 = vmatprep.subr.mxu0 0.0
        %4432 = vmatpush2.xpose.msra.mxu0 0.0
        %4433 = vmatprep.subr.mxu0 0.0
        %4434 = vmatpush2.xpose.msra.mxu0 0.0
        %4435 = vmatprep.subr.mxu0 0.0
        %4436 = vmatpush2.xpose.msra.mxu0 0.0
        %4437 = vmatprep.subr.mxu0 0.0
        %4438 = vmatpush2.xpose.msra.mxu0 0.0
        %4439 = vmatprep.subr.mxu0 0.0
        %4440 = vmatpush2.xpose.msra.mxu0 0.0
        %4441 = vmatprep.subr.mxu0 0.0
        %4442 = vmatpush2.xpose.msra.mxu0 0.0
        %4443 = vmatprep.subr.mxu0 0.0
        %4444 = vmatpush2.xpose.msra.mxu0 0.0
        %4445 = vmatprep.subr.mxu0 0.0
        %4446 = vmatpush2.xpose.msra.mxu0 0.0
        %4447 = vmatprep.subr.mxu0 0.0
        %4448 = vmatpush2.xpose.msra.mxu0 0.0
        %4449 = vmatprep.subr.mxu0 0.0
        %4450 = vmatpush2.xpose.msra.mxu0 0.0
        %4451 = vmatprep.subr.mxu0 0.0
        %4452 = vmatpush2.xpose.msra.mxu0 0.0
        %4453 = vmatprep.subr.mxu0 0.0
        %4454 = vmatpush2.xpose.msra.mxu0 0.0
        %4455 = vmatprep.subr.mxu0 0.0
        %4456 = vmatpush2.xpose.msra.mxu0 0.0
        %4457 = vmatprep.mubr.f32.mxu0 0.0
        %4458 = vmatmul.mubr.f32.gmra.mxu0 %v4383
        %v4459 = vpop.f32.mrf.mxu0
        %v4460 = vadd.f32 0.0, %v4459
        %v4461 = vpop.f32.mrf.mxu0
        %4462 = vmatprep.mubr.f32.mxu0 0.0
        %4463 = vmatmul.mubr.f32.gmra.mxu0 %v4385
        %v4464 = vpop.f32.mrf.mxu0
        %v4465 = vadd.f32 0.0, %v4464
        %v4466 = vpop.f32.mrf.mxu0
        %4467 = vdwg.mxu0
        %v4468 = vsel %vm3112, %v4460, -inf
        %4469 = vmax.xlane.f32.xlu0 %v4468
        %v4470 = vpop.xlane.xlu0 %4469
        %v4471 = vsel %vm3112, %v4465, -inf
        %4472 = vmax.xlane.f32.xlu0 %v4471
        %v4473 = vpop.xlane.xlu0 %4472
        %v4474 = vsub.f32 %v4460, %v4470
        %v4475 = vsub.f32 %v4465, %v4473
        %v4476 = vmul.f32 %v4474, 1.442695
        %v4477 = vpow.pop %v4476
        %v4478 = vmul.f32 %v4475, 1.442695
        %v4479 = vpow.pop %v4478
        %v4480 = vsel %vm3112, %v4477, 0.0
        %4481 = vadd.xlane.f32.xlu0 %v4480
        %v4482 = vpop.xlane.xlu0 %4481
        %v4483 = vsel %vm3112, %v4479, 0.0
        %4484 = vadd.xlane.f32.xlu0 %v4483
        %v4485 = vpop.xlane.xlu0 %4484
        %v4486 = vrcp.pop %v4482
        %v4487 = vmul.f32 %v4477, %v4486
        %v4488 = vrcp.pop %v4485
        %v4489 = vmul.f32 %v4479, %v4488
        %4490 = vrot.lane.b32.xlu0 %v3541, 112
        %v4491 = vpop.permute.xlu0 %4490
        %4492 = vrot.lane.b32.xlu0 %v3546, 112
        %v4493 = vpop.permute.xlu0 %4492
        %4494 = vrot.lane.b32.xlu0 %v3551, 112
        %v4495 = vpop.permute.xlu0 %4494
        %v4500 = vsel %vm3112, %v4487, 0
        %v4503 = vsel %vm3112, %v4489, 0
        %4505 = vmatprep.subr.mxu0 0.0
        %4506 = vmatpush1.msra.mxu0 0.0
        %4507 = vmatprep.subr.mxu0 0.0
        %4508 = vmatpush1.msra.mxu0 0.0
        %4509 = vmatprep.subr.mxu0 0.0
        %4510 = vmatpush1.msra.mxu0 0.0
        %4511 = vmatprep.subr.mxu0 0.0
        %4512 = vmatpush1.msra.mxu0 0.0
        %4513 = vmatprep.subr.mxu0 0.0
        %4514 = vmatpush1.msra.mxu0 0.0
        %4515 = vmatprep.subr.mxu0 0.0
        %4516 = vmatpush1.msra.mxu0 0.0
        %4517 = vmatprep.subr.mxu0 0.0
        %4518 = vmatpush1.msra.mxu0 0.0
        %4519 = vmatprep.subr.mxu0 0.0
        %4520 = vmatpush1.msra.mxu0 0.0
        %4521 = vmatprep.subr.mxu0 0.0
        %4522 = vmatpush1.msra.mxu0 0.0
        %4523 = vmatprep.subr.mxu0 0.0
        %4524 = vmatpush1.msra.mxu0 0.0
        %4525 = vmatprep.subr.mxu0 0.0
        %4526 = vmatpush1.msra.mxu0 0.0
        %4527 = vmatprep.subr.mxu0 0.0
        %4528 = vmatpush1.msra.mxu0 0.0
        %4529 = vmatprep.subr.mxu0 0.0
        %4530 = vmatpush1.msra.mxu0 0.0
        %4531 = vmatprep.subr.mxu0 0.0
        %4532 = vmatpush1.msra.mxu0 %v4495
        %4533 = vmatprep.subr.mxu0 0.0
        %4534 = vmatpush1.msra.mxu0 %v4493
        %4535 = vmatprep.subr.mxu0 0.0
        %4536 = vmatpush1.msra.mxu0 %v4491
        %4537 = vmatprep.subr.mxu0 0.0
        %4538 = vmatpush2.msra.mxu0 0.0
        %4539 = vmatprep.subr.mxu0 0.0
        %4540 = vmatpush2.msra.mxu0 0.0
        %4541 = vmatprep.subr.mxu0 0.0
        %4542 = vmatpush2.msra.mxu0 0.0
        %4543 = vmatprep.subr.mxu0 0.0
        %4544 = vmatpush2.msra.mxu0 0.0
        %4545 = vmatprep.subr.mxu0 0.0
        %4546 = vmatpush2.msra.mxu0 0.0
        %4547 = vmatprep.subr.mxu0 0.0
        %4548 = vmatpush2.msra.mxu0 0.0
        %4549 = vmatprep.subr.mxu0 0.0
        %4550 = vmatpush2.msra.mxu0 0.0
        %4551 = vmatprep.subr.mxu0 0.0
        %4552 = vmatpush2.msra.mxu0 0.0
        %4553 = vmatprep.subr.mxu0 0.0
        %4554 = vmatpush2.msra.mxu0 0.0
        %4555 = vmatprep.subr.mxu0 0.0
        %4556 = vmatpush2.msra.mxu0 0.0
        %4557 = vmatprep.subr.mxu0 0.0
        %4558 = vmatpush2.msra.mxu0 0.0
        %4559 = vmatprep.subr.mxu0 0.0
        %4560 = vmatpush2.msra.mxu0 0.0
        %4561 = vmatprep.subr.mxu0 0.0
        %4562 = vmatpush2.msra.mxu0 0.0
        %4563 = vmatprep.subr.mxu0 0.0
        %4564 = vmatpush2.msra.mxu0 0.0
        %4565 = vmatprep.subr.mxu0 0.0
        %4566 = vmatpush2.msra.mxu0 0.0
        %4567 = vmatprep.subr.mxu0 0.0
        %4568 = vmatpush2.msra.mxu0 0.0
        %4569 = vmatprep.mubr.f32.mxu0 0.0
        %4570 = vmatmul.mubr.f32.gmra.mxu0 %v4500
        %v4571 = vpop.f32.mrf.mxu0
        %v4572 = vadd.f32 0.0, %v4571
        %v4573 = vpop.f32.mrf.mxu0
        %4574 = vmatprep.mubr.f32.mxu0 0.0
        %4575 = vmatmul.mubr.f32.gmra.mxu0 %v4503
        %v4576 = vpop.f32.mrf.mxu0
        %v4577 = vadd.f32 0.0, %v4576
        %v4578 = vpop.f32.mrf.mxu0
        %4579 = vdwg.mxu0
        %4580 = vrot.lane.b32.xlu0 %v3554, 108
        %v4581 = vpop.permute.xlu0 %4580
        %4582 = vrot.lane.b32.xlu0 %v3555, 108
        %v4583 = vpop.permute.xlu0 %4582
        %4584 = vrot.lane.b32.xlu0 %v3446, 108
        %v4585 = vpop.permute.xlu0 %4584
        %4586 = vrot.lane.b32.xlu0 %v3451, 108
        %v4587 = vpop.permute.xlu0 %4586
        %4588 = vrot.lane.b32.xlu0 %v3456, 108
        %v4589 = vpop.permute.xlu0 %4588
        %v4590 = vsel %vm1449, %v4581, 0
        %v4592 = vsel %vm1449, %v4583, 0
        %v4594 = vsel %vm1449, %v4585, 0
        %v4596 = vsel %vm1449, %v4587, 0
        %v4598 = vsel %vm1449, %v4589, 0
        %4600 = vmatprep.subr.mxu0 0.0
        %4601 = vmatpush1.xpose.msra.mxu0 0.0
        %4602 = vmatprep.subr.mxu0 0.0
        %4603 = vmatpush1.xpose.msra.mxu0 0.0
        %4604 = vmatprep.subr.mxu0 0.0
        %4605 = vmatpush1.xpose.msra.mxu0 0.0
        %4606 = vmatprep.subr.mxu0 0.0
        %4607 = vmatpush1.xpose.msra.mxu0 0.0
        %4608 = vmatprep.subr.mxu0 0.0
        %4609 = vmatpush1.xpose.msra.mxu0 0.0
        %4610 = vmatprep.subr.mxu0 0.0
        %4611 = vmatpush1.xpose.msra.mxu0 0.0
        %4612 = vmatprep.subr.mxu0 0.0
        %4613 = vmatpush1.xpose.msra.mxu0 0.0
        %4614 = vmatprep.subr.mxu0 0.0
        %4615 = vmatpush1.xpose.msra.mxu0 0.0
        %4616 = vmatprep.subr.mxu0 0.0
        %4617 = vmatpush1.xpose.msra.mxu0 0.0
        %4618 = vmatprep.subr.mxu0 0.0
        %4619 = vmatpush1.xpose.msra.mxu0 0.0
        %4620 = vmatprep.subr.mxu0 0.0
        %4621 = vmatpush1.xpose.msra.mxu0 0.0
        %4622 = vmatprep.subr.mxu0 0.0
        %4623 = vmatpush1.xpose.msra.mxu0 0.0
        %4624 = vmatprep.subr.mxu0 0.0
        %4625 = vmatpush1.xpose.msra.mxu0 0.0
        %4626 = vmatprep.subr.mxu0 0.0
        %4627 = vmatpush1.xpose.msra.mxu0 %v4598
        %4628 = vmatprep.subr.mxu0 0.0
        %4629 = vmatpush1.xpose.msra.mxu0 %v4596
        %4630 = vmatprep.subr.mxu0 0.0
        %4631 = vmatpush1.xpose.msra.mxu0 %v4594
        %4632 = vmatprep.subr.mxu0 0.0
        %4633 = vmatpush2.xpose.msra.mxu0 0.0
        %4634 = vmatprep.subr.mxu0 0.0
        %4635 = vmatpush2.xpose.msra.mxu0 0.0
        %4636 = vmatprep.subr.mxu0 0.0
        %4637 = vmatpush2.xpose.msra.mxu0 0.0
        %4638 = vmatprep.subr.mxu0 0.0
        %4639 = vmatpush2.xpose.msra.mxu0 0.0
        %4640 = vmatprep.subr.mxu0 0.0
        %4641 = vmatpush2.xpose.msra.mxu0 0.0
        %4642 = vmatprep.subr.mxu0 0.0
        %4643 = vmatpush2.xpose.msra.mxu0 0.0
        %4644 = vmatprep.subr.mxu0 0.0
        %4645 = vmatpush2.xpose.msra.mxu0 0.0
        %4646 = vmatprep.subr.mxu0 0.0
        %4647 = vmatpush2.xpose.msra.mxu0 0.0
        %4648 = vmatprep.subr.mxu0 0.0
        %4649 = vmatpush2.xpose.msra.mxu0 0.0
        %4650 = vmatprep.subr.mxu0 0.0
        %4651 = vmatpush2.xpose.msra.mxu0 0.0
        %4652 = vmatprep.subr.mxu0 0.0
        %4653 = vmatpush2.xpose.msra.mxu0 0.0
        %4654 = vmatprep.subr.mxu0 0.0
        %4655 = vmatpush2.xpose.msra.mxu0 0.0
        %4656 = vmatprep.subr.mxu0 0.0
        %4657 = vmatpush2.xpose.msra.mxu0 0.0
        %4658 = vmatprep.subr.mxu0 0.0
        %4659 = vmatpush2.xpose.msra.mxu0 0.0
        %4660 = vmatprep.subr.mxu0 0.0
        %4661 = vmatpush2.xpose.msra.mxu0 0.0
        %4662 = vmatprep.subr.mxu0 0.0
        %4663 = vmatpush2.xpose.msra.mxu0 0.0
        %4664 = vmatprep.mubr.f32.mxu0 0.0
        %4665 = vmatmul.mubr.f32.gmra.mxu0 %v4590
        %v4666 = vpop.f32.mrf.mxu0
        %v4667 = vadd.f32 0.0, %v4666
        %v4668 = vpop.f32.mrf.mxu0
        %4669 = vmatprep.mubr.f32.mxu0 0.0
        %4670 = vmatmul.mubr.f32.gmra.mxu0 %v4592
        %v4671 = vpop.f32.mrf.mxu0
        %v4672 = vadd.f32 0.0, %v4671
        %v4673 = vpop.f32.mrf.mxu0
        %4674 = vdwg.mxu0
        %v4675 = vsel %vm3112, %v4667, -inf
        %4676 = vmax.xlane.f32.xlu0 %v4675
        %v4677 = vpop.xlane.xlu0 %4676
        %v4678 = vsel %vm3112, %v4672, -inf
        %4679 = vmax.xlane.f32.xlu0 %v4678
        %v4680 = vpop.xlane.xlu0 %4679
        %v4681 = vsub.f32 %v4667, %v4677
        %v4682 = vsub.f32 %v4672, %v4680
        %v4683 = vmul.f32 %v4681, 1.442695
        %v4684 = vpow.pop %v4683
        %v4685 = vmul.f32 %v4682, 1.442695
        %v4686 = vpow.pop %v4685
        %v4687 = vsel %vm3112, %v4684, 0.0
        %4688 = vadd.xlane.f32.xlu0 %v4687
        %v4689 = vpop.xlane.xlu0 %4688
        %v4690 = vsel %vm3112, %v4686, 0.0
        %4691 = vadd.xlane.f32.xlu0 %v4690
        %v4692 = vpop.xlane.xlu0 %4691
        %v4693 = vrcp.pop %v4689
        %v4694 = vmul.f32 %v4684, %v4693
        %v4695 = vrcp.pop %v4692
        %v4696 = vmul.f32 %v4686, %v4695
        %4697 = vrot.lane.b32.xlu0 %v3541, 108
        %v4698 = vpop.permute.xlu0 %4697
        %4699 = vrot.lane.b32.xlu0 %v3546, 108
        %v4700 = vpop.permute.xlu0 %4699
        %4701 = vrot.lane.b32.xlu0 %v3551, 108
        %v4702 = vpop.permute.xlu0 %4701
        %v4707 = vsel %vm3112, %v4694, 0
        %v4710 = vsel %vm3112, %v4696, 0
        %4712 = vmatprep.subr.mxu0 0.0
        %4713 = vmatpush1.msra.mxu0 0.0
        %4714 = vmatprep.subr.mxu0 0.0
        %4715 = vmatpush1.msra.mxu0 0.0
        %4716 = vmatprep.subr.mxu0 0.0
        %4717 = vmatpush1.msra.mxu0 0.0
        %4718 = vmatprep.subr.mxu0 0.0
        %4719 = vmatpush1.msra.mxu0 0.0
        %4720 = vmatprep.subr.mxu0 0.0
        %4721 = vmatpush1.msra.mxu0 0.0
        %4722 = vmatprep.subr.mxu0 0.0
        %4723 = vmatpush1.msra.mxu0 0.0
        %4724 = vmatprep.subr.mxu0 0.0
        %4725 = vmatpush1.msra.mxu0 0.0
        %4726 = vmatprep.subr.mxu0 0.0
        %4727 = vmatpush1.msra.mxu0 0.0
        %4728 = vmatprep.subr.mxu0 0.0
        %4729 = vmatpush1.msra.mxu0 0.0
        %4730 = vmatprep.subr.mxu0 0.0
        %4731 = vmatpush1.msra.mxu0 0.0
        %4732 = vmatprep.subr.mxu0 0.0
        %4733 = vmatpush1.msra.mxu0 0.0
        %4734 = vmatprep.subr.mxu0 0.0
        %4735 = vmatpush1.msra.mxu0 0.0
        %4736 = vmatprep.subr.mxu0 0.0
        %4737 = vmatpush1.msra.mxu0 0.0
        %4738 = vmatprep.subr.mxu0 0.0
        %4739 = vmatpush1.msra.mxu0 %v4702
        %4740 = vmatprep.subr.mxu0 0.0
        %4741 = vmatpush1.msra.mxu0 %v4700
        %4742 = vmatprep.subr.mxu0 0.0
        %4743 = vmatpush1.msra.mxu0 %v4698
        %4744 = vmatprep.subr.mxu0 0.0
        %4745 = vmatpush2.msra.mxu0 0.0
        %4746 = vmatprep.subr.mxu0 0.0
        %4747 = vmatpush2.msra.mxu0 0.0
        %4748 = vmatprep.subr.mxu0 0.0
        %4749 = vmatpush2.msra.mxu0 0.0
        %4750 = vmatprep.subr.mxu0 0.0
        %4751 = vmatpush2.msra.mxu0 0.0
        %4752 = vmatprep.subr.mxu0 0.0
        %4753 = vmatpush2.msra.mxu0 0.0
        %4754 = vmatprep.subr.mxu0 0.0
        %4755 = vmatpush2.msra.mxu0 0.0
        %4756 = vmatprep.subr.mxu0 0.0
        %4757 = vmatpush2.msra.mxu0 0.0
        %4758 = vmatprep.subr.mxu0 0.0
        %4759 = vmatpush2.msra.mxu0 0.0
        %4760 = vmatprep.subr.mxu0 0.0
        %4761 = vmatpush2.msra.mxu0 0.0
        %4762 = vmatprep.subr.mxu0 0.0
        %4763 = vmatpush2.msra.mxu0 0.0
        %4764 = vmatprep.subr.mxu0 0.0
        %4765 = vmatpush2.msra.mxu0 0.0
        %4766 = vmatprep.subr.mxu0 0.0
        %4767 = vmatpush2.msra.mxu0 0.0
        %4768 = vmatprep.subr.mxu0 0.0
        %4769 = vmatpush2.msra.mxu0 0.0
        %4770 = vmatprep.subr.mxu0 0.0
        %4771 = vmatpush2.msra.mxu0 0.0
        %4772 = vmatprep.subr.mxu0 0.0
        %4773 = vmatpush2.msra.mxu0 0.0
        %4774 = vmatprep.subr.mxu0 0.0
        %4775 = vmatpush2.msra.mxu0 0.0
        %4776 = vmatprep.mubr.f32.mxu0 0.0
        %4777 = vmatmul.mubr.f32.gmra.mxu0 %v4707
        %v4778 = vpop.f32.mrf.mxu0
        %v4779 = vadd.f32 0.0, %v4778
        %v4780 = vpop.f32.mrf.mxu0
        %4781 = vmatprep.mubr.f32.mxu0 0.0
        %4782 = vmatmul.mubr.f32.gmra.mxu0 %v4710
        %v4783 = vpop.f32.mrf.mxu0
        %v4784 = vadd.f32 0.0, %v4783
        %v4785 = vpop.f32.mrf.mxu0
        %4786 = vdwg.mxu0
        %4787 = vrot.lane.b32.xlu0 %v3554, 104
        %v4788 = vpop.permute.xlu0 %4787
        %4789 = vrot.lane.b32.xlu0 %v3555, 104
        %v4790 = vpop.permute.xlu0 %4789
        %4791 = vrot.lane.b32.xlu0 %v3446, 104
        %v4792 = vpop.permute.xlu0 %4791
        %4793 = vrot.lane.b32.xlu0 %v3451, 104
        %v4794 = vpop.permute.xlu0 %4793
        %4795 = vrot.lane.b32.xlu0 %v3456, 104
        %v4796 = vpop.permute.xlu0 %4795
        %v4797 = vsel %vm1449, %v4788, 0
        %v4799 = vsel %vm1449, %v4790, 0
        %v4801 = vsel %vm1449, %v4792, 0
        %v4803 = vsel %vm1449, %v4794, 0
        %v4805 = vsel %vm1449, %v4796, 0
        %4807 = vmatprep.subr.mxu0 0.0
        %4808 = vmatpush1.xpose.msra.mxu0 0.0
        %4809 = vmatprep.subr.mxu0 0.0
        %4810 = vmatpush1.xpose.msra.mxu0 0.0
        %4811 = vmatprep.subr.mxu0 0.0
        %4812 = vmatpush1.xpose.msra.mxu0 0.0
        %4813 = vmatprep.subr.mxu0 0.0
        %4814 = vmatpush1.xpose.msra.mxu0 0.0
        %4815 = vmatprep.subr.mxu0 0.0
        %4816 = vmatpush1.xpose.msra.mxu0 0.0
        %4817 = vmatprep.subr.mxu0 0.0
        %4818 = vmatpush1.xpose.msra.mxu0 0.0
        %4819 = vmatprep.subr.mxu0 0.0
        %4820 = vmatpush1.xpose.msra.mxu0 0.0
        %4821 = vmatprep.subr.mxu0 0.0
        %4822 = vmatpush1.xpose.msra.mxu0 0.0
        %4823 = vmatprep.subr.mxu0 0.0
        %4824 = vmatpush1.xpose.msra.mxu0 0.0
        %4825 = vmatprep.subr.mxu0 0.0
        %4826 = vmatpush1.xpose.msra.mxu0 0.0
        %4827 = vmatprep.subr.mxu0 0.0
        %4828 = vmatpush1.xpose.msra.mxu0 0.0
        %4829 = vmatprep.subr.mxu0 0.0
        %4830 = vmatpush1.xpose.msra.mxu0 0.0
        %4831 = vmatprep.subr.mxu0 0.0
        %4832 = vmatpush1.xpose.msra.mxu0 0.0
        %4833 = vmatprep.subr.mxu0 0.0
        %4834 = vmatpush1.xpose.msra.mxu0 %v4805
        %4835 = vmatprep.subr.mxu0 0.0
        %4836 = vmatpush1.xpose.msra.mxu0 %v4803
        %4837 = vmatprep.subr.mxu0 0.0
        %4838 = vmatpush1.xpose.msra.mxu0 %v4801
        %4839 = vmatprep.subr.mxu0 0.0
        %4840 = vmatpush2.xpose.msra.mxu0 0.0
        %4841 = vmatprep.subr.mxu0 0.0
        %4842 = vmatpush2.xpose.msra.mxu0 0.0
        %4843 = vmatprep.subr.mxu0 0.0
        %4844 = vmatpush2.xpose.msra.mxu0 0.0
        %4845 = vmatprep.subr.mxu0 0.0
        %4846 = vmatpush2.xpose.msra.mxu0 0.0
        %4847 = vmatprep.subr.mxu0 0.0
        %4848 = vmatpush2.xpose.msra.mxu0 0.0
        %4849 = vmatprep.subr.mxu0 0.0
        %4850 = vmatpush2.xpose.msra.mxu0 0.0
        %4851 = vmatprep.subr.mxu0 0.0
        %4852 = vmatpush2.xpose.msra.mxu0 0.0
        %4853 = vmatprep.subr.mxu0 0.0
        %4854 = vmatpush2.xpose.msra.mxu0 0.0
        %4855 = vmatprep.subr.mxu0 0.0
        %4856 = vmatpush2.xpose.msra.mxu0 0.0
        %4857 = vmatprep.subr.mxu0 0.0
        %4858 = vmatpush2.xpose.msra.mxu0 0.0
        %4859 = vmatprep.subr.mxu0 0.0
        %4860 = vmatpush2.xpose.msra.mxu0 0.0
        %4861 = vmatprep.subr.mxu0 0.0
        %4862 = vmatpush2.xpose.msra.mxu0 0.0
        %4863 = vmatprep.subr.mxu0 0.0
        %4864 = vmatpush2.xpose.msra.mxu0 0.0
        %4865 = vmatprep.subr.mxu0 0.0
        %4866 = vmatpush2.xpose.msra.mxu0 0.0
        %4867 = vmatprep.subr.mxu0 0.0
        %4868 = vmatpush2.xpose.msra.mxu0 0.0
        %4869 = vmatprep.subr.mxu0 0.0
        %4870 = vmatpush2.xpose.msra.mxu0 0.0
        %4871 = vmatprep.mubr.f32.mxu0 0.0
        %4872 = vmatmul.mubr.f32.gmra.mxu0 %v4797
        %v4873 = vpop.f32.mrf.mxu0
        %v4874 = vadd.f32 0.0, %v4873
        %v4875 = vpop.f32.mrf.mxu0
        %4876 = vmatprep.mubr.f32.mxu0 0.0
        %4877 = vmatmul.mubr.f32.gmra.mxu0 %v4799
        %v4878 = vpop.f32.mrf.mxu0
        %v4879 = vadd.f32 0.0, %v4878
        %v4880 = vpop.f32.mrf.mxu0
        %4881 = vdwg.mxu0
        %v4882 = vsel %vm3112, %v4874, -inf
        %4883 = vmax.xlane.f32.xlu0 %v4882
        %v4884 = vpop.xlane.xlu0 %4883
        %v4885 = vsel %vm3112, %v4879, -inf
        %4886 = vmax.xlane.f32.xlu0 %v4885
        %v4887 = vpop.xlane.xlu0 %4886
        %v4888 = vsub.f32 %v4874, %v4884
        %v4889 = vsub.f32 %v4879, %v4887
        %v4890 = vmul.f32 %v4888, 1.442695
        %v4891 = vpow.pop %v4890
        %v4892 = vmul.f32 %v4889, 1.442695
        %v4893 = vpow.pop %v4892
        %v4894 = vsel %vm3112, %v4891, 0.0
        %4895 = vadd.xlane.f32.xlu0 %v4894
        %v4896 = vpop.xlane.xlu0 %4895
        %v4897 = vsel %vm3112, %v4893, 0.0
        %4898 = vadd.xlane.f32.xlu0 %v4897
        %v4899 = vpop.xlane.xlu0 %4898
        %v4900 = vrcp.pop %v4896
        %v4901 = vmul.f32 %v4891, %v4900
        %v4902 = vrcp.pop %v4899
        %v4903 = vmul.f32 %v4893, %v4902
        %4904 = vrot.lane.b32.xlu0 %v3541, 104
        %v4905 = vpop.permute.xlu0 %4904
        %4906 = vrot.lane.b32.xlu0 %v3546, 104
        %v4907 = vpop.permute.xlu0 %4906
        %4908 = vrot.lane.b32.xlu0 %v3551, 104
        %v4909 = vpop.permute.xlu0 %4908
        %v4914 = vsel %vm3112, %v4901, 0
        %v4917 = vsel %vm3112, %v4903, 0
        %4919 = vmatprep.subr.mxu0 0.0
        %4920 = vmatpush1.msra.mxu0 0.0
        %4921 = vmatprep.subr.mxu0 0.0
        %4922 = vmatpush1.msra.mxu0 0.0
        %4923 = vmatprep.subr.mxu0 0.0
        %4924 = vmatpush1.msra.mxu0 0.0
        %4925 = vmatprep.subr.mxu0 0.0
        %4926 = vmatpush1.msra.mxu0 0.0
        %4927 = vmatprep.subr.mxu0 0.0
        %4928 = vmatpush1.msra.mxu0 0.0
        %4929 = vmatprep.subr.mxu0 0.0
        %4930 = vmatpush1.msra.mxu0 0.0
        %4931 = vmatprep.subr.mxu0 0.0
        %4932 = vmatpush1.msra.mxu0 0.0
        %4933 = vmatprep.subr.mxu0 0.0
        %4934 = vmatpush1.msra.mxu0 0.0
        %4935 = vmatprep.subr.mxu0 0.0
        %4936 = vmatpush1.msra.mxu0 0.0
        %4937 = vmatprep.subr.mxu0 0.0
        %4938 = vmatpush1.msra.mxu0 0.0
        %4939 = vmatprep.subr.mxu0 0.0
        %4940 = vmatpush1.msra.mxu0 0.0
        %4941 = vmatprep.subr.mxu0 0.0
        %4942 = vmatpush1.msra.mxu0 0.0
        %4943 = vmatprep.subr.mxu0 0.0
        %4944 = vmatpush1.msra.mxu0 0.0
        %4945 = vmatprep.subr.mxu0 0.0
        %4946 = vmatpush1.msra.mxu0 %v4909
        %4947 = vmatprep.subr.mxu0 0.0
        %4948 = vmatpush1.msra.mxu0 %v4907
        %4949 = vmatprep.subr.mxu0 0.0
        %4950 = vmatpush1.msra.mxu0 %v4905
        %4951 = vmatprep.subr.mxu0 0.0
        %4952 = vmatpush2.msra.mxu0 0.0
        %4953 = vmatprep.subr.mxu0 0.0
        %4954 = vmatpush2.msra.mxu0 0.0
        %4955 = vmatprep.subr.mxu0 0.0
        %4956 = vmatpush2.msra.mxu0 0.0
        %4957 = vmatprep.subr.mxu0 0.0
        %4958 = vmatpush2.msra.mxu0 0.0
        %4959 = vmatprep.subr.mxu0 0.0
        %4960 = vmatpush2.msra.mxu0 0.0
        %4961 = vmatprep.subr.mxu0 0.0
        %4962 = vmatpush2.msra.mxu0 0.0
        %4963 = vmatprep.subr.mxu0 0.0
        %4964 = vmatpush2.msra.mxu0 0.0
        %4965 = vmatprep.subr.mxu0 0.0
        %4966 = vmatpush2.msra.mxu0 0.0
        %4967 = vmatprep.subr.mxu0 0.0
        %4968 = vmatpush2.msra.mxu0 0.0
        %4969 = vmatprep.subr.mxu0 0.0
        %4970 = vmatpush2.msra.mxu0 0.0
        %4971 = vmatprep.subr.mxu0 0.0
        %4972 = vmatpush2.msra.mxu0 0.0
        %4973 = vmatprep.subr.mxu0 0.0
        %4974 = vmatpush2.msra.mxu0 0.0
        %4975 = vmatprep.subr.mxu0 0.0
        %4976 = vmatpush2.msra.mxu0 0.0
        %4977 = vmatprep.subr.mxu0 0.0
        %4978 = vmatpush2.msra.mxu0 0.0
        %4979 = vmatprep.subr.mxu0 0.0
        %4980 = vmatpush2.msra.mxu0 0.0
        %4981 = vmatprep.subr.mxu0 0.0
        %4982 = vmatpush2.msra.mxu0 0.0
        %4983 = vmatprep.mubr.f32.mxu0 0.0
        %4984 = vmatmul.mubr.f32.gmra.mxu0 %v4914
        %v4985 = vpop.f32.mrf.mxu0
        %v4986 = vadd.f32 0.0, %v4985
        %v4987 = vpop.f32.mrf.mxu0
        %4988 = vmatprep.mubr.f32.mxu0 0.0
        %4989 = vmatmul.mubr.f32.gmra.mxu0 %v4917
        %v4990 = vpop.f32.mrf.mxu0
        %v4991 = vadd.f32 0.0, %v4990
        %v4992 = vpop.f32.mrf.mxu0
        %4993 = vdwg.mxu0
        %4994 = vrot.lane.b32.xlu0 %v3554, 100
        %v4995 = vpop.permute.xlu0 %4994
        %4996 = vrot.lane.b32.xlu0 %v3555, 100
        %v4997 = vpop.permute.xlu0 %4996
        %4998 = vrot.lane.b32.xlu0 %v3446, 100
        %v4999 = vpop.permute.xlu0 %4998
        %5000 = vrot.lane.b32.xlu0 %v3451, 100
        %v5001 = vpop.permute.xlu0 %5000
        %5002 = vrot.lane.b32.xlu0 %v3456, 100
        %v5003 = vpop.permute.xlu0 %5002
        %v5004 = vsel %vm1449, %v4995, 0
        %v5006 = vsel %vm1449, %v4997, 0
        %v5008 = vsel %vm1449, %v4999, 0
        %v5010 = vsel %vm1449, %v5001, 0
        %v5012 = vsel %vm1449, %v5003, 0
        %5014 = vmatprep.subr.mxu0 0.0
        %5015 = vmatpush1.xpose.msra.mxu0 0.0
        %5016 = vmatprep.subr.mxu0 0.0
        %5017 = vmatpush1.xpose.msra.mxu0 0.0
        %5018 = vmatprep.subr.mxu0 0.0
        %5019 = vmatpush1.xpose.msra.mxu0 0.0
        %5020 = vmatprep.subr.mxu0 0.0
        %5021 = vmatpush1.xpose.msra.mxu0 0.0
        %5022 = vmatprep.subr.mxu0 0.0
        %5023 = vmatpush1.xpose.msra.mxu0 0.0
        %5024 = vmatprep.subr.mxu0 0.0
        %5025 = vmatpush1.xpose.msra.mxu0 0.0
        %5026 = vmatprep.subr.mxu0 0.0
        %5027 = vmatpush1.xpose.msra.mxu0 0.0
        %5028 = vmatprep.subr.mxu0 0.0
        %5029 = vmatpush1.xpose.msra.mxu0 0.0
        %5030 = vmatprep.subr.mxu0 0.0
        %5031 = vmatpush1.xpose.msra.mxu0 0.0
        %5032 = vmatprep.subr.mxu0 0.0
        %5033 = vmatpush1.xpose.msra.mxu0 0.0
        %5034 = vmatprep.subr.mxu0 0.0
        %5035 = vmatpush1.xpose.msra.mxu0 0.0
        %5036 = vmatprep.subr.mxu0 0.0
        %5037 = vmatpush1.xpose.msra.mxu0 0.0
        %5038 = vmatprep.subr.mxu0 0.0
        %5039 = vmatpush1.xpose.msra.mxu0 0.0
        %5040 = vmatprep.subr.mxu0 0.0
        %5041 = vmatpush1.xpose.msra.mxu0 %v5012
        %5042 = vmatprep.subr.mxu0 0.0
        %5043 = vmatpush1.xpose.msra.mxu0 %v5010
        %5044 = vmatprep.subr.mxu0 0.0
        %5045 = vmatpush1.xpose.msra.mxu0 %v5008
        %5046 = vmatprep.subr.mxu0 0.0
        %5047 = vmatpush2.xpose.msra.mxu0 0.0
        %5048 = vmatprep.subr.mxu0 0.0
        %5049 = vmatpush2.xpose.msra.mxu0 0.0
        %5050 = vmatprep.subr.mxu0 0.0
        %5051 = vmatpush2.xpose.msra.mxu0 0.0
        %5052 = vmatprep.subr.mxu0 0.0
        %5053 = vmatpush2.xpose.msra.mxu0 0.0
        %5054 = vmatprep.subr.mxu0 0.0
        %5055 = vmatpush2.xpose.msra.mxu0 0.0
        %5056 = vmatprep.subr.mxu0 0.0
        %5057 = vmatpush2.xpose.msra.mxu0 0.0
        %5058 = vmatprep.subr.mxu0 0.0
        %5059 = vmatpush2.xpose.msra.mxu0 0.0
        %5060 = vmatprep.subr.mxu0 0.0
        %5061 = vmatpush2.xpose.msra.mxu0 0.0
        %5062 = vmatprep.subr.mxu0 0.0
        %5063 = vmatpush2.xpose.msra.mxu0 0.0
        %5064 = vmatprep.subr.mxu0 0.0
        %5065 = vmatpush2.xpose.msra.mxu0 0.0
        %5066 = vmatprep.subr.mxu0 0.0
        %5067 = vmatpush2.xpose.msra.mxu0 0.0
        %5068 = vmatprep.subr.mxu0 0.0
        %5069 = vmatpush2.xpose.msra.mxu0 0.0
        %5070 = vmatprep.subr.mxu0 0.0
        %5071 = vmatpush2.xpose.msra.mxu0 0.0
        %5072 = vmatprep.subr.mxu0 0.0
        %5073 = vmatpush2.xpose.msra.mxu0 0.0
        %5074 = vmatprep.subr.mxu0 0.0
        %5075 = vmatpush2.xpose.msra.mxu0 0.0
        %5076 = vmatprep.subr.mxu0 0.0
        %5077 = vmatpush2.xpose.msra.mxu0 0.0
        %5078 = vmatprep.mubr.f32.mxu0 0.0
        %5079 = vmatmul.mubr.f32.gmra.mxu0 %v5004
        %v5080 = vpop.f32.mrf.mxu0
        %v5081 = vadd.f32 0.0, %v5080
        %v5082 = vpop.f32.mrf.mxu0
        %5083 = vmatprep.mubr.f32.mxu0 0.0
        %5084 = vmatmul.mubr.f32.gmra.mxu0 %v5006
        %v5085 = vpop.f32.mrf.mxu0
        %v5086 = vadd.f32 0.0, %v5085
        %v5087 = vpop.f32.mrf.mxu0
        %5088 = vdwg.mxu0
        %v5089 = vsel %vm3112, %v5081, -inf
        %5090 = vmax.xlane.f32.xlu0 %v5089
        %v5091 = vpop.xlane.xlu0 %5090
        %v5092 = vsel %vm3112, %v5086, -inf
        %5093 = vmax.xlane.f32.xlu0 %v5092
        %v5094 = vpop.xlane.xlu0 %5093
        %v5095 = vsub.f32 %v5081, %v5091
        %v5096 = vsub.f32 %v5086, %v5094
        %v5097 = vmul.f32 %v5095, 1.442695
        %v5098 = vpow.pop %v5097
        %v5099 = vmul.f32 %v5096, 1.442695
        %v5100 = vpow.pop %v5099
        %v5101 = vsel %vm3112, %v5098, 0.0
        %5102 = vadd.xlane.f32.xlu0 %v5101
        %v5103 = vpop.xlane.xlu0 %5102
        %v5104 = vsel %vm3112, %v5100, 0.0
        %5105 = vadd.xlane.f32.xlu0 %v5104
        %v5106 = vpop.xlane.xlu0 %5105
        %v5107 = vrcp.pop %v5103
        %v5108 = vmul.f32 %v5098, %v5107
        %v5109 = vrcp.pop %v5106
        %v5110 = vmul.f32 %v5100, %v5109
        %5111 = vrot.lane.b32.xlu0 %v3541, 100
        %v5112 = vpop.permute.xlu0 %5111
        %5113 = vrot.lane.b32.xlu0 %v3546, 100
        %v5114 = vpop.permute.xlu0 %5113
        %5115 = vrot.lane.b32.xlu0 %v3551, 100
        %v5116 = vpop.permute.xlu0 %5115
        %v5121 = vsel %vm3112, %v5108, 0
        %v5124 = vsel %vm3112, %v5110, 0
        %5126 = vmatprep.subr.mxu0 0.0
        %5127 = vmatpush1.msra.mxu0 0.0
        %5128 = vmatprep.subr.mxu0 0.0
        %5129 = vmatpush1.msra.mxu0 0.0
        %5130 = vmatprep.subr.mxu0 0.0
        %5131 = vmatpush1.msra.mxu0 0.0
        %5132 = vmatprep.subr.mxu0 0.0
        %5133 = vmatpush1.msra.mxu0 0.0
        %5134 = vmatprep.subr.mxu0 0.0
        %5135 = vmatpush1.msra.mxu0 0.0
        %5136 = vmatprep.subr.mxu0 0.0
        %5137 = vmatpush1.msra.mxu0 0.0
        %5138 = vmatprep.subr.mxu0 0.0
        %5139 = vmatpush1.msra.mxu0 0.0
        %5140 = vmatprep.subr.mxu0 0.0
        %5141 = vmatpush1.msra.mxu0 0.0
        %5142 = vmatprep.subr.mxu0 0.0
        %5143 = vmatpush1.msra.mxu0 0.0
        %5144 = vmatprep.subr.mxu0 0.0
        %5145 = vmatpush1.msra.mxu0 0.0
        %5146 = vmatprep.subr.mxu0 0.0
        %5147 = vmatpush1.msra.mxu0 0.0
        %5148 = vmatprep.subr.mxu0 0.0
        %5149 = vmatpush1.msra.mxu0 0.0
        %5150 = vmatprep.subr.mxu0 0.0
        %5151 = vmatpush1.msra.mxu0 0.0
        %5152 = vmatprep.subr.mxu0 0.0
        %5153 = vmatpush1.msra.mxu0 %v5116
        %5154 = vmatprep.subr.mxu0 0.0
        %5155 = vmatpush1.msra.mxu0 %v5114
        %5156 = vmatprep.subr.mxu0 0.0
        %5157 = vmatpush1.msra.mxu0 %v5112
        %5158 = vmatprep.subr.mxu0 0.0
        %5159 = vmatpush2.msra.mxu0 0.0
        %5160 = vmatprep.subr.mxu0 0.0
        %5161 = vmatpush2.msra.mxu0 0.0
        %5162 = vmatprep.subr.mxu0 0.0
        %5163 = vmatpush2.msra.mxu0 0.0
        %5164 = vmatprep.subr.mxu0 0.0
        %5165 = vmatpush2.msra.mxu0 0.0
        %5166 = vmatprep.subr.mxu0 0.0
        %5167 = vmatpush2.msra.mxu0 0.0
        %5168 = vmatprep.subr.mxu0 0.0
        %5169 = vmatpush2.msra.mxu0 0.0
        %5170 = vmatprep.subr.mxu0 0.0
        %5171 = vmatpush2.msra.mxu0 0.0
        %5172 = vmatprep.subr.mxu0 0.0
        %5173 = vmatpush2.msra.mxu0 0.0
        %5174 = vmatprep.subr.mxu0 0.0
        %5175 = vmatpush2.msra.mxu0 0.0
        %5176 = vmatprep.subr.mxu0 0.0
        %5177 = vmatpush2.msra.mxu0 0.0
        %5178 = vmatprep.subr.mxu0 0.0
        %5179 = vmatpush2.msra.mxu0 0.0
        %5180 = vmatprep.subr.mxu0 0.0
        %5181 = vmatpush2.msra.mxu0 0.0
        %5182 = vmatprep.subr.mxu0 0.0
        %5183 = vmatpush2.msra.mxu0 0.0
        %5184 = vmatprep.subr.mxu0 0.0
        %5185 = vmatpush2.msra.mxu0 0.0
        %5186 = vmatprep.subr.mxu0 0.0
        %5187 = vmatpush2.msra.mxu0 0.0
        %5188 = vmatprep.subr.mxu0 0.0
        %5189 = vmatpush2.msra.mxu0 0.0
        %5190 = vmatprep.mubr.f32.mxu0 0.0
        %5191 = vmatmul.mubr.f32.gmra.mxu0 %v5121
        %v5192 = vpop.f32.mrf.mxu0
        %v5193 = vadd.f32 0.0, %v5192
        %v5194 = vpop.f32.mrf.mxu0
        %5195 = vmatprep.mubr.f32.mxu0 0.0
        %5196 = vmatmul.mubr.f32.gmra.mxu0 %v5124
        %v5197 = vpop.f32.mrf.mxu0
        %v5198 = vadd.f32 0.0, %v5197
        %v5199 = vpop.f32.mrf.mxu0
        %5200 = vdwg.mxu0
        %5203 = vrot.lane.b32.xlu0 %v3951, 4
        %v5204 = vpop.permute.xlu0 %5203
        %5205 = vrot.lane.b32.xlu0 %v3956, 4
        %v5206 = vpop.permute.xlu0 %5205
        %5211 = vrot.lane.b32.xlu0 %v4158, 8
        %v5212 = vpop.permute.xlu0 %5211
        %5213 = vrot.lane.b32.xlu0 %v4163, 8
        %v5214 = vpop.permute.xlu0 %5213
        %5219 = vrot.lane.b32.xlu0 %v4365, 12
        %v5220 = vpop.permute.xlu0 %5219
        %5221 = vrot.lane.b32.xlu0 %v4370, 12
        %v5222 = vpop.permute.xlu0 %5221
        %5227 = vrot.lane.b32.xlu0 %v4572, 16
        %v5228 = vpop.permute.xlu0 %5227
        %5229 = vrot.lane.b32.xlu0 %v4577, 16
        %v5230 = vpop.permute.xlu0 %5229
        %5235 = vrot.lane.b32.xlu0 %v4779, 20
        %v5236 = vpop.permute.xlu0 %5235
        %5237 = vrot.lane.b32.xlu0 %v4784, 20
        %v5238 = vpop.permute.xlu0 %5237
        %5243 = vrot.lane.b32.xlu0 %v4986, 24
        %v5244 = vpop.permute.xlu0 %5243
        %5245 = vrot.lane.b32.xlu0 %v4991, 24
        %v5246 = vpop.permute.xlu0 %5245
        %5251 = vrot.lane.b32.xlu0 %v5193, 28
        %v5252 = vpop.permute.xlu0 %5251
        %5253 = vrot.lane.b32.xlu0 %v5198, 28
        %v5254 = vpop.permute.xlu0 %5253
        %v5257 = vsel %vm1449, %v3741, %v5204
        %v5258 = vsel %vm1449, %v3746, %v5206
        %v5259 = vsel %vm3101, %v5257, %v5212
        %v5260 = vsel %vm3101, %v5258, %v5214
        %v5261 = vsel %vm3104, %v5259, %v5220
        %v5262 = vsel %vm3104, %v5260, %v5222
        %v5263 = vsel %vm1537, %v5261, %v5228
        %v5264 = vsel %vm1537, %v5262, %v5230
        %v5265 = vsel %vm3109, %v5263, %v5236
        %v5266 = vsel %vm3109, %v5264, %v5238
        %v5267 = vsel %vm3112, %v5265, %v5244
        %v5268 = vsel %vm3112, %v5266, %v5246
        %v5269 = vsel %vm3115, %v5267, %v5252
        %v5270 = vsel %vm3115, %v5268, %v5254
        %v5272 = vlaneseq
        %v5273 = vshrl.u32 %v5272, 7
        %v5274 = vsub.s32 0, %v5273
        %v5275 = vrot.slane %v3276, %v5274
        %v5278 = vsel %vm1197, %v5269, 0
        %v5281 = vsel %vm1197, %v5270, 0
        %5283 = vmatprep.subr.mxu0 0.0
        %5284 = vmatpush1.msra.mxu0 0.0
        %5285 = vmatprep.subr.mxu0 0.0
        %5286 = vmatpush1.msra.mxu0 0.0
        %5287 = vmatprep.subr.mxu0 0.0
        %5288 = vmatpush1.msra.mxu0 0.0
        %5289 = vmatprep.subr.mxu0 0.0
        %5290 = vmatpush1.msra.mxu0 0.0
        %5291 = vmatprep.subr.mxu0 0.0
        %5292 = vmatpush1.msra.mxu0 0.0
        %5293 = vmatprep.subr.mxu0 0.0
        %5294 = vmatpush1.msra.mxu0 0.0
        %5295 = vmatprep.subr.mxu0 0.0
        %5296 = vmatpush1.msra.mxu0 0.0
        %5297 = vmatprep.subr.mxu0 0.0
        %5298 = vmatpush1.msra.mxu0 0.0
        %5299 = vmatprep.subr.mxu0 0.0
        %5300 = vmatpush1.msra.mxu0 0.0
        %5301 = vmatprep.subr.mxu0 0.0
        %5302 = vmatpush1.msra.mxu0 0.0
        %5303 = vmatprep.subr.mxu0 0.0
        %5304 = vmatpush1.msra.mxu0 0.0
        %5305 = vmatprep.subr.mxu0 0.0
        %5306 = vmatpush1.msra.mxu0 0.0
        %5307 = vmatprep.subr.mxu0 0.0
        %5308 = vmatpush1.msra.mxu0 %v3275
        %5309 = vmatprep.subr.mxu0 0.0
        %5310 = vmatpush1.msra.mxu0 %v3274
        %5311 = vmatprep.subr.mxu0 0.0
        %5312 = vmatpush1.msra.mxu0 %v3273
        %5313 = vmatprep.subr.mxu0 0.0
        %5314 = vmatpush1.msra.mxu0 %v3272
        %5315 = vmatprep.subr.mxu0 0.0
        %5316 = vmatpush2.msra.mxu0 0.0
        %5317 = vmatprep.subr.mxu0 0.0
        %5318 = vmatpush2.msra.mxu0 0.0
        %5319 = vmatprep.subr.mxu0 0.0
        %5320 = vmatpush2.msra.mxu0 0.0
        %5321 = vmatprep.subr.mxu0 0.0
        %5322 = vmatpush2.msra.mxu0 0.0
        %5323 = vmatprep.subr.mxu0 0.0
        %5324 = vmatpush2.msra.mxu0 0.0
        %5325 = vmatprep.subr.mxu0 0.0
        %5326 = vmatpush2.msra.mxu0 0.0
        %5327 = vmatprep.subr.mxu0 0.0
        %5328 = vmatpush2.msra.mxu0 0.0
        %5329 = vmatprep.subr.mxu0 0.0
        %5330 = vmatpush2.msra.mxu0 0.0
        %5331 = vmatprep.subr.mxu0 0.0
        %5332 = vmatpush2.msra.mxu0 0.0
        %5333 = vmatprep.subr.mxu0 0.0
        %5334 = vmatpush2.msra.mxu0 0.0
        %5335 = vmatprep.subr.mxu0 0.0
        %5336 = vmatpush2.msra.mxu0 0.0
        %5337 = vmatprep.subr.mxu0 0.0
        %5338 = vmatpush2.msra.mxu0 0.0
        %5339 = vmatprep.subr.mxu0 0.0
        %5340 = vmatpush2.msra.mxu0 0.0
        %5341 = vmatprep.subr.mxu0 0.0
        %5342 = vmatpush2.msra.mxu0 0.0
        %5343 = vmatprep.subr.mxu0 0.0
        %5344 = vmatpush2.msra.mxu0 0.0
        %5345 = vmatprep.subr.mxu0 0.0
        %5346 = vmatpush2.msra.mxu0 0.0
        %5347 = vmatprep.mubr.f32.mxu0 0.0
        %5348 = vmatmul.mubr.f32.gmra.mxu0 %v5278
        %v5349 = vpop.f32.mrf.mxu0
        %v5350 = vadd.f32 %v5275, %v5349
        %v5351 = vpop.f32.mrf.mxu0
        %5352 = vmatprep.mubr.f32.mxu0 0.0
        %5353 = vmatmul.mubr.f32.gmra.mxu0 %v5281
        %v5354 = vpop.f32.mrf.mxu0
        %v5355 = vadd.f32 %v5275, %v5354
        %v5356 = vpop.f32.mrf.mxu0
        %5357 = vdwg.mxu0
        %v5358 = vadd.f32 %v3250, %v5350
        %v5359 = vadd.f32 %v3251, %v5355
        %v5360 = vld [vmem:[%s45] sm:$0x1]
        %v5361 = vld [vmem:[%s47] sm:$0x1]
        %v5362 = vsel %vm1197, %v5358, 0.0
        %5363 = vadd.xlane.f32.xlu0 %v5362
        %v5364 = vpop.xlane.xlu0 %5363
        %v5365 = vsel %vm1197, %v5359, 0.0
        %5366 = vadd.xlane.f32.xlu0 %v5365
        %v5367 = vpop.xlane.xlu0 %5366
        %v5368 = vmul.f32 %v5364, %v3215
        %v5369 = vmul.f32 %v5367, %v3215
        %v5370 = vsub.f32 %v5358, %v5368
        %v5371 = vsub.f32 %v5359, %v5369
        %v5372 = vmul.f32 %v5370, %v5370
        %v5373 = vmul.f32 %v5371, %v5371
        %v5374 = vsel %vm1197, %v5372, 0.0
        %5375 = vadd.xlane.f32.xlu0 %v5374
        %v5376 = vpop.xlane.xlu0 %5375
        %v5377 = vsel %vm1197, %v5373, 0.0
        %5378 = vadd.xlane.f32.xlu0 %v5377
        %v5379 = vpop.xlane.xlu0 %5378
        %v5380 = vmul.f32 %v5376, %v3215
        %v5381 = vmul.f32 %v5379, %v3215
        %v5382 = vadd.f32 %v5380, 1e-05
        %v5383 = vadd.f32 %v5381, 1e-05
        %v5384 = vrsqrt.pop %v5382
        %v5385 = vrsqrt.pop %v5383
        %v5386 = vmul.f32 %v5370, %v5384
        %v5387 = vmul.f32 %v5371, %v5385
        %v5389 = vlaneseq
        %v5390 = vshrl.u32 %v5389, 7
        %v5391 = vsub.s32 0, %v5390
        %v5392 = vrot.slane %v5360, %v5391
        %v5394 = vmul.f32 %v5386, %v5392
        %v5395 = vmul.f32 %v5387, %v5392
        %v5397 = vlaneseq
        %v5398 = vshrl.u32 %v5397, 7
        %v5399 = vsub.s32 0, %v5398
        %v5400 = vrot.slane %v5361, %v5399
        %v5402 = vadd.f32 %v5394, %v5400
        %v5403 = vadd.f32 %v5395, %v5400
        %v5404 = vld [vmem:[#allocation19] sm:$0xff]
        %v5405 = vld [vmem:[#allocation19 + $0x8] sm:$0xff]
        %v5406 = vld [vmem:[#allocation19 + $0x10] sm:$0xff]
        %v5407 = vld [vmem:[#allocation19 + $0x18] sm:$0xff]
        %v5408 = vld [vmem:[%s51] sm:$0x1]
        %v5410 = vlaneseq
        %v5411 = vshrl.u32 %v5410, 7
        %v5412 = vsub.s32 0, %v5411
        %v5413 = vrot.slane %v5408, %v5412
        %v5416 = vsel %vm1197, %v5402, 0
        %v5419 = vsel %vm1197, %v5403, 0
        %5421 = vmatprep.subr.mxu0 0.0
        %5422 = vmatpush1.msra.mxu0 0.0
        %5423 = vmatprep.subr.mxu0 0.0
        %5424 = vmatpush1.msra.mxu0 0.0
        %5425 = vmatprep.subr.mxu0 0.0
        %5426 = vmatpush1.msra.mxu0 0.0
        %5427 = vmatprep.subr.mxu0 0.0
        %5428 = vmatpush1.msra.mxu0 0.0
        %5429 = vmatprep.subr.mxu0 0.0
        %5430 = vmatpush1.msra.mxu0 0.0
        %5431 = vmatprep.subr.mxu0 0.0
        %5432 = vmatpush1.msra.mxu0 0.0
        %5433 = vmatprep.subr.mxu0 0.0
        %5434 = vmatpush1.msra.mxu0 0.0
        %5435 = vmatprep.subr.mxu0 0.0
        %5436 = vmatpush1.msra.mxu0 0.0
        %5437 = vmatprep.subr.mxu0 0.0
        %5438 = vmatpush1.msra.mxu0 0.0
        %5439 = vmatprep.subr.mxu0 0.0
        %5440 = vmatpush1.msra.mxu0 0.0
        %5441 = vmatprep.subr.mxu0 0.0
        %5442 = vmatpush1.msra.mxu0 0.0
        %5443 = vmatprep.subr.mxu0 0.0
        %5444 = vmatpush1.msra.mxu0 0.0
        %5445 = vmatprep.subr.mxu0 0.0
        %5446 = vmatpush1.msra.mxu0 %v5407
        %5447 = vmatprep.subr.mxu0 0.0
        %5448 = vmatpush1.msra.mxu0 %v5406
        %5449 = vmatprep.subr.mxu0 0.0
        %5450 = vmatpush1.msra.mxu0 %v5405
        %5451 = vmatprep.subr.mxu0 0.0
        %5452 = vmatpush1.msra.mxu0 %v5404
        %5453 = vmatprep.subr.mxu0 0.0
        %5454 = vmatpush2.msra.mxu0 0.0
        %5455 = vmatprep.subr.mxu0 0.0
        %5456 = vmatpush2.msra.mxu0 0.0
        %5457 = vmatprep.subr.mxu0 0.0
        %5458 = vmatpush2.msra.mxu0 0.0
        %5459 = vmatprep.subr.mxu0 0.0
        %5460 = vmatpush2.msra.mxu0 0.0
        %5461 = vmatprep.subr.mxu0 0.0
        %5462 = vmatpush2.msra.mxu0 0.0
        %5463 = vmatprep.subr.mxu0 0.0
        %5464 = vmatpush2.msra.mxu0 0.0
        %5465 = vmatprep.subr.mxu0 0.0
        %5466 = vmatpush2.msra.mxu0 0.0
        %5467 = vmatprep.subr.mxu0 0.0
        %5468 = vmatpush2.msra.mxu0 0.0
        %5469 = vmatprep.subr.mxu0 0.0
        %5470 = vmatpush2.msra.mxu0 0.0
        %5471 = vmatprep.subr.mxu0 0.0
        %5472 = vmatpush2.msra.mxu0 0.0
        %5473 = vmatprep.subr.mxu0 0.0
        %5474 = vmatpush2.msra.mxu0 0.0
        %5475 = vmatprep.subr.mxu0 0.0
        %5476 = vmatpush2.msra.mxu0 0.0
        %5477 = vmatprep.subr.mxu0 0.0
        %5478 = vmatpush2.msra.mxu0 0.0
        %5479 = vmatprep.subr.mxu0 0.0
        %5480 = vmatpush2.msra.mxu0 0.0
        %5481 = vmatprep.subr.mxu0 0.0
        %5482 = vmatpush2.msra.mxu0 0.0
        %5483 = vmatprep.subr.mxu0 0.0
        %5484 = vmatpush2.msra.mxu0 0.0
        %5485 = vmatprep.mubr.f32.mxu0 0.0
        %5486 = vmatmul.mubr.f32.gmra.mxu0 %v5416
        %v5487 = vpop.f32.mrf.mxu0
        %v5488 = vadd.f32 %v5413, %v5487
        %v5489 = vpop.f32.mrf.mxu0
        %5490 = vmatprep.mubr.f32.mxu0 0.0
        %5491 = vmatmul.mubr.f32.gmra.mxu0 %v5419
        %v5492 = vpop.f32.mrf.mxu0
        %v5493 = vadd.f32 %v5413, %v5492
        %v5494 = vpop.f32.mrf.mxu0
        %5495 = vdwg.mxu0
        %v5496 = vmax.f32 %v5488, 0.0
        %v5497 = vmax.f32 %v5493, 0.0
        %v5498 = vld [vmem:[%s53] sm:$0xff]
        %v5499 = vld [vmem:[%s53 + $0x8] sm:$0xff]
        %v5500 = vld [vmem:[%s53 + $0x10] sm:$0xff]
        %v5501 = vld [vmem:[%s53 + $0x18] sm:$0xff]
        %v5502 = vld [vmem:[%s53 + $0x20] sm:$0xff]
        %v5503 = vld [vmem:[%s53 + $0x28] sm:$0xff]
        %v5504 = vld [vmem:[%s53 + $0x30] sm:$0xff]
        %v5505 = vld [vmem:[%s53 + $0x38] sm:$0xff]
        %v5506 = vld [vmem:[%s55] sm:$0x1]
        %v5508 = vlaneseq
        %v5509 = vshrl.u32 %v5508, 7
        %v5510 = vsub.s32 0, %v5509
        %v5511 = vrot.slane %v5506, %v5510
        %vm5513 = vcmask 523264
        %v5515 = vsel %vm5513, %v5496, 0
        %v5518 = vsel %vm5513, %v5497, 0
        %5520 = vmatprep.subr.mxu0 0.0
        %5521 = vmatpush1.msra.mxu0 0.0
        %5522 = vmatprep.subr.mxu0 0.0
        %5523 = vmatpush1.msra.mxu0 0.0
        %5524 = vmatprep.subr.mxu0 0.0
        %5525 = vmatpush1.msra.mxu0 0.0
        %5526 = vmatprep.subr.mxu0 0.0
        %5527 = vmatpush1.msra.mxu0 0.0
        %5528 = vmatprep.subr.mxu0 0.0
        %5529 = vmatpush1.msra.mxu0 0.0
        %5530 = vmatprep.subr.mxu0 0.0
        %5531 = vmatpush1.msra.mxu0 0.0
        %5532 = vmatprep.subr.mxu0 0.0
        %5533 = vmatpush1.msra.mxu0 0.0
        %5534 = vmatprep.subr.mxu0 0.0
        %5535 = vmatpush1.msra.mxu0 0.0
        %5536 = vmatprep.subr.mxu0 0.0
        %5537 = vmatpush1.msra.mxu0 %v5505
        %5538 = vmatprep.subr.mxu0 0.0
        %5539 = vmatpush1.msra.mxu0 %v5504
        %5540 = vmatprep.subr.mxu0 0.0
        %5541 = vmatpush1.msra.mxu0 %v5503
        %5542 = vmatprep.subr.mxu0 0.0
        %5543 = vmatpush1.msra.mxu0 %v5502
        %5544 = vmatprep.subr.mxu0 0.0
        %5545 = vmatpush1.msra.mxu0 %v5501
        %5546 = vmatprep.subr.mxu0 0.0
        %5547 = vmatpush1.msra.mxu0 %v5500
        %5548 = vmatprep.subr.mxu0 0.0
        %5549 = vmatpush1.msra.mxu0 %v5499
        %5550 = vmatprep.subr.mxu0 0.0
        %5551 = vmatpush1.msra.mxu0 %v5498
        %5552 = vmatprep.subr.mxu0 0.0
        %5553 = vmatpush2.msra.mxu0 0.0
        %5554 = vmatprep.subr.mxu0 0.0
        %5555 = vmatpush2.msra.mxu0 0.0
        %5556 = vmatprep.subr.mxu0 0.0
        %5557 = vmatpush2.msra.mxu0 0.0
        %5558 = vmatprep.subr.mxu0 0.0
        %5559 = vmatpush2.msra.mxu0 0.0
        %5560 = vmatprep.subr.mxu0 0.0
        %5561 = vmatpush2.msra.mxu0 0.0
        %5562 = vmatprep.subr.mxu0 0.0
        %5563 = vmatpush2.msra.mxu0 0.0
        %5564 = vmatprep.subr.mxu0 0.0
        %5565 = vmatpush2.msra.mxu0 0.0
        %5566 = vmatprep.subr.mxu0 0.0
        %5567 = vmatpush2.msra.mxu0 0.0
        %5568 = vmatprep.subr.mxu0 0.0
        %5569 = vmatpush2.msra.mxu0 0.0
        %5570 = vmatprep.subr.mxu0 0.0
        %5571 = vmatpush2.msra.mxu0 0.0
        %5572 = vmatprep.subr.mxu0 0.0
        %5573 = vmatpush2.msra.mxu0 0.0
        %5574 = vmatprep.subr.mxu0 0.0
        %5575 = vmatpush2.msra.mxu0 0.0
        %5576 = vmatprep.subr.mxu0 0.0
        %5577 = vmatpush2.msra.mxu0 0.0
        %5578 = vmatprep.subr.mxu0 0.0
        %5579 = vmatpush2.msra.mxu0 0.0
        %5580 = vmatprep.subr.mxu0 0.0
        %5581 = vmatpush2.msra.mxu0 0.0
        %5582 = vmatprep.subr.mxu0 0.0
        %5583 = vmatpush2.msra.mxu0 0.0
        %5584 = vmatprep.mubr.f32.mxu0 0.0
        %5585 = vmatmul.mubr.f32.gmra.mxu0 %v5515
        %v5586 = vpop.f32.mrf.mxu0
        %v5587 = vadd.f32 %v5511, %v5586
        %v5588 = vpop.f32.mrf.mxu0
        %5589 = vmatprep.mubr.f32.mxu0 0.0
        %5590 = vmatmul.mubr.f32.gmra.mxu0 %v5518
        %v5591 = vpop.f32.mrf.mxu0
        %v5592 = vadd.f32 %v5511, %v5591
        %v5593 = vpop.f32.mrf.mxu0
        %5594 = vdwg.mxu0
        %v5595 = vadd.f32 %v5402, %v5587
        %v5596 = vadd.f32 %v5403, %v5592
        %v5597 = vld [vmem:[%s57] sm:$0x1]
        %v5598 = vld [vmem:[%s59] sm:$0x1]
        %v5599 = vsel %vm1197, %v5595, 0.0
        %5600 = vadd.xlane.f32.xlu0 %v5599
        %v5601 = vpop.xlane.xlu0 %5600
        %v5602 = vsel %vm1197, %v5596, 0.0
        %5603 = vadd.xlane.f32.xlu0 %v5602
        %v5604 = vpop.xlane.xlu0 %5603
        %v5605 = vmul.f32 %v5601, %v3215
        %v5606 = vmul.f32 %v5604, %v3215
        %v5607 = vsub.f32 %v5595, %v5605
        %v5608 = vsub.f32 %v5596, %v5606
        %v5609 = vmul.f32 %v5607, %v5607
        %v5610 = vmul.f32 %v5608, %v5608
        %v5611 = vsel %vm1197, %v5609, 0.0
        %5612 = vadd.xlane.f32.xlu0 %v5611
        %v5613 = vpop.xlane.xlu0 %5612
        %v5614 = vsel %vm1197, %v5610, 0.0
        %5615 = vadd.xlane.f32.xlu0 %v5614
        %v5616 = vpop.xlane.xlu0 %5615
        %v5617 = vmul.f32 %v5613, %v3215
        %v5618 = vmul.f32 %v5616, %v3215
        %v5619 = vadd.f32 %v5617, 1e-05
        %v5620 = vadd.f32 %v5618, 1e-05
        %v5621 = vrsqrt.pop %v5619
        %v5622 = vrsqrt.pop %v5620
        %v5623 = vmul.f32 %v5607, %v5621
        %v5624 = vmul.f32 %v5608, %v5622
        %v5626 = vlaneseq
        %v5627 = vshrl.u32 %v5626, 7
        %v5628 = vsub.s32 0, %v5627
        %v5629 = vrot.slane %v5597, %v5628
        %v5631 = vmul.f32 %v5623, %v5629
        %v5632 = vmul.f32 %v5624, %v5629
        %v5634 = vlaneseq
        %v5635 = vshrl.u32 %v5634, 7
        %v5636 = vsub.s32 0, %v5635
        %v5637 = vrot.slane %v5598, %v5636
        %v5639 = vadd.f32 %v5631, %v5637
        %v5640 = vadd.f32 %v5632, %v5637
        %5641 = vst.msk [vmem:[%s1148] sm:$0xff] %vm1197, %v5639
        %5642 = vst.msk [vmem:[%s1148 + $0x8] sm:$0xff] %vm1197, %v5640
        %s5643 = sand.u32 %s743, 1
        %s5644 = scalar_lea.sflag [#allocation4], %s5643
        %s5645 = sand.u32 %s743, 1
        %s5646 = smul.addr %s5645, 16
        %s5647 = scalar_lea.vmem [#allocation20], %s5646
        // Predicated region
        $region185: #{tpu_custom_call.1} parent=139 // pred_check
          %p5648 = pneg %p753
        $region186: #{tpu_custom_call.1} parent=139 // pred_check_branch
          %5650 = sbr.rel (%p5648) target = $region188
        $region187: #{tpu_custom_call.1} parent=139 // pred_region
          %s5652 = ssub.s32 256, 256
          %5653 = vsyncadd %s5644, %s5652
          %s5654 = smul.addr %s85, 2
          %s5655 = smul.addr %s5654, 128
          %s5656 = scalar_lea.hbm %s61, %s5655
          %s5657 = sshll.u32 %s5647, 4
          %s5658 = int_to_ptr.vmem [resolvable:$true] %s5657
          %5663 = dma.vmem_to_hbm [thread:$0]  %s5658, 256, %s5656, %s5644, 128, 128, 8
        $region188: #{tpu_custom_call.1} parent=139 // pred_fallthru
          _
      $region140: #{tpu_custom_call.1} parent=5 // pred_fallthru
        _
      %p5664 = scmp.le.s32.totalorder 2, %s80
      // Predicated region
      $region189: #{tpu_custom_call.1} parent=5 // pred_check
        %p5665 = pneg %p5664
      $region190: #{tpu_custom_call.1} parent=5 // pred_check_branch
        %5667 = sbr.rel (%p5665) target = $region192
      $region191: #{tpu_custom_call.1} parent=5 // pred_region
        %s5668 = ssub.s32 %s80, 2
        // Predicated region
        $region193: #{tpu_custom_call.1} parent=191 // pred_check
          %p5669 = pneg %p759
        $region194: #{tpu_custom_call.1} parent=191 // pred_check_branch
          %5671 = sbr.rel (%p5669) target = $region196
        $region195: #{tpu_custom_call.1} parent=191 // pred_region
          %s5672 = sand.u32 %s744, 1
          %s5673 = scalar_lea.sflag [#allocation4], %s5672
          %s5674 = sand.u32 %s744, 1
          %s5675 = smul.addr %s5674, 16
          %s5676 = scalar_lea.vmem [#allocation20], %s5675
          %5677 = dma.done %s5673, 256
        $region196: #{tpu_custom_call.1} parent=191 // pred_fallthru
          _
      $region192: #{tpu_custom_call.1} parent=5 // pred_fallthru
        _
    $region6: #{tpu_custom_call.1} parent=1 // loop_footer
      %s84 = sadd.s32 1, %s80
    $region7: #{tpu_custom_call.1} parent=1 // loop_footer_branch
      %79 = sbr.rel target = $region3
    $region8: #{tpu_custom_call.1} parent=1 // loop_exit
      _
    %5678 = vsyncpa [#allocation3], 1
    %s5679 = scalar_lea.sflag [#allocation3], 1
    %5680 = vsyncpa %s5679, 1
    %5681 = vsyncpa [#allocation6], 1
    %s5682 = scalar_lea.sflag [#allocation6], 1
    %5683 = vsyncpa %s5682, 1
    %5684 = vsyncpa [#allocation9], 1
    %5685 = vsyncpa [#allocation12], 1
    %5686 = vsyncpa [#allocation15], 1
    %5687 = vsyncpa [#allocation18], 1
    %5688 = vsyncpa [#allocation4], 1
    %s5689 = scalar_lea.sflag [#allocation4], 1
    %5690 = vsyncpa %s5689, 1

</llo_original>
